<compile_context>
chip_gen: v7x
topology: tpu7x:2x2x1
jax: 0.10.0
libtpu: 0.0.40
codegen_flags: <defaults>
</compile_context>

<pallas_src>
import functools

import jax
import jax.numpy as jnp
from jax.experimental import pallas as pl
from jax.experimental.pallas import tpu as pltpu

LANE = 128  # pad output-channel and K dims to this for lane-dense tiles


def _round_up(x, m):
    return ((x + m - 1) // m) * m


def _pick_tm(m, split_threshold=256):
    """Row-tile for the parallel grid axis.

    v5e/v6e have one TensorCore: a single full-M block avoids per-step
    overhead and the ragged tail.  v7x has two TensorCores, so split large-M
    layers into two "parallel" blocks to keep both busy.
    """
    kind = ""
    try:
        kind = jax.devices()[0].device_kind.lower()
    except Exception:
        pass
    if "v7" in kind and m >= split_threshold:
        return _round_up((m + 1) // 2, 8)
    return m


# ----------------------------------------------------------------------------
# Pallas kernel: (M,K)bf16 @ (K,Cout)bf16 + bias, optional ReLU,
# optional fused BatchNorm batch statistics (sum / sum-of-squares).
# ----------------------------------------------------------------------------
def _gemm_kernel(p_ref, w_ref, b_ref, *out_refs, apply_relu, emit_stats,
                 mask_rows, m_total, tm):
    acc = jnp.dot(p_ref[...], w_ref[...], preferred_element_type=jnp.float32)
    acc = acc + b_ref[...]
    if apply_relu:
        acc = jnp.maximum(acc, 0.0)
    y_ref = out_refs[0]
    y_ref[...] = acc.astype(y_ref.dtype)

    if emit_stats:
        s_ref = out_refs[1]
        if mask_rows:
            # Ragged last tile: rows beyond the real M are garbage reads and
            # must not contribute to the batch statistics.
            row = (jax.lax.broadcasted_iota(jnp.int32, acc.shape, 0)
                   + pl.program_id(0) * tm)
            acc = jnp.where(row < m_total, acc, 0.0)
        s_ref[0] = jnp.concatenate(
            [jnp.sum(acc, axis=0, keepdims=True),
             jnp.sum(acc * acc, axis=0, keepdims=True)], axis=0)


def conv_gemm(patches, weights, bias, *, apply_relu, emit_stats,
              out_dtype=jnp.bfloat16):
    """(M,K)bf16 @ (K,Cout)bf16 + bias(f32), optional ReLU + BN statistics."""
    M, K = patches.shape
    Cout = weights.shape[1]
    tm = min(_pick_tm(M), M)
    grid_m = -(-M // tm)
    mask_rows = emit_stats and (grid_m * tm != M)

    y_shape = jax.ShapeDtypeStruct((M, Cout), out_dtype)
    y_spec = pl.BlockSpec((tm, Cout), lambda i: (i, 0))
    if emit_stats:
        out_shape = (y_shape,
                     jax.ShapeDtypeStruct((grid_m, 2, Cout), jnp.float32))
        out_specs = [y_spec, pl.BlockSpec((1, 2, Cout), lambda i: (i, 0, 0))]
    else:
        out_shape = y_shape
        out_specs = y_spec

    kernel = functools.partial(_gemm_kernel, apply_relu=apply_relu,
                               emit_stats=emit_stats, mask_rows=mask_rows,
                               m_total=M, tm=tm)
    return pl.pallas_call(
        kernel,
        out_shape=out_shape,
        grid_spec=pltpu.PrefetchScalarGridSpec(
            num_scalar_prefetch=0,
            grid=(grid_m,),
            in_specs=[
                pl.BlockSpec((tm, K), lambda i: (i, 0)),
                pl.BlockSpec((K, Cout), lambda i: (0, 0)),
                pl.BlockSpec((1, Cout), lambda i: (0, 0)),
            ],
            out_specs=out_specs,
        ),
        compiler_params=pltpu.CompilerParams(
            dimension_semantics=("parallel",)),
    )(patches, weights, bias.reshape(1, Cout))


# ----------------------------------------------------------------------------
# Glue: im2col, weight packing (+ BN folding), per-layer wrapper
# ----------------------------------------------------------------------------
def im2col(x_nhwc, kh, kw, stride):
    N, H, W, C = x_nhwc.shape
    Ho = (H - kh) // stride + 1
    Wo = (W - kw) // stride + 1
    cols = []
    for i in range(kh):
        for j in range(kw):
            cols.append(
                x_nhwc[:, i:i + stride * (Ho - 1) + 1:stride,
                       j:j + stride * (Wo - 1) + 1:stride, :])
    patches = jnp.stack(cols, axis=3)                # (N, Ho, Wo, KH*KW, C)
    return patches.reshape(N * Ho * Wo, kh * kw * C), (N, Ho, Wo)


def pack_conv_params(w_oihw, b, cout_pad, scale=None, shift=None):
    """Build (K_pad, cout_pad) bf16 weights + (cout_pad,) f32 bias.

    Real Cin is used on the contraction axis (no channel padding).  Optionally
    folds a preceding per-input-channel affine y = scale*x + shift
    (training-mode BatchNorm) into the weights/bias, then zero-pads K up to a
    multiple of LANE for clean tiling.
    """
    Cout, Cin, KH, KW = w_oihw.shape
    w = jnp.transpose(w_oihw, (2, 3, 1, 0)).astype(jnp.float32)  # (KH,KW,Cin,Cout)
    w = jnp.pad(w, ((0, 0), (0, 0), (0, 0), (0, cout_pad - Cout)))
    k_real = KH * KW * Cin
    w2d = w.reshape(k_real, cout_pad)                            # (K, Cout_pad)
    b2 = jnp.pad(b.astype(jnp.float32), (0, cout_pad - Cout))
    if scale is not None:
        scale_k = jnp.tile(scale, KH * KW)                       # cin fastest
        shift_k = jnp.tile(shift, KH * KW)
        b2 = b2 + jnp.dot(shift_k, w2d)
        w2d = w2d * scale_k[:, None]
    k_pad = _round_up(k_real, LANE)
    if k_pad != k_real:
        w2d = jnp.pad(w2d, ((0, k_pad - k_real), (0, 0)))
    return w2d.astype(jnp.bfloat16), b2, k_pad


def bn_scale_shift_from_stats(stats, m, gamma, beta, eps=1e-5):
    """Training-mode BatchNorm2d (batch stats, biased variance) as (scale, shift).

    `stats` is the (grid_m, 2, C_pad) per-block [sum, sum-of-squares] output
    of the producing conv kernel; `m` is the real per-channel element count.
    """
    c = gamma.shape[0]
    s = jnp.sum(stats, axis=0)                       # (2, C_pad)
    mean = s[0, :c] / m
    var = jnp.maximum(s[1, :c] / m - mean * mean, 0.0)
    inv = jax.lax.rsqrt(var + eps)
    scale = gamma * inv
    shift = beta - gamma * mean * inv
    return scale, shift


def conv_layer(x_nhwc, w_oihw, b, stride, *, apply_relu, emit_stats,
               scale=None, shift=None, cout_pad=LANE):
    KH, KW = w_oihw.shape[2], w_oihw.shape[3]
    w2d, b2, k_pad = pack_conv_params(w_oihw, b, cout_pad, scale, shift)
    patches, dims = im2col(x_nhwc, KH, KW, stride)
    if patches.shape[1] != k_pad:
        patches = jnp.pad(patches, ((0, 0), (0, k_pad - patches.shape[1])))
    res = conv_gemm(patches.astype(jnp.bfloat16), w2d, b2,
                    apply_relu=apply_relu, emit_stats=emit_stats)
    if emit_stats:
        y2d, stats = res
    else:
        y2d, stats = res, None
    return y2d, stats, dims


# ----------------------------------------------------------------------------
# Forward pass (matches the PyTorch ImageModel.forward semantics)
# ----------------------------------------------------------------------------
def image_model_forward(x_nchw, params, eps=1e-5):
    x = jnp.transpose(x_nchw, (0, 2, 3, 1)).astype(jnp.bfloat16)  # NHWC bf16
    N = x.shape[0]

    # x = relu(conv(x)); Cout 64 -> padded to 128 (lane-dense), K 75 -> 128.
    # BN1 batch statistics come out of the same kernel (no extra HBM pass).
    y0, st0, (_, H0, W0) = conv_layer(
        x, params["conv_w"], params["conv_b"], 2,
        apply_relu=True, emit_stats=True)
    # TODO(synk): Dropout(p=0.25) is stochastic; applied as identity (eval semantics).

    # batchnorm1 folded into conv1; conv1 only contracts the 64 real channels.
    s1, t1 = bn_scale_shift_from_stats(st0, y0.shape[0],
                                       params["bn1_g"], params["bn1_b"], eps)
    x1 = y0[:, :64].reshape(N, H0, W0, 64)
    y1, st1, (_, H1, W1) = conv_layer(
        x1, params["conv1_w"], params["conv1_b"], 2,
        apply_relu=False, emit_stats=True, scale=s1, shift=t1)

    # dropout -> identity; batchnorm2 folded into conv2 (which carries ReLU).
    s2, t2 = bn_scale_shift_from_stats(st1, y1.shape[0],
                                       params["bn2_g"], params["bn2_b"], eps)
    x2 = y1.reshape(N, H1, W1, LANE)
    y2, _, (_, H2, W2) = conv_layer(
        x2, params["conv2_w"], params["conv2_b"], 2,
        apply_relu=True, emit_stats=False, scale=s2, shift=t2)

    # conv3 has only N output rows: a Pallas launch is pure overhead, so it is
    # a plain XLA dot on the 64 real channels (no Cout padding waste).
    x3 = y2[:, :64].reshape(N, H2, W2, 64)
    p3, (_, H3, W3) = im2col(x3, 5, 5, 3)
    w3 = jnp.transpose(params["conv3_w"], (2, 3, 1, 0)).reshape(-1, 16)
    y3 = jnp.dot(p3.astype(jnp.float32), w3.astype(jnp.float32),
                 preferred_element_type=jnp.float32)
    y3 = jnp.maximum(y3 + params["conv3_b"], 0.0)

    # flatten with PyTorch NCHW ordering
    y3 = y3.reshape(N, H3, W3, 16)
    y3 = jnp.transpose(y3, (0, 3, 1, 2))
    return y3.reshape(N, -1)


# ----------------------------------------------------------------------------
# Pure-JAX f32 reference (for validation)
# ----------------------------------------------------------------------------
def ref_forward(x_nchw, params):
    def conv(x, w, b, s):
        y = jax.lax.conv_general_dilated(
            x, w, (s, s), "VALID", dimension_numbers=("NCHW", "OIHW", "NCHW"))
        return y + b.reshape(1, -1, 1, 1)

    def bn(x, g, b, eps=1e-5):
        mean = x.mean(axis=(0, 2, 3), keepdims=True)
        var = ((x - mean) ** 2).mean(axis=(0, 2, 3), keepdims=True)
        return ((x - mean) * jax.lax.rsqrt(var + eps) * g.reshape(1, -1, 1, 1)
                + b.reshape(1, -1, 1, 1))

    x = jax.nn.relu(conv(x_nchw, params["conv_w"], params["conv_b"], 2))
    x = bn(x, params["bn1_g"], params["bn1_b"])
    x = conv(x, params["conv1_w"], params["conv1_b"], 2)
    x = bn(x, params["bn2_g"], params["bn2_b"])
    x = jax.nn.relu(conv(x, params["conv2_w"], params["conv2_b"], 2))
    x = jax.nn.relu(conv(x, params["conv3_w"], params["conv3_b"], 3))
    return x.reshape(x.shape[0], -1)


# ----------------------------------------------------------------------------
# Deterministic parameter init + demo
# ----------------------------------------------------------------------------
def init_params(key):
    def conv_init(k, cout, cin, kh, kw):
        kw_, kb_ = jax.random.split(k)
        fan_in = cin * kh * kw
        bound = 1.0 / jnp.sqrt(fan_in)
        w = jax.random.uniform(kw_, (cout, cin, kh, kw), jnp.float32,
                               -bound, bound)
        b = jax.random.uniform(kb_, (cout,), jnp.float32, -bound, bound)
        return w, b

    keys = jax.random.split(key, 4)
    p = {}
    p["conv_w"], p["conv_b"] = conv_init(keys[0], 64, 3, 5, 5)
    p["conv1_w"], p["conv1_b"] = conv_init(keys[1], 128, 64, 5, 5)
    p["conv2_w"], p["conv2_b"] = conv_init(keys[2], 64, 128, 5, 5)
    p["conv3_w"], p["conv3_b"] = conv_init(keys[3], 16, 64, 5, 5)
    # BatchNorm affine params (PyTorch default init: gamma=1, beta=0)
    p["bn1_g"] = jnp.ones((64,), jnp.float32)
    p["bn1_b"] = jnp.zeros((64,), jnp.float32)
    p["bn2_g"] = jnp.ones((128,), jnp.float32)
    p["bn2_b"] = jnp.zeros((128,), jnp.float32)
    return p


if __name__ == "__main__":
    key = jax.random.PRNGKey(0)
    k_x, k_p = jax.random.split(key)

    # Smallest clean img_size for this conv stack is >= 61; use 64.
    # Spatial trace: 64 -> 30 -> 13 -> 5 -> 1, final flatten -> (N, 16).
    x = jax.random.normal(k_x, (2, 3, 64, 64), jnp.float32)   # NCHW, like torch
    params = init_params(k_p)

    out = jax.jit(image_model_forward)(x, params)
    out = jax.block_until_ready(out)
    assert out.shape == (2, 16), out.shape

    ref = jax.block_until_ready(ref_forward(x, params))
    max_err = float(jnp.max(jnp.abs(out - ref)))
    ref_scale = float(jnp.max(jnp.abs(ref))) + 1e-6
    # bf16 MXU operands + bf16 activations -> compare with a bf16-appropriate
    # tolerance (max abs error relative to the output's dynamic range).
    assert max_err <= 5e-2 * ref_scale, (max_err, ref_scale)

    print("KERNEL_OK")
</pallas_src>

<mosaic_0001>
module attributes {stable_mosaic.version = 11 : i64} {
  func.func @_gemm_kernel(%arg0: i32, %arg1: memref<1800x128xbf16, #tpu.memory_space<vmem>>, %arg2: memref<128x128xbf16, #tpu.memory_space<vmem>>, %arg3: memref<1x128xf32, #tpu.memory_space<vmem>>, %arg4: memref<1800x128xbf16, #tpu.memory_space<vmem>>, %arg5: memref<1x2x128xf32, #tpu.memory_space<vmem>>) attributes {dimension_semantics = [#tpu.dimension_semantics<parallel>], iteration_bounds = array<i64: 1>, scalar_prefetch = 0 : i64, scratch_operands = 0 : i64, tpu.core_type = #tpu.core_type<tc>, window_params = [{transform_indices = @transform_0, window_bounds = array<i64: 1800, 128>}, {pipeline_mode = #tpu.pipeline_mode<synchronous>, transform_indices = @transform_1, window_bounds = array<i64: 128, 128>}, {pipeline_mode = #tpu.pipeline_mode<synchronous>, transform_indices = @transform_2, window_bounds = array<i64: 1, 128>}, {transform_indices = @transform_3, window_bounds = array<i64: 1800, 128>}, {transform_indices = @transform_4, window_bounds = array<i64: 1, 2, 128>}]} {
    %c0 = arith.constant 0 : index
    %c0_0 = arith.constant 0 : index
    %0 = vector.load %arg1[%c0, %c0_0] : memref<1800x128xbf16, #tpu.memory_space<vmem>>, vector<1800x128xbf16>
    %c0_1 = arith.constant 0 : index
    %c0_2 = arith.constant 0 : index
    %1 = vector.load %arg2[%c0_1, %c0_2] : memref<128x128xbf16, #tpu.memory_space<vmem>>, vector<128x128xbf16>
    %cst = arith.constant dense<0.000000e+00> : vector<1800x128xf32>
    %2 = tpu.matmul %0, %1, %cst {dimension_numbers = #tpu.dot_dimension_numbers<[1], [0], [0], [1], [0, 0, 1, 1], [], []>} : vector<1800x128xbf16>, vector<128x128xbf16>, vector<1800x128xf32> -> vector<1800x128xf32>
    %c0_3 = arith.constant 0 : index
    %c0_4 = arith.constant 0 : index
    %3 = vector.load %arg3[%c0_3, %c0_4] : memref<1x128xf32, #tpu.memory_space<vmem>>, vector<1x128xf32>
    %4 = vector.broadcast %3 : vector<1x128xf32> to vector<1800x128xf32>
    %5 = arith.addf %2, %4 : vector<1800x128xf32>
    %cst_5 = arith.constant 0.000000e+00 : f32
    %6 = vector.broadcast %cst_5 : f32 to vector<1800x128xf32>
    %7 = arith.maximumf %5, %6 : vector<1800x128xf32>
    %8 = arith.truncf %7 : vector<1800x128xf32> to vector<1800x128xbf16>
    %c0_6 = arith.constant 0 : index
    %c0_7 = arith.constant 0 : index
    %9 = vector.load %arg4[%c0_6, %c0_7] : memref<1800x128xbf16, #tpu.memory_space<vmem>>, vector<1800x128xbf16>
    tpu.vector_store %arg4[%c0_6, %c0_7], %8 {strides = array<i32>} : memref<1800x128xbf16, #tpu.memory_space<vmem>>, vector<1800x128xbf16>,
    %cst_8 = arith.constant dense<0.000000e+00> : vector<128xf32>
    %10 = vector.multi_reduction <add>, %7, %cst_8 [0] : vector<1800x128xf32> to vector<128xf32>
    %11 = vector.shape_cast %10 : vector<128xf32> to vector<1x128xf32>
    %12 = arith.mulf %7, %7 : vector<1800x128xf32>
    %cst_9 = arith.constant dense<0.000000e+00> : vector<128xf32>
    %13 = vector.multi_reduction <add>, %12, %cst_9 [0] : vector<1800x128xf32> to vector<128xf32>
    %14 = vector.shape_cast %13 : vector<128xf32> to vector<1x128xf32>
    %15 = tpu.concatenate %11, %14 in 0 : vector<1x128xf32>, vector<1x128xf32> -> vector<2x128xf32>
    %c0_10 = arith.constant 0 : index
    %c0_11 = arith.constant 0 : index
    %c0_12 = arith.constant 0 : index
    %16 = vector.load %arg5[%c0_10, %c0_11, %c0_12] : memref<1x2x128xf32, #tpu.memory_space<vmem>>, vector<1x2x128xf32>
    %17 = vector.shape_cast %16 : vector<1x2x128xf32> to vector<2x128xf32>
    %18 = vector.shape_cast %15 : vector<2x128xf32> to vector<1x2x128xf32>
    tpu.vector_store %arg5[%c0_10, %c0_11, %c0_12], %18 {strides = array<i32>} : memref<1x2x128xf32, #tpu.memory_space<vmem>>, vector<1x2x128xf32>,
    return
  }
  func.func @transform_0(%arg0: i32) -> (i32, i32) {
    %c0_i32 = arith.constant 0 : i32
    %c0_i32_0 = arith.constant 0 : i32
    return %arg0, %c0_i32 : i32, i32
  }
  func.func @transform_1(%arg0: i32) -> (i32, i32) {
    %c0_i32 = arith.constant 0 : i32
    %c0_i32_0 = arith.constant 0 : i32
    %c0_i32_1 = arith.constant 0 : i32
    return %c0_i32, %c0_i32_0 : i32, i32
  }
  func.func @transform_2(%arg0: i32) -> (i32, i32) {
    %c0_i32 = arith.constant 0 : i32
    %c0_i32_0 = arith.constant 0 : i32
    %c0_i32_1 = arith.constant 0 : i32
    return %c0_i32, %c0_i32_0 : i32, i32
  }
  func.func @transform_3(%arg0: i32) -> (i32, i32) {
    %c0_i32 = arith.constant 0 : i32
    %c0_i32_0 = arith.constant 0 : i32
    return %arg0, %c0_i32 : i32, i32
  }
  func.func @transform_4(%arg0: i32) -> (i32, i32, i32) {
    %c0_i32 = arith.constant 0 : i32
    %c0_i32_0 = arith.constant 0 : i32
    %c0_i32_1 = arith.constant 0 : i32
    return %arg0, %c0_i32, %c0_i32_0 : i32, i32, i32
  }
}

module attributes {stable_mosaic.version = 11 : i64} {
  func.func @_gemm_kernel(%arg0: i32, %arg1: memref<338x1664xbf16, #tpu.memory_space<vmem>>, %arg2: memref<1664x128xbf16, #tpu.memory_space<vmem>>, %arg3: memref<1x128xf32, #tpu.memory_space<vmem>>, %arg4: memref<338x128xbf16, #tpu.memory_space<vmem>>, %arg5: memref<1x2x128xf32, #tpu.memory_space<vmem>>) attributes {dimension_semantics = [#tpu.dimension_semantics<parallel>], iteration_bounds = array<i64: 1>, scalar_prefetch = 0 : i64, scratch_operands = 0 : i64, tpu.core_type = #tpu.core_type<tc>, window_params = [{transform_indices = @transform_0, window_bounds = array<i64: 338, 1664>}, {pipeline_mode = #tpu.pipeline_mode<synchronous>, transform_indices = @transform_1, window_bounds = array<i64: 1664, 128>}, {pipeline_mode = #tpu.pipeline_mode<synchronous>, transform_indices = @transform_2, window_bounds = array<i64: 1, 128>}, {transform_indices = @transform_3, window_bounds = array<i64: 338, 128>}, {transform_indices = @transform_4, window_bounds = array<i64: 1, 2, 128>}]} {
    %c0 = arith.constant 0 : index
    %c0_0 = arith.constant 0 : index
    %0 = vector.load %arg1[%c0, %c0_0] : memref<338x1664xbf16, #tpu.memory_space<vmem>>, vector<338x1664xbf16>
    %c0_1 = arith.constant 0 : index
    %c0_2 = arith.constant 0 : index
    %1 = vector.load %arg2[%c0_1, %c0_2] : memref<1664x128xbf16, #tpu.memory_space<vmem>>, vector<1664x128xbf16>
    %cst = arith.constant dense<0.000000e+00> : vector<338x128xf32>
    %2 = tpu.matmul %0, %1, %cst {dimension_numbers = #tpu.dot_dimension_numbers<[1], [0], [0], [1], [0, 0, 1, 1], [], []>} : vector<338x1664xbf16>, vector<1664x128xbf16>, vector<338x128xf32> -> vector<338x128xf32>
    %c0_3 = arith.constant 0 : index
    %c0_4 = arith.constant 0 : index
    %3 = vector.load %arg3[%c0_3, %c0_4] : memref<1x128xf32, #tpu.memory_space<vmem>>, vector<1x128xf32>
    %4 = vector.broadcast %3 : vector<1x128xf32> to vector<338x128xf32>
    %5 = arith.addf %2, %4 : vector<338x128xf32>
    %6 = arith.truncf %5 : vector<338x128xf32> to vector<338x128xbf16>
    %c0_5 = arith.constant 0 : index
    %c0_6 = arith.constant 0 : index
    %7 = vector.load %arg4[%c0_5, %c0_6] : memref<338x128xbf16, #tpu.memory_space<vmem>>, vector<338x128xbf16>
    tpu.vector_store %arg4[%c0_5, %c0_6], %6 {strides = array<i32>} : memref<338x128xbf16, #tpu.memory_space<vmem>>, vector<338x128xbf16>,
    %cst_7 = arith.constant dense<0.000000e+00> : vector<128xf32>
    %8 = vector.multi_reduction <add>, %5, %cst_7 [0] : vector<338x128xf32> to vector<128xf32>
    %9 = vector.shape_cast %8 : vector<128xf32> to vector<1x128xf32>
    %10 = arith.mulf %5, %5 : vector<338x128xf32>
    %cst_8 = arith.constant dense<0.000000e+00> : vector<128xf32>
    %11 = vector.multi_reduction <add>, %10, %cst_8 [0] : vector<338x128xf32> to vector<128xf32>
    %12 = vector.shape_cast %11 : vector<128xf32> to vector<1x128xf32>
    %13 = tpu.concatenate %9, %12 in 0 : vector<1x128xf32>, vector<1x128xf32> -> vector<2x128xf32>
    %c0_9 = arith.constant 0 : index
    %c0_10 = arith.constant 0 : index
    %c0_11 = arith.constant 0 : index
    %14 = vector.load %arg5[%c0_9, %c0_10, %c0_11] : memref<1x2x128xf32, #tpu.memory_space<vmem>>, vector<1x2x128xf32>
    %15 = vector.shape_cast %14 : vector<1x2x128xf32> to vector<2x128xf32>
    %16 = vector.shape_cast %13 : vector<2x128xf32> to vector<1x2x128xf32>
    tpu.vector_store %arg5[%c0_9, %c0_10, %c0_11], %16 {strides = array<i32>} : memref<1x2x128xf32, #tpu.memory_space<vmem>>, vector<1x2x128xf32>,
    return
  }
  func.func @transform_0(%arg0: i32) -> (i32, i32) {
    %c0_i32 = arith.constant 0 : i32
    %c0_i32_0 = arith.constant 0 : i32
    return %arg0, %c0_i32 : i32, i32
  }
  func.func @transform_1(%arg0: i32) -> (i32, i32) {
    %c0_i32 = arith.constant 0 : i32
    %c0_i32_0 = arith.constant 0 : i32
    %c0_i32_1 = arith.constant 0 : i32
    return %c0_i32, %c0_i32_0 : i32, i32
  }
  func.func @transform_2(%arg0: i32) -> (i32, i32) {
    %c0_i32 = arith.constant 0 : i32
    %c0_i32_0 = arith.constant 0 : i32
    %c0_i32_1 = arith.constant 0 : i32
    return %c0_i32, %c0_i32_0 : i32, i32
  }
  func.func @transform_3(%arg0: i32) -> (i32, i32) {
    %c0_i32 = arith.constant 0 : i32
    %c0_i32_0 = arith.constant 0 : i32
    return %arg0, %c0_i32 : i32, i32
  }
  func.func @transform_4(%arg0: i32) -> (i32, i32, i32) {
    %c0_i32 = arith.constant 0 : i32
    %c0_i32_0 = arith.constant 0 : i32
    %c0_i32_1 = arith.constant 0 : i32
    return %arg0, %c0_i32, %c0_i32_0 : i32, i32, i32
  }
}

module attributes {stable_mosaic.version = 11 : i64} {
  func.func @_gemm_kernel(%arg0: i32, %arg1: memref<50x3200xbf16, #tpu.memory_space<vmem>>, %arg2: memref<3200x128xbf16, #tpu.memory_space<vmem>>, %arg3: memref<1x128xf32, #tpu.memory_space<vmem>>, %arg4: memref<50x128xbf16, #tpu.memory_space<vmem>>) attributes {dimension_semantics = [#tpu.dimension_semantics<parallel>], iteration_bounds = array<i64: 1>, scalar_prefetch = 0 : i64, scratch_operands = 0 : i64, tpu.core_type = #tpu.core_type<tc>, window_params = [{transform_indices = @transform_0, window_bounds = array<i64: 50, 3200>}, {pipeline_mode = #tpu.pipeline_mode<synchronous>, transform_indices = @transform_1, window_bounds = array<i64: 3200, 128>}, {pipeline_mode = #tpu.pipeline_mode<synchronous>, transform_indices = @transform_2, window_bounds = array<i64: 1, 128>}, {transform_indices = @transform_3, window_bounds = array<i64: 50, 128>}]} {
    %c0 = arith.constant 0 : index
    %c0_0 = arith.constant 0 : index
    %0 = vector.load %arg1[%c0, %c0_0] : memref<50x3200xbf16, #tpu.memory_space<vmem>>, vector<50x3200xbf16>
    %c0_1 = arith.constant 0 : index
    %c0_2 = arith.constant 0 : index
    %1 = vector.load %arg2[%c0_1, %c0_2] : memref<3200x128xbf16, #tpu.memory_space<vmem>>, vector<3200x128xbf16>
    %cst = arith.constant dense<0.000000e+00> : vector<50x128xf32>
    %2 = tpu.matmul %0, %1, %cst {dimension_numbers = #tpu.dot_dimension_numbers<[1], [0], [0], [1], [0, 0, 1, 1], [], []>} : vector<50x3200xbf16>, vector<3200x128xbf16>, vector<50x128xf32> -> vector<50x128xf32>
    %c0_3 = arith.constant 0 : index
    %c0_4 = arith.constant 0 : index
    %3 = vector.load %arg3[%c0_3, %c0_4] : memref<1x128xf32, #tpu.memory_space<vmem>>, vector<1x128xf32>
    %4 = vector.broadcast %3 : vector<1x128xf32> to vector<50x128xf32>
    %5 = arith.addf %2, %4 : vector<50x128xf32>
    %cst_5 = arith.constant 0.000000e+00 : f32
    %6 = vector.broadcast %cst_5 : f32 to vector<50x128xf32>
    %7 = arith.maximumf %5, %6 : vector<50x128xf32>
    %8 = arith.truncf %7 : vector<50x128xf32> to vector<50x128xbf16>
    %c0_6 = arith.constant 0 : index
    %c0_7 = arith.constant 0 : index
    %9 = vector.load %arg4[%c0_6, %c0_7] : memref<50x128xbf16, #tpu.memory_space<vmem>>, vector<50x128xbf16>
    tpu.vector_store %arg4[%c0_6, %c0_7], %8 {strides = array<i32>} : memref<50x128xbf16, #tpu.memory_space<vmem>>, vector<50x128xbf16>,
    return
  }
  func.func @transform_0(%arg0: i32) -> (i32, i32) {
    %c0_i32 = arith.constant 0 : i32
    %c0_i32_0 = arith.constant 0 : i32
    return %arg0, %c0_i32 : i32, i32
  }
  func.func @transform_1(%arg0: i32) -> (i32, i32) {
    %c0_i32 = arith.constant 0 : i32
    %c0_i32_0 = arith.constant 0 : i32
    %c0_i32_1 = arith.constant 0 : i32
    return %c0_i32, %c0_i32_0 : i32, i32
  }
  func.func @transform_2(%arg0: i32) -> (i32, i32) {
    %c0_i32 = arith.constant 0 : i32
    %c0_i32_0 = arith.constant 0 : i32
    %c0_i32_1 = arith.constant 0 : i32
    return %c0_i32, %c0_i32_0 : i32, i32
  }
  func.func @transform_3(%arg0: i32) -> (i32, i32) {
    %c0_i32 = arith.constant 0 : i32
    %c0_i32_0 = arith.constant 0 : i32
    return %arg0, %c0_i32 : i32, i32
  }
}

</mosaic_0001>

<llo_original>
// kernel: image_model_forward.3
$region0: #{image_model_forward.3}
  #allocation0 [shape = 'u32[]', space=smem, size = 0x4, offset = 0x4, fixed_abs, tag = 'smem constant byte address 0x4 - core index']
  #allocation1 [shape = 'u32[144,128]{1,0:T(1,128)}', space=vmem, size = 0x12000, scoped, tag = 'internal scratch']
  %s0 = inlined_call_operand.vmem [shape: bf16[1800,128], index: 0, kind: input, shape index: {}]
  %s1 = inlined_call_operand.vmem [shape: bf16[128,128], index: 1, kind: input, shape index: {}]
  %s2 = inlined_call_operand.vmem [shape: f32[1,128], index: 2, kind: input, shape index: {}]
  %s3 = inlined_call_operand.vmem [shape: bf16[1800,128], index: 3, kind: output, shape index: {0}]
  %s4 = inlined_call_operand.vmem [shape: f32[1,2,128], index: 4, kind: output, shape index: {1}]
  %5 = xla_tuple %s3, %s4
  %s6 = sld [smem:[#allocation0]]
  $region30: #{image_model_forward.3} parent=0
    _
  %s8 = ssub.s32 1, %s6
  %s9 = scalar_select 0, %s8, %s6
  // Predicated region
  $region2: #{image_model_forward.3} parent=0 // pred_check
    _
  $region3: #{image_model_forward.3} parent=0 // pred_check_branch
    %11 = sbr.rel (0) target = $region5
  $region4: #{image_model_forward.3} parent=0 // pred_region
    _
  $region5: #{image_model_forward.3} parent=0 // pred_fallthru
    _
  // Predicated region
  $region6: #{image_model_forward.3} parent=0 // pred_check
    _
  $region7: #{image_model_forward.3} parent=0 // pred_check_branch
    %13 = sbr.rel (0) target = $region9
  $region8: #{image_model_forward.3} parent=0 // pred_region
    _
  $region9: #{image_model_forward.3} parent=0 // pred_fallthru
    _
  // Predicated region
  $region10: #{image_model_forward.3} parent=0 // pred_check
    _
  $region11: #{image_model_forward.3} parent=0 // pred_check_branch
    %15 = sbr.rel (0) target = $region13
  $region12: #{image_model_forward.3} parent=0 // pred_region
    _
  $region13: #{image_model_forward.3} parent=0 // pred_fallthru
    _
  %v17 = vld [vmem:[%s0] sm:$0xf]
  %v18 = vld [vmem:[%s0 + $0x4] sm:$0xf]
  %v19 = vld [vmem:[%s0 + $0x8] sm:$0xf]
  %v20 = vld [vmem:[%s0 + $0xc] sm:$0xf]
  %v21 = vld [vmem:[%s0 + $0x10] sm:$0xf]
  %v22 = vld [vmem:[%s0 + $0x14] sm:$0xf]
  %v23 = vld [vmem:[%s0 + $0x18] sm:$0xf]
  %v24 = vld [vmem:[%s0 + $0x1c] sm:$0xf]
  %v25 = vld [vmem:[%s0 + $0x20] sm:$0xf]
  %v26 = vld [vmem:[%s0 + $0x24] sm:$0xf]
  %v27 = vld [vmem:[%s0 + $0x28] sm:$0xf]
  %v28 = vld [vmem:[%s0 + $0x2c] sm:$0xf]
  %v29 = vld [vmem:[%s0 + $0x30] sm:$0xf]
  %v30 = vld [vmem:[%s0 + $0x34] sm:$0xf]
  %v31 = vld [vmem:[%s0 + $0x38] sm:$0xf]
  %v32 = vld [vmem:[%s0 + $0x3c] sm:$0xf]
  %v33 = vld [vmem:[%s0 + $0x40] sm:$0xf]
  %v34 = vld [vmem:[%s0 + $0x44] sm:$0xf]
  %v35 = vld [vmem:[%s0 + $0x48] sm:$0xf]
  %v36 = vld [vmem:[%s0 + $0x4c] sm:$0xf]
  %v37 = vld [vmem:[%s0 + $0x50] sm:$0xf]
  %v38 = vld [vmem:[%s0 + $0x54] sm:$0xf]
  %v39 = vld [vmem:[%s0 + $0x58] sm:$0xf]
  %v40 = vld [vmem:[%s0 + $0x5c] sm:$0xf]
  %v41 = vld [vmem:[%s0 + $0x60] sm:$0xf]
  %v42 = vld [vmem:[%s0 + $0x64] sm:$0xf]
  %v43 = vld [vmem:[%s0 + $0x68] sm:$0xf]
  %v44 = vld [vmem:[%s0 + $0x6c] sm:$0xf]
  %v45 = vld [vmem:[%s0 + $0x70] sm:$0xf]
  %v46 = vld [vmem:[%s0 + $0x74] sm:$0xf]
  %v47 = vld [vmem:[%s0 + $0x78] sm:$0xf]
  %v48 = vld [vmem:[%s0 + $0x7c] sm:$0xf]
  %v49 = vld [vmem:[%s0 + $0x80] sm:$0xf]
  %v50 = vld [vmem:[%s0 + $0x84] sm:$0xf]
  %v51 = vld [vmem:[%s0 + $0x88] sm:$0xf]
  %v52 = vld [vmem:[%s0 + $0x8c] sm:$0xf]
  %v53 = vld [vmem:[%s0 + $0x90] sm:$0xf]
  %v54 = vld [vmem:[%s0 + $0x94] sm:$0xf]
  %v55 = vld [vmem:[%s0 + $0x98] sm:$0xf]
  %v56 = vld [vmem:[%s0 + $0x9c] sm:$0xf]
  %v57 = vld [vmem:[%s0 + $0xa0] sm:$0xf]
  %v58 = vld [vmem:[%s0 + $0xa4] sm:$0xf]
  %v59 = vld [vmem:[%s0 + $0xa8] sm:$0xf]
  %v60 = vld [vmem:[%s0 + $0xac] sm:$0xf]
  %v61 = vld [vmem:[%s0 + $0xb0] sm:$0xf]
  %v62 = vld [vmem:[%s0 + $0xb4] sm:$0xf]
  %v63 = vld [vmem:[%s0 + $0xb8] sm:$0xf]
  %v64 = vld [vmem:[%s0 + $0xbc] sm:$0xf]
  %v65 = vld [vmem:[%s0 + $0xc0] sm:$0xf]
  %v66 = vld [vmem:[%s0 + $0xc4] sm:$0xf]
  %v67 = vld [vmem:[%s0 + $0xc8] sm:$0xf]
  %v68 = vld [vmem:[%s0 + $0xcc] sm:$0xf]
  %v69 = vld [vmem:[%s0 + $0xd0] sm:$0xf]
  %v70 = vld [vmem:[%s0 + $0xd4] sm:$0xf]
  %v71 = vld [vmem:[%s0 + $0xd8] sm:$0xf]
  %v72 = vld [vmem:[%s0 + $0xdc] sm:$0xf]
  %v73 = vld [vmem:[%s0 + $0xe0] sm:$0xf]
  %v74 = vld [vmem:[%s0 + $0xe4] sm:$0xf]
  %v75 = vld [vmem:[%s0 + $0xe8] sm:$0xf]
  %v76 = vld [vmem:[%s0 + $0xec] sm:$0xf]
  %v77 = vld [vmem:[%s0 + $0xf0] sm:$0xf]
  %v78 = vld [vmem:[%s0 + $0xf4] sm:$0xf]
  %v79 = vld [vmem:[%s0 + $0xf8] sm:$0xf]
  %v80 = vld [vmem:[%s0 + $0xfc] sm:$0xf]
  %v81 = vld [vmem:[%s0 + $0x100] sm:$0xf]
  %v82 = vld [vmem:[%s0 + $0x104] sm:$0xf]
  %v83 = vld [vmem:[%s0 + $0x108] sm:$0xf]
  %v84 = vld [vmem:[%s0 + $0x10c] sm:$0xf]
  %v85 = vld [vmem:[%s0 + $0x110] sm:$0xf]
  %v86 = vld [vmem:[%s0 + $0x114] sm:$0xf]
  %v87 = vld [vmem:[%s0 + $0x118] sm:$0xf]
  %v88 = vld [vmem:[%s0 + $0x11c] sm:$0xf]
  %v89 = vld [vmem:[%s0 + $0x120] sm:$0xf]
  %v90 = vld [vmem:[%s0 + $0x124] sm:$0xf]
  %v91 = vld [vmem:[%s0 + $0x128] sm:$0xf]
  %v92 = vld [vmem:[%s0 + $0x12c] sm:$0xf]
  %v93 = vld [vmem:[%s0 + $0x130] sm:$0xf]
  %v94 = vld [vmem:[%s0 + $0x134] sm:$0xf]
  %v95 = vld [vmem:[%s0 + $0x138] sm:$0xf]
  %v96 = vld [vmem:[%s0 + $0x13c] sm:$0xf]
  %v97 = vld [vmem:[%s0 + $0x140] sm:$0xf]
  %v98 = vld [vmem:[%s0 + $0x144] sm:$0xf]
  %v99 = vld [vmem:[%s0 + $0x148] sm:$0xf]
  %v100 = vld [vmem:[%s0 + $0x14c] sm:$0xf]
  %v101 = vld [vmem:[%s0 + $0x150] sm:$0xf]
  %v102 = vld [vmem:[%s0 + $0x154] sm:$0xf]
  %v103 = vld [vmem:[%s0 + $0x158] sm:$0xf]
  %v104 = vld [vmem:[%s0 + $0x15c] sm:$0xf]
  %v105 = vld [vmem:[%s0 + $0x160] sm:$0xf]
  %v106 = vld [vmem:[%s0 + $0x164] sm:$0xf]
  %v107 = vld [vmem:[%s0 + $0x168] sm:$0xf]
  %v108 = vld [vmem:[%s0 + $0x16c] sm:$0xf]
  %v109 = vld [vmem:[%s0 + $0x170] sm:$0xf]
  %v110 = vld [vmem:[%s0 + $0x174] sm:$0xf]
  %v111 = vld [vmem:[%s0 + $0x178] sm:$0xf]
  %v112 = vld [vmem:[%s0 + $0x17c] sm:$0xf]
  %v113 = vld [vmem:[%s0 + $0x180] sm:$0xf]
  %v114 = vld [vmem:[%s0 + $0x184] sm:$0xf]
  %v115 = vld [vmem:[%s0 + $0x188] sm:$0xf]
  %v116 = vld [vmem:[%s0 + $0x18c] sm:$0xf]
  %v117 = vld [vmem:[%s0 + $0x190] sm:$0xf]
  %v118 = vld [vmem:[%s0 + $0x194] sm:$0xf]
  %v119 = vld [vmem:[%s0 + $0x198] sm:$0xf]
  %v120 = vld [vmem:[%s0 + $0x19c] sm:$0xf]
  %v121 = vld [vmem:[%s0 + $0x1a0] sm:$0xf]
  %v122 = vld [vmem:[%s0 + $0x1a4] sm:$0xf]
  %v123 = vld [vmem:[%s0 + $0x1a8] sm:$0xf]
  %v124 = vld [vmem:[%s0 + $0x1ac] sm:$0xf]
  %v125 = vld [vmem:[%s0 + $0x1b0] sm:$0xf]
  %v126 = vld [vmem:[%s0 + $0x1b4] sm:$0xf]
  %v127 = vld [vmem:[%s0 + $0x1b8] sm:$0xf]
  %v128 = vld [vmem:[%s0 + $0x1bc] sm:$0xf]
  %v129 = vld [vmem:[%s0 + $0x1c0] sm:$0xf]
  %v130 = vld [vmem:[%s0 + $0x1c4] sm:$0xf]
  %v131 = vld [vmem:[%s0 + $0x1c8] sm:$0xf]
  %v132 = vld [vmem:[%s0 + $0x1cc] sm:$0xf]
  %v133 = vld [vmem:[%s0 + $0x1d0] sm:$0xf]
  %v134 = vld [vmem:[%s0 + $0x1d4] sm:$0xf]
  %v135 = vld [vmem:[%s0 + $0x1d8] sm:$0xf]
  %v136 = vld [vmem:[%s0 + $0x1dc] sm:$0xf]
  %v137 = vld [vmem:[%s0 + $0x1e0] sm:$0xf]
  %v138 = vld [vmem:[%s0 + $0x1e4] sm:$0xf]
  %v139 = vld [vmem:[%s0 + $0x1e8] sm:$0xf]
  %v140 = vld [vmem:[%s0 + $0x1ec] sm:$0xf]
  %v141 = vld [vmem:[%s0 + $0x1f0] sm:$0xf]
  %v142 = vld [vmem:[%s0 + $0x1f4] sm:$0xf]
  %v143 = vld [vmem:[%s0 + $0x1f8] sm:$0xf]
  %v144 = vld [vmem:[%s0 + $0x1fc] sm:$0xf]
  %v145 = vld [vmem:[%s0 + $0x200] sm:$0xf]
  %v146 = vld [vmem:[%s0 + $0x204] sm:$0xf]
  %v147 = vld [vmem:[%s0 + $0x208] sm:$0xf]
  %v148 = vld [vmem:[%s0 + $0x20c] sm:$0xf]
  %v149 = vld [vmem:[%s0 + $0x210] sm:$0xf]
  %v150 = vld [vmem:[%s0 + $0x214] sm:$0xf]
  %v151 = vld [vmem:[%s0 + $0x218] sm:$0xf]
  %v152 = vld [vmem:[%s0 + $0x21c] sm:$0xf]
  %v153 = vld [vmem:[%s0 + $0x220] sm:$0xf]
  %v154 = vld [vmem:[%s0 + $0x224] sm:$0xf]
  %v155 = vld [vmem:[%s0 + $0x228] sm:$0xf]
  %v156 = vld [vmem:[%s0 + $0x22c] sm:$0xf]
  %v157 = vld [vmem:[%s0 + $0x230] sm:$0xf]
  %v158 = vld [vmem:[%s0 + $0x234] sm:$0xf]
  %v159 = vld [vmem:[%s0 + $0x238] sm:$0xf]
  %v160 = vld [vmem:[%s0 + $0x23c] sm:$0xf]
  %v161 = vld [vmem:[%s0 + $0x240] sm:$0xf]
  %v162 = vld [vmem:[%s0 + $0x244] sm:$0xf]
  %v163 = vld [vmem:[%s0 + $0x248] sm:$0xf]
  %v164 = vld [vmem:[%s0 + $0x24c] sm:$0xf]
  %v165 = vld [vmem:[%s0 + $0x250] sm:$0xf]
  %v166 = vld [vmem:[%s0 + $0x254] sm:$0xf]
  %v167 = vld [vmem:[%s0 + $0x258] sm:$0xf]
  %v168 = vld [vmem:[%s0 + $0x25c] sm:$0xf]
  %v169 = vld [vmem:[%s0 + $0x260] sm:$0xf]
  %v170 = vld [vmem:[%s0 + $0x264] sm:$0xf]
  %v171 = vld [vmem:[%s0 + $0x268] sm:$0xf]
  %v172 = vld [vmem:[%s0 + $0x26c] sm:$0xf]
  %v173 = vld [vmem:[%s0 + $0x270] sm:$0xf]
  %v174 = vld [vmem:[%s0 + $0x274] sm:$0xf]
  %v175 = vld [vmem:[%s0 + $0x278] sm:$0xf]
  %v176 = vld [vmem:[%s0 + $0x27c] sm:$0xf]
  %v177 = vld [vmem:[%s0 + $0x280] sm:$0xf]
  %v178 = vld [vmem:[%s0 + $0x284] sm:$0xf]
  %v179 = vld [vmem:[%s0 + $0x288] sm:$0xf]
  %v180 = vld [vmem:[%s0 + $0x28c] sm:$0xf]
  %v181 = vld [vmem:[%s0 + $0x290] sm:$0xf]
  %v182 = vld [vmem:[%s0 + $0x294] sm:$0xf]
  %v183 = vld [vmem:[%s0 + $0x298] sm:$0xf]
  %v184 = vld [vmem:[%s0 + $0x29c] sm:$0xf]
  %v185 = vld [vmem:[%s0 + $0x2a0] sm:$0xf]
  %v186 = vld [vmem:[%s0 + $0x2a4] sm:$0xf]
  %v187 = vld [vmem:[%s0 + $0x2a8] sm:$0xf]
  %v188 = vld [vmem:[%s0 + $0x2ac] sm:$0xf]
  %v189 = vld [vmem:[%s0 + $0x2b0] sm:$0xf]
  %v190 = vld [vmem:[%s0 + $0x2b4] sm:$0xf]
  %v191 = vld [vmem:[%s0 + $0x2b8] sm:$0xf]
  %v192 = vld [vmem:[%s0 + $0x2bc] sm:$0xf]
  %v193 = vld [vmem:[%s0 + $0x2c0] sm:$0xf]
  %v194 = vld [vmem:[%s0 + $0x2c4] sm:$0xf]
  %v195 = vld [vmem:[%s0 + $0x2c8] sm:$0xf]
  %v196 = vld [vmem:[%s0 + $0x2cc] sm:$0xf]
  %v197 = vld [vmem:[%s0 + $0x2d0] sm:$0xf]
  %v198 = vld [vmem:[%s0 + $0x2d4] sm:$0xf]
  %v199 = vld [vmem:[%s0 + $0x2d8] sm:$0xf]
  %v200 = vld [vmem:[%s0 + $0x2dc] sm:$0xf]
  %v201 = vld [vmem:[%s0 + $0x2e0] sm:$0xf]
  %v202 = vld [vmem:[%s0 + $0x2e4] sm:$0xf]
  %v203 = vld [vmem:[%s0 + $0x2e8] sm:$0xf]
  %v204 = vld [vmem:[%s0 + $0x2ec] sm:$0xf]
  %v205 = vld [vmem:[%s0 + $0x2f0] sm:$0xf]
  %v206 = vld [vmem:[%s0 + $0x2f4] sm:$0xf]
  %v207 = vld [vmem:[%s0 + $0x2f8] sm:$0xf]
  %v208 = vld [vmem:[%s0 + $0x2fc] sm:$0xf]
  %v209 = vld [vmem:[%s0 + $0x300] sm:$0xf]
  %v210 = vld [vmem:[%s0 + $0x304] sm:$0xf]
  %v211 = vld [vmem:[%s0 + $0x308] sm:$0xf]
  %v212 = vld [vmem:[%s0 + $0x30c] sm:$0xf]
  %v213 = vld [vmem:[%s0 + $0x310] sm:$0xf]
  %v214 = vld [vmem:[%s0 + $0x314] sm:$0xf]
  %v215 = vld [vmem:[%s0 + $0x318] sm:$0xf]
  %v216 = vld [vmem:[%s0 + $0x31c] sm:$0xf]
  %v217 = vld [vmem:[%s0 + $0x320] sm:$0xf]
  %v218 = vld [vmem:[%s0 + $0x324] sm:$0xf]
  %v219 = vld [vmem:[%s0 + $0x328] sm:$0xf]
  %v220 = vld [vmem:[%s0 + $0x32c] sm:$0xf]
  %v221 = vld [vmem:[%s0 + $0x330] sm:$0xf]
  %v222 = vld [vmem:[%s0 + $0x334] sm:$0xf]
  %v223 = vld [vmem:[%s0 + $0x338] sm:$0xf]
  %v224 = vld [vmem:[%s0 + $0x33c] sm:$0xf]
  %v225 = vld [vmem:[%s0 + $0x340] sm:$0xf]
  %v226 = vld [vmem:[%s0 + $0x344] sm:$0xf]
  %v227 = vld [vmem:[%s0 + $0x348] sm:$0xf]
  %v228 = vld [vmem:[%s0 + $0x34c] sm:$0xf]
  %v229 = vld [vmem:[%s0 + $0x350] sm:$0xf]
  %v230 = vld [vmem:[%s0 + $0x354] sm:$0xf]
  %v231 = vld [vmem:[%s0 + $0x358] sm:$0xf]
  %v232 = vld [vmem:[%s0 + $0x35c] sm:$0xf]
  %v233 = vld [vmem:[%s0 + $0x360] sm:$0xf]
  %v234 = vld [vmem:[%s0 + $0x364] sm:$0xf]
  %v235 = vld [vmem:[%s0 + $0x368] sm:$0xf]
  %v236 = vld [vmem:[%s0 + $0x36c] sm:$0xf]
  %v237 = vld [vmem:[%s0 + $0x370] sm:$0xf]
  %v238 = vld [vmem:[%s0 + $0x374] sm:$0xf]
  %v239 = vld [vmem:[%s0 + $0x378] sm:$0xf]
  %v240 = vld [vmem:[%s0 + $0x37c] sm:$0xf]
  %v241 = vld [vmem:[%s0 + $0x380] sm:$0xf]
  %v242 = vld [vmem:[%s1] sm:$0xf]
  %v243 = vld [vmem:[%s1 + $0x4] sm:$0xf]
  %v244 = vld [vmem:[%s1 + $0x8] sm:$0xf]
  %v245 = vld [vmem:[%s1 + $0xc] sm:$0xf]
  %v246 = vld [vmem:[%s1 + $0x10] sm:$0xf]
  %v247 = vld [vmem:[%s1 + $0x14] sm:$0xf]
  %v248 = vld [vmem:[%s1 + $0x18] sm:$0xf]
  %v249 = vld [vmem:[%s1 + $0x1c] sm:$0xf]
  %v250 = vld [vmem:[%s1 + $0x20] sm:$0xf]
  %v251 = vld [vmem:[%s1 + $0x24] sm:$0xf]
  %v252 = vld [vmem:[%s1 + $0x28] sm:$0xf]
  %v253 = vld [vmem:[%s1 + $0x2c] sm:$0xf]
  %v254 = vld [vmem:[%s1 + $0x30] sm:$0xf]
  %v255 = vld [vmem:[%s1 + $0x34] sm:$0xf]
  %v256 = vld [vmem:[%s1 + $0x38] sm:$0xf]
  %v257 = vld [vmem:[%s1 + $0x3c] sm:$0xf]
  %v258 = vld [vmem:[%s2] sm:$0x1]
  %v260 = vlaneseq
  %v261 = vshrl.u32 %v260, 7
  %v262 = vsub.s32 0, %v261
  %v263 = vrot.slane %v258, %v262
  %v490 = vunpack.c.l.b16 %v17
  %v491 = vunpack.c.l.b16 %v18
  %v492 = vunpack.c.l.b16 %v19
  %v493 = vunpack.c.l.b16 %v20
  %v494 = vunpack.c.l.b16 %v21
  %v495 = vunpack.c.l.b16 %v22
  %v496 = vunpack.c.l.b16 %v23
  %v497 = vunpack.c.l.b16 %v24
  %v498 = vunpack.c.l.b16 %v25
  %v499 = vunpack.c.l.b16 %v26
  %v500 = vunpack.c.l.b16 %v27
  %v501 = vunpack.c.l.b16 %v28
  %v502 = vunpack.c.l.b16 %v29
  %v503 = vunpack.c.l.b16 %v30
  %v504 = vunpack.c.l.b16 %v31
  %v505 = vunpack.c.l.b16 %v32
  %v506 = vunpack.c.l.b16 %v33
  %v507 = vunpack.c.l.b16 %v34
  %v508 = vunpack.c.l.b16 %v35
  %v509 = vunpack.c.l.b16 %v36
  %v510 = vunpack.c.l.b16 %v37
  %v511 = vunpack.c.l.b16 %v38
  %v512 = vunpack.c.l.b16 %v39
  %v513 = vunpack.c.l.b16 %v40
  %v514 = vunpack.c.l.b16 %v41
  %v515 = vunpack.c.l.b16 %v42
  %v516 = vunpack.c.l.b16 %v43
  %v517 = vunpack.c.l.b16 %v44
  %v518 = vunpack.c.l.b16 %v45
  %v519 = vunpack.c.l.b16 %v46
  %v520 = vunpack.c.l.b16 %v47
  %v521 = vunpack.c.l.b16 %v48
  %v522 = vunpack.c.l.b16 %v49
  %v523 = vunpack.c.l.b16 %v50
  %v524 = vunpack.c.l.b16 %v51
  %v525 = vunpack.c.l.b16 %v52
  %v526 = vunpack.c.l.b16 %v53
  %v527 = vunpack.c.l.b16 %v54
  %v528 = vunpack.c.l.b16 %v55
  %v529 = vunpack.c.l.b16 %v56
  %v530 = vunpack.c.l.b16 %v57
  %v531 = vunpack.c.l.b16 %v58
  %v532 = vunpack.c.l.b16 %v59
  %v533 = vunpack.c.l.b16 %v60
  %v534 = vunpack.c.l.b16 %v61
  %v535 = vunpack.c.l.b16 %v62
  %v536 = vunpack.c.l.b16 %v63
  %v537 = vunpack.c.l.b16 %v64
  %v538 = vunpack.c.l.b16 %v65
  %v539 = vunpack.c.l.b16 %v66
  %v540 = vunpack.c.l.b16 %v67
  %v541 = vunpack.c.l.b16 %v68
  %v542 = vunpack.c.l.b16 %v69
  %v543 = vunpack.c.l.b16 %v70
  %v544 = vunpack.c.l.b16 %v71
  %v545 = vunpack.c.l.b16 %v72
  %v546 = vunpack.c.l.b16 %v73
  %v547 = vunpack.c.l.b16 %v74
  %v548 = vunpack.c.l.b16 %v75
  %v549 = vunpack.c.l.b16 %v76
  %v550 = vunpack.c.l.b16 %v77
  %v551 = vunpack.c.l.b16 %v78
  %v552 = vunpack.c.l.b16 %v79
  %v553 = vunpack.c.l.b16 %v80
  %v554 = vunpack.c.l.b16 %v81
  %v555 = vunpack.c.l.b16 %v82
  %v556 = vunpack.c.l.b16 %v83
  %v557 = vunpack.c.l.b16 %v84
  %v558 = vunpack.c.l.b16 %v85
  %v559 = vunpack.c.l.b16 %v86
  %v560 = vunpack.c.l.b16 %v87
  %v561 = vunpack.c.l.b16 %v88
  %v562 = vunpack.c.l.b16 %v89
  %v563 = vunpack.c.l.b16 %v90
  %v564 = vunpack.c.l.b16 %v91
  %v565 = vunpack.c.l.b16 %v92
  %v566 = vunpack.c.l.b16 %v93
  %v567 = vunpack.c.l.b16 %v94
  %v568 = vunpack.c.l.b16 %v95
  %v569 = vunpack.c.l.b16 %v96
  %v570 = vunpack.c.l.b16 %v97
  %v571 = vunpack.c.l.b16 %v98
  %v572 = vunpack.c.l.b16 %v99
  %v573 = vunpack.c.l.b16 %v100
  %v574 = vunpack.c.l.b16 %v101
  %v575 = vunpack.c.l.b16 %v102
  %v576 = vunpack.c.l.b16 %v103
  %v577 = vunpack.c.l.b16 %v104
  %v578 = vunpack.c.l.b16 %v105
  %v579 = vunpack.c.l.b16 %v106
  %v580 = vunpack.c.l.b16 %v107
  %v581 = vunpack.c.l.b16 %v108
  %v582 = vunpack.c.l.b16 %v109
  %v583 = vunpack.c.l.b16 %v110
  %v584 = vunpack.c.l.b16 %v111
  %v585 = vunpack.c.l.b16 %v112
  %v586 = vunpack.c.l.b16 %v113
  %v587 = vunpack.c.l.b16 %v114
  %v588 = vunpack.c.l.b16 %v115
  %v589 = vunpack.c.l.b16 %v116
  %v590 = vunpack.c.l.b16 %v117
  %v591 = vunpack.c.l.b16 %v118
  %v592 = vunpack.c.l.b16 %v119
  %v593 = vunpack.c.l.b16 %v120
  %v594 = vunpack.c.l.b16 %v121
  %v595 = vunpack.c.l.b16 %v122
  %v596 = vunpack.c.l.b16 %v123
  %v597 = vunpack.c.l.b16 %v124
  %v598 = vunpack.c.l.b16 %v125
  %v599 = vunpack.c.l.b16 %v126
  %v600 = vunpack.c.l.b16 %v127
  %v601 = vunpack.c.l.b16 %v128
  %v602 = vunpack.c.l.b16 %v129
  %v603 = vunpack.c.l.b16 %v130
  %v604 = vunpack.c.l.b16 %v131
  %v605 = vunpack.c.l.b16 %v132
  %v606 = vunpack.c.l.b16 %v133
  %v607 = vunpack.c.l.b16 %v134
  %v608 = vunpack.c.l.b16 %v135
  %v609 = vunpack.c.l.b16 %v136
  %v610 = vunpack.c.l.b16 %v137
  %v611 = vunpack.c.l.b16 %v138
  %v612 = vunpack.c.l.b16 %v139
  %v613 = vunpack.c.l.b16 %v140
  %v614 = vunpack.c.l.b16 %v141
  %v615 = vunpack.c.l.b16 %v142
  %v616 = vunpack.c.l.b16 %v143
  %v617 = vunpack.c.l.b16 %v144
  %v618 = vunpack.c.l.b16 %v145
  %v619 = vunpack.c.l.b16 %v146
  %v620 = vunpack.c.l.b16 %v147
  %v621 = vunpack.c.l.b16 %v148
  %v622 = vunpack.c.l.b16 %v149
  %v623 = vunpack.c.l.b16 %v150
  %v624 = vunpack.c.l.b16 %v151
  %v625 = vunpack.c.l.b16 %v152
  %v626 = vunpack.c.l.b16 %v153
  %v627 = vunpack.c.l.b16 %v154
  %v628 = vunpack.c.l.b16 %v155
  %v629 = vunpack.c.l.b16 %v156
  %v630 = vunpack.c.l.b16 %v157
  %v631 = vunpack.c.l.b16 %v158
  %v632 = vunpack.c.l.b16 %v159
  %v633 = vunpack.c.l.b16 %v160
  %v634 = vunpack.c.l.b16 %v161
  %v635 = vunpack.c.l.b16 %v162
  %v636 = vunpack.c.l.b16 %v163
  %v637 = vunpack.c.l.b16 %v164
  %v638 = vunpack.c.l.b16 %v165
  %v639 = vunpack.c.l.b16 %v166
  %v640 = vunpack.c.l.b16 %v167
  %v641 = vunpack.c.l.b16 %v168
  %v642 = vunpack.c.l.b16 %v169
  %v643 = vunpack.c.l.b16 %v170
  %v644 = vunpack.c.l.b16 %v171
  %v645 = vunpack.c.l.b16 %v172
  %v646 = vunpack.c.l.b16 %v173
  %v647 = vunpack.c.l.b16 %v174
  %v648 = vunpack.c.l.b16 %v175
  %v649 = vunpack.c.l.b16 %v176
  %v650 = vunpack.c.l.b16 %v177
  %v651 = vunpack.c.l.b16 %v178
  %v652 = vunpack.c.l.b16 %v179
  %v653 = vunpack.c.l.b16 %v180
  %v654 = vunpack.c.l.b16 %v181
  %v655 = vunpack.c.l.b16 %v182
  %v656 = vunpack.c.l.b16 %v183
  %v657 = vunpack.c.l.b16 %v184
  %v658 = vunpack.c.l.b16 %v185
  %v659 = vunpack.c.l.b16 %v186
  %v660 = vunpack.c.l.b16 %v187
  %v661 = vunpack.c.l.b16 %v188
  %v662 = vunpack.c.l.b16 %v189
  %v663 = vunpack.c.l.b16 %v190
  %v664 = vunpack.c.l.b16 %v191
  %v665 = vunpack.c.l.b16 %v192
  %v666 = vunpack.c.l.b16 %v193
  %v667 = vunpack.c.l.b16 %v194
  %v668 = vunpack.c.l.b16 %v195
  %v669 = vunpack.c.l.b16 %v196
  %v670 = vunpack.c.l.b16 %v197
  %v671 = vunpack.c.l.b16 %v198
  %v672 = vunpack.c.l.b16 %v199
  %v673 = vunpack.c.l.b16 %v200
  %v674 = vunpack.c.l.b16 %v201
  %v675 = vunpack.c.l.b16 %v202
  %v676 = vunpack.c.l.b16 %v203
  %v677 = vunpack.c.l.b16 %v204
  %v678 = vunpack.c.l.b16 %v205
  %v679 = vunpack.c.l.b16 %v206
  %v680 = vunpack.c.l.b16 %v207
  %v681 = vunpack.c.l.b16 %v208
  %v682 = vunpack.c.l.b16 %v209
  %v683 = vunpack.c.l.b16 %v210
  %v684 = vunpack.c.l.b16 %v211
  %v685 = vunpack.c.l.b16 %v212
  %v686 = vunpack.c.l.b16 %v213
  %v687 = vunpack.c.l.b16 %v214
  %v688 = vunpack.c.l.b16 %v215
  %v689 = vunpack.c.l.b16 %v216
  %v690 = vunpack.c.l.b16 %v217
  %v691 = vunpack.c.l.b16 %v218
  %v692 = vunpack.c.l.b16 %v219
  %v693 = vunpack.c.l.b16 %v220
  %v694 = vunpack.c.l.b16 %v221
  %v695 = vunpack.c.l.b16 %v222
  %v696 = vunpack.c.l.b16 %v223
  %v697 = vunpack.c.l.b16 %v224
  %v698 = vunpack.c.l.b16 %v225
  %v699 = vunpack.c.l.b16 %v226
  %v700 = vunpack.c.l.b16 %v227
  %v701 = vunpack.c.l.b16 %v228
  %v702 = vunpack.c.l.b16 %v229
  %v703 = vunpack.c.l.b16 %v230
  %v704 = vunpack.c.l.b16 %v231
  %v705 = vunpack.c.l.b16 %v232
  %v706 = vunpack.c.l.b16 %v233
  %v707 = vunpack.c.l.b16 %v234
  %v708 = vunpack.c.l.b16 %v235
  %v709 = vunpack.c.l.b16 %v236
  %v710 = vunpack.c.l.b16 %v237
  %v711 = vunpack.c.l.b16 %v238
  %v712 = vunpack.c.l.b16 %v239
  %v713 = vunpack.c.l.b16 %v240
  %v714 = vunpack.c.l.b16 %v241
  %v715 = vpack.c.b16 %v491, %v490
  %v716 = vpack.c.b16 %v493, %v492
  %v717 = vpack.c.b16 %v495, %v494
  %v718 = vpack.c.b16 %v497, %v496
  %v719 = vpack.c.b16 %v499, %v498
  %v720 = vpack.c.b16 %v501, %v500
  %v721 = vpack.c.b16 %v503, %v502
  %v722 = vpack.c.b16 %v505, %v504
  %v723 = vpack.c.b16 %v507, %v506
  %v724 = vpack.c.b16 %v509, %v508
  %v725 = vpack.c.b16 %v511, %v510
  %v726 = vpack.c.b16 %v513, %v512
  %v727 = vpack.c.b16 %v515, %v514
  %v728 = vpack.c.b16 %v517, %v516
  %v729 = vpack.c.b16 %v519, %v518
  %v730 = vpack.c.b16 %v521, %v520
  %v731 = vpack.c.b16 %v523, %v522
  %v732 = vpack.c.b16 %v525, %v524
  %v733 = vpack.c.b16 %v527, %v526
  %v734 = vpack.c.b16 %v529, %v528
  %v735 = vpack.c.b16 %v531, %v530
  %v736 = vpack.c.b16 %v533, %v532
  %v737 = vpack.c.b16 %v535, %v534
  %v738 = vpack.c.b16 %v537, %v536
  %v739 = vpack.c.b16 %v539, %v538
  %v740 = vpack.c.b16 %v541, %v540
  %v741 = vpack.c.b16 %v543, %v542
  %v742 = vpack.c.b16 %v545, %v544
  %v743 = vpack.c.b16 %v547, %v546
  %v744 = vpack.c.b16 %v549, %v548
  %v745 = vpack.c.b16 %v551, %v550
  %v746 = vpack.c.b16 %v553, %v552
  %v747 = vpack.c.b16 %v555, %v554
  %v748 = vpack.c.b16 %v557, %v556
  %v749 = vpack.c.b16 %v559, %v558
  %v750 = vpack.c.b16 %v561, %v560
  %v751 = vpack.c.b16 %v563, %v562
  %v752 = vpack.c.b16 %v565, %v564
  %v753 = vpack.c.b16 %v567, %v566
  %v754 = vpack.c.b16 %v569, %v568
  %v755 = vpack.c.b16 %v571, %v570
  %v756 = vpack.c.b16 %v573, %v572
  %v757 = vpack.c.b16 %v575, %v574
  %v758 = vpack.c.b16 %v577, %v576
  %v759 = vpack.c.b16 %v579, %v578
  %v760 = vpack.c.b16 %v581, %v580
  %v761 = vpack.c.b16 %v583, %v582
  %v762 = vpack.c.b16 %v585, %v584
  %v763 = vpack.c.b16 %v587, %v586
  %v764 = vpack.c.b16 %v589, %v588
  %v765 = vpack.c.b16 %v591, %v590
  %v766 = vpack.c.b16 %v593, %v592
  %v767 = vpack.c.b16 %v595, %v594
  %v768 = vpack.c.b16 %v597, %v596
  %v769 = vpack.c.b16 %v599, %v598
  %v770 = vpack.c.b16 %v601, %v600
  %v771 = vpack.c.b16 %v603, %v602
  %v772 = vpack.c.b16 %v605, %v604
  %v773 = vpack.c.b16 %v607, %v606
  %v774 = vpack.c.b16 %v609, %v608
  %v775 = vpack.c.b16 %v611, %v610
  %v776 = vpack.c.b16 %v613, %v612
  %v777 = vpack.c.b16 %v615, %v614
  %v778 = vpack.c.b16 %v617, %v616
  %v779 = vpack.c.b16 %v619, %v618
  %v780 = vpack.c.b16 %v621, %v620
  %v781 = vpack.c.b16 %v623, %v622
  %v782 = vpack.c.b16 %v625, %v624
  %v783 = vpack.c.b16 %v627, %v626
  %v784 = vpack.c.b16 %v629, %v628
  %v785 = vpack.c.b16 %v631, %v630
  %v786 = vpack.c.b16 %v633, %v632
  %v787 = vpack.c.b16 %v635, %v634
  %v788 = vpack.c.b16 %v637, %v636
  %v789 = vpack.c.b16 %v639, %v638
  %v790 = vpack.c.b16 %v641, %v640
  %v791 = vpack.c.b16 %v643, %v642
  %v792 = vpack.c.b16 %v645, %v644
  %v793 = vpack.c.b16 %v647, %v646
  %v794 = vpack.c.b16 %v649, %v648
  %v795 = vpack.c.b16 %v651, %v650
  %v796 = vpack.c.b16 %v653, %v652
  %v797 = vpack.c.b16 %v655, %v654
  %v798 = vpack.c.b16 %v657, %v656
  %v799 = vpack.c.b16 %v659, %v658
  %v800 = vpack.c.b16 %v661, %v660
  %v801 = vpack.c.b16 %v663, %v662
  %v802 = vpack.c.b16 %v665, %v664
  %v803 = vpack.c.b16 %v667, %v666
  %v804 = vpack.c.b16 %v669, %v668
  %v805 = vpack.c.b16 %v671, %v670
  %v806 = vpack.c.b16 %v673, %v672
  %v807 = vpack.c.b16 %v675, %v674
  %v808 = vpack.c.b16 %v677, %v676
  %v809 = vpack.c.b16 %v679, %v678
  %v810 = vpack.c.b16 %v681, %v680
  %v811 = vpack.c.b16 %v683, %v682
  %v812 = vpack.c.b16 %v685, %v684
  %v813 = vpack.c.b16 %v687, %v686
  %v814 = vpack.c.b16 %v689, %v688
  %v815 = vpack.c.b16 %v691, %v690
  %v816 = vpack.c.b16 %v693, %v692
  %v817 = vpack.c.b16 %v695, %v694
  %v818 = vpack.c.b16 %v697, %v696
  %v819 = vpack.c.b16 %v699, %v698
  %v820 = vpack.c.b16 %v701, %v700
  %v821 = vpack.c.b16 %v703, %v702
  %v822 = vpack.c.b16 %v705, %v704
  %v823 = vpack.c.b16 %v707, %v706
  %v824 = vpack.c.b16 %v709, %v708
  %v825 = vpack.c.b16 %v711, %v710
  %v826 = vpack.c.b16 %v713, %v712
  %v827 = vpack.c.b16 %v714, %v714
  %v957 = vunpack.c.l.b16 %v242
  %v958 = vunpack.c.l.b16 %v243
  %v959 = vunpack.c.l.b16 %v244
  %v960 = vunpack.c.l.b16 %v245
  %v961 = vunpack.c.l.b16 %v246
  %v962 = vunpack.c.l.b16 %v247
  %v963 = vunpack.c.l.b16 %v248
  %v964 = vunpack.c.l.b16 %v249
  %v965 = vunpack.c.l.b16 %v250
  %v966 = vunpack.c.l.b16 %v251
  %v967 = vunpack.c.l.b16 %v252
  %v968 = vunpack.c.l.b16 %v253
  %v969 = vunpack.c.l.b16 %v254
  %v970 = vunpack.c.l.b16 %v255
  %v971 = vunpack.c.l.b16 %v256
  %v972 = vunpack.c.l.b16 %v257
  %v973 = vpack.c.b16 %v958, %v957
  %v974 = vpack.c.b16 %v960, %v959
  %v975 = vpack.c.b16 %v962, %v961
  %v976 = vpack.c.b16 %v964, %v963
  %v977 = vpack.c.b16 %v966, %v965
  %v978 = vpack.c.b16 %v968, %v967
  %v979 = vpack.c.b16 %v970, %v969
  %v980 = vpack.c.b16 %v972, %v971
  %989 = vmatprep.subr.bf16.mxu0 0
  %990 = vmatpush1.bf16.msra.mxu0 %v973
  %991 = vmatprep.subr.bf16.mxu0 0
  %992 = vmatpush1.bf16.msra.mxu0 %v974
  %993 = vmatprep.subr.bf16.mxu0 0
  %994 = vmatpush1.bf16.msra.mxu0 %v975
  %995 = vmatprep.subr.bf16.mxu0 0
  %996 = vmatpush1.bf16.msra.mxu0 %v976
  %997 = vmatprep.subr.bf16.mxu0 0
  %998 = vmatpush1.bf16.msra.mxu0 %v977
  %999 = vmatprep.subr.bf16.mxu0 0
  %1000 = vmatpush1.bf16.msra.mxu0 %v978
  %1001 = vmatprep.subr.bf16.mxu0 0
  %1002 = vmatpush1.bf16.msra.mxu0 %v979
  %1003 = vmatprep.subr.bf16.mxu0 0
  %1004 = vmatpush1.bf16.msra.mxu0 %v980
  %1005 = vmatprep.subr.bf16.mxu0 0
  %1006 = vmatpush1.bf16.msra.mxu0 0
  %1007 = vmatprep.subr.bf16.mxu0 0
  %1008 = vmatpush1.bf16.msra.mxu0 0
  %1009 = vmatprep.subr.bf16.mxu0 0
  %1010 = vmatpush1.bf16.msra.mxu0 0
  %1011 = vmatprep.subr.bf16.mxu0 0
  %1012 = vmatpush1.bf16.msra.mxu0 0
  %1013 = vmatprep.subr.bf16.mxu0 0
  %1014 = vmatpush1.bf16.msra.mxu0 0
  %1015 = vmatprep.subr.bf16.mxu0 0
  %1016 = vmatpush1.bf16.msra.mxu0 0
  %1017 = vmatprep.subr.bf16.mxu0 0
  %1018 = vmatpush1.bf16.msra.mxu0 0
  %1019 = vmatprep.subr.bf16.mxu0 0
  %1020 = vmatpush1.bf16.msra.mxu0 0
  %1021 = vmatprep.mubr.bf16.mxu0 0
  %1022 = vmatmul.mubr.bf16.gmra.mrb[0].mxu0 %v715
  %v1023 = vpop.f32.mrb[0].mxu0
  %v1024 = vadd.f32 %v263, %v1023
  %v1025 = vpop.f32.mrb[0].mxu0
  %v1026 = vpop.f32.mrb[0].mxu0
  %v1027 = vadd.f32 %v263, %v1026
  %v1028 = vpop.f32.mrb[0].mxu0
  %1029 = vmatprep.mubr.bf16.mxu0 0
  %1030 = vmatmul.mubr.bf16.gmra.mrb[0].mxu0 %v716
  %v1031 = vpop.f32.mrb[0].mxu0
  %v1032 = vadd.f32 %v263, %v1031
  %v1033 = vpop.f32.mrb[0].mxu0
  %v1034 = vpop.f32.mrb[0].mxu0
  %v1035 = vadd.f32 %v263, %v1034
  %v1036 = vpop.f32.mrb[0].mxu0
  %1037 = vmatprep.mubr.bf16.mxu0 0
  %1038 = vmatmul.mubr.bf16.gmra.mrb[0].mxu0 %v717
  %v1039 = vpop.f32.mrb[0].mxu0
  %v1040 = vadd.f32 %v263, %v1039
  %v1041 = vpop.f32.mrb[0].mxu0
  %v1042 = vpop.f32.mrb[0].mxu0
  %v1043 = vadd.f32 %v263, %v1042
  %v1044 = vpop.f32.mrb[0].mxu0
  %1045 = vmatprep.mubr.bf16.mxu0 0
  %1046 = vmatmul.mubr.bf16.gmra.mrb[0].mxu0 %v718
  %v1047 = vpop.f32.mrb[0].mxu0
  %v1048 = vadd.f32 %v263, %v1047
  %v1049 = vpop.f32.mrb[0].mxu0
  %v1050 = vpop.f32.mrb[0].mxu0
  %v1051 = vadd.f32 %v263, %v1050
  %v1052 = vpop.f32.mrb[0].mxu0
  %1053 = vmatprep.mubr.bf16.mxu0 0
  %1054 = vmatmul.mubr.bf16.gmra.mrb[0].mxu0 %v719
  %v1055 = vpop.f32.mrb[0].mxu0
  %v1056 = vadd.f32 %v263, %v1055
  %v1057 = vpop.f32.mrb[0].mxu0
  %v1058 = vpop.f32.mrb[0].mxu0
  %v1059 = vadd.f32 %v263, %v1058
  %v1060 = vpop.f32.mrb[0].mxu0
  %1061 = vmatprep.mubr.bf16.mxu0 0
  %1062 = vmatmul.mubr.bf16.gmra.mrb[0].mxu0 %v720
  %v1063 = vpop.f32.mrb[0].mxu0
  %v1064 = vadd.f32 %v263, %v1063
  %v1065 = vpop.f32.mrb[0].mxu0
  %v1066 = vpop.f32.mrb[0].mxu0
  %v1067 = vadd.f32 %v263, %v1066
  %v1068 = vpop.f32.mrb[0].mxu0
  %1069 = vmatprep.mubr.bf16.mxu0 0
  %1070 = vmatmul.mubr.bf16.gmra.mrb[0].mxu0 %v721
  %v1071 = vpop.f32.mrb[0].mxu0
  %v1072 = vadd.f32 %v263, %v1071
  %v1073 = vpop.f32.mrb[0].mxu0
  %v1074 = vpop.f32.mrb[0].mxu0
  %v1075 = vadd.f32 %v263, %v1074
  %v1076 = vpop.f32.mrb[0].mxu0
  %1077 = vmatprep.mubr.bf16.mxu0 0
  %1078 = vmatmul.mubr.bf16.gmra.mrb[0].mxu0 %v722
  %v1079 = vpop.f32.mrb[0].mxu0
  %v1080 = vadd.f32 %v263, %v1079
  %v1081 = vpop.f32.mrb[0].mxu0
  %v1082 = vpop.f32.mrb[0].mxu0
  %v1083 = vadd.f32 %v263, %v1082
  %v1084 = vpop.f32.mrb[0].mxu0
  %1085 = vmatprep.mubr.bf16.mxu0 0
  %1086 = vmatmul.mubr.bf16.gmra.mrb[0].mxu0 %v723
  %v1087 = vpop.f32.mrb[0].mxu0
  %v1088 = vadd.f32 %v263, %v1087
  %v1089 = vpop.f32.mrb[0].mxu0
  %v1090 = vpop.f32.mrb[0].mxu0
  %v1091 = vadd.f32 %v263, %v1090
  %v1092 = vpop.f32.mrb[0].mxu0
  %1093 = vmatprep.mubr.bf16.mxu0 0
  %1094 = vmatmul.mubr.bf16.gmra.mrb[0].mxu0 %v724
  %v1095 = vpop.f32.mrb[0].mxu0
  %v1096 = vadd.f32 %v263, %v1095
  %v1097 = vpop.f32.mrb[0].mxu0
  %v1098 = vpop.f32.mrb[0].mxu0
  %v1099 = vadd.f32 %v263, %v1098
  %v1100 = vpop.f32.mrb[0].mxu0
  %1101 = vmatprep.mubr.bf16.mxu0 0
  %1102 = vmatmul.mubr.bf16.gmra.mrb[0].mxu0 %v725
  %v1103 = vpop.f32.mrb[0].mxu0
  %v1104 = vadd.f32 %v263, %v1103
  %v1105 = vpop.f32.mrb[0].mxu0
  %v1106 = vpop.f32.mrb[0].mxu0
  %v1107 = vadd.f32 %v263, %v1106
  %v1108 = vpop.f32.mrb[0].mxu0
  %1109 = vmatprep.mubr.bf16.mxu0 0
  %1110 = vmatmul.mubr.bf16.gmra.mrb[0].mxu0 %v726
  %v1111 = vpop.f32.mrb[0].mxu0
  %v1112 = vadd.f32 %v263, %v1111
  %v1113 = vpop.f32.mrb[0].mxu0
  %v1114 = vpop.f32.mrb[0].mxu0
  %v1115 = vadd.f32 %v263, %v1114
  %v1116 = vpop.f32.mrb[0].mxu0
  %1117 = vmatprep.mubr.bf16.mxu0 0
  %1118 = vmatmul.mubr.bf16.gmra.mrb[0].mxu0 %v727
  %v1119 = vpop.f32.mrb[0].mxu0
  %v1120 = vadd.f32 %v263, %v1119
  %v1121 = vpop.f32.mrb[0].mxu0
  %v1122 = vpop.f32.mrb[0].mxu0
  %v1123 = vadd.f32 %v263, %v1122
  %v1124 = vpop.f32.mrb[0].mxu0
  %1125 = vmatprep.mubr.bf16.mxu0 0
  %1126 = vmatmul.mubr.bf16.gmra.mrb[0].mxu0 %v728
  %v1127 = vpop.f32.mrb[0].mxu0
  %v1128 = vadd.f32 %v263, %v1127
  %v1129 = vpop.f32.mrb[0].mxu0
  %v1130 = vpop.f32.mrb[0].mxu0
  %v1131 = vadd.f32 %v263, %v1130
  %v1132 = vpop.f32.mrb[0].mxu0
  %1133 = vmatprep.mubr.bf16.mxu0 0
  %1134 = vmatmul.mubr.bf16.gmra.mrb[0].mxu0 %v729
  %v1135 = vpop.f32.mrb[0].mxu0
  %v1136 = vadd.f32 %v263, %v1135
  %v1137 = vpop.f32.mrb[0].mxu0
  %v1138 = vpop.f32.mrb[0].mxu0
  %v1139 = vadd.f32 %v263, %v1138
  %v1140 = vpop.f32.mrb[0].mxu0
  %1141 = vmatprep.mubr.bf16.mxu0 0
  %1142 = vmatmul.mubr.bf16.gmra.mrb[0].mxu0 %v730
  %v1143 = vpop.f32.mrb[0].mxu0
  %v1144 = vadd.f32 %v263, %v1143
  %v1145 = vpop.f32.mrb[0].mxu0
  %v1146 = vpop.f32.mrb[0].mxu0
  %v1147 = vadd.f32 %v263, %v1146
  %v1148 = vpop.f32.mrb[0].mxu0
  %1149 = vmatprep.mubr.bf16.mxu0 0
  %1150 = vmatmul.mubr.bf16.gmra.mrb[0].mxu0 %v731
  %v1151 = vpop.f32.mrb[0].mxu0
  %v1152 = vadd.f32 %v263, %v1151
  %v1153 = vpop.f32.mrb[0].mxu0
  %v1154 = vpop.f32.mrb[0].mxu0
  %v1155 = vadd.f32 %v263, %v1154
  %v1156 = vpop.f32.mrb[0].mxu0
  %1157 = vmatprep.mubr.bf16.mxu0 0
  %1158 = vmatmul.mubr.bf16.gmra.mrb[0].mxu0 %v732
  %v1159 = vpop.f32.mrb[0].mxu0
  %v1160 = vadd.f32 %v263, %v1159
  %v1161 = vpop.f32.mrb[0].mxu0
  %v1162 = vpop.f32.mrb[0].mxu0
  %v1163 = vadd.f32 %v263, %v1162
  %v1164 = vpop.f32.mrb[0].mxu0
  %1165 = vmatprep.mubr.bf16.mxu0 0
  %1166 = vmatmul.mubr.bf16.gmra.mrb[0].mxu0 %v733
  %v1167 = vpop.f32.mrb[0].mxu0
  %v1168 = vadd.f32 %v263, %v1167
  %v1169 = vpop.f32.mrb[0].mxu0
  %v1170 = vpop.f32.mrb[0].mxu0
  %v1171 = vadd.f32 %v263, %v1170
  %v1172 = vpop.f32.mrb[0].mxu0
  %1173 = vmatprep.mubr.bf16.mxu0 0
  %1174 = vmatmul.mubr.bf16.gmra.mrb[0].mxu0 %v734
  %v1175 = vpop.f32.mrb[0].mxu0
  %v1176 = vadd.f32 %v263, %v1175
  %v1177 = vpop.f32.mrb[0].mxu0
  %v1178 = vpop.f32.mrb[0].mxu0
  %v1179 = vadd.f32 %v263, %v1178
  %v1180 = vpop.f32.mrb[0].mxu0
  %1181 = vmatprep.mubr.bf16.mxu0 0
  %1182 = vmatmul.mubr.bf16.gmra.mrb[0].mxu0 %v735
  %v1183 = vpop.f32.mrb[0].mxu0
  %v1184 = vadd.f32 %v263, %v1183
  %v1185 = vpop.f32.mrb[0].mxu0
  %v1186 = vpop.f32.mrb[0].mxu0
  %v1187 = vadd.f32 %v263, %v1186
  %v1188 = vpop.f32.mrb[0].mxu0
  %1189 = vmatprep.mubr.bf16.mxu0 0
  %1190 = vmatmul.mubr.bf16.gmra.mrb[0].mxu0 %v736
  %v1191 = vpop.f32.mrb[0].mxu0
  %v1192 = vadd.f32 %v263, %v1191
  %v1193 = vpop.f32.mrb[0].mxu0
  %v1194 = vpop.f32.mrb[0].mxu0
  %v1195 = vadd.f32 %v263, %v1194
  %v1196 = vpop.f32.mrb[0].mxu0
  %1197 = vmatprep.mubr.bf16.mxu0 0
  %1198 = vmatmul.mubr.bf16.gmra.mrb[0].mxu0 %v737
  %v1199 = vpop.f32.mrb[0].mxu0
  %v1200 = vadd.f32 %v263, %v1199
  %v1201 = vpop.f32.mrb[0].mxu0
  %v1202 = vpop.f32.mrb[0].mxu0
  %v1203 = vadd.f32 %v263, %v1202
  %v1204 = vpop.f32.mrb[0].mxu0
  %1205 = vmatprep.mubr.bf16.mxu0 0
  %1206 = vmatmul.mubr.bf16.gmra.mrb[0].mxu0 %v738
  %v1207 = vpop.f32.mrb[0].mxu0
  %v1208 = vadd.f32 %v263, %v1207
  %v1209 = vpop.f32.mrb[0].mxu0
  %v1210 = vpop.f32.mrb[0].mxu0
  %v1211 = vadd.f32 %v263, %v1210
  %v1212 = vpop.f32.mrb[0].mxu0
  %1213 = vmatprep.mubr.bf16.mxu0 0
  %1214 = vmatmul.mubr.bf16.gmra.mrb[0].mxu0 %v739
  %v1215 = vpop.f32.mrb[0].mxu0
  %v1216 = vadd.f32 %v263, %v1215
  %v1217 = vpop.f32.mrb[0].mxu0
  %v1218 = vpop.f32.mrb[0].mxu0
  %v1219 = vadd.f32 %v263, %v1218
  %v1220 = vpop.f32.mrb[0].mxu0
  %1221 = vmatprep.mubr.bf16.mxu0 0
  %1222 = vmatmul.mubr.bf16.gmra.mrb[0].mxu0 %v740
  %v1223 = vpop.f32.mrb[0].mxu0
  %v1224 = vadd.f32 %v263, %v1223
  %v1225 = vpop.f32.mrb[0].mxu0
  %v1226 = vpop.f32.mrb[0].mxu0
  %v1227 = vadd.f32 %v263, %v1226
  %v1228 = vpop.f32.mrb[0].mxu0
  %1229 = vmatprep.mubr.bf16.mxu0 0
  %1230 = vmatmul.mubr.bf16.gmra.mrb[0].mxu0 %v741
  %v1231 = vpop.f32.mrb[0].mxu0
  %v1232 = vadd.f32 %v263, %v1231
  %v1233 = vpop.f32.mrb[0].mxu0
  %v1234 = vpop.f32.mrb[0].mxu0
  %v1235 = vadd.f32 %v263, %v1234
  %v1236 = vpop.f32.mrb[0].mxu0
  %1237 = vmatprep.mubr.bf16.mxu0 0
  %1238 = vmatmul.mubr.bf16.gmra.mrb[0].mxu0 %v742
  %v1239 = vpop.f32.mrb[0].mxu0
  %v1240 = vadd.f32 %v263, %v1239
  %v1241 = vpop.f32.mrb[0].mxu0
  %v1242 = vpop.f32.mrb[0].mxu0
  %v1243 = vadd.f32 %v263, %v1242
  %v1244 = vpop.f32.mrb[0].mxu0
  %1245 = vmatprep.mubr.bf16.mxu0 0
  %1246 = vmatmul.mubr.bf16.gmra.mrb[0].mxu0 %v743
  %v1247 = vpop.f32.mrb[0].mxu0
  %v1248 = vadd.f32 %v263, %v1247
  %v1249 = vpop.f32.mrb[0].mxu0
  %v1250 = vpop.f32.mrb[0].mxu0
  %v1251 = vadd.f32 %v263, %v1250
  %v1252 = vpop.f32.mrb[0].mxu0
  %1253 = vmatprep.mubr.bf16.mxu0 0
  %1254 = vmatmul.mubr.bf16.gmra.mrb[0].mxu0 %v744
  %v1255 = vpop.f32.mrb[0].mxu0
  %v1256 = vadd.f32 %v263, %v1255
  %v1257 = vpop.f32.mrb[0].mxu0
  %v1258 = vpop.f32.mrb[0].mxu0
  %v1259 = vadd.f32 %v263, %v1258
  %v1260 = vpop.f32.mrb[0].mxu0
  %1261 = vmatprep.mubr.bf16.mxu0 0
  %1262 = vmatmul.mubr.bf16.gmra.mrb[0].mxu0 %v745
  %v1263 = vpop.f32.mrb[0].mxu0
  %v1264 = vadd.f32 %v263, %v1263
  %v1265 = vpop.f32.mrb[0].mxu0
  %v1266 = vpop.f32.mrb[0].mxu0
  %v1267 = vadd.f32 %v263, %v1266
  %v1268 = vpop.f32.mrb[0].mxu0
  %1269 = vmatprep.mubr.bf16.mxu0 0
  %1270 = vmatmul.mubr.bf16.gmra.mrb[0].mxu0 %v746
  %v1271 = vpop.f32.mrb[0].mxu0
  %v1272 = vadd.f32 %v263, %v1271
  %v1273 = vpop.f32.mrb[0].mxu0
  %v1274 = vpop.f32.mrb[0].mxu0
  %v1275 = vadd.f32 %v263, %v1274
  %v1276 = vpop.f32.mrb[0].mxu0
  %1277 = vmatprep.mubr.bf16.mxu0 0
  %1278 = vmatmul.mubr.bf16.gmra.mrb[0].mxu0 %v747
  %v1279 = vpop.f32.mrb[0].mxu0
  %v1280 = vadd.f32 %v263, %v1279
  %v1281 = vpop.f32.mrb[0].mxu0
  %v1282 = vpop.f32.mrb[0].mxu0
  %v1283 = vadd.f32 %v263, %v1282
  %v1284 = vpop.f32.mrb[0].mxu0
  %1285 = vmatprep.mubr.bf16.mxu0 0
  %1286 = vmatmul.mubr.bf16.gmra.mrb[0].mxu0 %v748
  %v1287 = vpop.f32.mrb[0].mxu0
  %v1288 = vadd.f32 %v263, %v1287
  %v1289 = vpop.f32.mrb[0].mxu0
  %v1290 = vpop.f32.mrb[0].mxu0
  %v1291 = vadd.f32 %v263, %v1290
  %v1292 = vpop.f32.mrb[0].mxu0
  %1293 = vmatprep.mubr.bf16.mxu0 0
  %1294 = vmatmul.mubr.bf16.gmra.mrb[0].mxu0 %v749
  %v1295 = vpop.f32.mrb[0].mxu0
  %v1296 = vadd.f32 %v263, %v1295
  %v1297 = vpop.f32.mrb[0].mxu0
  %v1298 = vpop.f32.mrb[0].mxu0
  %v1299 = vadd.f32 %v263, %v1298
  %v1300 = vpop.f32.mrb[0].mxu0
  %1301 = vmatprep.mubr.bf16.mxu0 0
  %1302 = vmatmul.mubr.bf16.gmra.mrb[0].mxu0 %v750
  %v1303 = vpop.f32.mrb[0].mxu0
  %v1304 = vadd.f32 %v263, %v1303
  %v1305 = vpop.f32.mrb[0].mxu0
  %v1306 = vpop.f32.mrb[0].mxu0
  %v1307 = vadd.f32 %v263, %v1306
  %v1308 = vpop.f32.mrb[0].mxu0
  %1309 = vmatprep.mubr.bf16.mxu0 0
  %1310 = vmatmul.mubr.bf16.gmra.mrb[0].mxu0 %v751
  %v1311 = vpop.f32.mrb[0].mxu0
  %v1312 = vadd.f32 %v263, %v1311
  %v1313 = vpop.f32.mrb[0].mxu0
  %v1314 = vpop.f32.mrb[0].mxu0
  %v1315 = vadd.f32 %v263, %v1314
  %v1316 = vpop.f32.mrb[0].mxu0
  %1317 = vmatprep.mubr.bf16.mxu0 0
  %1318 = vmatmul.mubr.bf16.gmra.mrb[0].mxu0 %v752
  %v1319 = vpop.f32.mrb[0].mxu0
  %v1320 = vadd.f32 %v263, %v1319
  %v1321 = vpop.f32.mrb[0].mxu0
  %v1322 = vpop.f32.mrb[0].mxu0
  %v1323 = vadd.f32 %v263, %v1322
  %v1324 = vpop.f32.mrb[0].mxu0
  %1325 = vmatprep.mubr.bf16.mxu0 0
  %1326 = vmatmul.mubr.bf16.gmra.mrb[0].mxu0 %v753
  %v1327 = vpop.f32.mrb[0].mxu0
  %v1328 = vadd.f32 %v263, %v1327
  %v1329 = vpop.f32.mrb[0].mxu0
  %v1330 = vpop.f32.mrb[0].mxu0
  %v1331 = vadd.f32 %v263, %v1330
  %v1332 = vpop.f32.mrb[0].mxu0
  %1333 = vmatprep.mubr.bf16.mxu0 0
  %1334 = vmatmul.mubr.bf16.gmra.mrb[0].mxu0 %v754
  %v1335 = vpop.f32.mrb[0].mxu0
  %v1336 = vadd.f32 %v263, %v1335
  %v1337 = vpop.f32.mrb[0].mxu0
  %v1338 = vpop.f32.mrb[0].mxu0
  %v1339 = vadd.f32 %v263, %v1338
  %v1340 = vpop.f32.mrb[0].mxu0
  %1341 = vmatprep.mubr.bf16.mxu0 0
  %1342 = vmatmul.mubr.bf16.gmra.mrb[0].mxu0 %v755
  %v1343 = vpop.f32.mrb[0].mxu0
  %v1344 = vadd.f32 %v263, %v1343
  %v1345 = vpop.f32.mrb[0].mxu0
  %v1346 = vpop.f32.mrb[0].mxu0
  %v1347 = vadd.f32 %v263, %v1346
  %v1348 = vpop.f32.mrb[0].mxu0
  %1349 = vmatprep.mubr.bf16.mxu0 0
  %1350 = vmatmul.mubr.bf16.gmra.mrb[0].mxu0 %v756
  %v1351 = vpop.f32.mrb[0].mxu0
  %v1352 = vadd.f32 %v263, %v1351
  %v1353 = vpop.f32.mrb[0].mxu0
  %v1354 = vpop.f32.mrb[0].mxu0
  %v1355 = vadd.f32 %v263, %v1354
  %v1356 = vpop.f32.mrb[0].mxu0
  %1357 = vmatprep.mubr.bf16.mxu0 0
  %1358 = vmatmul.mubr.bf16.gmra.mrb[0].mxu0 %v757
  %v1359 = vpop.f32.mrb[0].mxu0
  %v1360 = vadd.f32 %v263, %v1359
  %v1361 = vpop.f32.mrb[0].mxu0
  %v1362 = vpop.f32.mrb[0].mxu0
  %v1363 = vadd.f32 %v263, %v1362
  %v1364 = vpop.f32.mrb[0].mxu0
  %1365 = vmatprep.mubr.bf16.mxu0 0
  %1366 = vmatmul.mubr.bf16.gmra.mrb[0].mxu0 %v758
  %v1367 = vpop.f32.mrb[0].mxu0
  %v1368 = vadd.f32 %v263, %v1367
  %v1369 = vpop.f32.mrb[0].mxu0
  %v1370 = vpop.f32.mrb[0].mxu0
  %v1371 = vadd.f32 %v263, %v1370
  %v1372 = vpop.f32.mrb[0].mxu0
  %1373 = vmatprep.mubr.bf16.mxu0 0
  %1374 = vmatmul.mubr.bf16.gmra.mrb[0].mxu0 %v759
  %v1375 = vpop.f32.mrb[0].mxu0
  %v1376 = vadd.f32 %v263, %v1375
  %v1377 = vpop.f32.mrb[0].mxu0
  %v1378 = vpop.f32.mrb[0].mxu0
  %v1379 = vadd.f32 %v263, %v1378
  %v1380 = vpop.f32.mrb[0].mxu0
  %1381 = vmatprep.mubr.bf16.mxu0 0
  %1382 = vmatmul.mubr.bf16.gmra.mrb[0].mxu0 %v760
  %v1383 = vpop.f32.mrb[0].mxu0
  %v1384 = vadd.f32 %v263, %v1383
  %v1385 = vpop.f32.mrb[0].mxu0
  %v1386 = vpop.f32.mrb[0].mxu0
  %v1387 = vadd.f32 %v263, %v1386
  %v1388 = vpop.f32.mrb[0].mxu0
  %1389 = vmatprep.mubr.bf16.mxu0 0
  %1390 = vmatmul.mubr.bf16.gmra.mrb[0].mxu0 %v761
  %v1391 = vpop.f32.mrb[0].mxu0
  %v1392 = vadd.f32 %v263, %v1391
  %v1393 = vpop.f32.mrb[0].mxu0
  %v1394 = vpop.f32.mrb[0].mxu0
  %v1395 = vadd.f32 %v263, %v1394
  %v1396 = vpop.f32.mrb[0].mxu0
  %1397 = vmatprep.mubr.bf16.mxu0 0
  %1398 = vmatmul.mubr.bf16.gmra.mrb[0].mxu0 %v762
  %v1399 = vpop.f32.mrb[0].mxu0
  %v1400 = vadd.f32 %v263, %v1399
  %v1401 = vpop.f32.mrb[0].mxu0
  %v1402 = vpop.f32.mrb[0].mxu0
  %v1403 = vadd.f32 %v263, %v1402
  %v1404 = vpop.f32.mrb[0].mxu0
  %1405 = vmatprep.mubr.bf16.mxu0 0
  %1406 = vmatmul.mubr.bf16.gmra.mrb[0].mxu0 %v763
  %v1407 = vpop.f32.mrb[0].mxu0
  %v1408 = vadd.f32 %v263, %v1407
  %v1409 = vpop.f32.mrb[0].mxu0
  %v1410 = vpop.f32.mrb[0].mxu0
  %v1411 = vadd.f32 %v263, %v1410
  %v1412 = vpop.f32.mrb[0].mxu0
  %1413 = vmatprep.mubr.bf16.mxu0 0
  %1414 = vmatmul.mubr.bf16.gmra.mrb[0].mxu0 %v764
  %v1415 = vpop.f32.mrb[0].mxu0
  %v1416 = vadd.f32 %v263, %v1415
  %v1417 = vpop.f32.mrb[0].mxu0
  %v1418 = vpop.f32.mrb[0].mxu0
  %v1419 = vadd.f32 %v263, %v1418
  %v1420 = vpop.f32.mrb[0].mxu0
  %1421 = vmatprep.mubr.bf16.mxu0 0
  %1422 = vmatmul.mubr.bf16.gmra.mrb[0].mxu0 %v765
  %v1423 = vpop.f32.mrb[0].mxu0
  %v1424 = vadd.f32 %v263, %v1423
  %v1425 = vpop.f32.mrb[0].mxu0
  %v1426 = vpop.f32.mrb[0].mxu0
  %v1427 = vadd.f32 %v263, %v1426
  %v1428 = vpop.f32.mrb[0].mxu0
  %1429 = vmatprep.mubr.bf16.mxu0 0
  %1430 = vmatmul.mubr.bf16.gmra.mrb[0].mxu0 %v766
  %v1431 = vpop.f32.mrb[0].mxu0
  %v1432 = vadd.f32 %v263, %v1431
  %v1433 = vpop.f32.mrb[0].mxu0
  %v1434 = vpop.f32.mrb[0].mxu0
  %v1435 = vadd.f32 %v263, %v1434
  %v1436 = vpop.f32.mrb[0].mxu0
  %1437 = vmatprep.mubr.bf16.mxu0 0
  %1438 = vmatmul.mubr.bf16.gmra.mrb[0].mxu0 %v767
  %v1439 = vpop.f32.mrb[0].mxu0
  %v1440 = vadd.f32 %v263, %v1439
  %v1441 = vpop.f32.mrb[0].mxu0
  %v1442 = vpop.f32.mrb[0].mxu0
  %v1443 = vadd.f32 %v263, %v1442
  %v1444 = vpop.f32.mrb[0].mxu0
  %1445 = vmatprep.mubr.bf16.mxu0 0
  %1446 = vmatmul.mubr.bf16.gmra.mrb[0].mxu0 %v768
  %v1447 = vpop.f32.mrb[0].mxu0
  %v1448 = vadd.f32 %v263, %v1447
  %v1449 = vpop.f32.mrb[0].mxu0
  %v1450 = vpop.f32.mrb[0].mxu0
  %v1451 = vadd.f32 %v263, %v1450
  %v1452 = vpop.f32.mrb[0].mxu0
  %1453 = vmatprep.mubr.bf16.mxu0 0
  %1454 = vmatmul.mubr.bf16.gmra.mrb[0].mxu0 %v769
  %v1455 = vpop.f32.mrb[0].mxu0
  %v1456 = vadd.f32 %v263, %v1455
  %v1457 = vpop.f32.mrb[0].mxu0
  %v1458 = vpop.f32.mrb[0].mxu0
  %v1459 = vadd.f32 %v263, %v1458
  %v1460 = vpop.f32.mrb[0].mxu0
  %1461 = vmatprep.mubr.bf16.mxu0 0
  %1462 = vmatmul.mubr.bf16.gmra.mrb[0].mxu0 %v770
  %v1463 = vpop.f32.mrb[0].mxu0
  %v1464 = vadd.f32 %v263, %v1463
  %v1465 = vpop.f32.mrb[0].mxu0
  %v1466 = vpop.f32.mrb[0].mxu0
  %v1467 = vadd.f32 %v263, %v1466
  %v1468 = vpop.f32.mrb[0].mxu0
  %1469 = vmatprep.mubr.bf16.mxu0 0
  %1470 = vmatmul.mubr.bf16.gmra.mrb[0].mxu0 %v771
  %v1471 = vpop.f32.mrb[0].mxu0
  %v1472 = vadd.f32 %v263, %v1471
  %v1473 = vpop.f32.mrb[0].mxu0
  %v1474 = vpop.f32.mrb[0].mxu0
  %v1475 = vadd.f32 %v263, %v1474
  %v1476 = vpop.f32.mrb[0].mxu0
  %1477 = vmatprep.mubr.bf16.mxu0 0
  %1478 = vmatmul.mubr.bf16.gmra.mrb[0].mxu0 %v772
  %v1479 = vpop.f32.mrb[0].mxu0
  %v1480 = vadd.f32 %v263, %v1479
  %v1481 = vpop.f32.mrb[0].mxu0
  %v1482 = vpop.f32.mrb[0].mxu0
  %v1483 = vadd.f32 %v263, %v1482
  %v1484 = vpop.f32.mrb[0].mxu0
  %1485 = vmatprep.mubr.bf16.mxu0 0
  %1486 = vmatmul.mubr.bf16.gmra.mrb[0].mxu0 %v773
  %v1487 = vpop.f32.mrb[0].mxu0
  %v1488 = vadd.f32 %v263, %v1487
  %v1489 = vpop.f32.mrb[0].mxu0
  %v1490 = vpop.f32.mrb[0].mxu0
  %v1491 = vadd.f32 %v263, %v1490
  %v1492 = vpop.f32.mrb[0].mxu0
  %1493 = vmatprep.mubr.bf16.mxu0 0
  %1494 = vmatmul.mubr.bf16.gmra.mrb[0].mxu0 %v774
  %v1495 = vpop.f32.mrb[0].mxu0
  %v1496 = vadd.f32 %v263, %v1495
  %v1497 = vpop.f32.mrb[0].mxu0
  %v1498 = vpop.f32.mrb[0].mxu0
  %v1499 = vadd.f32 %v263, %v1498
  %v1500 = vpop.f32.mrb[0].mxu0
  %1501 = vmatprep.mubr.bf16.mxu0 0
  %1502 = vmatmul.mubr.bf16.gmra.mrb[0].mxu0 %v775
  %v1503 = vpop.f32.mrb[0].mxu0
  %v1504 = vadd.f32 %v263, %v1503
  %v1505 = vpop.f32.mrb[0].mxu0
  %v1506 = vpop.f32.mrb[0].mxu0
  %v1507 = vadd.f32 %v263, %v1506
  %v1508 = vpop.f32.mrb[0].mxu0
  %1509 = vmatprep.mubr.bf16.mxu0 0
  %1510 = vmatmul.mubr.bf16.gmra.mrb[0].mxu0 %v776
  %v1511 = vpop.f32.mrb[0].mxu0
  %v1512 = vadd.f32 %v263, %v1511
  %v1513 = vpop.f32.mrb[0].mxu0
  %v1514 = vpop.f32.mrb[0].mxu0
  %v1515 = vadd.f32 %v263, %v1514
  %v1516 = vpop.f32.mrb[0].mxu0
  %1517 = vmatprep.mubr.bf16.mxu0 0
  %1518 = vmatmul.mubr.bf16.gmra.mrb[0].mxu0 %v777
  %v1519 = vpop.f32.mrb[0].mxu0
  %v1520 = vadd.f32 %v263, %v1519
  %v1521 = vpop.f32.mrb[0].mxu0
  %v1522 = vpop.f32.mrb[0].mxu0
  %v1523 = vadd.f32 %v263, %v1522
  %v1524 = vpop.f32.mrb[0].mxu0
  %1525 = vmatprep.mubr.bf16.mxu0 0
  %1526 = vmatmul.mubr.bf16.gmra.mrb[0].mxu0 %v778
  %v1527 = vpop.f32.mrb[0].mxu0
  %v1528 = vadd.f32 %v263, %v1527
  %v1529 = vpop.f32.mrb[0].mxu0
  %v1530 = vpop.f32.mrb[0].mxu0
  %v1531 = vadd.f32 %v263, %v1530
  %v1532 = vpop.f32.mrb[0].mxu0
  %1533 = vmatprep.mubr.bf16.mxu0 0
  %1534 = vmatmul.mubr.bf16.gmra.mrb[0].mxu0 %v779
  %v1535 = vpop.f32.mrb[0].mxu0
  %v1536 = vadd.f32 %v263, %v1535
  %v1537 = vpop.f32.mrb[0].mxu0
  %v1538 = vpop.f32.mrb[0].mxu0
  %v1539 = vadd.f32 %v263, %v1538
  %v1540 = vpop.f32.mrb[0].mxu0
  %1541 = vmatprep.mubr.bf16.mxu0 0
  %1542 = vmatmul.mubr.bf16.gmra.mrb[0].mxu0 %v780
  %v1543 = vpop.f32.mrb[0].mxu0
  %v1544 = vadd.f32 %v263, %v1543
  %v1545 = vpop.f32.mrb[0].mxu0
  %v1546 = vpop.f32.mrb[0].mxu0
  %v1547 = vadd.f32 %v263, %v1546
  %v1548 = vpop.f32.mrb[0].mxu0
  %1549 = vmatprep.mubr.bf16.mxu0 0
  %1550 = vmatmul.mubr.bf16.gmra.mrb[0].mxu0 %v781
  %v1551 = vpop.f32.mrb[0].mxu0
  %v1552 = vadd.f32 %v263, %v1551
  %v1553 = vpop.f32.mrb[0].mxu0
  %v1554 = vpop.f32.mrb[0].mxu0
  %v1555 = vadd.f32 %v263, %v1554
  %v1556 = vpop.f32.mrb[0].mxu0
  %1557 = vmatprep.mubr.bf16.mxu0 0
  %1558 = vmatmul.mubr.bf16.gmra.mrb[0].mxu0 %v782
  %v1559 = vpop.f32.mrb[0].mxu0
  %v1560 = vadd.f32 %v263, %v1559
  %v1561 = vpop.f32.mrb[0].mxu0
  %v1562 = vpop.f32.mrb[0].mxu0
  %v1563 = vadd.f32 %v263, %v1562
  %v1564 = vpop.f32.mrb[0].mxu0
  %1565 = vmatprep.mubr.bf16.mxu0 0
  %1566 = vmatmul.mubr.bf16.gmra.mrb[0].mxu0 %v783
  %v1567 = vpop.f32.mrb[0].mxu0
  %v1568 = vadd.f32 %v263, %v1567
  %v1569 = vpop.f32.mrb[0].mxu0
  %v1570 = vpop.f32.mrb[0].mxu0
  %v1571 = vadd.f32 %v263, %v1570
  %v1572 = vpop.f32.mrb[0].mxu0
  %1573 = vmatprep.mubr.bf16.mxu0 0
  %1574 = vmatmul.mubr.bf16.gmra.mrb[0].mxu0 %v784
  %v1575 = vpop.f32.mrb[0].mxu0
  %v1576 = vadd.f32 %v263, %v1575
  %v1577 = vpop.f32.mrb[0].mxu0
  %v1578 = vpop.f32.mrb[0].mxu0
  %v1579 = vadd.f32 %v263, %v1578
  %v1580 = vpop.f32.mrb[0].mxu0
  %1581 = vmatprep.mubr.bf16.mxu0 0
  %1582 = vmatmul.mubr.bf16.gmra.mrb[0].mxu0 %v785
  %v1583 = vpop.f32.mrb[0].mxu0
  %v1584 = vadd.f32 %v263, %v1583
  %v1585 = vpop.f32.mrb[0].mxu0
  %v1586 = vpop.f32.mrb[0].mxu0
  %v1587 = vadd.f32 %v263, %v1586
  %v1588 = vpop.f32.mrb[0].mxu0
  %1589 = vmatprep.mubr.bf16.mxu0 0
  %1590 = vmatmul.mubr.bf16.gmra.mrb[0].mxu0 %v786
  %v1591 = vpop.f32.mrb[0].mxu0
  %v1592 = vadd.f32 %v263, %v1591
  %v1593 = vpop.f32.mrb[0].mxu0
  %v1594 = vpop.f32.mrb[0].mxu0
  %v1595 = vadd.f32 %v263, %v1594
  %v1596 = vpop.f32.mrb[0].mxu0
  %1597 = vmatprep.mubr.bf16.mxu0 0
  %1598 = vmatmul.mubr.bf16.gmra.mrb[0].mxu0 %v787
  %v1599 = vpop.f32.mrb[0].mxu0
  %v1600 = vadd.f32 %v263, %v1599
  %v1601 = vpop.f32.mrb[0].mxu0
  %v1602 = vpop.f32.mrb[0].mxu0
  %v1603 = vadd.f32 %v263, %v1602
  %v1604 = vpop.f32.mrb[0].mxu0
  %1605 = vmatprep.mubr.bf16.mxu0 0
  %1606 = vmatmul.mubr.bf16.gmra.mrb[0].mxu0 %v788
  %v1607 = vpop.f32.mrb[0].mxu0
  %v1608 = vadd.f32 %v263, %v1607
  %v1609 = vpop.f32.mrb[0].mxu0
  %v1610 = vpop.f32.mrb[0].mxu0
  %v1611 = vadd.f32 %v263, %v1610
  %v1612 = vpop.f32.mrb[0].mxu0
  %1613 = vmatprep.mubr.bf16.mxu0 0
  %1614 = vmatmul.mubr.bf16.gmra.mrb[0].mxu0 %v789
  %v1615 = vpop.f32.mrb[0].mxu0
  %v1616 = vadd.f32 %v263, %v1615
  %v1617 = vpop.f32.mrb[0].mxu0
  %v1618 = vpop.f32.mrb[0].mxu0
  %v1619 = vadd.f32 %v263, %v1618
  %v1620 = vpop.f32.mrb[0].mxu0
  %1621 = vmatprep.mubr.bf16.mxu0 0
  %1622 = vmatmul.mubr.bf16.gmra.mrb[0].mxu0 %v790
  %v1623 = vpop.f32.mrb[0].mxu0
  %v1624 = vadd.f32 %v263, %v1623
  %v1625 = vpop.f32.mrb[0].mxu0
  %v1626 = vpop.f32.mrb[0].mxu0
  %v1627 = vadd.f32 %v263, %v1626
  %v1628 = vpop.f32.mrb[0].mxu0
  %1629 = vmatprep.mubr.bf16.mxu0 0
  %1630 = vmatmul.mubr.bf16.gmra.mrb[0].mxu0 %v791
  %v1631 = vpop.f32.mrb[0].mxu0
  %v1632 = vadd.f32 %v263, %v1631
  %v1633 = vpop.f32.mrb[0].mxu0
  %v1634 = vpop.f32.mrb[0].mxu0
  %v1635 = vadd.f32 %v263, %v1634
  %v1636 = vpop.f32.mrb[0].mxu0
  %1637 = vmatprep.mubr.bf16.mxu0 0
  %1638 = vmatmul.mubr.bf16.gmra.mrb[0].mxu0 %v792
  %v1639 = vpop.f32.mrb[0].mxu0
  %v1640 = vadd.f32 %v263, %v1639
  %v1641 = vpop.f32.mrb[0].mxu0
  %v1642 = vpop.f32.mrb[0].mxu0
  %v1643 = vadd.f32 %v263, %v1642
  %v1644 = vpop.f32.mrb[0].mxu0
  %1645 = vmatprep.mubr.bf16.mxu0 0
  %1646 = vmatmul.mubr.bf16.gmra.mrb[0].mxu0 %v793
  %v1647 = vpop.f32.mrb[0].mxu0
  %v1648 = vadd.f32 %v263, %v1647
  %v1649 = vpop.f32.mrb[0].mxu0
  %v1650 = vpop.f32.mrb[0].mxu0
  %v1651 = vadd.f32 %v263, %v1650
  %v1652 = vpop.f32.mrb[0].mxu0
  %1653 = vmatprep.mubr.bf16.mxu0 0
  %1654 = vmatmul.mubr.bf16.gmra.mrb[0].mxu0 %v794
  %v1655 = vpop.f32.mrb[0].mxu0
  %v1656 = vadd.f32 %v263, %v1655
  %v1657 = vpop.f32.mrb[0].mxu0
  %v1658 = vpop.f32.mrb[0].mxu0
  %v1659 = vadd.f32 %v263, %v1658
  %v1660 = vpop.f32.mrb[0].mxu0
  %1661 = vmatprep.mubr.bf16.mxu0 0
  %1662 = vmatmul.mubr.bf16.gmra.mrb[0].mxu0 %v795
  %v1663 = vpop.f32.mrb[0].mxu0
  %v1664 = vadd.f32 %v263, %v1663
  %v1665 = vpop.f32.mrb[0].mxu0
  %v1666 = vpop.f32.mrb[0].mxu0
  %v1667 = vadd.f32 %v263, %v1666
  %v1668 = vpop.f32.mrb[0].mxu0
  %1669 = vmatprep.mubr.bf16.mxu0 0
  %1670 = vmatmul.mubr.bf16.gmra.mrb[0].mxu0 %v796
  %v1671 = vpop.f32.mrb[0].mxu0
  %v1672 = vadd.f32 %v263, %v1671
  %v1673 = vpop.f32.mrb[0].mxu0
  %v1674 = vpop.f32.mrb[0].mxu0
  %v1675 = vadd.f32 %v263, %v1674
  %v1676 = vpop.f32.mrb[0].mxu0
  %1677 = vmatprep.mubr.bf16.mxu0 0
  %1678 = vmatmul.mubr.bf16.gmra.mrb[0].mxu0 %v797
  %v1679 = vpop.f32.mrb[0].mxu0
  %v1680 = vadd.f32 %v263, %v1679
  %v1681 = vpop.f32.mrb[0].mxu0
  %v1682 = vpop.f32.mrb[0].mxu0
  %v1683 = vadd.f32 %v263, %v1682
  %v1684 = vpop.f32.mrb[0].mxu0
  %1685 = vmatprep.mubr.bf16.mxu0 0
  %1686 = vmatmul.mubr.bf16.gmra.mrb[0].mxu0 %v798
  %v1687 = vpop.f32.mrb[0].mxu0
  %v1688 = vadd.f32 %v263, %v1687
  %v1689 = vpop.f32.mrb[0].mxu0
  %v1690 = vpop.f32.mrb[0].mxu0
  %v1691 = vadd.f32 %v263, %v1690
  %v1692 = vpop.f32.mrb[0].mxu0
  %1693 = vmatprep.mubr.bf16.mxu0 0
  %1694 = vmatmul.mubr.bf16.gmra.mrb[0].mxu0 %v799
  %v1695 = vpop.f32.mrb[0].mxu0
  %v1696 = vadd.f32 %v263, %v1695
  %v1697 = vpop.f32.mrb[0].mxu0
  %v1698 = vpop.f32.mrb[0].mxu0
  %v1699 = vadd.f32 %v263, %v1698
  %v1700 = vpop.f32.mrb[0].mxu0
  %1701 = vmatprep.mubr.bf16.mxu0 0
  %1702 = vmatmul.mubr.bf16.gmra.mrb[0].mxu0 %v800
  %v1703 = vpop.f32.mrb[0].mxu0
  %v1704 = vadd.f32 %v263, %v1703
  %v1705 = vpop.f32.mrb[0].mxu0
  %v1706 = vpop.f32.mrb[0].mxu0
  %v1707 = vadd.f32 %v263, %v1706
  %v1708 = vpop.f32.mrb[0].mxu0
  %1709 = vmatprep.mubr.bf16.mxu0 0
  %1710 = vmatmul.mubr.bf16.gmra.mrb[0].mxu0 %v801
  %v1711 = vpop.f32.mrb[0].mxu0
  %v1712 = vadd.f32 %v263, %v1711
  %v1713 = vpop.f32.mrb[0].mxu0
  %v1714 = vpop.f32.mrb[0].mxu0
  %v1715 = vadd.f32 %v263, %v1714
  %v1716 = vpop.f32.mrb[0].mxu0
  %1717 = vmatprep.mubr.bf16.mxu0 0
  %1718 = vmatmul.mubr.bf16.gmra.mrb[0].mxu0 %v802
  %v1719 = vpop.f32.mrb[0].mxu0
  %v1720 = vadd.f32 %v263, %v1719
  %v1721 = vpop.f32.mrb[0].mxu0
  %v1722 = vpop.f32.mrb[0].mxu0
  %v1723 = vadd.f32 %v263, %v1722
  %v1724 = vpop.f32.mrb[0].mxu0
  %1725 = vmatprep.mubr.bf16.mxu0 0
  %1726 = vmatmul.mubr.bf16.gmra.mrb[0].mxu0 %v803
  %v1727 = vpop.f32.mrb[0].mxu0
  %v1728 = vadd.f32 %v263, %v1727
  %v1729 = vpop.f32.mrb[0].mxu0
  %v1730 = vpop.f32.mrb[0].mxu0
  %v1731 = vadd.f32 %v263, %v1730
  %v1732 = vpop.f32.mrb[0].mxu0
  %1733 = vmatprep.mubr.bf16.mxu0 0
  %1734 = vmatmul.mubr.bf16.gmra.mrb[0].mxu0 %v804
  %v1735 = vpop.f32.mrb[0].mxu0
  %v1736 = vadd.f32 %v263, %v1735
  %v1737 = vpop.f32.mrb[0].mxu0
  %v1738 = vpop.f32.mrb[0].mxu0
  %v1739 = vadd.f32 %v263, %v1738
  %v1740 = vpop.f32.mrb[0].mxu0
  %1741 = vmatprep.mubr.bf16.mxu0 0
  %1742 = vmatmul.mubr.bf16.gmra.mrb[0].mxu0 %v805
  %v1743 = vpop.f32.mrb[0].mxu0
  %v1744 = vadd.f32 %v263, %v1743
  %v1745 = vpop.f32.mrb[0].mxu0
  %v1746 = vpop.f32.mrb[0].mxu0
  %v1747 = vadd.f32 %v263, %v1746
  %v1748 = vpop.f32.mrb[0].mxu0
  %1749 = vmatprep.mubr.bf16.mxu0 0
  %1750 = vmatmul.mubr.bf16.gmra.mrb[0].mxu0 %v806
  %v1751 = vpop.f32.mrb[0].mxu0
  %v1752 = vadd.f32 %v263, %v1751
  %v1753 = vpop.f32.mrb[0].mxu0
  %v1754 = vpop.f32.mrb[0].mxu0
  %v1755 = vadd.f32 %v263, %v1754
  %v1756 = vpop.f32.mrb[0].mxu0
  %1757 = vmatprep.mubr.bf16.mxu0 0
  %1758 = vmatmul.mubr.bf16.gmra.mrb[0].mxu0 %v807
  %v1759 = vpop.f32.mrb[0].mxu0
  %v1760 = vadd.f32 %v263, %v1759
  %v1761 = vpop.f32.mrb[0].mxu0
  %v1762 = vpop.f32.mrb[0].mxu0
  %v1763 = vadd.f32 %v263, %v1762
  %v1764 = vpop.f32.mrb[0].mxu0
  %1765 = vmatprep.mubr.bf16.mxu0 0
  %1766 = vmatmul.mubr.bf16.gmra.mrb[0].mxu0 %v808
  %v1767 = vpop.f32.mrb[0].mxu0
  %v1768 = vadd.f32 %v263, %v1767
  %v1769 = vpop.f32.mrb[0].mxu0
  %v1770 = vpop.f32.mrb[0].mxu0
  %v1771 = vadd.f32 %v263, %v1770
  %v1772 = vpop.f32.mrb[0].mxu0
  %1773 = vmatprep.mubr.bf16.mxu0 0
  %1774 = vmatmul.mubr.bf16.gmra.mrb[0].mxu0 %v809
  %v1775 = vpop.f32.mrb[0].mxu0
  %v1776 = vadd.f32 %v263, %v1775
  %v1777 = vpop.f32.mrb[0].mxu0
  %v1778 = vpop.f32.mrb[0].mxu0
  %v1779 = vadd.f32 %v263, %v1778
  %v1780 = vpop.f32.mrb[0].mxu0
  %1781 = vmatprep.mubr.bf16.mxu0 0
  %1782 = vmatmul.mubr.bf16.gmra.mrb[0].mxu0 %v810
  %v1783 = vpop.f32.mrb[0].mxu0
  %v1784 = vadd.f32 %v263, %v1783
  %v1785 = vpop.f32.mrb[0].mxu0
  %v1786 = vpop.f32.mrb[0].mxu0
  %v1787 = vadd.f32 %v263, %v1786
  %v1788 = vpop.f32.mrb[0].mxu0
  %1789 = vmatprep.mubr.bf16.mxu0 0
  %1790 = vmatmul.mubr.bf16.gmra.mrb[0].mxu0 %v811
  %v1791 = vpop.f32.mrb[0].mxu0
  %v1792 = vadd.f32 %v263, %v1791
  %v1793 = vpop.f32.mrb[0].mxu0
  %v1794 = vpop.f32.mrb[0].mxu0
  %v1795 = vadd.f32 %v263, %v1794
  %v1796 = vpop.f32.mrb[0].mxu0
  %1797 = vmatprep.mubr.bf16.mxu0 0
  %1798 = vmatmul.mubr.bf16.gmra.mrb[0].mxu0 %v812
  %v1799 = vpop.f32.mrb[0].mxu0
  %v1800 = vadd.f32 %v263, %v1799
  %v1801 = vpop.f32.mrb[0].mxu0
  %v1802 = vpop.f32.mrb[0].mxu0
  %v1803 = vadd.f32 %v263, %v1802
  %v1804 = vpop.f32.mrb[0].mxu0
  %1805 = vmatprep.mubr.bf16.mxu0 0
  %1806 = vmatmul.mubr.bf16.gmra.mrb[0].mxu0 %v813
  %v1807 = vpop.f32.mrb[0].mxu0
  %v1808 = vadd.f32 %v263, %v1807
  %v1809 = vpop.f32.mrb[0].mxu0
  %v1810 = vpop.f32.mrb[0].mxu0
  %v1811 = vadd.f32 %v263, %v1810
  %v1812 = vpop.f32.mrb[0].mxu0
  %1813 = vmatprep.mubr.bf16.mxu0 0
  %1814 = vmatmul.mubr.bf16.gmra.mrb[0].mxu0 %v814
  %v1815 = vpop.f32.mrb[0].mxu0
  %v1816 = vadd.f32 %v263, %v1815
  %v1817 = vpop.f32.mrb[0].mxu0
  %v1818 = vpop.f32.mrb[0].mxu0
  %v1819 = vadd.f32 %v263, %v1818
  %v1820 = vpop.f32.mrb[0].mxu0
  %1821 = vmatprep.mubr.bf16.mxu0 0
  %1822 = vmatmul.mubr.bf16.gmra.mrb[0].mxu0 %v815
  %v1823 = vpop.f32.mrb[0].mxu0
  %v1824 = vadd.f32 %v263, %v1823
  %v1825 = vpop.f32.mrb[0].mxu0
  %v1826 = vpop.f32.mrb[0].mxu0
  %v1827 = vadd.f32 %v263, %v1826
  %v1828 = vpop.f32.mrb[0].mxu0
  %1829 = vmatprep.mubr.bf16.mxu0 0
  %1830 = vmatmul.mubr.bf16.gmra.mrb[0].mxu0 %v816
  %v1831 = vpop.f32.mrb[0].mxu0
  %v1832 = vadd.f32 %v263, %v1831
  %v1833 = vpop.f32.mrb[0].mxu0
  %v1834 = vpop.f32.mrb[0].mxu0
  %v1835 = vadd.f32 %v263, %v1834
  %v1836 = vpop.f32.mrb[0].mxu0
  %1837 = vmatprep.mubr.bf16.mxu0 0
  %1838 = vmatmul.mubr.bf16.gmra.mrb[0].mxu0 %v817
  %v1839 = vpop.f32.mrb[0].mxu0
  %v1840 = vadd.f32 %v263, %v1839
  %v1841 = vpop.f32.mrb[0].mxu0
  %v1842 = vpop.f32.mrb[0].mxu0
  %v1843 = vadd.f32 %v263, %v1842
  %v1844 = vpop.f32.mrb[0].mxu0
  %1845 = vmatprep.mubr.bf16.mxu0 0
  %1846 = vmatmul.mubr.bf16.gmra.mrb[0].mxu0 %v818
  %v1847 = vpop.f32.mrb[0].mxu0
  %v1848 = vadd.f32 %v263, %v1847
  %v1849 = vpop.f32.mrb[0].mxu0
  %v1850 = vpop.f32.mrb[0].mxu0
  %v1851 = vadd.f32 %v263, %v1850
  %v1852 = vpop.f32.mrb[0].mxu0
  %1853 = vmatprep.mubr.bf16.mxu0 0
  %1854 = vmatmul.mubr.bf16.gmra.mrb[0].mxu0 %v819
  %v1855 = vpop.f32.mrb[0].mxu0
  %v1856 = vadd.f32 %v263, %v1855
  %v1857 = vpop.f32.mrb[0].mxu0
  %v1858 = vpop.f32.mrb[0].mxu0
  %v1859 = vadd.f32 %v263, %v1858
  %v1860 = vpop.f32.mrb[0].mxu0
  %1861 = vmatprep.mubr.bf16.mxu0 0
  %1862 = vmatmul.mubr.bf16.gmra.mrb[0].mxu0 %v820
  %v1863 = vpop.f32.mrb[0].mxu0
  %v1864 = vadd.f32 %v263, %v1863
  %v1865 = vpop.f32.mrb[0].mxu0
  %v1866 = vpop.f32.mrb[0].mxu0
  %v1867 = vadd.f32 %v263, %v1866
  %v1868 = vpop.f32.mrb[0].mxu0
  %1869 = vmatprep.mubr.bf16.mxu0 0
  %1870 = vmatmul.mubr.bf16.gmra.mrb[0].mxu0 %v821
  %v1871 = vpop.f32.mrb[0].mxu0
  %v1872 = vadd.f32 %v263, %v1871
  %v1873 = vpop.f32.mrb[0].mxu0
  %v1874 = vpop.f32.mrb[0].mxu0
  %v1875 = vadd.f32 %v263, %v1874
  %v1876 = vpop.f32.mrb[0].mxu0
  %1877 = vmatprep.mubr.bf16.mxu0 0
  %1878 = vmatmul.mubr.bf16.gmra.mrb[0].mxu0 %v822
  %v1879 = vpop.f32.mrb[0].mxu0
  %v1880 = vadd.f32 %v263, %v1879
  %v1881 = vpop.f32.mrb[0].mxu0
  %v1882 = vpop.f32.mrb[0].mxu0
  %v1883 = vadd.f32 %v263, %v1882
  %v1884 = vpop.f32.mrb[0].mxu0
  %1885 = vmatprep.mubr.bf16.mxu0 0
  %1886 = vmatmul.mubr.bf16.gmra.mrb[0].mxu0 %v823
  %v1887 = vpop.f32.mrb[0].mxu0
  %v1888 = vadd.f32 %v263, %v1887
  %v1889 = vpop.f32.mrb[0].mxu0
  %v1890 = vpop.f32.mrb[0].mxu0
  %v1891 = vadd.f32 %v263, %v1890
  %v1892 = vpop.f32.mrb[0].mxu0
  %1893 = vmatprep.mubr.bf16.mxu0 0
  %1894 = vmatmul.mubr.bf16.gmra.mrb[0].mxu0 %v824
  %v1895 = vpop.f32.mrb[0].mxu0
  %v1896 = vadd.f32 %v263, %v1895
  %v1897 = vpop.f32.mrb[0].mxu0
  %v1898 = vpop.f32.mrb[0].mxu0
  %v1899 = vadd.f32 %v263, %v1898
  %v1900 = vpop.f32.mrb[0].mxu0
  %1901 = vmatprep.mubr.bf16.mxu0 0
  %1902 = vmatmul.mubr.bf16.gmra.mrb[0].mxu0 %v825
  %v1903 = vpop.f32.mrb[0].mxu0
  %v1904 = vadd.f32 %v263, %v1903
  %v1905 = vpop.f32.mrb[0].mxu0
  %v1906 = vpop.f32.mrb[0].mxu0
  %v1907 = vadd.f32 %v263, %v1906
  %v1908 = vpop.f32.mrb[0].mxu0
  %1909 = vmatprep.mubr.bf16.mxu0 0
  %1910 = vmatmul.mubr.bf16.gmra.mrb[0].mxu0 %v826
  %v1911 = vpop.f32.mrb[0].mxu0
  %v1912 = vadd.f32 %v263, %v1911
  %v1913 = vpop.f32.mrb[0].mxu0
  %v1914 = vpop.f32.mrb[0].mxu0
  %v1915 = vadd.f32 %v263, %v1914
  %v1916 = vpop.f32.mrb[0].mxu0
  %1917 = vmatprep.mubr.bf16.mxu0 0
  %1918 = vmatmul.mubr.bf16.gmra.mrb[0].mxu0 %v827
  %v1919 = vpop.f32.mrb[0].mxu0
  %v1920 = vadd.f32 %v263, %v1919
  %v1921 = vpop.f32.mrb[0].mxu0
  %v1922 = vpop.f32.mrb[0].mxu0
  %v1923 = vpop.f32.mrb[0].mxu0
  %1924 = vdwg.mxu0
  %v1925 = vmax.f32 %v1024, 0.0
  %v1926 = vmax.f32 %v1027, 0.0
  %v1927 = vmax.f32 %v1032, 0.0
  %v1928 = vmax.f32 %v1035, 0.0
  %v1929 = vmax.f32 %v1040, 0.0
  %v1930 = vmax.f32 %v1043, 0.0
  %v1931 = vmax.f32 %v1048, 0.0
  %v1932 = vmax.f32 %v1051, 0.0
  %v1933 = vmax.f32 %v1056, 0.0
  %v1934 = vmax.f32 %v1059, 0.0
  %v1935 = vmax.f32 %v1064, 0.0
  %v1936 = vmax.f32 %v1067, 0.0
  %v1937 = vmax.f32 %v1072, 0.0
  %v1938 = vmax.f32 %v1075, 0.0
  %v1939 = vmax.f32 %v1080, 0.0
  %v1940 = vmax.f32 %v1083, 0.0
  %v1941 = vmax.f32 %v1088, 0.0
  %v1942 = vmax.f32 %v1091, 0.0
  %v1943 = vmax.f32 %v1096, 0.0
  %v1944 = vmax.f32 %v1099, 0.0
  %v1945 = vmax.f32 %v1104, 0.0
  %v1946 = vmax.f32 %v1107, 0.0
  %v1947 = vmax.f32 %v1112, 0.0
  %v1948 = vmax.f32 %v1115, 0.0
  %v1949 = vmax.f32 %v1120, 0.0
  %v1950 = vmax.f32 %v1123, 0.0
  %v1951 = vmax.f32 %v1128, 0.0
  %v1952 = vmax.f32 %v1131, 0.0
  %v1953 = vmax.f32 %v1136, 0.0
  %v1954 = vmax.f32 %v1139, 0.0
  %v1955 = vmax.f32 %v1144, 0.0
  %v1956 = vmax.f32 %v1147, 0.0
  %v1957 = vmax.f32 %v1152, 0.0
  %v1958 = vmax.f32 %v1155, 0.0
  %v1959 = vmax.f32 %v1160, 0.0
  %v1960 = vmax.f32 %v1163, 0.0
  %v1961 = vmax.f32 %v1168, 0.0
  %v1962 = vmax.f32 %v1171, 0.0
  %v1963 = vmax.f32 %v1176, 0.0
  %v1964 = vmax.f32 %v1179, 0.0
  %v1965 = vmax.f32 %v1184, 0.0
  %v1966 = vmax.f32 %v1187, 0.0
  %v1967 = vmax.f32 %v1192, 0.0
  %v1968 = vmax.f32 %v1195, 0.0
  %v1969 = vmax.f32 %v1200, 0.0
  %v1970 = vmax.f32 %v1203, 0.0
  %v1971 = vmax.f32 %v1208, 0.0
  %v1972 = vmax.f32 %v1211, 0.0
  %v1973 = vmax.f32 %v1216, 0.0
  %v1974 = vmax.f32 %v1219, 0.0
  %v1975 = vmax.f32 %v1224, 0.0
  %v1976 = vmax.f32 %v1227, 0.0
  %v1977 = vmax.f32 %v1232, 0.0
  %v1978 = vmax.f32 %v1235, 0.0
  %v1979 = vmax.f32 %v1240, 0.0
  %v1980 = vmax.f32 %v1243, 0.0
  %v1981 = vmax.f32 %v1248, 0.0
  %v1982 = vmax.f32 %v1251, 0.0
  %v1983 = vmax.f32 %v1256, 0.0
  %v1984 = vmax.f32 %v1259, 0.0
  %v1985 = vmax.f32 %v1264, 0.0
  %v1986 = vmax.f32 %v1267, 0.0
  %v1987 = vmax.f32 %v1272, 0.0
  %v1988 = vmax.f32 %v1275, 0.0
  %v1989 = vmax.f32 %v1280, 0.0
  %v1990 = vmax.f32 %v1283, 0.0
  %v1991 = vmax.f32 %v1288, 0.0
  %v1992 = vmax.f32 %v1291, 0.0
  %v1993 = vmax.f32 %v1296, 0.0
  %v1994 = vmax.f32 %v1299, 0.0
  %v1995 = vmax.f32 %v1304, 0.0
  %v1996 = vmax.f32 %v1307, 0.0
  %v1997 = vmax.f32 %v1312, 0.0
  %v1998 = vmax.f32 %v1315, 0.0
  %v1999 = vmax.f32 %v1320, 0.0
  %v2000 = vmax.f32 %v1323, 0.0
  %v2001 = vmax.f32 %v1328, 0.0
  %v2002 = vmax.f32 %v1331, 0.0
  %v2003 = vmax.f32 %v1336, 0.0
  %v2004 = vmax.f32 %v1339, 0.0
  %v2005 = vmax.f32 %v1344, 0.0
  %v2006 = vmax.f32 %v1347, 0.0
  %v2007 = vmax.f32 %v1352, 0.0
  %v2008 = vmax.f32 %v1355, 0.0
  %v2009 = vmax.f32 %v1360, 0.0
  %v2010 = vmax.f32 %v1363, 0.0
  %v2011 = vmax.f32 %v1368, 0.0
  %v2012 = vmax.f32 %v1371, 0.0
  %v2013 = vmax.f32 %v1376, 0.0
  %v2014 = vmax.f32 %v1379, 0.0
  %v2015 = vmax.f32 %v1384, 0.0
  %v2016 = vmax.f32 %v1387, 0.0
  %v2017 = vmax.f32 %v1392, 0.0
  %v2018 = vmax.f32 %v1395, 0.0
  %v2019 = vmax.f32 %v1400, 0.0
  %v2020 = vmax.f32 %v1403, 0.0
  %v2021 = vmax.f32 %v1408, 0.0
  %v2022 = vmax.f32 %v1411, 0.0
  %v2023 = vmax.f32 %v1416, 0.0
  %v2024 = vmax.f32 %v1419, 0.0
  %v2025 = vmax.f32 %v1424, 0.0
  %v2026 = vmax.f32 %v1427, 0.0
  %v2027 = vmax.f32 %v1432, 0.0
  %v2028 = vmax.f32 %v1435, 0.0
  %v2029 = vmax.f32 %v1440, 0.0
  %v2030 = vmax.f32 %v1443, 0.0
  %v2031 = vmax.f32 %v1448, 0.0
  %v2032 = vmax.f32 %v1451, 0.0
  %v2033 = vmax.f32 %v1456, 0.0
  %v2034 = vmax.f32 %v1459, 0.0
  %v2035 = vmax.f32 %v1464, 0.0
  %v2036 = vmax.f32 %v1467, 0.0
  %v2037 = vmax.f32 %v1472, 0.0
  %v2038 = vmax.f32 %v1475, 0.0
  %v2039 = vmax.f32 %v1480, 0.0
  %v2040 = vmax.f32 %v1483, 0.0
  %v2041 = vmax.f32 %v1488, 0.0
  %v2042 = vmax.f32 %v1491, 0.0
  %v2043 = vmax.f32 %v1496, 0.0
  %v2044 = vmax.f32 %v1499, 0.0
  %v2045 = vmax.f32 %v1504, 0.0
  %v2046 = vmax.f32 %v1507, 0.0
  %v2047 = vmax.f32 %v1512, 0.0
  %v2048 = vmax.f32 %v1515, 0.0
  %v2049 = vmax.f32 %v1520, 0.0
  %v2050 = vmax.f32 %v1523, 0.0
  %v2051 = vmax.f32 %v1528, 0.0
  %v2052 = vmax.f32 %v1531, 0.0
  %v2053 = vmax.f32 %v1536, 0.0
  %v2054 = vmax.f32 %v1539, 0.0
  %v2055 = vmax.f32 %v1544, 0.0
  %v2056 = vmax.f32 %v1547, 0.0
  %v2057 = vmax.f32 %v1552, 0.0
  %v2058 = vmax.f32 %v1555, 0.0
  %v2059 = vmax.f32 %v1560, 0.0
  %v2060 = vmax.f32 %v1563, 0.0
  %v2061 = vmax.f32 %v1568, 0.0
  %v2062 = vmax.f32 %v1571, 0.0
  %v2063 = vmax.f32 %v1576, 0.0
  %v2064 = vmax.f32 %v1579, 0.0
  %v2065 = vmax.f32 %v1584, 0.0
  %v2066 = vmax.f32 %v1587, 0.0
  %v2067 = vmax.f32 %v1592, 0.0
  %v2068 = vmax.f32 %v1595, 0.0
  %v2069 = vmax.f32 %v1600, 0.0
  %v2070 = vmax.f32 %v1603, 0.0
  %v2071 = vmax.f32 %v1608, 0.0
  %v2072 = vmax.f32 %v1611, 0.0
  %v2073 = vmax.f32 %v1616, 0.0
  %v2074 = vmax.f32 %v1619, 0.0
  %v2075 = vmax.f32 %v1624, 0.0
  %v2076 = vmax.f32 %v1627, 0.0
  %v2077 = vmax.f32 %v1632, 0.0
  %v2078 = vmax.f32 %v1635, 0.0
  %v2079 = vmax.f32 %v1640, 0.0
  %v2080 = vmax.f32 %v1643, 0.0
  %v2081 = vmax.f32 %v1648, 0.0
  %v2082 = vmax.f32 %v1651, 0.0
  %v2083 = vmax.f32 %v1656, 0.0
  %v2084 = vmax.f32 %v1659, 0.0
  %v2085 = vmax.f32 %v1664, 0.0
  %v2086 = vmax.f32 %v1667, 0.0
  %v2087 = vmax.f32 %v1672, 0.0
  %v2088 = vmax.f32 %v1675, 0.0
  %v2089 = vmax.f32 %v1680, 0.0
  %v2090 = vmax.f32 %v1683, 0.0
  %v2091 = vmax.f32 %v1688, 0.0
  %v2092 = vmax.f32 %v1691, 0.0
  %v2093 = vmax.f32 %v1696, 0.0
  %v2094 = vmax.f32 %v1699, 0.0
  %v2095 = vmax.f32 %v1704, 0.0
  %v2096 = vmax.f32 %v1707, 0.0
  %v2097 = vmax.f32 %v1712, 0.0
  %v2098 = vmax.f32 %v1715, 0.0
  %v2099 = vmax.f32 %v1720, 0.0
  %v2100 = vmax.f32 %v1723, 0.0
  %v2101 = vmax.f32 %v1728, 0.0
  %v2102 = vmax.f32 %v1731, 0.0
  %v2103 = vmax.f32 %v1736, 0.0
  %v2104 = vmax.f32 %v1739, 0.0
  %v2105 = vmax.f32 %v1744, 0.0
  %v2106 = vmax.f32 %v1747, 0.0
  %v2107 = vmax.f32 %v1752, 0.0
  %v2108 = vmax.f32 %v1755, 0.0
  %v2109 = vmax.f32 %v1760, 0.0
  %v2110 = vmax.f32 %v1763, 0.0
  %v2111 = vmax.f32 %v1768, 0.0
  %v2112 = vmax.f32 %v1771, 0.0
  %v2113 = vmax.f32 %v1776, 0.0
  %v2114 = vmax.f32 %v1779, 0.0
  %v2115 = vmax.f32 %v1784, 0.0
  %v2116 = vmax.f32 %v1787, 0.0
  %v2117 = vmax.f32 %v1792, 0.0
  %v2118 = vmax.f32 %v1795, 0.0
  %v2119 = vmax.f32 %v1800, 0.0
  %v2120 = vmax.f32 %v1803, 0.0
  %v2121 = vmax.f32 %v1808, 0.0
  %v2122 = vmax.f32 %v1811, 0.0
  %v2123 = vmax.f32 %v1816, 0.0
  %v2124 = vmax.f32 %v1819, 0.0
  %v2125 = vmax.f32 %v1824, 0.0
  %v2126 = vmax.f32 %v1827, 0.0
  %v2127 = vmax.f32 %v1832, 0.0
  %v2128 = vmax.f32 %v1835, 0.0
  %v2129 = vmax.f32 %v1840, 0.0
  %v2130 = vmax.f32 %v1843, 0.0
  %v2131 = vmax.f32 %v1848, 0.0
  %v2132 = vmax.f32 %v1851, 0.0
  %v2133 = vmax.f32 %v1856, 0.0
  %v2134 = vmax.f32 %v1859, 0.0
  %v2135 = vmax.f32 %v1864, 0.0
  %v2136 = vmax.f32 %v1867, 0.0
  %v2137 = vmax.f32 %v1872, 0.0
  %v2138 = vmax.f32 %v1875, 0.0
  %v2139 = vmax.f32 %v1880, 0.0
  %v2140 = vmax.f32 %v1883, 0.0
  %v2141 = vmax.f32 %v1888, 0.0
  %v2142 = vmax.f32 %v1891, 0.0
  %v2143 = vmax.f32 %v1896, 0.0
  %v2144 = vmax.f32 %v1899, 0.0
  %v2145 = vmax.f32 %v1904, 0.0
  %v2146 = vmax.f32 %v1907, 0.0
  %v2147 = vmax.f32 %v1912, 0.0
  %v2148 = vmax.f32 %v1915, 0.0
  %v2149 = vmax.f32 %v1920, 0.0
  %v2150 = vpack.c.bf16 %v1926, %v1925
  %v2151 = vpack.c.bf16 %v1928, %v1927
  %v2152 = vpack.c.bf16 %v1930, %v1929
  %v2153 = vpack.c.bf16 %v1932, %v1931
  %v2154 = vpack.c.bf16 %v1934, %v1933
  %v2155 = vpack.c.bf16 %v1936, %v1935
  %v2156 = vpack.c.bf16 %v1938, %v1937
  %v2157 = vpack.c.bf16 %v1940, %v1939
  %v2158 = vpack.c.bf16 %v1942, %v1941
  %v2159 = vpack.c.bf16 %v1944, %v1943
  %v2160 = vpack.c.bf16 %v1946, %v1945
  %v2161 = vpack.c.bf16 %v1948, %v1947
  %v2162 = vpack.c.bf16 %v1950, %v1949
  %v2163 = vpack.c.bf16 %v1952, %v1951
  %v2164 = vpack.c.bf16 %v1954, %v1953
  %v2165 = vpack.c.bf16 %v1956, %v1955
  %v2166 = vpack.c.bf16 %v1958, %v1957
  %v2167 = vpack.c.bf16 %v1960, %v1959
  %v2168 = vpack.c.bf16 %v1962, %v1961
  %v2169 = vpack.c.bf16 %v1964, %v1963
  %v2170 = vpack.c.bf16 %v1966, %v1965
  %v2171 = vpack.c.bf16 %v1968, %v1967
  %v2172 = vpack.c.bf16 %v1970, %v1969
  %v2173 = vpack.c.bf16 %v1972, %v1971
  %v2174 = vpack.c.bf16 %v1974, %v1973
  %v2175 = vpack.c.bf16 %v1976, %v1975
  %v2176 = vpack.c.bf16 %v1978, %v1977
  %v2177 = vpack.c.bf16 %v1980, %v1979
  %v2178 = vpack.c.bf16 %v1982, %v1981
  %v2179 = vpack.c.bf16 %v1984, %v1983
  %v2180 = vpack.c.bf16 %v1986, %v1985
  %v2181 = vpack.c.bf16 %v1988, %v1987
  %v2182 = vpack.c.bf16 %v1990, %v1989
  %v2183 = vpack.c.bf16 %v1992, %v1991
  %v2184 = vpack.c.bf16 %v1994, %v1993
  %v2185 = vpack.c.bf16 %v1996, %v1995
  %v2186 = vpack.c.bf16 %v1998, %v1997
  %v2187 = vpack.c.bf16 %v2000, %v1999
  %v2188 = vpack.c.bf16 %v2002, %v2001
  %v2189 = vpack.c.bf16 %v2004, %v2003
  %v2190 = vpack.c.bf16 %v2006, %v2005
  %v2191 = vpack.c.bf16 %v2008, %v2007
  %v2192 = vpack.c.bf16 %v2010, %v2009
  %v2193 = vpack.c.bf16 %v2012, %v2011
  %v2194 = vpack.c.bf16 %v2014, %v2013
  %v2195 = vpack.c.bf16 %v2016, %v2015
  %v2196 = vpack.c.bf16 %v2018, %v2017
  %v2197 = vpack.c.bf16 %v2020, %v2019
  %v2198 = vpack.c.bf16 %v2022, %v2021
  %v2199 = vpack.c.bf16 %v2024, %v2023
  %v2200 = vpack.c.bf16 %v2026, %v2025
  %v2201 = vpack.c.bf16 %v2028, %v2027
  %v2202 = vpack.c.bf16 %v2030, %v2029
  %v2203 = vpack.c.bf16 %v2032, %v2031
  %v2204 = vpack.c.bf16 %v2034, %v2033
  %v2205 = vpack.c.bf16 %v2036, %v2035
  %v2206 = vpack.c.bf16 %v2038, %v2037
  %v2207 = vpack.c.bf16 %v2040, %v2039
  %v2208 = vpack.c.bf16 %v2042, %v2041
  %v2209 = vpack.c.bf16 %v2044, %v2043
  %v2210 = vpack.c.bf16 %v2046, %v2045
  %v2211 = vpack.c.bf16 %v2048, %v2047
  %v2212 = vpack.c.bf16 %v2050, %v2049
  %v2213 = vpack.c.bf16 %v2052, %v2051
  %v2214 = vpack.c.bf16 %v2054, %v2053
  %v2215 = vpack.c.bf16 %v2056, %v2055
  %v2216 = vpack.c.bf16 %v2058, %v2057
  %v2217 = vpack.c.bf16 %v2060, %v2059
  %v2218 = vpack.c.bf16 %v2062, %v2061
  %v2219 = vpack.c.bf16 %v2064, %v2063
  %v2220 = vpack.c.bf16 %v2066, %v2065
  %v2221 = vpack.c.bf16 %v2068, %v2067
  %v2222 = vpack.c.bf16 %v2070, %v2069
  %v2223 = vpack.c.bf16 %v2072, %v2071
  %v2224 = vpack.c.bf16 %v2074, %v2073
  %v2225 = vpack.c.bf16 %v2076, %v2075
  %v2226 = vpack.c.bf16 %v2078, %v2077
  %v2227 = vpack.c.bf16 %v2080, %v2079
  %v2228 = vpack.c.bf16 %v2082, %v2081
  %v2229 = vpack.c.bf16 %v2084, %v2083
  %v2230 = vpack.c.bf16 %v2086, %v2085
  %v2231 = vpack.c.bf16 %v2088, %v2087
  %v2232 = vpack.c.bf16 %v2090, %v2089
  %v2233 = vpack.c.bf16 %v2092, %v2091
  %v2234 = vpack.c.bf16 %v2094, %v2093
  %v2235 = vpack.c.bf16 %v2096, %v2095
  %v2236 = vpack.c.bf16 %v2098, %v2097
  %v2237 = vpack.c.bf16 %v2100, %v2099
  %v2238 = vpack.c.bf16 %v2102, %v2101
  %v2239 = vpack.c.bf16 %v2104, %v2103
  %v2240 = vpack.c.bf16 %v2106, %v2105
  %v2241 = vpack.c.bf16 %v2108, %v2107
  %v2242 = vpack.c.bf16 %v2110, %v2109
  %v2243 = vpack.c.bf16 %v2112, %v2111
  %v2244 = vpack.c.bf16 %v2114, %v2113
  %v2245 = vpack.c.bf16 %v2116, %v2115
  %v2246 = vpack.c.bf16 %v2118, %v2117
  %v2247 = vpack.c.bf16 %v2120, %v2119
  %v2248 = vpack.c.bf16 %v2122, %v2121
  %v2249 = vpack.c.bf16 %v2124, %v2123
  %v2250 = vpack.c.bf16 %v2126, %v2125
  %v2251 = vpack.c.bf16 %v2128, %v2127
  %v2252 = vpack.c.bf16 %v2130, %v2129
  %v2253 = vpack.c.bf16 %v2132, %v2131
  %v2254 = vpack.c.bf16 %v2134, %v2133
  %v2255 = vpack.c.bf16 %v2136, %v2135
  %v2256 = vpack.c.bf16 %v2138, %v2137
  %v2257 = vpack.c.bf16 %v2140, %v2139
  %v2258 = vpack.c.bf16 %v2142, %v2141
  %v2259 = vpack.c.bf16 %v2144, %v2143
  %v2260 = vpack.c.bf16 %v2146, %v2145
  %v2261 = vpack.c.bf16 %v2148, %v2147
  %v2262 = vpack.c.bf16 %v2149, %v2149
  %v2376 = vunpack.c.l.b16 %v2150
  %v2377 = vunpack.c.h.b16 %v2150
  %v2378 = vunpack.c.l.b16 %v2151
  %v2379 = vunpack.c.h.b16 %v2151
  %v2380 = vunpack.c.l.b16 %v2152
  %v2381 = vunpack.c.h.b16 %v2152
  %v2382 = vunpack.c.l.b16 %v2153
  %v2383 = vunpack.c.h.b16 %v2153
  %v2384 = vunpack.c.l.b16 %v2154
  %v2385 = vunpack.c.h.b16 %v2154
  %v2386 = vunpack.c.l.b16 %v2155
  %v2387 = vunpack.c.h.b16 %v2155
  %v2388 = vunpack.c.l.b16 %v2156
  %v2389 = vunpack.c.h.b16 %v2156
  %v2390 = vunpack.c.l.b16 %v2157
  %v2391 = vunpack.c.h.b16 %v2157
  %v2392 = vunpack.c.l.b16 %v2158
  %v2393 = vunpack.c.h.b16 %v2158
  %v2394 = vunpack.c.l.b16 %v2159
  %v2395 = vunpack.c.h.b16 %v2159
  %v2396 = vunpack.c.l.b16 %v2160
  %v2397 = vunpack.c.h.b16 %v2160
  %v2398 = vunpack.c.l.b16 %v2161
  %v2399 = vunpack.c.h.b16 %v2161
  %v2400 = vunpack.c.l.b16 %v2162
  %v2401 = vunpack.c.h.b16 %v2162
  %v2402 = vunpack.c.l.b16 %v2163
  %v2403 = vunpack.c.h.b16 %v2163
  %v2404 = vunpack.c.l.b16 %v2164
  %v2405 = vunpack.c.h.b16 %v2164
  %v2406 = vunpack.c.l.b16 %v2165
  %v2407 = vunpack.c.h.b16 %v2165
  %v2408 = vunpack.c.l.b16 %v2166
  %v2409 = vunpack.c.h.b16 %v2166
  %v2410 = vunpack.c.l.b16 %v2167
  %v2411 = vunpack.c.h.b16 %v2167
  %v2412 = vunpack.c.l.b16 %v2168
  %v2413 = vunpack.c.h.b16 %v2168
  %v2414 = vunpack.c.l.b16 %v2169
  %v2415 = vunpack.c.h.b16 %v2169
  %v2416 = vunpack.c.l.b16 %v2170
  %v2417 = vunpack.c.h.b16 %v2170
  %v2418 = vunpack.c.l.b16 %v2171
  %v2419 = vunpack.c.h.b16 %v2171
  %v2420 = vunpack.c.l.b16 %v2172
  %v2421 = vunpack.c.h.b16 %v2172
  %v2422 = vunpack.c.l.b16 %v2173
  %v2423 = vunpack.c.h.b16 %v2173
  %v2424 = vunpack.c.l.b16 %v2174
  %v2425 = vunpack.c.h.b16 %v2174
  %v2426 = vunpack.c.l.b16 %v2175
  %v2427 = vunpack.c.h.b16 %v2175
  %v2428 = vunpack.c.l.b16 %v2176
  %v2429 = vunpack.c.h.b16 %v2176
  %v2430 = vunpack.c.l.b16 %v2177
  %v2431 = vunpack.c.h.b16 %v2177
  %v2432 = vunpack.c.l.b16 %v2178
  %v2433 = vunpack.c.h.b16 %v2178
  %v2434 = vunpack.c.l.b16 %v2179
  %v2435 = vunpack.c.h.b16 %v2179
  %v2436 = vunpack.c.l.b16 %v2180
  %v2437 = vunpack.c.h.b16 %v2180
  %v2438 = vunpack.c.l.b16 %v2181
  %v2439 = vunpack.c.h.b16 %v2181
  %v2440 = vunpack.c.l.b16 %v2182
  %v2441 = vunpack.c.h.b16 %v2182
  %v2442 = vunpack.c.l.b16 %v2183
  %v2443 = vunpack.c.h.b16 %v2183
  %v2444 = vunpack.c.l.b16 %v2184
  %v2445 = vunpack.c.h.b16 %v2184
  %v2446 = vunpack.c.l.b16 %v2185
  %v2447 = vunpack.c.h.b16 %v2185
  %v2448 = vunpack.c.l.b16 %v2186
  %v2449 = vunpack.c.h.b16 %v2186
  %v2450 = vunpack.c.l.b16 %v2187
  %v2451 = vunpack.c.h.b16 %v2187
  %v2452 = vunpack.c.l.b16 %v2188
  %v2453 = vunpack.c.h.b16 %v2188
  %v2454 = vunpack.c.l.b16 %v2189
  %v2455 = vunpack.c.h.b16 %v2189
  %v2456 = vunpack.c.l.b16 %v2190
  %v2457 = vunpack.c.h.b16 %v2190
  %v2458 = vunpack.c.l.b16 %v2191
  %v2459 = vunpack.c.h.b16 %v2191
  %v2460 = vunpack.c.l.b16 %v2192
  %v2461 = vunpack.c.h.b16 %v2192
  %v2462 = vunpack.c.l.b16 %v2193
  %v2463 = vunpack.c.h.b16 %v2193
  %v2464 = vunpack.c.l.b16 %v2194
  %v2465 = vunpack.c.h.b16 %v2194
  %v2466 = vunpack.c.l.b16 %v2195
  %v2467 = vunpack.c.h.b16 %v2195
  %v2468 = vunpack.c.l.b16 %v2196
  %v2469 = vunpack.c.h.b16 %v2196
  %v2470 = vunpack.c.l.b16 %v2197
  %v2471 = vunpack.c.h.b16 %v2197
  %v2472 = vunpack.c.l.b16 %v2198
  %v2473 = vunpack.c.h.b16 %v2198
  %v2474 = vunpack.c.l.b16 %v2199
  %v2475 = vunpack.c.h.b16 %v2199
  %v2476 = vunpack.c.l.b16 %v2200
  %v2477 = vunpack.c.h.b16 %v2200
  %v2478 = vunpack.c.l.b16 %v2201
  %v2479 = vunpack.c.h.b16 %v2201
  %v2480 = vunpack.c.l.b16 %v2202
  %v2481 = vunpack.c.h.b16 %v2202
  %v2482 = vunpack.c.l.b16 %v2203
  %v2483 = vunpack.c.h.b16 %v2203
  %v2484 = vunpack.c.l.b16 %v2204
  %v2485 = vunpack.c.h.b16 %v2204
  %v2486 = vunpack.c.l.b16 %v2205
  %v2487 = vunpack.c.h.b16 %v2205
  %v2488 = vunpack.c.l.b16 %v2206
  %v2489 = vunpack.c.h.b16 %v2206
  %v2490 = vunpack.c.l.b16 %v2207
  %v2491 = vunpack.c.h.b16 %v2207
  %v2492 = vunpack.c.l.b16 %v2208
  %v2493 = vunpack.c.h.b16 %v2208
  %v2494 = vunpack.c.l.b16 %v2209
  %v2495 = vunpack.c.h.b16 %v2209
  %v2496 = vunpack.c.l.b16 %v2210
  %v2497 = vunpack.c.h.b16 %v2210
  %v2498 = vunpack.c.l.b16 %v2211
  %v2499 = vunpack.c.h.b16 %v2211
  %v2500 = vunpack.c.l.b16 %v2212
  %v2501 = vunpack.c.h.b16 %v2212
  %v2502 = vunpack.c.l.b16 %v2213
  %v2503 = vunpack.c.h.b16 %v2213
  %v2504 = vunpack.c.l.b16 %v2214
  %v2505 = vunpack.c.h.b16 %v2214
  %v2506 = vunpack.c.l.b16 %v2215
  %v2507 = vunpack.c.h.b16 %v2215
  %v2508 = vunpack.c.l.b16 %v2216
  %v2509 = vunpack.c.h.b16 %v2216
  %v2510 = vunpack.c.l.b16 %v2217
  %v2511 = vunpack.c.h.b16 %v2217
  %v2512 = vunpack.c.l.b16 %v2218
  %v2513 = vunpack.c.h.b16 %v2218
  %v2514 = vunpack.c.l.b16 %v2219
  %v2515 = vunpack.c.h.b16 %v2219
  %v2516 = vunpack.c.l.b16 %v2220
  %v2517 = vunpack.c.h.b16 %v2220
  %v2518 = vunpack.c.l.b16 %v2221
  %v2519 = vunpack.c.h.b16 %v2221
  %v2520 = vunpack.c.l.b16 %v2222
  %v2521 = vunpack.c.h.b16 %v2222
  %v2522 = vunpack.c.l.b16 %v2223
  %v2523 = vunpack.c.h.b16 %v2223
  %v2524 = vunpack.c.l.b16 %v2224
  %v2525 = vunpack.c.h.b16 %v2224
  %v2526 = vunpack.c.l.b16 %v2225
  %v2527 = vunpack.c.h.b16 %v2225
  %v2528 = vunpack.c.l.b16 %v2226
  %v2529 = vunpack.c.h.b16 %v2226
  %v2530 = vunpack.c.l.b16 %v2227
  %v2531 = vunpack.c.h.b16 %v2227
  %v2532 = vunpack.c.l.b16 %v2228
  %v2533 = vunpack.c.h.b16 %v2228
  %v2534 = vunpack.c.l.b16 %v2229
  %v2535 = vunpack.c.h.b16 %v2229
  %v2536 = vunpack.c.l.b16 %v2230
  %v2537 = vunpack.c.h.b16 %v2230
  %v2538 = vunpack.c.l.b16 %v2231
  %v2539 = vunpack.c.h.b16 %v2231
  %v2540 = vunpack.c.l.b16 %v2232
  %v2541 = vunpack.c.h.b16 %v2232
  %v2542 = vunpack.c.l.b16 %v2233
  %v2543 = vunpack.c.h.b16 %v2233
  %v2544 = vunpack.c.l.b16 %v2234
  %v2545 = vunpack.c.h.b16 %v2234
  %v2546 = vunpack.c.l.b16 %v2235
  %v2547 = vunpack.c.h.b16 %v2235
  %v2548 = vunpack.c.l.b16 %v2236
  %v2549 = vunpack.c.h.b16 %v2236
  %v2550 = vunpack.c.l.b16 %v2237
  %v2551 = vunpack.c.h.b16 %v2237
  %v2552 = vunpack.c.l.b16 %v2238
  %v2553 = vunpack.c.h.b16 %v2238
  %v2554 = vunpack.c.l.b16 %v2239
  %v2555 = vunpack.c.h.b16 %v2239
  %v2556 = vunpack.c.l.b16 %v2240
  %v2557 = vunpack.c.h.b16 %v2240
  %v2558 = vunpack.c.l.b16 %v2241
  %v2559 = vunpack.c.h.b16 %v2241
  %v2560 = vunpack.c.l.b16 %v2242
  %v2561 = vunpack.c.h.b16 %v2242
  %v2562 = vunpack.c.l.b16 %v2243
  %v2563 = vunpack.c.h.b16 %v2243
  %v2564 = vunpack.c.l.b16 %v2244
  %v2565 = vunpack.c.h.b16 %v2244
  %v2566 = vunpack.c.l.b16 %v2245
  %v2567 = vunpack.c.h.b16 %v2245
  %v2568 = vunpack.c.l.b16 %v2246
  %v2569 = vunpack.c.h.b16 %v2246
  %v2570 = vunpack.c.l.b16 %v2247
  %v2571 = vunpack.c.h.b16 %v2247
  %v2572 = vunpack.c.l.b16 %v2248
  %v2573 = vunpack.c.h.b16 %v2248
  %v2574 = vunpack.c.l.b16 %v2249
  %v2575 = vunpack.c.h.b16 %v2249
  %v2576 = vunpack.c.l.b16 %v2250
  %v2577 = vunpack.c.h.b16 %v2250
  %v2578 = vunpack.c.l.b16 %v2251
  %v2579 = vunpack.c.h.b16 %v2251
  %v2580 = vunpack.c.l.b16 %v2252
  %v2581 = vunpack.c.h.b16 %v2252
  %v2582 = vunpack.c.l.b16 %v2253
  %v2583 = vunpack.c.h.b16 %v2253
  %v2584 = vunpack.c.l.b16 %v2254
  %v2585 = vunpack.c.h.b16 %v2254
  %v2586 = vunpack.c.l.b16 %v2255
  %v2587 = vunpack.c.h.b16 %v2255
  %v2588 = vunpack.c.l.b16 %v2256
  %v2589 = vunpack.c.h.b16 %v2256
  %v2590 = vunpack.c.l.b16 %v2257
  %v2591 = vunpack.c.h.b16 %v2257
  %v2592 = vunpack.c.l.b16 %v2258
  %v2593 = vunpack.c.h.b16 %v2258
  %v2594 = vunpack.c.l.b16 %v2259
  %v2595 = vunpack.c.h.b16 %v2259
  %v2596 = vunpack.c.l.b16 %v2260
  %v2597 = vunpack.c.h.b16 %v2260
  %v2598 = vunpack.c.l.b16 %v2261
  %v2599 = vunpack.c.h.b16 %v2261
  %v2600 = vunpack.c.l.b16 %v2262
  %v2601 = vpack.c.b16 %v2376, %v2376
  %v2602 = vpack.c.b16 %v2377, %v2377
  %v2603 = vpack.c.b16 %v2378, %v2378
  %v2604 = vpack.c.b16 %v2379, %v2379
  %v2605 = vpack.c.b16 %v2380, %v2380
  %v2606 = vpack.c.b16 %v2381, %v2381
  %v2607 = vpack.c.b16 %v2382, %v2382
  %v2608 = vpack.c.b16 %v2383, %v2383
  %v2609 = vpack.c.b16 %v2384, %v2384
  %v2610 = vpack.c.b16 %v2385, %v2385
  %v2611 = vpack.c.b16 %v2386, %v2386
  %v2612 = vpack.c.b16 %v2387, %v2387
  %v2613 = vpack.c.b16 %v2388, %v2388
  %v2614 = vpack.c.b16 %v2389, %v2389
  %v2615 = vpack.c.b16 %v2390, %v2390
  %v2616 = vpack.c.b16 %v2391, %v2391
  %v2617 = vpack.c.b16 %v2392, %v2392
  %v2618 = vpack.c.b16 %v2393, %v2393
  %v2619 = vpack.c.b16 %v2394, %v2394
  %v2620 = vpack.c.b16 %v2395, %v2395
  %v2621 = vpack.c.b16 %v2396, %v2396
  %v2622 = vpack.c.b16 %v2397, %v2397
  %v2623 = vpack.c.b16 %v2398, %v2398
  %v2624 = vpack.c.b16 %v2399, %v2399
  %v2625 = vpack.c.b16 %v2400, %v2400
  %v2626 = vpack.c.b16 %v2401, %v2401
  %v2627 = vpack.c.b16 %v2402, %v2402
  %v2628 = vpack.c.b16 %v2403, %v2403
  %v2629 = vpack.c.b16 %v2404, %v2404
  %v2630 = vpack.c.b16 %v2405, %v2405
  %v2631 = vpack.c.b16 %v2406, %v2406
  %v2632 = vpack.c.b16 %v2407, %v2407
  %v2633 = vpack.c.b16 %v2408, %v2408
  %v2634 = vpack.c.b16 %v2409, %v2409
  %v2635 = vpack.c.b16 %v2410, %v2410
  %v2636 = vpack.c.b16 %v2411, %v2411
  %v2637 = vpack.c.b16 %v2412, %v2412
  %v2638 = vpack.c.b16 %v2413, %v2413
  %v2639 = vpack.c.b16 %v2414, %v2414
  %v2640 = vpack.c.b16 %v2415, %v2415
  %v2641 = vpack.c.b16 %v2416, %v2416
  %v2642 = vpack.c.b16 %v2417, %v2417
  %v2643 = vpack.c.b16 %v2418, %v2418
  %v2644 = vpack.c.b16 %v2419, %v2419
  %v2645 = vpack.c.b16 %v2420, %v2420
  %v2646 = vpack.c.b16 %v2421, %v2421
  %v2647 = vpack.c.b16 %v2422, %v2422
  %v2648 = vpack.c.b16 %v2423, %v2423
  %v2649 = vpack.c.b16 %v2424, %v2424
  %v2650 = vpack.c.b16 %v2425, %v2425
  %v2651 = vpack.c.b16 %v2426, %v2426
  %v2652 = vpack.c.b16 %v2427, %v2427
  %v2653 = vpack.c.b16 %v2428, %v2428
  %v2654 = vpack.c.b16 %v2429, %v2429
  %v2655 = vpack.c.b16 %v2430, %v2430
  %v2656 = vpack.c.b16 %v2431, %v2431
  %v2657 = vpack.c.b16 %v2432, %v2432
  %v2658 = vpack.c.b16 %v2433, %v2433
  %v2659 = vpack.c.b16 %v2434, %v2434
  %v2660 = vpack.c.b16 %v2435, %v2435
  %v2661 = vpack.c.b16 %v2436, %v2436
  %v2662 = vpack.c.b16 %v2437, %v2437
  %v2663 = vpack.c.b16 %v2438, %v2438
  %v2664 = vpack.c.b16 %v2439, %v2439
  %v2665 = vpack.c.b16 %v2440, %v2440
  %v2666 = vpack.c.b16 %v2441, %v2441
  %v2667 = vpack.c.b16 %v2442, %v2442
  %v2668 = vpack.c.b16 %v2443, %v2443
  %v2669 = vpack.c.b16 %v2444, %v2444
  %v2670 = vpack.c.b16 %v2445, %v2445
  %v2671 = vpack.c.b16 %v2446, %v2446
  %v2672 = vpack.c.b16 %v2447, %v2447
  %v2673 = vpack.c.b16 %v2448, %v2448
  %v2674 = vpack.c.b16 %v2449, %v2449
  %v2675 = vpack.c.b16 %v2450, %v2450
  %v2676 = vpack.c.b16 %v2451, %v2451
  %v2677 = vpack.c.b16 %v2452, %v2452
  %v2678 = vpack.c.b16 %v2453, %v2453
  %v2679 = vpack.c.b16 %v2454, %v2454
  %v2680 = vpack.c.b16 %v2455, %v2455
  %v2681 = vpack.c.b16 %v2456, %v2456
  %v2682 = vpack.c.b16 %v2457, %v2457
  %v2683 = vpack.c.b16 %v2458, %v2458
  %v2684 = vpack.c.b16 %v2459, %v2459
  %v2685 = vpack.c.b16 %v2460, %v2460
  %v2686 = vpack.c.b16 %v2461, %v2461
  %v2687 = vpack.c.b16 %v2462, %v2462
  %v2688 = vpack.c.b16 %v2463, %v2463
  %v2689 = vpack.c.b16 %v2464, %v2464
  %v2690 = vpack.c.b16 %v2465, %v2465
  %v2691 = vpack.c.b16 %v2466, %v2466
  %v2692 = vpack.c.b16 %v2467, %v2467
  %v2693 = vpack.c.b16 %v2468, %v2468
  %v2694 = vpack.c.b16 %v2469, %v2469
  %v2695 = vpack.c.b16 %v2470, %v2470
  %v2696 = vpack.c.b16 %v2471, %v2471
  %v2697 = vpack.c.b16 %v2472, %v2472
  %v2698 = vpack.c.b16 %v2473, %v2473
  %v2699 = vpack.c.b16 %v2474, %v2474
  %v2700 = vpack.c.b16 %v2475, %v2475
  %v2701 = vpack.c.b16 %v2476, %v2476
  %v2702 = vpack.c.b16 %v2477, %v2477
  %v2703 = vpack.c.b16 %v2478, %v2478
  %v2704 = vpack.c.b16 %v2479, %v2479
  %v2705 = vpack.c.b16 %v2480, %v2480
  %v2706 = vpack.c.b16 %v2481, %v2481
  %v2707 = vpack.c.b16 %v2482, %v2482
  %v2708 = vpack.c.b16 %v2483, %v2483
  %v2709 = vpack.c.b16 %v2484, %v2484
  %v2710 = vpack.c.b16 %v2485, %v2485
  %v2711 = vpack.c.b16 %v2486, %v2486
  %v2712 = vpack.c.b16 %v2487, %v2487
  %v2713 = vpack.c.b16 %v2488, %v2488
  %v2714 = vpack.c.b16 %v2489, %v2489
  %v2715 = vpack.c.b16 %v2490, %v2490
  %v2716 = vpack.c.b16 %v2491, %v2491
  %v2717 = vpack.c.b16 %v2492, %v2492
  %v2718 = vpack.c.b16 %v2493, %v2493
  %v2719 = vpack.c.b16 %v2494, %v2494
  %v2720 = vpack.c.b16 %v2495, %v2495
  %v2721 = vpack.c.b16 %v2496, %v2496
  %v2722 = vpack.c.b16 %v2497, %v2497
  %v2723 = vpack.c.b16 %v2498, %v2498
  %v2724 = vpack.c.b16 %v2499, %v2499
  %v2725 = vpack.c.b16 %v2500, %v2500
  %v2726 = vpack.c.b16 %v2501, %v2501
  %v2727 = vpack.c.b16 %v2502, %v2502
  %v2728 = vpack.c.b16 %v2503, %v2503
  %v2729 = vpack.c.b16 %v2504, %v2504
  %v2730 = vpack.c.b16 %v2505, %v2505
  %v2731 = vpack.c.b16 %v2506, %v2506
  %v2732 = vpack.c.b16 %v2507, %v2507
  %v2733 = vpack.c.b16 %v2508, %v2508
  %v2734 = vpack.c.b16 %v2509, %v2509
  %v2735 = vpack.c.b16 %v2510, %v2510
  %v2736 = vpack.c.b16 %v2511, %v2511
  %v2737 = vpack.c.b16 %v2512, %v2512
  %v2738 = vpack.c.b16 %v2513, %v2513
  %v2739 = vpack.c.b16 %v2514, %v2514
  %v2740 = vpack.c.b16 %v2515, %v2515
  %v2741 = vpack.c.b16 %v2516, %v2516
  %v2742 = vpack.c.b16 %v2517, %v2517
  %v2743 = vpack.c.b16 %v2518, %v2518
  %v2744 = vpack.c.b16 %v2519, %v2519
  %v2745 = vpack.c.b16 %v2520, %v2520
  %v2746 = vpack.c.b16 %v2521, %v2521
  %v2747 = vpack.c.b16 %v2522, %v2522
  %v2748 = vpack.c.b16 %v2523, %v2523
  %v2749 = vpack.c.b16 %v2524, %v2524
  %v2750 = vpack.c.b16 %v2525, %v2525
  %v2751 = vpack.c.b16 %v2526, %v2526
  %v2752 = vpack.c.b16 %v2527, %v2527
  %v2753 = vpack.c.b16 %v2528, %v2528
  %v2754 = vpack.c.b16 %v2529, %v2529
  %v2755 = vpack.c.b16 %v2530, %v2530
  %v2756 = vpack.c.b16 %v2531, %v2531
  %v2757 = vpack.c.b16 %v2532, %v2532
  %v2758 = vpack.c.b16 %v2533, %v2533
  %v2759 = vpack.c.b16 %v2534, %v2534
  %v2760 = vpack.c.b16 %v2535, %v2535
  %v2761 = vpack.c.b16 %v2536, %v2536
  %v2762 = vpack.c.b16 %v2537, %v2537
  %v2763 = vpack.c.b16 %v2538, %v2538
  %v2764 = vpack.c.b16 %v2539, %v2539
  %v2765 = vpack.c.b16 %v2540, %v2540
  %v2766 = vpack.c.b16 %v2541, %v2541
  %v2767 = vpack.c.b16 %v2542, %v2542
  %v2768 = vpack.c.b16 %v2543, %v2543
  %v2769 = vpack.c.b16 %v2544, %v2544
  %v2770 = vpack.c.b16 %v2545, %v2545
  %v2771 = vpack.c.b16 %v2546, %v2546
  %v2772 = vpack.c.b16 %v2547, %v2547
  %v2773 = vpack.c.b16 %v2548, %v2548
  %v2774 = vpack.c.b16 %v2549, %v2549
  %v2775 = vpack.c.b16 %v2550, %v2550
  %v2776 = vpack.c.b16 %v2551, %v2551
  %v2777 = vpack.c.b16 %v2552, %v2552
  %v2778 = vpack.c.b16 %v2553, %v2553
  %v2779 = vpack.c.b16 %v2554, %v2554
  %v2780 = vpack.c.b16 %v2555, %v2555
  %v2781 = vpack.c.b16 %v2556, %v2556
  %v2782 = vpack.c.b16 %v2557, %v2557
  %v2783 = vpack.c.b16 %v2558, %v2558
  %v2784 = vpack.c.b16 %v2559, %v2559
  %v2785 = vpack.c.b16 %v2560, %v2560
  %v2786 = vpack.c.b16 %v2561, %v2561
  %v2787 = vpack.c.b16 %v2562, %v2562
  %v2788 = vpack.c.b16 %v2563, %v2563
  %v2789 = vpack.c.b16 %v2564, %v2564
  %v2790 = vpack.c.b16 %v2565, %v2565
  %v2791 = vpack.c.b16 %v2566, %v2566
  %v2792 = vpack.c.b16 %v2567, %v2567
  %v2793 = vpack.c.b16 %v2568, %v2568
  %v2794 = vpack.c.b16 %v2569, %v2569
  %v2795 = vpack.c.b16 %v2570, %v2570
  %v2796 = vpack.c.b16 %v2571, %v2571
  %v2797 = vpack.c.b16 %v2572, %v2572
  %v2798 = vpack.c.b16 %v2573, %v2573
  %v2799 = vpack.c.b16 %v2574, %v2574
  %v2800 = vpack.c.b16 %v2575, %v2575
  %v2801 = vpack.c.b16 %v2576, %v2576
  %v2802 = vpack.c.b16 %v2577, %v2577
  %v2803 = vpack.c.b16 %v2578, %v2578
  %v2804 = vpack.c.b16 %v2579, %v2579
  %v2805 = vpack.c.b16 %v2580, %v2580
  %v2806 = vpack.c.b16 %v2581, %v2581
  %v2807 = vpack.c.b16 %v2582, %v2582
  %v2808 = vpack.c.b16 %v2583, %v2583
  %v2809 = vpack.c.b16 %v2584, %v2584
  %v2810 = vpack.c.b16 %v2585, %v2585
  %v2811 = vpack.c.b16 %v2586, %v2586
  %v2812 = vpack.c.b16 %v2587, %v2587
  %v2813 = vpack.c.b16 %v2588, %v2588
  %v2814 = vpack.c.b16 %v2589, %v2589
  %v2815 = vpack.c.b16 %v2590, %v2590
  %v2816 = vpack.c.b16 %v2591, %v2591
  %v2817 = vpack.c.b16 %v2592, %v2592
  %v2818 = vpack.c.b16 %v2593, %v2593
  %v2819 = vpack.c.b16 %v2594, %v2594
  %v2820 = vpack.c.b16 %v2595, %v2595
  %v2821 = vpack.c.b16 %v2596, %v2596
  %v2822 = vpack.c.b16 %v2597, %v2597
  %v2823 = vpack.c.b16 %v2598, %v2598
  %v2824 = vpack.c.b16 %v2599, %v2599
  %v2825 = vpack.c.b16 %v2600, %v2600
  %3051 = vst [vmem:[%s3] sm:$0xf] %v2601
  %3052 = vst [vmem:[%s3 + $0x4] sm:$0xf] %v2602
  %3053 = vst [vmem:[%s3 + $0x8] sm:$0xf] %v2603
  %3054 = vst [vmem:[%s3 + $0xc] sm:$0xf] %v2604
  %3055 = vst [vmem:[%s3 + $0x10] sm:$0xf] %v2605
  %3056 = vst [vmem:[%s3 + $0x14] sm:$0xf] %v2606
  %3057 = vst [vmem:[%s3 + $0x18] sm:$0xf] %v2607
  %3058 = vst [vmem:[%s3 + $0x1c] sm:$0xf] %v2608
  %3059 = vst [vmem:[%s3 + $0x20] sm:$0xf] %v2609
  %3060 = vst [vmem:[%s3 + $0x24] sm:$0xf] %v2610
  %3061 = vst [vmem:[%s3 + $0x28] sm:$0xf] %v2611
  %3062 = vst [vmem:[%s3 + $0x2c] sm:$0xf] %v2612
  %3063 = vst [vmem:[%s3 + $0x30] sm:$0xf] %v2613
  %3064 = vst [vmem:[%s3 + $0x34] sm:$0xf] %v2614
  %3065 = vst [vmem:[%s3 + $0x38] sm:$0xf] %v2615
  %3066 = vst [vmem:[%s3 + $0x3c] sm:$0xf] %v2616
  %3067 = vst [vmem:[%s3 + $0x40] sm:$0xf] %v2617
  %3068 = vst [vmem:[%s3 + $0x44] sm:$0xf] %v2618
  %3069 = vst [vmem:[%s3 + $0x48] sm:$0xf] %v2619
  %3070 = vst [vmem:[%s3 + $0x4c] sm:$0xf] %v2620
  %3071 = vst [vmem:[%s3 + $0x50] sm:$0xf] %v2621
  %3072 = vst [vmem:[%s3 + $0x54] sm:$0xf] %v2622
  %3073 = vst [vmem:[%s3 + $0x58] sm:$0xf] %v2623
  %3074 = vst [vmem:[%s3 + $0x5c] sm:$0xf] %v2624
  %3075 = vst [vmem:[%s3 + $0x60] sm:$0xf] %v2625
  %3076 = vst [vmem:[%s3 + $0x64] sm:$0xf] %v2626
  %3077 = vst [vmem:[%s3 + $0x68] sm:$0xf] %v2627
  %3078 = vst [vmem:[%s3 + $0x6c] sm:$0xf] %v2628
  %3079 = vst [vmem:[%s3 + $0x70] sm:$0xf] %v2629
  %3080 = vst [vmem:[%s3 + $0x74] sm:$0xf] %v2630
  %3081 = vst [vmem:[%s3 + $0x78] sm:$0xf] %v2631
  %3082 = vst [vmem:[%s3 + $0x7c] sm:$0xf] %v2632
  %3083 = vst [vmem:[%s3 + $0x80] sm:$0xf] %v2633
  %3084 = vst [vmem:[%s3 + $0x84] sm:$0xf] %v2634
  %3085 = vst [vmem:[%s3 + $0x88] sm:$0xf] %v2635
  %3086 = vst [vmem:[%s3 + $0x8c] sm:$0xf] %v2636
  %3087 = vst [vmem:[%s3 + $0x90] sm:$0xf] %v2637
  %3088 = vst [vmem:[%s3 + $0x94] sm:$0xf] %v2638
  %3089 = vst [vmem:[%s3 + $0x98] sm:$0xf] %v2639
  %3090 = vst [vmem:[%s3 + $0x9c] sm:$0xf] %v2640
  %3091 = vst [vmem:[%s3 + $0xa0] sm:$0xf] %v2641
  %3092 = vst [vmem:[%s3 + $0xa4] sm:$0xf] %v2642
  %3093 = vst [vmem:[%s3 + $0xa8] sm:$0xf] %v2643
  %3094 = vst [vmem:[%s3 + $0xac] sm:$0xf] %v2644
  %3095 = vst [vmem:[%s3 + $0xb0] sm:$0xf] %v2645
  %3096 = vst [vmem:[%s3 + $0xb4] sm:$0xf] %v2646
  %3097 = vst [vmem:[%s3 + $0xb8] sm:$0xf] %v2647
  %3098 = vst [vmem:[%s3 + $0xbc] sm:$0xf] %v2648
  %3099 = vst [vmem:[%s3 + $0xc0] sm:$0xf] %v2649
  %3100 = vst [vmem:[%s3 + $0xc4] sm:$0xf] %v2650
  %3101 = vst [vmem:[%s3 + $0xc8] sm:$0xf] %v2651
  %3102 = vst [vmem:[%s3 + $0xcc] sm:$0xf] %v2652
  %3103 = vst [vmem:[%s3 + $0xd0] sm:$0xf] %v2653
  %3104 = vst [vmem:[%s3 + $0xd4] sm:$0xf] %v2654
  %3105 = vst [vmem:[%s3 + $0xd8] sm:$0xf] %v2655
  %3106 = vst [vmem:[%s3 + $0xdc] sm:$0xf] %v2656
  %3107 = vst [vmem:[%s3 + $0xe0] sm:$0xf] %v2657
  %3108 = vst [vmem:[%s3 + $0xe4] sm:$0xf] %v2658
  %3109 = vst [vmem:[%s3 + $0xe8] sm:$0xf] %v2659
  %3110 = vst [vmem:[%s3 + $0xec] sm:$0xf] %v2660
  %3111 = vst [vmem:[%s3 + $0xf0] sm:$0xf] %v2661
  %3112 = vst [vmem:[%s3 + $0xf4] sm:$0xf] %v2662
  %3113 = vst [vmem:[%s3 + $0xf8] sm:$0xf] %v2663
  %3114 = vst [vmem:[%s3 + $0xfc] sm:$0xf] %v2664
  %3115 = vst [vmem:[%s3 + $0x100] sm:$0xf] %v2665
  %3116 = vst [vmem:[%s3 + $0x104] sm:$0xf] %v2666
  %3117 = vst [vmem:[%s3 + $0x108] sm:$0xf] %v2667
  %3118 = vst [vmem:[%s3 + $0x10c] sm:$0xf] %v2668
  %3119 = vst [vmem:[%s3 + $0x110] sm:$0xf] %v2669
  %3120 = vst [vmem:[%s3 + $0x114] sm:$0xf] %v2670
  %3121 = vst [vmem:[%s3 + $0x118] sm:$0xf] %v2671
  %3122 = vst [vmem:[%s3 + $0x11c] sm:$0xf] %v2672
  %3123 = vst [vmem:[%s3 + $0x120] sm:$0xf] %v2673
  %3124 = vst [vmem:[%s3 + $0x124] sm:$0xf] %v2674
  %3125 = vst [vmem:[%s3 + $0x128] sm:$0xf] %v2675
  %3126 = vst [vmem:[%s3 + $0x12c] sm:$0xf] %v2676
  %3127 = vst [vmem:[%s3 + $0x130] sm:$0xf] %v2677
  %3128 = vst [vmem:[%s3 + $0x134] sm:$0xf] %v2678
  %3129 = vst [vmem:[%s3 + $0x138] sm:$0xf] %v2679
  %3130 = vst [vmem:[%s3 + $0x13c] sm:$0xf] %v2680
  %3131 = vst [vmem:[%s3 + $0x140] sm:$0xf] %v2681
  %3132 = vst [vmem:[%s3 + $0x144] sm:$0xf] %v2682
  %3133 = vst [vmem:[%s3 + $0x148] sm:$0xf] %v2683
  %3134 = vst [vmem:[%s3 + $0x14c] sm:$0xf] %v2684
  %3135 = vst [vmem:[%s3 + $0x150] sm:$0xf] %v2685
  %3136 = vst [vmem:[%s3 + $0x154] sm:$0xf] %v2686
  %3137 = vst [vmem:[%s3 + $0x158] sm:$0xf] %v2687
  %3138 = vst [vmem:[%s3 + $0x15c] sm:$0xf] %v2688
  %3139 = vst [vmem:[%s3 + $0x160] sm:$0xf] %v2689
  %3140 = vst [vmem:[%s3 + $0x164] sm:$0xf] %v2690
  %3141 = vst [vmem:[%s3 + $0x168] sm:$0xf] %v2691
  %3142 = vst [vmem:[%s3 + $0x16c] sm:$0xf] %v2692
  %3143 = vst [vmem:[%s3 + $0x170] sm:$0xf] %v2693
  %3144 = vst [vmem:[%s3 + $0x174] sm:$0xf] %v2694
  %3145 = vst [vmem:[%s3 + $0x178] sm:$0xf] %v2695
  %3146 = vst [vmem:[%s3 + $0x17c] sm:$0xf] %v2696
  %3147 = vst [vmem:[%s3 + $0x180] sm:$0xf] %v2697
  %3148 = vst [vmem:[%s3 + $0x184] sm:$0xf] %v2698
  %3149 = vst [vmem:[%s3 + $0x188] sm:$0xf] %v2699
  %3150 = vst [vmem:[%s3 + $0x18c] sm:$0xf] %v2700
  %3151 = vst [vmem:[%s3 + $0x190] sm:$0xf] %v2701
  %3152 = vst [vmem:[%s3 + $0x194] sm:$0xf] %v2702
  %3153 = vst [vmem:[%s3 + $0x198] sm:$0xf] %v2703
  %3154 = vst [vmem:[%s3 + $0x19c] sm:$0xf] %v2704
  %3155 = vst [vmem:[%s3 + $0x1a0] sm:$0xf] %v2705
  %3156 = vst [vmem:[%s3 + $0x1a4] sm:$0xf] %v2706
  %3157 = vst [vmem:[%s3 + $0x1a8] sm:$0xf] %v2707
  %3158 = vst [vmem:[%s3 + $0x1ac] sm:$0xf] %v2708
  %3159 = vst [vmem:[%s3 + $0x1b0] sm:$0xf] %v2709
  %3160 = vst [vmem:[%s3 + $0x1b4] sm:$0xf] %v2710
  %3161 = vst [vmem:[%s3 + $0x1b8] sm:$0xf] %v2711
  %3162 = vst [vmem:[%s3 + $0x1bc] sm:$0xf] %v2712
  %3163 = vst [vmem:[%s3 + $0x1c0] sm:$0xf] %v2713
  %3164 = vst [vmem:[%s3 + $0x1c4] sm:$0xf] %v2714
  %3165 = vst [vmem:[%s3 + $0x1c8] sm:$0xf] %v2715
  %3166 = vst [vmem:[%s3 + $0x1cc] sm:$0xf] %v2716
  %3167 = vst [vmem:[%s3 + $0x1d0] sm:$0xf] %v2717
  %3168 = vst [vmem:[%s3 + $0x1d4] sm:$0xf] %v2718
  %3169 = vst [vmem:[%s3 + $0x1d8] sm:$0xf] %v2719
  %3170 = vst [vmem:[%s3 + $0x1dc] sm:$0xf] %v2720
  %3171 = vst [vmem:[%s3 + $0x1e0] sm:$0xf] %v2721
  %3172 = vst [vmem:[%s3 + $0x1e4] sm:$0xf] %v2722
  %3173 = vst [vmem:[%s3 + $0x1e8] sm:$0xf] %v2723
  %3174 = vst [vmem:[%s3 + $0x1ec] sm:$0xf] %v2724
  %3175 = vst [vmem:[%s3 + $0x1f0] sm:$0xf] %v2725
  %3176 = vst [vmem:[%s3 + $0x1f4] sm:$0xf] %v2726
  %3177 = vst [vmem:[%s3 + $0x1f8] sm:$0xf] %v2727
  %3178 = vst [vmem:[%s3 + $0x1fc] sm:$0xf] %v2728
  %3179 = vst [vmem:[%s3 + $0x200] sm:$0xf] %v2729
  %3180 = vst [vmem:[%s3 + $0x204] sm:$0xf] %v2730
  %3181 = vst [vmem:[%s3 + $0x208] sm:$0xf] %v2731
  %3182 = vst [vmem:[%s3 + $0x20c] sm:$0xf] %v2732
  %3183 = vst [vmem:[%s3 + $0x210] sm:$0xf] %v2733
  %3184 = vst [vmem:[%s3 + $0x214] sm:$0xf] %v2734
  %3185 = vst [vmem:[%s3 + $0x218] sm:$0xf] %v2735
  %3186 = vst [vmem:[%s3 + $0x21c] sm:$0xf] %v2736
  %3187 = vst [vmem:[%s3 + $0x220] sm:$0xf] %v2737
  %3188 = vst [vmem:[%s3 + $0x224] sm:$0xf] %v2738
  %3189 = vst [vmem:[%s3 + $0x228] sm:$0xf] %v2739
  %3190 = vst [vmem:[%s3 + $0x22c] sm:$0xf] %v2740
  %3191 = vst [vmem:[%s3 + $0x230] sm:$0xf] %v2741
  %3192 = vst [vmem:[%s3 + $0x234] sm:$0xf] %v2742
  %3193 = vst [vmem:[%s3 + $0x238] sm:$0xf] %v2743
  %3194 = vst [vmem:[%s3 + $0x23c] sm:$0xf] %v2744
  %3195 = vst [vmem:[%s3 + $0x240] sm:$0xf] %v2745
  %3196 = vst [vmem:[%s3 + $0x244] sm:$0xf] %v2746
  %3197 = vst [vmem:[%s3 + $0x248] sm:$0xf] %v2747
  %3198 = vst [vmem:[%s3 + $0x24c] sm:$0xf] %v2748
  %3199 = vst [vmem:[%s3 + $0x250] sm:$0xf] %v2749
  %3200 = vst [vmem:[%s3 + $0x254] sm:$0xf] %v2750
  %3201 = vst [vmem:[%s3 + $0x258] sm:$0xf] %v2751
  %3202 = vst [vmem:[%s3 + $0x25c] sm:$0xf] %v2752
  %3203 = vst [vmem:[%s3 + $0x260] sm:$0xf] %v2753
  %3204 = vst [vmem:[%s3 + $0x264] sm:$0xf] %v2754
  %3205 = vst [vmem:[%s3 + $0x268] sm:$0xf] %v2755
  %3206 = vst [vmem:[%s3 + $0x26c] sm:$0xf] %v2756
  %3207 = vst [vmem:[%s3 + $0x270] sm:$0xf] %v2757
  %3208 = vst [vmem:[%s3 + $0x274] sm:$0xf] %v2758
  %3209 = vst [vmem:[%s3 + $0x278] sm:$0xf] %v2759
  %3210 = vst [vmem:[%s3 + $0x27c] sm:$0xf] %v2760
  %3211 = vst [vmem:[%s3 + $0x280] sm:$0xf] %v2761
  %3212 = vst [vmem:[%s3 + $0x284] sm:$0xf] %v2762
  %3213 = vst [vmem:[%s3 + $0x288] sm:$0xf] %v2763
  %3214 = vst [vmem:[%s3 + $0x28c] sm:$0xf] %v2764
  %3215 = vst [vmem:[%s3 + $0x290] sm:$0xf] %v2765
  %3216 = vst [vmem:[%s3 + $0x294] sm:$0xf] %v2766
  %3217 = vst [vmem:[%s3 + $0x298] sm:$0xf] %v2767
  %3218 = vst [vmem:[%s3 + $0x29c] sm:$0xf] %v2768
  %3219 = vst [vmem:[%s3 + $0x2a0] sm:$0xf] %v2769
  %3220 = vst [vmem:[%s3 + $0x2a4] sm:$0xf] %v2770
  %3221 = vst [vmem:[%s3 + $0x2a8] sm:$0xf] %v2771
  %3222 = vst [vmem:[%s3 + $0x2ac] sm:$0xf] %v2772
  %3223 = vst [vmem:[%s3 + $0x2b0] sm:$0xf] %v2773
  %3224 = vst [vmem:[%s3 + $0x2b4] sm:$0xf] %v2774
  %3225 = vst [vmem:[%s3 + $0x2b8] sm:$0xf] %v2775
  %3226 = vst [vmem:[%s3 + $0x2bc] sm:$0xf] %v2776
  %3227 = vst [vmem:[%s3 + $0x2c0] sm:$0xf] %v2777
  %3228 = vst [vmem:[%s3 + $0x2c4] sm:$0xf] %v2778
  %3229 = vst [vmem:[%s3 + $0x2c8] sm:$0xf] %v2779
  %3230 = vst [vmem:[%s3 + $0x2cc] sm:$0xf] %v2780
  %3231 = vst [vmem:[%s3 + $0x2d0] sm:$0xf] %v2781
  %3232 = vst [vmem:[%s3 + $0x2d4] sm:$0xf] %v2782
  %3233 = vst [vmem:[%s3 + $0x2d8] sm:$0xf] %v2783
  %3234 = vst [vmem:[%s3 + $0x2dc] sm:$0xf] %v2784
  %3235 = vst [vmem:[%s3 + $0x2e0] sm:$0xf] %v2785
  %3236 = vst [vmem:[%s3 + $0x2e4] sm:$0xf] %v2786
  %3237 = vst [vmem:[%s3 + $0x2e8] sm:$0xf] %v2787
  %3238 = vst [vmem:[%s3 + $0x2ec] sm:$0xf] %v2788
  %3239 = vst [vmem:[%s3 + $0x2f0] sm:$0xf] %v2789
  %3240 = vst [vmem:[%s3 + $0x2f4] sm:$0xf] %v2790
  %3241 = vst [vmem:[%s3 + $0x2f8] sm:$0xf] %v2791
  %3242 = vst [vmem:[%s3 + $0x2fc] sm:$0xf] %v2792
  %3243 = vst [vmem:[%s3 + $0x300] sm:$0xf] %v2793
  %3244 = vst [vmem:[%s3 + $0x304] sm:$0xf] %v2794
  %3245 = vst [vmem:[%s3 + $0x308] sm:$0xf] %v2795
  %3246 = vst [vmem:[%s3 + $0x30c] sm:$0xf] %v2796
  %3247 = vst [vmem:[%s3 + $0x310] sm:$0xf] %v2797
  %3248 = vst [vmem:[%s3 + $0x314] sm:$0xf] %v2798
  %3249 = vst [vmem:[%s3 + $0x318] sm:$0xf] %v2799
  %3250 = vst [vmem:[%s3 + $0x31c] sm:$0xf] %v2800
  %3251 = vst [vmem:[%s3 + $0x320] sm:$0xf] %v2801
  %3252 = vst [vmem:[%s3 + $0x324] sm:$0xf] %v2802
  %3253 = vst [vmem:[%s3 + $0x328] sm:$0xf] %v2803
  %3254 = vst [vmem:[%s3 + $0x32c] sm:$0xf] %v2804
  %3255 = vst [vmem:[%s3 + $0x330] sm:$0xf] %v2805
  %3256 = vst [vmem:[%s3 + $0x334] sm:$0xf] %v2806
  %3257 = vst [vmem:[%s3 + $0x338] sm:$0xf] %v2807
  %3258 = vst [vmem:[%s3 + $0x33c] sm:$0xf] %v2808
  %3259 = vst [vmem:[%s3 + $0x340] sm:$0xf] %v2809
  %3260 = vst [vmem:[%s3 + $0x344] sm:$0xf] %v2810
  %3261 = vst [vmem:[%s3 + $0x348] sm:$0xf] %v2811
  %3262 = vst [vmem:[%s3 + $0x34c] sm:$0xf] %v2812
  %3263 = vst [vmem:[%s3 + $0x350] sm:$0xf] %v2813
  %3264 = vst [vmem:[%s3 + $0x354] sm:$0xf] %v2814
  %3265 = vst [vmem:[%s3 + $0x358] sm:$0xf] %v2815
  %3266 = vst [vmem:[%s3 + $0x35c] sm:$0xf] %v2816
  %3267 = vst [vmem:[%s3 + $0x360] sm:$0xf] %v2817
  %3268 = vst [vmem:[%s3 + $0x364] sm:$0xf] %v2818
  %3269 = vst [vmem:[%s3 + $0x368] sm:$0xf] %v2819
  %3270 = vst [vmem:[%s3 + $0x36c] sm:$0xf] %v2820
  %3271 = vst [vmem:[%s3 + $0x370] sm:$0xf] %v2821
  %3272 = vst [vmem:[%s3 + $0x374] sm:$0xf] %v2822
  %3273 = vst [vmem:[%s3 + $0x378] sm:$0xf] %v2823
  %3274 = vst [vmem:[%s3 + $0x37c] sm:$0xf] %v2824
  %3275 = vst [vmem:[%s3 + $0x380] sm:$0xf] %v2825
  %v3276 = vadd.f32 %v1925, %v1926
  %v3277 = vadd.f32 %v3276, %v1927
  %v3278 = vadd.f32 %v3277, %v1928
  %v3279 = vadd.f32 %v3278, %v1929
  %v3280 = vadd.f32 %v3279, %v1930
  %v3281 = vadd.f32 %v3280, %v1931
  %v3282 = vadd.f32 %v3281, %v1932
  %v3283 = vadd.f32 %v3282, %v1933
  %v3284 = vadd.f32 %v3283, %v1934
  %v3285 = vadd.f32 %v3284, %v1935
  %v3286 = vadd.f32 %v3285, %v1936
  %v3287 = vadd.f32 %v3286, %v1937
  %v3288 = vadd.f32 %v3287, %v1938
  %v3289 = vadd.f32 %v3288, %v1939
  %v3290 = vadd.f32 %v3289, %v1940
  %v3291 = vadd.f32 %v3290, %v1941
  %v3292 = vadd.f32 %v3291, %v1942
  %v3293 = vadd.f32 %v3292, %v1943
  %v3294 = vadd.f32 %v3293, %v1944
  %v3295 = vadd.f32 %v3294, %v1945
  %v3296 = vadd.f32 %v3295, %v1946
  %v3297 = vadd.f32 %v3296, %v1947
  %v3298 = vadd.f32 %v3297, %v1948
  %v3299 = vadd.f32 %v3298, %v1949
  %v3300 = vadd.f32 %v3299, %v1950
  %v3301 = vadd.f32 %v3300, %v1951
  %v3302 = vadd.f32 %v3301, %v1952
  %v3303 = vadd.f32 %v3302, %v1953
  %v3304 = vadd.f32 %v3303, %v1954
  %v3305 = vadd.f32 %v3304, %v1955
  %v3306 = vadd.f32 %v3305, %v1956
  %v3307 = vadd.f32 %v3306, %v1957
  %v3308 = vadd.f32 %v3307, %v1958
  %v3309 = vadd.f32 %v3308, %v1959
  %v3310 = vadd.f32 %v3309, %v1960
  %v3311 = vadd.f32 %v3310, %v1961
  %v3312 = vadd.f32 %v3311, %v1962
  %v3313 = vadd.f32 %v3312, %v1963
  %v3314 = vadd.f32 %v3313, %v1964
  %v3315 = vadd.f32 %v3314, %v1965
  %v3316 = vadd.f32 %v3315, %v1966
  %v3317 = vadd.f32 %v3316, %v1967
  %v3318 = vadd.f32 %v3317, %v1968
  %v3319 = vadd.f32 %v3318, %v1969
  %v3320 = vadd.f32 %v3319, %v1970
  %v3321 = vadd.f32 %v3320, %v1971
  %v3322 = vadd.f32 %v3321, %v1972
  %v3323 = vadd.f32 %v3322, %v1973
  %v3324 = vadd.f32 %v3323, %v1974
  %v3325 = vadd.f32 %v3324, %v1975
  %v3326 = vadd.f32 %v3325, %v1976
  %v3327 = vadd.f32 %v3326, %v1977
  %v3328 = vadd.f32 %v3327, %v1978
  %v3329 = vadd.f32 %v3328, %v1979
  %v3330 = vadd.f32 %v3329, %v1980
  %v3331 = vadd.f32 %v3330, %v1981
  %v3332 = vadd.f32 %v3331, %v1982
  %v3333 = vadd.f32 %v3332, %v1983
  %v3334 = vadd.f32 %v3333, %v1984
  %v3335 = vadd.f32 %v3334, %v1985
  %v3336 = vadd.f32 %v3335, %v1986
  %v3337 = vadd.f32 %v3336, %v1987
  %v3338 = vadd.f32 %v3337, %v1988
  %v3339 = vadd.f32 %v3338, %v1989
  %v3340 = vadd.f32 %v3339, %v1990
  %v3341 = vadd.f32 %v3340, %v1991
  %v3342 = vadd.f32 %v3341, %v1992
  %v3343 = vadd.f32 %v3342, %v1993
  %v3344 = vadd.f32 %v3343, %v1994
  %v3345 = vadd.f32 %v3344, %v1995
  %v3346 = vadd.f32 %v3345, %v1996
  %v3347 = vadd.f32 %v3346, %v1997
  %v3348 = vadd.f32 %v3347, %v1998
  %v3349 = vadd.f32 %v3348, %v1999
  %v3350 = vadd.f32 %v3349, %v2000
  %v3351 = vadd.f32 %v3350, %v2001
  %v3352 = vadd.f32 %v3351, %v2002
  %v3353 = vadd.f32 %v3352, %v2003
  %v3354 = vadd.f32 %v3353, %v2004
  %v3355 = vadd.f32 %v3354, %v2005
  %v3356 = vadd.f32 %v3355, %v2006
  %v3357 = vadd.f32 %v3356, %v2007
  %v3358 = vadd.f32 %v3357, %v2008
  %v3359 = vadd.f32 %v3358, %v2009
  %v3360 = vadd.f32 %v3359, %v2010
  %v3361 = vadd.f32 %v3360, %v2011
  %v3362 = vadd.f32 %v3361, %v2012
  %v3363 = vadd.f32 %v3362, %v2013
  %v3364 = vadd.f32 %v3363, %v2014
  %v3365 = vadd.f32 %v3364, %v2015
  %v3366 = vadd.f32 %v3365, %v2016
  %v3367 = vadd.f32 %v3366, %v2017
  %v3368 = vadd.f32 %v3367, %v2018
  %v3369 = vadd.f32 %v3368, %v2019
  %v3370 = vadd.f32 %v3369, %v2020
  %v3371 = vadd.f32 %v3370, %v2021
  %v3372 = vadd.f32 %v3371, %v2022
  %v3373 = vadd.f32 %v3372, %v2023
  %v3374 = vadd.f32 %v3373, %v2024
  %v3375 = vadd.f32 %v3374, %v2025
  %v3376 = vadd.f32 %v3375, %v2026
  %v3377 = vadd.f32 %v3376, %v2027
  %v3378 = vadd.f32 %v3377, %v2028
  %v3379 = vadd.f32 %v3378, %v2029
  %v3380 = vadd.f32 %v3379, %v2030
  %v3381 = vadd.f32 %v3380, %v2031
  %v3382 = vadd.f32 %v3381, %v2032
  %v3383 = vadd.f32 %v3382, %v2033
  %v3384 = vadd.f32 %v3383, %v2034
  %v3385 = vadd.f32 %v3384, %v2035
  %v3386 = vadd.f32 %v3385, %v2036
  %v3387 = vadd.f32 %v3386, %v2037
  %v3388 = vadd.f32 %v3387, %v2038
  %v3389 = vadd.f32 %v3388, %v2039
  %v3390 = vadd.f32 %v3389, %v2040
  %v3391 = vadd.f32 %v3390, %v2041
  %v3392 = vadd.f32 %v3391, %v2042
  %v3393 = vadd.f32 %v3392, %v2043
  %v3394 = vadd.f32 %v3393, %v2044
  %v3395 = vadd.f32 %v3394, %v2045
  %v3396 = vadd.f32 %v3395, %v2046
  %v3397 = vadd.f32 %v3396, %v2047
  %v3398 = vadd.f32 %v3397, %v2048
  %v3399 = vadd.f32 %v3398, %v2049
  %v3400 = vadd.f32 %v3399, %v2050
  %v3401 = vadd.f32 %v3400, %v2051
  %v3402 = vadd.f32 %v3401, %v2052
  %v3403 = vadd.f32 %v3402, %v2053
  %v3404 = vadd.f32 %v3403, %v2054
  %v3405 = vadd.f32 %v3404, %v2055
  %v3406 = vadd.f32 %v3405, %v2056
  %v3407 = vadd.f32 %v3406, %v2057
  %v3408 = vadd.f32 %v3407, %v2058
  %v3409 = vadd.f32 %v3408, %v2059
  %v3410 = vadd.f32 %v3409, %v2060
  %v3411 = vadd.f32 %v3410, %v2061
  %v3412 = vadd.f32 %v3411, %v2062
  %v3413 = vadd.f32 %v3412, %v2063
  %v3414 = vadd.f32 %v3413, %v2064
  %v3415 = vadd.f32 %v3414, %v2065
  %v3416 = vadd.f32 %v3415, %v2066
  %v3417 = vadd.f32 %v3416, %v2067
  %v3418 = vadd.f32 %v3417, %v2068
  %v3419 = vadd.f32 %v3418, %v2069
  %v3420 = vadd.f32 %v3419, %v2070
  %v3421 = vadd.f32 %v3420, %v2071
  %v3422 = vadd.f32 %v3421, %v2072
  %v3423 = vadd.f32 %v3422, %v2073
  %v3424 = vadd.f32 %v3423, %v2074
  %v3425 = vadd.f32 %v3424, %v2075
  %v3426 = vadd.f32 %v3425, %v2076
  %v3427 = vadd.f32 %v3426, %v2077
  %v3428 = vadd.f32 %v3427, %v2078
  %v3429 = vadd.f32 %v3428, %v2079
  %v3430 = vadd.f32 %v3429, %v2080
  %v3431 = vadd.f32 %v3430, %v2081
  %v3432 = vadd.f32 %v3431, %v2082
  %v3433 = vadd.f32 %v3432, %v2083
  %v3434 = vadd.f32 %v3433, %v2084
  %v3435 = vadd.f32 %v3434, %v2085
  %v3436 = vadd.f32 %v3435, %v2086
  %v3437 = vadd.f32 %v3436, %v2087
  %v3438 = vadd.f32 %v3437, %v2088
  %v3439 = vadd.f32 %v3438, %v2089
  %v3440 = vadd.f32 %v3439, %v2090
  %v3441 = vadd.f32 %v3440, %v2091
  %v3442 = vadd.f32 %v3441, %v2092
  %v3443 = vadd.f32 %v3442, %v2093
  %v3444 = vadd.f32 %v3443, %v2094
  %v3445 = vadd.f32 %v3444, %v2095
  %v3446 = vadd.f32 %v3445, %v2096
  %v3447 = vadd.f32 %v3446, %v2097
  %v3448 = vadd.f32 %v3447, %v2098
  %v3449 = vadd.f32 %v3448, %v2099
  %v3450 = vadd.f32 %v3449, %v2100
  %v3451 = vadd.f32 %v3450, %v2101
  %v3452 = vadd.f32 %v3451, %v2102
  %v3453 = vadd.f32 %v3452, %v2103
  %v3454 = vadd.f32 %v3453, %v2104
  %v3455 = vadd.f32 %v3454, %v2105
  %v3456 = vadd.f32 %v3455, %v2106
  %v3457 = vadd.f32 %v3456, %v2107
  %v3458 = vadd.f32 %v3457, %v2108
  %v3459 = vadd.f32 %v3458, %v2109
  %v3460 = vadd.f32 %v3459, %v2110
  %v3461 = vadd.f32 %v3460, %v2111
  %v3462 = vadd.f32 %v3461, %v2112
  %v3463 = vadd.f32 %v3462, %v2113
  %v3464 = vadd.f32 %v3463, %v2114
  %v3465 = vadd.f32 %v3464, %v2115
  %v3466 = vadd.f32 %v3465, %v2116
  %v3467 = vadd.f32 %v3466, %v2117
  %v3468 = vadd.f32 %v3467, %v2118
  %v3469 = vadd.f32 %v3468, %v2119
  %v3470 = vadd.f32 %v3469, %v2120
  %v3471 = vadd.f32 %v3470, %v2121
  %v3472 = vadd.f32 %v3471, %v2122
  %v3473 = vadd.f32 %v3472, %v2123
  %v3474 = vadd.f32 %v3473, %v2124
  %v3475 = vadd.f32 %v3474, %v2125
  %v3476 = vadd.f32 %v3475, %v2126
  %v3477 = vadd.f32 %v3476, %v2127
  %v3478 = vadd.f32 %v3477, %v2128
  %v3479 = vadd.f32 %v3478, %v2129
  %v3480 = vadd.f32 %v3479, %v2130
  %v3481 = vadd.f32 %v3480, %v2131
  %v3482 = vadd.f32 %v3481, %v2132
  %v3483 = vadd.f32 %v3482, %v2133
  %v3484 = vadd.f32 %v3483, %v2134
  %v3485 = vadd.f32 %v3484, %v2135
  %v3486 = vadd.f32 %v3485, %v2136
  %v3487 = vadd.f32 %v3486, %v2137
  %v3488 = vadd.f32 %v3487, %v2138
  %v3489 = vadd.f32 %v3488, %v2139
  %v3490 = vadd.f32 %v3489, %v2140
  %v3491 = vadd.f32 %v3490, %v2141
  %v3492 = vadd.f32 %v3491, %v2142
  %v3493 = vadd.f32 %v3492, %v2143
  %v3494 = vadd.f32 %v3493, %v2144
  %v3495 = vadd.f32 %v3494, %v2145
  %v3496 = vadd.f32 %v3495, %v2146
  %v3497 = vadd.f32 %v3496, %v2147
  %v3498 = vadd.f32 %v3497, %v2148
  %v3499 = vadd.f32 %v3498, %v2149
  %v3500 = vrot.slane %v3499, 4
  %v3501 = vadd.f32 %v3499, %v3500
  %v3502 = vrot.slane %v3501, 2
  %v3503 = vadd.f32 %v3501, %v3502
  %v3504 = vrot.slane %v3503, 1
  %v3505 = vadd.f32 %v3503, %v3504
  %v3506 = vmul.f32 %v1925, %v1925
  %v3507 = vmul.f32 %v1926, %v1926
  %v3508 = vmul.f32 %v1927, %v1927
  %v3509 = vmul.f32 %v1928, %v1928
  %v3510 = vmul.f32 %v1929, %v1929
  %v3511 = vmul.f32 %v1930, %v1930
  %v3512 = vmul.f32 %v1931, %v1931
  %v3513 = vmul.f32 %v1932, %v1932
  %v3514 = vmul.f32 %v1933, %v1933
  %v3515 = vmul.f32 %v1934, %v1934
  %v3516 = vmul.f32 %v1935, %v1935
  %v3517 = vmul.f32 %v1936, %v1936
  %v3518 = vmul.f32 %v1937, %v1937
  %v3519 = vmul.f32 %v1938, %v1938
  %v3520 = vmul.f32 %v1939, %v1939
  %v3521 = vmul.f32 %v1940, %v1940
  %v3522 = vmul.f32 %v1941, %v1941
  %v3523 = vmul.f32 %v1942, %v1942
  %v3524 = vmul.f32 %v1943, %v1943
  %v3525 = vmul.f32 %v1944, %v1944
  %v3526 = vmul.f32 %v1945, %v1945
  %v3527 = vmul.f32 %v1946, %v1946
  %v3528 = vmul.f32 %v1947, %v1947
  %v3529 = vmul.f32 %v1948, %v1948
  %v3530 = vmul.f32 %v1949, %v1949
  %v3531 = vmul.f32 %v1950, %v1950
  %v3532 = vmul.f32 %v1951, %v1951
  %v3533 = vmul.f32 %v1952, %v1952
  %v3534 = vmul.f32 %v1953, %v1953
  %v3535 = vmul.f32 %v1954, %v1954
  %v3536 = vmul.f32 %v1955, %v1955
  %v3537 = vmul.f32 %v1956, %v1956
  %v3538 = vmul.f32 %v1957, %v1957
  %v3539 = vmul.f32 %v1958, %v1958
  %v3540 = vmul.f32 %v1959, %v1959
  %v3541 = vmul.f32 %v1960, %v1960
  %v3542 = vmul.f32 %v1961, %v1961
  %v3543 = vmul.f32 %v1962, %v1962
  %v3544 = vmul.f32 %v1963, %v1963
  %v3545 = vmul.f32 %v1964, %v1964
  %v3546 = vmul.f32 %v1965, %v1965
  %v3547 = vmul.f32 %v1966, %v1966
  %v3548 = vmul.f32 %v1967, %v1967
  %v3549 = vmul.f32 %v1968, %v1968
  %v3550 = vmul.f32 %v1969, %v1969
  %v3551 = vmul.f32 %v1970, %v1970
  %v3552 = vmul.f32 %v1971, %v1971
  %v3553 = vmul.f32 %v1972, %v1972
  %v3554 = vmul.f32 %v1973, %v1973
  %v3555 = vmul.f32 %v1974, %v1974
  %v3556 = vmul.f32 %v1975, %v1975
  %v3557 = vmul.f32 %v1976, %v1976
  %v3558 = vmul.f32 %v1977, %v1977
  %v3559 = vmul.f32 %v1978, %v1978
  %v3560 = vmul.f32 %v1979, %v1979
  %v3561 = vmul.f32 %v1980, %v1980
  %v3562 = vmul.f32 %v1981, %v1981
  %v3563 = vmul.f32 %v1982, %v1982
  %v3564 = vmul.f32 %v1983, %v1983
  %v3565 = vmul.f32 %v1984, %v1984
  %v3566 = vmul.f32 %v1985, %v1985
  %v3567 = vmul.f32 %v1986, %v1986
  %v3568 = vmul.f32 %v1987, %v1987
  %v3569 = vmul.f32 %v1988, %v1988
  %v3570 = vmul.f32 %v1989, %v1989
  %v3571 = vmul.f32 %v1990, %v1990
  %v3572 = vmul.f32 %v1991, %v1991
  %v3573 = vmul.f32 %v1992, %v1992
  %v3574 = vmul.f32 %v1993, %v1993
  %v3575 = vmul.f32 %v1994, %v1994
  %v3576 = vmul.f32 %v1995, %v1995
  %v3577 = vmul.f32 %v1996, %v1996
  %v3578 = vmul.f32 %v1997, %v1997
  %v3579 = vmul.f32 %v1998, %v1998
  %v3580 = vmul.f32 %v1999, %v1999
  %v3581 = vmul.f32 %v2000, %v2000
  %v3582 = vmul.f32 %v2001, %v2001
  %v3583 = vmul.f32 %v2002, %v2002
  %v3584 = vmul.f32 %v2003, %v2003
  %v3585 = vmul.f32 %v2004, %v2004
  %v3586 = vmul.f32 %v2005, %v2005
  %v3587 = vmul.f32 %v2006, %v2006
  %v3588 = vmul.f32 %v2007, %v2007
  %v3589 = vmul.f32 %v2008, %v2008
  %v3590 = vmul.f32 %v2009, %v2009
  %v3591 = vmul.f32 %v2010, %v2010
  %v3592 = vmul.f32 %v2011, %v2011
  %v3593 = vmul.f32 %v2012, %v2012
  %v3594 = vmul.f32 %v2013, %v2013
  %v3595 = vmul.f32 %v2014, %v2014
  %v3596 = vmul.f32 %v2015, %v2015
  %v3597 = vmul.f32 %v2016, %v2016
  %v3598 = vmul.f32 %v2017, %v2017
  %v3599 = vmul.f32 %v2018, %v2018
  %v3600 = vmul.f32 %v2019, %v2019
  %v3601 = vmul.f32 %v2020, %v2020
  %v3602 = vmul.f32 %v2021, %v2021
  %v3603 = vmul.f32 %v2022, %v2022
  %v3604 = vmul.f32 %v2023, %v2023
  %v3605 = vmul.f32 %v2024, %v2024
  %v3606 = vmul.f32 %v2025, %v2025
  %v3607 = vmul.f32 %v2026, %v2026
  %v3608 = vmul.f32 %v2027, %v2027
  %v3609 = vmul.f32 %v2028, %v2028
  %v3610 = vmul.f32 %v2029, %v2029
  %v3611 = vmul.f32 %v2030, %v2030
  %v3612 = vmul.f32 %v2031, %v2031
  %v3613 = vmul.f32 %v2032, %v2032
  %v3614 = vmul.f32 %v2033, %v2033
  %v3615 = vmul.f32 %v2034, %v2034
  %v3616 = vmul.f32 %v2035, %v2035
  %v3617 = vmul.f32 %v2036, %v2036
  %v3618 = vmul.f32 %v2037, %v2037
  %v3619 = vmul.f32 %v2038, %v2038
  %v3620 = vmul.f32 %v2039, %v2039
  %v3621 = vmul.f32 %v2040, %v2040
  %v3622 = vmul.f32 %v2041, %v2041
  %v3623 = vmul.f32 %v2042, %v2042
  %v3624 = vmul.f32 %v2043, %v2043
  %v3625 = vmul.f32 %v2044, %v2044
  %v3626 = vmul.f32 %v2045, %v2045
  %v3627 = vmul.f32 %v2046, %v2046
  %v3628 = vmul.f32 %v2047, %v2047
  %v3629 = vmul.f32 %v2048, %v2048
  %v3630 = vmul.f32 %v2049, %v2049
  %v3631 = vmul.f32 %v2050, %v2050
  %v3632 = vmul.f32 %v2051, %v2051
  %v3633 = vmul.f32 %v2052, %v2052
  %v3634 = vmul.f32 %v2053, %v2053
  %v3635 = vmul.f32 %v2054, %v2054
  %v3636 = vmul.f32 %v2055, %v2055
  %v3637 = vmul.f32 %v2056, %v2056
  %v3638 = vmul.f32 %v2057, %v2057
  %v3639 = vmul.f32 %v2058, %v2058
  %v3640 = vmul.f32 %v2059, %v2059
  %v3641 = vmul.f32 %v2060, %v2060
  %v3642 = vmul.f32 %v2061, %v2061
  %v3643 = vmul.f32 %v2062, %v2062
  %v3644 = vmul.f32 %v2063, %v2063
  %v3645 = vmul.f32 %v2064, %v2064
  %v3646 = vmul.f32 %v2065, %v2065
  %v3647 = vmul.f32 %v2066, %v2066
  %v3648 = vmul.f32 %v2067, %v2067
  %v3649 = vmul.f32 %v2068, %v2068
  %v3650 = vmul.f32 %v2069, %v2069
  %v3651 = vmul.f32 %v2070, %v2070
  %v3652 = vmul.f32 %v2071, %v2071
  %v3653 = vmul.f32 %v2072, %v2072
  %v3654 = vmul.f32 %v2073, %v2073
  %v3655 = vmul.f32 %v2074, %v2074
  %v3656 = vmul.f32 %v2075, %v2075
  %v3657 = vmul.f32 %v2076, %v2076
  %v3658 = vmul.f32 %v2077, %v2077
  %v3659 = vmul.f32 %v2078, %v2078
  %v3660 = vmul.f32 %v2079, %v2079
  %v3661 = vmul.f32 %v2080, %v2080
  %v3662 = vmul.f32 %v2081, %v2081
  %v3663 = vmul.f32 %v2082, %v2082
  %v3664 = vmul.f32 %v2083, %v2083
  %v3665 = vmul.f32 %v2084, %v2084
  %v3666 = vmul.f32 %v2085, %v2085
  %v3667 = vmul.f32 %v2086, %v2086
  %v3668 = vmul.f32 %v2087, %v2087
  %v3669 = vmul.f32 %v2088, %v2088
  %v3670 = vmul.f32 %v2089, %v2089
  %v3671 = vmul.f32 %v2090, %v2090
  %v3672 = vmul.f32 %v2091, %v2091
  %v3673 = vmul.f32 %v2092, %v2092
  %v3674 = vmul.f32 %v2093, %v2093
  %v3675 = vmul.f32 %v2094, %v2094
  %v3676 = vmul.f32 %v2095, %v2095
  %v3677 = vmul.f32 %v2096, %v2096
  %v3678 = vmul.f32 %v2097, %v2097
  %v3679 = vmul.f32 %v2098, %v2098
  %v3680 = vmul.f32 %v2099, %v2099
  %v3681 = vmul.f32 %v2100, %v2100
  %v3682 = vmul.f32 %v2101, %v2101
  %v3683 = vmul.f32 %v2102, %v2102
  %v3684 = vmul.f32 %v2103, %v2103
  %v3685 = vmul.f32 %v2104, %v2104
  %v3686 = vmul.f32 %v2105, %v2105
  %v3687 = vmul.f32 %v2106, %v2106
  %v3688 = vmul.f32 %v2107, %v2107
  %v3689 = vmul.f32 %v2108, %v2108
  %v3690 = vmul.f32 %v2109, %v2109
  %v3691 = vmul.f32 %v2110, %v2110
  %v3692 = vmul.f32 %v2111, %v2111
  %v3693 = vmul.f32 %v2112, %v2112
  %v3694 = vmul.f32 %v2113, %v2113
  %v3695 = vmul.f32 %v2114, %v2114
  %v3696 = vmul.f32 %v2115, %v2115
  %v3697 = vmul.f32 %v2116, %v2116
  %v3698 = vmul.f32 %v2117, %v2117
  %v3699 = vmul.f32 %v2118, %v2118
  %v3700 = vmul.f32 %v2119, %v2119
  %v3701 = vmul.f32 %v2120, %v2120
  %v3702 = vmul.f32 %v2121, %v2121
  %v3703 = vmul.f32 %v2122, %v2122
  %v3704 = vmul.f32 %v2123, %v2123
  %v3705 = vmul.f32 %v2124, %v2124
  %v3706 = vmul.f32 %v2125, %v2125
  %v3707 = vmul.f32 %v2126, %v2126
  %v3708 = vmul.f32 %v2127, %v2127
  %v3709 = vmul.f32 %v2128, %v2128
  %v3710 = vmul.f32 %v2129, %v2129
  %v3711 = vmul.f32 %v2130, %v2130
  %v3712 = vmul.f32 %v2131, %v2131
  %v3713 = vmul.f32 %v2132, %v2132
  %v3714 = vmul.f32 %v2133, %v2133
  %v3715 = vmul.f32 %v2134, %v2134
  %v3716 = vmul.f32 %v2135, %v2135
  %v3717 = vmul.f32 %v2136, %v2136
  %v3718 = vmul.f32 %v2137, %v2137
  %v3719 = vmul.f32 %v2138, %v2138
  %v3720 = vmul.f32 %v2139, %v2139
  %v3721 = vmul.f32 %v2140, %v2140
  %v3722 = vmul.f32 %v2141, %v2141
  %v3723 = vmul.f32 %v2142, %v2142
  %v3724 = vmul.f32 %v2143, %v2143
  %v3725 = vmul.f32 %v2144, %v2144
  %v3726 = vmul.f32 %v2145, %v2145
  %v3727 = vmul.f32 %v2146, %v2146
  %v3728 = vmul.f32 %v2147, %v2147
  %v3729 = vmul.f32 %v2148, %v2148
  %v3730 = vmul.f32 %v2149, %v2149
  %v3731 = vadd.f32 %v3506, %v3507
  %v3732 = vadd.f32 %v3731, %v3508
  %v3733 = vadd.f32 %v3732, %v3509
  %v3734 = vadd.f32 %v3733, %v3510
  %v3735 = vadd.f32 %v3734, %v3511
  %v3736 = vadd.f32 %v3735, %v3512
  %v3737 = vadd.f32 %v3736, %v3513
  %v3738 = vadd.f32 %v3737, %v3514
  %v3739 = vadd.f32 %v3738, %v3515
  %v3740 = vadd.f32 %v3739, %v3516
  %v3741 = vadd.f32 %v3740, %v3517
  %v3742 = vadd.f32 %v3741, %v3518
  %v3743 = vadd.f32 %v3742, %v3519
  %v3744 = vadd.f32 %v3743, %v3520
  %v3745 = vadd.f32 %v3744, %v3521
  %v3746 = vadd.f32 %v3745, %v3522
  %v3747 = vadd.f32 %v3746, %v3523
  %v3748 = vadd.f32 %v3747, %v3524
  %v3749 = vadd.f32 %v3748, %v3525
  %v3750 = vadd.f32 %v3749, %v3526
  %v3751 = vadd.f32 %v3750, %v3527
  %v3752 = vadd.f32 %v3751, %v3528
  %v3753 = vadd.f32 %v3752, %v3529
  %v3754 = vadd.f32 %v3753, %v3530
  %v3755 = vadd.f32 %v3754, %v3531
  %v3756 = vadd.f32 %v3755, %v3532
  %v3757 = vadd.f32 %v3756, %v3533
  %v3758 = vadd.f32 %v3757, %v3534
  %v3759 = vadd.f32 %v3758, %v3535
  %v3760 = vadd.f32 %v3759, %v3536
  %v3761 = vadd.f32 %v3760, %v3537
  %v3762 = vadd.f32 %v3761, %v3538
  %v3763 = vadd.f32 %v3762, %v3539
  %v3764 = vadd.f32 %v3763, %v3540
  %v3765 = vadd.f32 %v3764, %v3541
  %v3766 = vadd.f32 %v3765, %v3542
  %v3767 = vadd.f32 %v3766, %v3543
  %v3768 = vadd.f32 %v3767, %v3544
  %v3769 = vadd.f32 %v3768, %v3545
  %v3770 = vadd.f32 %v3769, %v3546
  %v3771 = vadd.f32 %v3770, %v3547
  %v3772 = vadd.f32 %v3771, %v3548
  %v3773 = vadd.f32 %v3772, %v3549
  %v3774 = vadd.f32 %v3773, %v3550
  %v3775 = vadd.f32 %v3774, %v3551
  %v3776 = vadd.f32 %v3775, %v3552
  %v3777 = vadd.f32 %v3776, %v3553
  %v3778 = vadd.f32 %v3777, %v3554
  %v3779 = vadd.f32 %v3778, %v3555
  %v3780 = vadd.f32 %v3779, %v3556
  %v3781 = vadd.f32 %v3780, %v3557
  %v3782 = vadd.f32 %v3781, %v3558
  %v3783 = vadd.f32 %v3782, %v3559
  %v3784 = vadd.f32 %v3783, %v3560
  %v3785 = vadd.f32 %v3784, %v3561
  %v3786 = vadd.f32 %v3785, %v3562
  %v3787 = vadd.f32 %v3786, %v3563
  %v3788 = vadd.f32 %v3787, %v3564
  %v3789 = vadd.f32 %v3788, %v3565
  %v3790 = vadd.f32 %v3789, %v3566
  %v3791 = vadd.f32 %v3790, %v3567
  %v3792 = vadd.f32 %v3791, %v3568
  %v3793 = vadd.f32 %v3792, %v3569
  %v3794 = vadd.f32 %v3793, %v3570
  %v3795 = vadd.f32 %v3794, %v3571
  %v3796 = vadd.f32 %v3795, %v3572
  %v3797 = vadd.f32 %v3796, %v3573
  %v3798 = vadd.f32 %v3797, %v3574
  %v3799 = vadd.f32 %v3798, %v3575
  %v3800 = vadd.f32 %v3799, %v3576
  %v3801 = vadd.f32 %v3800, %v3577
  %v3802 = vadd.f32 %v3801, %v3578
  %v3803 = vadd.f32 %v3802, %v3579
  %v3804 = vadd.f32 %v3803, %v3580
  %v3805 = vadd.f32 %v3804, %v3581
  %v3806 = vadd.f32 %v3805, %v3582
  %v3807 = vadd.f32 %v3806, %v3583
  %v3808 = vadd.f32 %v3807, %v3584
  %v3809 = vadd.f32 %v3808, %v3585
  %v3810 = vadd.f32 %v3809, %v3586
  %v3811 = vadd.f32 %v3810, %v3587
  %v3812 = vadd.f32 %v3811, %v3588
  %v3813 = vadd.f32 %v3812, %v3589
  %v3814 = vadd.f32 %v3813, %v3590
  %v3815 = vadd.f32 %v3814, %v3591
  %v3816 = vadd.f32 %v3815, %v3592
  %v3817 = vadd.f32 %v3816, %v3593
  %v3818 = vadd.f32 %v3817, %v3594
  %v3819 = vadd.f32 %v3818, %v3595
  %v3820 = vadd.f32 %v3819, %v3596
  %v3821 = vadd.f32 %v3820, %v3597
  %v3822 = vadd.f32 %v3821, %v3598
  %v3823 = vadd.f32 %v3822, %v3599
  %v3824 = vadd.f32 %v3823, %v3600
  %v3825 = vadd.f32 %v3824, %v3601
  %v3826 = vadd.f32 %v3825, %v3602
  %v3827 = vadd.f32 %v3826, %v3603
  %v3828 = vadd.f32 %v3827, %v3604
  %v3829 = vadd.f32 %v3828, %v3605
  %v3830 = vadd.f32 %v3829, %v3606
  %v3831 = vadd.f32 %v3830, %v3607
  %v3832 = vadd.f32 %v3831, %v3608
  %v3833 = vadd.f32 %v3832, %v3609
  %v3834 = vadd.f32 %v3833, %v3610
  %v3835 = vadd.f32 %v3834, %v3611
  %v3836 = vadd.f32 %v3835, %v3612
  %v3837 = vadd.f32 %v3836, %v3613
  %v3838 = vadd.f32 %v3837, %v3614
  %v3839 = vadd.f32 %v3838, %v3615
  %v3840 = vadd.f32 %v3839, %v3616
  %v3841 = vadd.f32 %v3840, %v3617
  %v3842 = vadd.f32 %v3841, %v3618
  %v3843 = vadd.f32 %v3842, %v3619
  %v3844 = vadd.f32 %v3843, %v3620
  %v3845 = vadd.f32 %v3844, %v3621
  %v3846 = vadd.f32 %v3845, %v3622
  %v3847 = vadd.f32 %v3846, %v3623
  %v3848 = vadd.f32 %v3847, %v3624
  %v3849 = vadd.f32 %v3848, %v3625
  %v3850 = vadd.f32 %v3849, %v3626
  %v3851 = vadd.f32 %v3850, %v3627
  %v3852 = vadd.f32 %v3851, %v3628
  %v3853 = vadd.f32 %v3852, %v3629
  %v3854 = vadd.f32 %v3853, %v3630
  %v3855 = vadd.f32 %v3854, %v3631
  %v3856 = vadd.f32 %v3855, %v3632
  %v3857 = vadd.f32 %v3856, %v3633
  %v3858 = vadd.f32 %v3857, %v3634
  %v3859 = vadd.f32 %v3858, %v3635
  %v3860 = vadd.f32 %v3859, %v3636
  %v3861 = vadd.f32 %v3860, %v3637
  %v3862 = vadd.f32 %v3861, %v3638
  %v3863 = vadd.f32 %v3862, %v3639
  %v3864 = vadd.f32 %v3863, %v3640
  %v3865 = vadd.f32 %v3864, %v3641
  %v3866 = vadd.f32 %v3865, %v3642
  %v3867 = vadd.f32 %v3866, %v3643
  %v3868 = vadd.f32 %v3867, %v3644
  %v3869 = vadd.f32 %v3868, %v3645
  %v3870 = vadd.f32 %v3869, %v3646
  %v3871 = vadd.f32 %v3870, %v3647
  %v3872 = vadd.f32 %v3871, %v3648
  %v3873 = vadd.f32 %v3872, %v3649
  %v3874 = vadd.f32 %v3873, %v3650
  %v3875 = vadd.f32 %v3874, %v3651
  %v3876 = vadd.f32 %v3875, %v3652
  %v3877 = vadd.f32 %v3876, %v3653
  %v3878 = vadd.f32 %v3877, %v3654
  %v3879 = vadd.f32 %v3878, %v3655
  %v3880 = vadd.f32 %v3879, %v3656
  %v3881 = vadd.f32 %v3880, %v3657
  %v3882 = vadd.f32 %v3881, %v3658
  %v3883 = vadd.f32 %v3882, %v3659
  %v3884 = vadd.f32 %v3883, %v3660
  %v3885 = vadd.f32 %v3884, %v3661
  %v3886 = vadd.f32 %v3885, %v3662
  %v3887 = vadd.f32 %v3886, %v3663
  %v3888 = vadd.f32 %v3887, %v3664
  %v3889 = vadd.f32 %v3888, %v3665
  %v3890 = vadd.f32 %v3889, %v3666
  %v3891 = vadd.f32 %v3890, %v3667
  %v3892 = vadd.f32 %v3891, %v3668
  %v3893 = vadd.f32 %v3892, %v3669
  %v3894 = vadd.f32 %v3893, %v3670
  %v3895 = vadd.f32 %v3894, %v3671
  %v3896 = vadd.f32 %v3895, %v3672
  %v3897 = vadd.f32 %v3896, %v3673
  %v3898 = vadd.f32 %v3897, %v3674
  %v3899 = vadd.f32 %v3898, %v3675
  %v3900 = vadd.f32 %v3899, %v3676
  %v3901 = vadd.f32 %v3900, %v3677
  %v3902 = vadd.f32 %v3901, %v3678
  %v3903 = vadd.f32 %v3902, %v3679
  %v3904 = vadd.f32 %v3903, %v3680
  %v3905 = vadd.f32 %v3904, %v3681
  %v3906 = vadd.f32 %v3905, %v3682
  %v3907 = vadd.f32 %v3906, %v3683
  %v3908 = vadd.f32 %v3907, %v3684
  %v3909 = vadd.f32 %v3908, %v3685
  %v3910 = vadd.f32 %v3909, %v3686
  %v3911 = vadd.f32 %v3910, %v3687
  %v3912 = vadd.f32 %v3911, %v3688
  %v3913 = vadd.f32 %v3912, %v3689
  %v3914 = vadd.f32 %v3913, %v3690
  %v3915 = vadd.f32 %v3914, %v3691
  %v3916 = vadd.f32 %v3915, %v3692
  %v3917 = vadd.f32 %v3916, %v3693
  %v3918 = vadd.f32 %v3917, %v3694
  %v3919 = vadd.f32 %v3918, %v3695
  %v3920 = vadd.f32 %v3919, %v3696
  %v3921 = vadd.f32 %v3920, %v3697
  %v3922 = vadd.f32 %v3921, %v3698
  %v3923 = vadd.f32 %v3922, %v3699
  %v3924 = vadd.f32 %v3923, %v3700
  %v3925 = vadd.f32 %v3924, %v3701
  %v3926 = vadd.f32 %v3925, %v3702
  %v3927 = vadd.f32 %v3926, %v3703
  %v3928 = vadd.f32 %v3927, %v3704
  %v3929 = vadd.f32 %v3928, %v3705
  %v3930 = vadd.f32 %v3929, %v3706
  %v3931 = vadd.f32 %v3930, %v3707
  %v3932 = vadd.f32 %v3931, %v3708
  %v3933 = vadd.f32 %v3932, %v3709
  %v3934 = vadd.f32 %v3933, %v3710
  %v3935 = vadd.f32 %v3934, %v3711
  %v3936 = vadd.f32 %v3935, %v3712
  %v3937 = vadd.f32 %v3936, %v3713
  %v3938 = vadd.f32 %v3937, %v3714
  %v3939 = vadd.f32 %v3938, %v3715
  %v3940 = vadd.f32 %v3939, %v3716
  %v3941 = vadd.f32 %v3940, %v3717
  %v3942 = vadd.f32 %v3941, %v3718
  %v3943 = vadd.f32 %v3942, %v3719
  %v3944 = vadd.f32 %v3943, %v3720
  %v3945 = vadd.f32 %v3944, %v3721
  %v3946 = vadd.f32 %v3945, %v3722
  %v3947 = vadd.f32 %v3946, %v3723
  %v3948 = vadd.f32 %v3947, %v3724
  %v3949 = vadd.f32 %v3948, %v3725
  %v3950 = vadd.f32 %v3949, %v3726
  %v3951 = vadd.f32 %v3950, %v3727
  %v3952 = vadd.f32 %v3951, %v3728
  %v3953 = vadd.f32 %v3952, %v3729
  %v3954 = vadd.f32 %v3953, %v3730
  %v3955 = vrot.slane %v3954, 4
  %v3956 = vadd.f32 %v3954, %v3955
  %v3957 = vrot.slane %v3956, 2
  %v3958 = vadd.f32 %v3956, %v3957
  %v3959 = vrot.slane %v3958, 1
  %v3960 = vadd.f32 %v3958, %v3959
  %vm3961 = vcmask 1040384
  %v3962 = vsel %vm3961, %v3505, %v3960
  %3963 = vst [vmem:[%s4] sm:$0x3] %v3962
  // Predicated region
  $region14: #{image_model_forward.3} parent=0 // pred_check
    _
  $region15: #{image_model_forward.3} parent=0 // pred_check_branch
    %3965 = sbr.rel (0) target = $region17
  $region16: #{image_model_forward.3} parent=0 // pred_region
    _
  $region17: #{image_model_forward.3} parent=0 // pred_fallthru
    _
  // Predicated region
  $region18: #{image_model_forward.3} parent=0 // pred_check
    _
  $region19: #{image_model_forward.3} parent=0 // pred_check_branch
    %3967 = sbr.rel (0) target = $region21
  $region20: #{image_model_forward.3} parent=0 // pred_region
    _
  $region21: #{image_model_forward.3} parent=0 // pred_fallthru
    _
  // Predicated region
  $region22: #{image_model_forward.3} parent=0 // pred_check
    _
  $region23: #{image_model_forward.3} parent=0 // pred_check_branch
    %3969 = sbr.rel (0) target = $region25
  $region24: #{image_model_forward.3} parent=0 // pred_region
    _
  $region25: #{image_model_forward.3} parent=0 // pred_fallthru
    _
  // Predicated region
  $region26: #{image_model_forward.3} parent=0 // pred_check
    _
  $region27: #{image_model_forward.3} parent=0 // pred_check_branch
    %3971 = sbr.rel (0) target = $region29
  $region28: #{image_model_forward.3} parent=0 // pred_region
    _
  $region29: #{image_model_forward.3} parent=0 // pred_fallthru
    _

// kernel: mul.17
$region0: #{mul.17}
  #allocation0 [shape = 's32[1]{0}', space=sflag, size = 0x4, scoped, tag = 'scoped memory for mul.17']
  %s0 = inlined_call_operand.vmem [shape: f32[64], index: 0, kind: input, shape index: {}]
  %s1 = inlined_call_operand.vmem [shape: f32[64], index: 1, kind: input, shape index: {}]
  %s2 = inlined_call_operand.vmem [shape: f32[64], index: 2, kind: output, shape index: {}]
  %v3 = vld [vmem:[%s0] sm:$0x1]
  %v4 = vld [vmem:[%s1] sm:$0x1]
  %5 = xla_tuple %v3, %v4
  %6 = xla_tuple %5
  %v7 = vmul.f32 %v3, %v4
  %8 = xla_tuple %v7
  %9 = vst [vmem:[%s2] sm:$0x1] %v7

// kernel: tile.23
$region0: #{tile.23}
  #allocation0 [shape = 's32[1]{0}', space=sflag, size = 0x4, scoped, tag = 'scoped memory for tile.23']
  %s0 = inlined_call_operand.vmem [shape: f32[64], index: 0, kind: input, shape index: {}]
  %s1 = inlined_call_operand.vmem [shape: f32[25,64], index: 1, kind: output, shape index: {}]
  // Predicated region
  $region2: #{tile.23} parent=0 // pred_check
    _
  $region3: #{tile.23} parent=0 // pred_check_branch
    %3 = sbr.rel (0) target = $region5
  $region4: #{tile.23} parent=0 // pred_region
    _
  $region5: #{tile.23} parent=0 // pred_fallthru
    _
  %v4 = vld [vmem:[%s0] ss:$0 sm:$0xff]
  %5 = vst [vmem:[%s1] sm:$0xff] %v4
  %s6 = scalar_lea.vmem %s1, 8
  %7 = vst [vmem:[%s6] sm:$0xff] %v4
  %s8 = scalar_lea.vmem %s1, 16
  %9 = vst [vmem:[%s8] sm:$0xff] %v4
  %s10 = scalar_lea.vmem %s1, 24
  %11 = vst [vmem:[%s10] sm:$0xff] %v4

// kernel: mul.21
$region0: #{mul.21}
  %s0 = inlined_call_operand.vmem [shape: f32[25,64], index: 0, kind: input, shape index: {}]
  %s1 = inlined_call_operand.vmem [shape: f32[1600], index: 1, kind: output, shape index: {}]
  %v2 = vld [vmem:[%s0] ss:$2 sm:$0xff]
  %vm3 = vcmask 523264
  %4 = vst.msk [vmem:[%s1] sm:$0xff] %vm3, %v2
  %s5 = scalar_lea.vmem %s0, 16
  %v6 = vld [vmem:[%s5] ss:$2 sm:$0x1f]
  %vm7 = vcmask 523264
  %s8 = scalar_lea.vmem %s1, 8
  %9 = vst.msk [vmem:[%s8] sm:$0x1f] %vm7, %v6
  %s10 = scalar_lea.vmem %s0, 1
  %v11 = vld [vmem:[%s10] ss:$2 sm:$0xff]
  %12 = vrot.lane.b32.xlu0 %v11, 64
  %v13 = vpop.permute.xlu0 %12
  %vm14 = vcmask 1048064
  %15 = vst.msk [vmem:[%s1] sm:$0xff] %vm14, %v13
  %s16 = scalar_lea.vmem %s0, 17
  %v17 = vld [vmem:[%s16] ss:$2 sm:$0xf]
  %18 = vrot.lane.b32.xlu0 %v17, 64
  %v19 = vpop.permute.xlu0 %18
  %vm20 = vcmask 1048064
  %s21 = scalar_lea.vmem %s1, 8
  %22 = vst.msk [vmem:[%s21] sm:$0xf] %vm20, %v19

// kernel: image_model_forward.4
$region0: #{image_model_forward.4}
  #allocation0 [shape = 'u32[]', space=smem, size = 0x4, offset = 0x4, fixed_abs, tag = 'smem constant byte address 0x4 - core index']
  #allocation1 [shape = 'u32[144,128]{1,0:T(1,128)}', space=vmem, size = 0x12000, scoped, tag = 'internal scratch']
  %s0 = inlined_call_operand.vmem [shape: bf16[338,1664], index: 0, kind: input, shape index: {}]
  %s1 = inlined_call_operand.vmem [shape: bf16[1664,128], index: 1, kind: input, shape index: {}]
  %s2 = inlined_call_operand.vmem [shape: f32[1,128], index: 2, kind: input, shape index: {}]
  %s3 = inlined_call_operand.vmem [shape: bf16[338,128], index: 3, kind: output, shape index: {0}]
  %s4 = inlined_call_operand.vmem [shape: f32[1,2,128], index: 4, kind: output, shape index: {1}]
  %5 = xla_tuple %s3, %s4
  %s6 = sld [smem:[#allocation0]]
  $region30: #{image_model_forward.4} parent=0
    _
  %s8 = ssub.s32 1, %s6
  %s9 = scalar_select 0, %s8, %s6
  // Predicated region
  $region2: #{image_model_forward.4} parent=0 // pred_check
    _
  $region3: #{image_model_forward.4} parent=0 // pred_check_branch
    %11 = sbr.rel (0) target = $region5
  $region4: #{image_model_forward.4} parent=0 // pred_region
    _
  $region5: #{image_model_forward.4} parent=0 // pred_fallthru
    _
  // Predicated region
  $region6: #{image_model_forward.4} parent=0 // pred_check
    _
  $region7: #{image_model_forward.4} parent=0 // pred_check_branch
    %13 = sbr.rel (0) target = $region9
  $region8: #{image_model_forward.4} parent=0 // pred_region
    _
  $region9: #{image_model_forward.4} parent=0 // pred_fallthru
    _
  // Predicated region
  $region10: #{image_model_forward.4} parent=0 // pred_check
    _
  $region11: #{image_model_forward.4} parent=0 // pred_check_branch
    %15 = sbr.rel (0) target = $region13
  $region12: #{image_model_forward.4} parent=0 // pred_region
    _
  $region13: #{image_model_forward.4} parent=0 // pred_fallthru
    _
  %v17 = vld [vmem:[%s0] sm:$0xff]
  %v18 = vld [vmem:[%s0 + $0x8] sm:$0xff]
  %v19 = vld [vmem:[%s0 + $0x10] sm:$0xff]
  %v20 = vld [vmem:[%s0 + $0x18] sm:$0xff]
  %v21 = vld [vmem:[%s0 + $0x20] sm:$0xff]
  %v22 = vld [vmem:[%s0 + $0x28] sm:$0xff]
  %v23 = vld [vmem:[%s0 + $0x30] sm:$0xf]
  %v24 = vld [vmem:[%s0 + $0x34] sm:$0xff]
  %v25 = vld [vmem:[%s0 + $0x3c] sm:$0xff]
  %v26 = vld [vmem:[%s0 + $0x44] sm:$0xff]
  %v27 = vld [vmem:[%s0 + $0x4c] sm:$0xff]
  %v28 = vld [vmem:[%s0 + $0x54] sm:$0xff]
  %v29 = vld [vmem:[%s0 + $0x5c] sm:$0xff]
  %v30 = vld [vmem:[%s0 + $0x64] sm:$0xf]
  %v31 = vld [vmem:[%s0 + $0x68] sm:$0xff]
  %v32 = vld [vmem:[%s0 + $0x70] sm:$0xff]
  %v33 = vld [vmem:[%s0 + $0x78] sm:$0xff]
  %v34 = vld [vmem:[%s0 + $0x80] sm:$0xff]
  %v35 = vld [vmem:[%s0 + $0x88] sm:$0xff]
  %v36 = vld [vmem:[%s0 + $0x90] sm:$0xff]
  %v37 = vld [vmem:[%s0 + $0x98] sm:$0xf]
  %v38 = vld [vmem:[%s0 + $0x9c] sm:$0xff]
  %v39 = vld [vmem:[%s0 + $0xa4] sm:$0xff]
  %v40 = vld [vmem:[%s0 + $0xac] sm:$0xff]
  %v41 = vld [vmem:[%s0 + $0xb4] sm:$0xff]
  %v42 = vld [vmem:[%s0 + $0xbc] sm:$0xff]
  %v43 = vld [vmem:[%s0 + $0xc4] sm:$0xff]
  %v44 = vld [vmem:[%s0 + $0xcc] sm:$0xf]
  %v45 = vld [vmem:[%s0 + $0xd0] sm:$0xff]
  %v46 = vld [vmem:[%s0 + $0xd8] sm:$0xff]
  %v47 = vld [vmem:[%s0 + $0xe0] sm:$0xff]
  %v48 = vld [vmem:[%s0 + $0xe8] sm:$0xff]
  %v49 = vld [vmem:[%s0 + $0xf0] sm:$0xff]
  %v50 = vld [vmem:[%s0 + $0xf8] sm:$0xff]
  %v51 = vld [vmem:[%s0 + $0x100] sm:$0xf]
  %v52 = vld [vmem:[%s0 + $0x104] sm:$0xff]
  %v53 = vld [vmem:[%s0 + $0x10c] sm:$0xff]
  %v54 = vld [vmem:[%s0 + $0x114] sm:$0xff]
  %v55 = vld [vmem:[%s0 + $0x11c] sm:$0xff]
  %v56 = vld [vmem:[%s0 + $0x124] sm:$0xff]
  %v57 = vld [vmem:[%s0 + $0x12c] sm:$0xff]
  %v58 = vld [vmem:[%s0 + $0x134] sm:$0xf]
  %v59 = vld [vmem:[%s0 + $0x138] sm:$0xff]
  %v60 = vld [vmem:[%s0 + $0x140] sm:$0xff]
  %v61 = vld [vmem:[%s0 + $0x148] sm:$0xff]
  %v62 = vld [vmem:[%s0 + $0x150] sm:$0xff]
  %v63 = vld [vmem:[%s0 + $0x158] sm:$0xff]
  %v64 = vld [vmem:[%s0 + $0x160] sm:$0xff]
  %v65 = vld [vmem:[%s0 + $0x168] sm:$0xf]
  %v66 = vld [vmem:[%s0 + $0x16c] sm:$0xff]
  %v67 = vld [vmem:[%s0 + $0x174] sm:$0xff]
  %v68 = vld [vmem:[%s0 + $0x17c] sm:$0xff]
  %v69 = vld [vmem:[%s0 + $0x184] sm:$0xff]
  %v70 = vld [vmem:[%s0 + $0x18c] sm:$0xff]
  %v71 = vld [vmem:[%s0 + $0x194] sm:$0xff]
  %v72 = vld [vmem:[%s0 + $0x19c] sm:$0xf]
  %v73 = vld [vmem:[%s0 + $0x1a0] sm:$0xff]
  %v74 = vld [vmem:[%s0 + $0x1a8] sm:$0xff]
  %v75 = vld [vmem:[%s0 + $0x1b0] sm:$0xff]
  %v76 = vld [vmem:[%s0 + $0x1b8] sm:$0xff]
  %v77 = vld [vmem:[%s0 + $0x1c0] sm:$0xff]
  %v78 = vld [vmem:[%s0 + $0x1c8] sm:$0xff]
  %v79 = vld [vmem:[%s0 + $0x1d0] sm:$0xf]
  %v80 = vld [vmem:[%s0 + $0x1d4] sm:$0xff]
  %v81 = vld [vmem:[%s0 + $0x1dc] sm:$0xff]
  %v82 = vld [vmem:[%s0 + $0x1e4] sm:$0xff]
  %v83 = vld [vmem:[%s0 + $0x1ec] sm:$0xff]
  %v84 = vld [vmem:[%s0 + $0x1f4] sm:$0xff]
  %v85 = vld [vmem:[%s0 + $0x1fc] sm:$0xff]
  %v86 = vld [vmem:[%s0 + $0x204] sm:$0xf]
  %v87 = vld [vmem:[%s0 + $0x208] sm:$0xff]
  %v88 = vld [vmem:[%s0 + $0x210] sm:$0xff]
  %v89 = vld [vmem:[%s0 + $0x218] sm:$0xff]
  %v90 = vld [vmem:[%s0 + $0x220] sm:$0xff]
  %v91 = vld [vmem:[%s0 + $0x228] sm:$0xff]
  %v92 = vld [vmem:[%s0 + $0x230] sm:$0xff]
  %v93 = vld [vmem:[%s0 + $0x238] sm:$0xf]
  %v94 = vld [vmem:[%s0 + $0x23c] sm:$0xff]
  %v95 = vld [vmem:[%s0 + $0x244] sm:$0xff]
  %v96 = vld [vmem:[%s0 + $0x24c] sm:$0xff]
  %v97 = vld [vmem:[%s0 + $0x254] sm:$0xff]
  %v98 = vld [vmem:[%s0 + $0x25c] sm:$0xff]
  %v99 = vld [vmem:[%s0 + $0x264] sm:$0xff]
  %v100 = vld [vmem:[%s0 + $0x26c] sm:$0xf]
  %v101 = vld [vmem:[%s0 + $0x270] sm:$0xff]
  %v102 = vld [vmem:[%s0 + $0x278] sm:$0xff]
  %v103 = vld [vmem:[%s0 + $0x280] sm:$0xff]
  %v104 = vld [vmem:[%s0 + $0x288] sm:$0xff]
  %v105 = vld [vmem:[%s0 + $0x290] sm:$0xff]
  %v106 = vld [vmem:[%s0 + $0x298] sm:$0xff]
  %v107 = vld [vmem:[%s0 + $0x2a0] sm:$0xf]
  %v108 = vld [vmem:[%s0 + $0x2a4] sm:$0xff]
  %v109 = vld [vmem:[%s0 + $0x2ac] sm:$0xff]
  %v110 = vld [vmem:[%s0 + $0x2b4] sm:$0xff]
  %v111 = vld [vmem:[%s0 + $0x2bc] sm:$0xff]
  %v112 = vld [vmem:[%s0 + $0x2c4] sm:$0xff]
  %v113 = vld [vmem:[%s0 + $0x2cc] sm:$0xff]
  %v114 = vld [vmem:[%s0 + $0x2d4] sm:$0xf]
  %v115 = vld [vmem:[%s0 + $0x2d8] sm:$0xff]
  %v116 = vld [vmem:[%s0 + $0x2e0] sm:$0xff]
  %v117 = vld [vmem:[%s0 + $0x2e8] sm:$0xff]
  %v118 = vld [vmem:[%s0 + $0x2f0] sm:$0xff]
  %v119 = vld [vmem:[%s0 + $0x2f8] sm:$0xff]
  %v120 = vld [vmem:[%s0 + $0x300] sm:$0xff]
  %v121 = vld [vmem:[%s0 + $0x308] sm:$0xf]
  %v122 = vld [vmem:[%s0 + $0x30c] sm:$0xff]
  %v123 = vld [vmem:[%s0 + $0x314] sm:$0xff]
  %v124 = vld [vmem:[%s0 + $0x31c] sm:$0xff]
  %v125 = vld [vmem:[%s0 + $0x324] sm:$0xff]
  %v126 = vld [vmem:[%s0 + $0x32c] sm:$0xff]
  %v127 = vld [vmem:[%s0 + $0x334] sm:$0xff]
  %v128 = vld [vmem:[%s0 + $0x33c] sm:$0xf]
  %v129 = vld [vmem:[%s0 + $0x340] sm:$0xff]
  %v130 = vld [vmem:[%s0 + $0x348] sm:$0xff]
  %v131 = vld [vmem:[%s0 + $0x350] sm:$0xff]
  %v132 = vld [vmem:[%s0 + $0x358] sm:$0xff]
  %v133 = vld [vmem:[%s0 + $0x360] sm:$0xff]
  %v134 = vld [vmem:[%s0 + $0x368] sm:$0xff]
  %v135 = vld [vmem:[%s0 + $0x370] sm:$0xf]
  %v136 = vld [vmem:[%s0 + $0x374] sm:$0xff]
  %v137 = vld [vmem:[%s0 + $0x37c] sm:$0xff]
  %v138 = vld [vmem:[%s0 + $0x384] sm:$0xff]
  %v139 = vld [vmem:[%s0 + $0x38c] sm:$0xff]
  %v140 = vld [vmem:[%s0 + $0x394] sm:$0xff]
  %v141 = vld [vmem:[%s0 + $0x39c] sm:$0xff]
  %v142 = vld [vmem:[%s0 + $0x3a4] sm:$0xf]
  %v143 = vld [vmem:[%s0 + $0x3a8] sm:$0xff]
  %v144 = vld [vmem:[%s0 + $0x3b0] sm:$0xff]
  %v145 = vld [vmem:[%s0 + $0x3b8] sm:$0xff]
  %v146 = vld [vmem:[%s0 + $0x3c0] sm:$0xff]
  %v147 = vld [vmem:[%s0 + $0x3c8] sm:$0xff]
  %v148 = vld [vmem:[%s0 + $0x3d0] sm:$0xff]
  %v149 = vld [vmem:[%s0 + $0x3d8] sm:$0xf]
  %v150 = vld [vmem:[%s0 + $0x3dc] sm:$0xff]
  %v151 = vld [vmem:[%s0 + $0x3e4] sm:$0xff]
  %v152 = vld [vmem:[%s0 + $0x3ec] sm:$0xff]
  %v153 = vld [vmem:[%s0 + $0x3f4] sm:$0xff]
  %v154 = vld [vmem:[%s0 + $0x3fc] sm:$0xff]
  %v155 = vld [vmem:[%s0 + $0x404] sm:$0xff]
  %v156 = vld [vmem:[%s0 + $0x40c] sm:$0xf]
  %v157 = vld [vmem:[%s0 + $0x410] sm:$0xff]
  %v158 = vld [vmem:[%s0 + $0x418] sm:$0xff]
  %v159 = vld [vmem:[%s0 + $0x420] sm:$0xff]
  %v160 = vld [vmem:[%s0 + $0x428] sm:$0xff]
  %v161 = vld [vmem:[%s0 + $0x430] sm:$0xff]
  %v162 = vld [vmem:[%s0 + $0x438] sm:$0xff]
  %v163 = vld [vmem:[%s0 + $0x440] sm:$0xf]
  %v164 = vld [vmem:[%s0 + $0x444] sm:$0xff]
  %v165 = vld [vmem:[%s0 + $0x44c] sm:$0xff]
  %v166 = vld [vmem:[%s0 + $0x454] sm:$0xff]
  %v167 = vld [vmem:[%s0 + $0x45c] sm:$0xff]
  %v168 = vld [vmem:[%s0 + $0x464] sm:$0xff]
  %v169 = vld [vmem:[%s0 + $0x46c] sm:$0xff]
  %v170 = vld [vmem:[%s0 + $0x474] sm:$0xf]
  %v171 = vld [vmem:[%s0 + $0x478] sm:$0xff]
  %v172 = vld [vmem:[%s0 + $0x480] sm:$0xff]
  %v173 = vld [vmem:[%s0 + $0x488] sm:$0xff]
  %v174 = vld [vmem:[%s0 + $0x490] sm:$0xff]
  %v175 = vld [vmem:[%s0 + $0x498] sm:$0xff]
  %v176 = vld [vmem:[%s0 + $0x4a0] sm:$0xff]
  %v177 = vld [vmem:[%s0 + $0x4a8] sm:$0xf]
  %v178 = vld [vmem:[%s0 + $0x4ac] sm:$0xff]
  %v179 = vld [vmem:[%s0 + $0x4b4] sm:$0xff]
  %v180 = vld [vmem:[%s0 + $0x4bc] sm:$0xff]
  %v181 = vld [vmem:[%s0 + $0x4c4] sm:$0xff]
  %v182 = vld [vmem:[%s0 + $0x4cc] sm:$0xff]
  %v183 = vld [vmem:[%s0 + $0x4d4] sm:$0xff]
  %v184 = vld [vmem:[%s0 + $0x4dc] sm:$0xf]
  %v185 = vld [vmem:[%s0 + $0x4e0] sm:$0xff]
  %v186 = vld [vmem:[%s0 + $0x4e8] sm:$0xff]
  %v187 = vld [vmem:[%s0 + $0x4f0] sm:$0xff]
  %v188 = vld [vmem:[%s0 + $0x4f8] sm:$0xff]
  %v189 = vld [vmem:[%s0 + $0x500] sm:$0xff]
  %v190 = vld [vmem:[%s0 + $0x508] sm:$0xff]
  %v191 = vld [vmem:[%s0 + $0x510] sm:$0xf]
  %v192 = vld [vmem:[%s0 + $0x514] sm:$0xff]
  %v193 = vld [vmem:[%s0 + $0x51c] sm:$0xff]
  %v194 = vld [vmem:[%s0 + $0x524] sm:$0xff]
  %v195 = vld [vmem:[%s0 + $0x52c] sm:$0xff]
  %v196 = vld [vmem:[%s0 + $0x534] sm:$0xff]
  %v197 = vld [vmem:[%s0 + $0x53c] sm:$0xff]
  %v198 = vld [vmem:[%s0 + $0x544] sm:$0xf]
  %v199 = vld [vmem:[%s0 + $0x548] sm:$0xff]
  %v200 = vld [vmem:[%s0 + $0x550] sm:$0xff]
  %v201 = vld [vmem:[%s0 + $0x558] sm:$0xff]
  %v202 = vld [vmem:[%s0 + $0x560] sm:$0xff]
  %v203 = vld [vmem:[%s0 + $0x568] sm:$0xff]
  %v204 = vld [vmem:[%s0 + $0x570] sm:$0xff]
  %v205 = vld [vmem:[%s0 + $0x578] sm:$0xf]
  %v206 = vld [vmem:[%s0 + $0x57c] sm:$0xff]
  %v207 = vld [vmem:[%s0 + $0x584] sm:$0xff]
  %v208 = vld [vmem:[%s0 + $0x58c] sm:$0xff]
  %v209 = vld [vmem:[%s0 + $0x594] sm:$0xff]
  %v210 = vld [vmem:[%s0 + $0x59c] sm:$0xff]
  %v211 = vld [vmem:[%s0 + $0x5a4] sm:$0xff]
  %v212 = vld [vmem:[%s0 + $0x5ac] sm:$0xf]
  %v213 = vld [vmem:[%s0 + $0x5b0] sm:$0xff]
  %v214 = vld [vmem:[%s0 + $0x5b8] sm:$0xff]
  %v215 = vld [vmem:[%s0 + $0x5c0] sm:$0xff]
  %v216 = vld [vmem:[%s0 + $0x5c8] sm:$0xff]
  %v217 = vld [vmem:[%s0 + $0x5d0] sm:$0xff]
  %v218 = vld [vmem:[%s0 + $0x5d8] sm:$0xff]
  %v219 = vld [vmem:[%s0 + $0x5e0] sm:$0xf]
  %v220 = vld [vmem:[%s0 + $0x5e4] sm:$0xff]
  %v221 = vld [vmem:[%s0 + $0x5ec] sm:$0xff]
  %v222 = vld [vmem:[%s0 + $0x5f4] sm:$0xff]
  %v223 = vld [vmem:[%s0 + $0x5fc] sm:$0xff]
  %v224 = vld [vmem:[%s0 + $0x604] sm:$0xff]
  %v225 = vld [vmem:[%s0 + $0x60c] sm:$0xff]
  %v226 = vld [vmem:[%s0 + $0x614] sm:$0xf]
  %v227 = vld [vmem:[%s0 + $0x618] sm:$0xff]
  %v228 = vld [vmem:[%s0 + $0x620] sm:$0xff]
  %v229 = vld [vmem:[%s0 + $0x628] sm:$0xff]
  %v230 = vld [vmem:[%s0 + $0x630] sm:$0xff]
  %v231 = vld [vmem:[%s0 + $0x638] sm:$0xff]
  %v232 = vld [vmem:[%s0 + $0x640] sm:$0xff]
  %v233 = vld [vmem:[%s0 + $0x648] sm:$0xf]
  %v234 = vld [vmem:[%s0 + $0x64c] sm:$0xff]
  %v235 = vld [vmem:[%s0 + $0x654] sm:$0xff]
  %v236 = vld [vmem:[%s0 + $0x65c] sm:$0xff]
  %v237 = vld [vmem:[%s0 + $0x664] sm:$0xff]
  %v238 = vld [vmem:[%s0 + $0x66c] sm:$0xff]
  %v239 = vld [vmem:[%s0 + $0x674] sm:$0xff]
  %v240 = vld [vmem:[%s0 + $0x67c] sm:$0xf]
  %v241 = vld [vmem:[%s0 + $0x680] sm:$0xff]
  %v242 = vld [vmem:[%s0 + $0x688] sm:$0xff]
  %v243 = vld [vmem:[%s0 + $0x690] sm:$0xff]
  %v244 = vld [vmem:[%s0 + $0x698] sm:$0xff]
  %v245 = vld [vmem:[%s0 + $0x6a0] sm:$0xff]
  %v246 = vld [vmem:[%s0 + $0x6a8] sm:$0xff]
  %v247 = vld [vmem:[%s0 + $0x6b0] sm:$0xf]
  %v248 = vld [vmem:[%s0 + $0x6b4] sm:$0xff]
  %v249 = vld [vmem:[%s0 + $0x6bc] sm:$0xff]
  %v250 = vld [vmem:[%s0 + $0x6c4] sm:$0xff]
  %v251 = vld [vmem:[%s0 + $0x6cc] sm:$0xff]
  %v252 = vld [vmem:[%s0 + $0x6d4] sm:$0xff]
  %v253 = vld [vmem:[%s0 + $0x6dc] sm:$0xff]
  %v254 = vld [vmem:[%s0 + $0x6e4] sm:$0xf]
  %v255 = vld [vmem:[%s0 + $0x6e8] sm:$0xff]
  %v256 = vld [vmem:[%s0 + $0x6f0] sm:$0xff]
  %v257 = vld [vmem:[%s0 + $0x6f8] sm:$0xff]
  %v258 = vld [vmem:[%s0 + $0x700] sm:$0xff]
  %v259 = vld [vmem:[%s0 + $0x708] sm:$0xff]
  %v260 = vld [vmem:[%s0 + $0x710] sm:$0xff]
  %v261 = vld [vmem:[%s0 + $0x718] sm:$0xf]
  %v262 = vld [vmem:[%s0 + $0x71c] sm:$0xff]
  %v263 = vld [vmem:[%s0 + $0x724] sm:$0xff]
  %v264 = vld [vmem:[%s0 + $0x72c] sm:$0xff]
  %v265 = vld [vmem:[%s0 + $0x734] sm:$0xff]
  %v266 = vld [vmem:[%s0 + $0x73c] sm:$0xff]
  %v267 = vld [vmem:[%s0 + $0x744] sm:$0xff]
  %v268 = vld [vmem:[%s0 + $0x74c] sm:$0xf]
  %v269 = vld [vmem:[%s0 + $0x750] sm:$0xff]
  %v270 = vld [vmem:[%s0 + $0x758] sm:$0xff]
  %v271 = vld [vmem:[%s0 + $0x760] sm:$0xff]
  %v272 = vld [vmem:[%s0 + $0x768] sm:$0xff]
  %v273 = vld [vmem:[%s0 + $0x770] sm:$0xff]
  %v274 = vld [vmem:[%s0 + $0x778] sm:$0xff]
  %v275 = vld [vmem:[%s0 + $0x780] sm:$0xf]
  %v276 = vld [vmem:[%s0 + $0x784] sm:$0xff]
  %v277 = vld [vmem:[%s0 + $0x78c] sm:$0xff]
  %v278 = vld [vmem:[%s0 + $0x794] sm:$0xff]
  %v279 = vld [vmem:[%s0 + $0x79c] sm:$0xff]
  %v280 = vld [vmem:[%s0 + $0x7a4] sm:$0xff]
  %v281 = vld [vmem:[%s0 + $0x7ac] sm:$0xff]
  %v282 = vld [vmem:[%s0 + $0x7b4] sm:$0xf]
  %v283 = vld [vmem:[%s0 + $0x7b8] sm:$0xff]
  %v284 = vld [vmem:[%s0 + $0x7c0] sm:$0xff]
  %v285 = vld [vmem:[%s0 + $0x7c8] sm:$0xff]
  %v286 = vld [vmem:[%s0 + $0x7d0] sm:$0xff]
  %v287 = vld [vmem:[%s0 + $0x7d8] sm:$0xff]
  %v288 = vld [vmem:[%s0 + $0x7e0] sm:$0xff]
  %v289 = vld [vmem:[%s0 + $0x7e8] sm:$0xf]
  %v290 = vld [vmem:[%s0 + $0x7ec] sm:$0xff]
  %v291 = vld [vmem:[%s0 + $0x7f4] sm:$0xff]
  %v292 = vld [vmem:[%s0 + $0x7fc] sm:$0xff]
  %v293 = vld [vmem:[%s0 + $0x804] sm:$0xff]
  %v294 = vld [vmem:[%s0 + $0x80c] sm:$0xff]
  %v295 = vld [vmem:[%s0 + $0x814] sm:$0xff]
  %v296 = vld [vmem:[%s0 + $0x81c] sm:$0xf]
  %v297 = vld [vmem:[%s0 + $0x820] sm:$0xff]
  %v298 = vld [vmem:[%s0 + $0x828] sm:$0xff]
  %v299 = vld [vmem:[%s0 + $0x830] sm:$0xff]
  %v300 = vld [vmem:[%s0 + $0x838] sm:$0xff]
  %v301 = vld [vmem:[%s0 + $0x840] sm:$0xff]
  %v302 = vld [vmem:[%s0 + $0x848] sm:$0xff]
  %v303 = vld [vmem:[%s0 + $0x850] sm:$0xf]
  %v304 = vld [vmem:[%s0 + $0x854] sm:$0xff]
  %v305 = vld [vmem:[%s0 + $0x85c] sm:$0xff]
  %v306 = vld [vmem:[%s0 + $0x864] sm:$0xff]
  %v307 = vld [vmem:[%s0 + $0x86c] sm:$0xff]
  %v308 = vld [vmem:[%s0 + $0x874] sm:$0xff]
  %v309 = vld [vmem:[%s0 + $0x87c] sm:$0xff]
  %v310 = vld [vmem:[%s0 + $0x884] sm:$0xf]
  %v311 = vld [vmem:[%s0 + $0x888] sm:$0x11]
  %v312 = vld [vmem:[%s0 + $0x890] sm:$0x11]
  %v313 = vld [vmem:[%s0 + $0x898] sm:$0x11]
  %v314 = vld [vmem:[%s0 + $0x8a0] sm:$0x11]
  %v315 = vld [vmem:[%s0 + $0x8a8] sm:$0x11]
  %v316 = vld [vmem:[%s0 + $0x8b0] sm:$0x11]
  %v317 = vld [vmem:[%s0 + $0x8b8] sm:$0x1]
  %v318 = vld [vmem:[%s1] sm:$0xf]
  %v319 = vld [vmem:[%s1 + $0x4] sm:$0xf]
  %v320 = vld [vmem:[%s1 + $0x8] sm:$0xf]
  %v321 = vld [vmem:[%s1 + $0xc] sm:$0xf]
  %v322 = vld [vmem:[%s1 + $0x10] sm:$0xf]
  %v323 = vld [vmem:[%s1 + $0x14] sm:$0xf]
  %v324 = vld [vmem:[%s1 + $0x18] sm:$0xf]
  %v325 = vld [vmem:[%s1 + $0x1c] sm:$0xf]
  %v326 = vld [vmem:[%s1 + $0x20] sm:$0xf]
  %v327 = vld [vmem:[%s1 + $0x24] sm:$0xf]
  %v328 = vld [vmem:[%s1 + $0x28] sm:$0xf]
  %v329 = vld [vmem:[%s1 + $0x2c] sm:$0xf]
  %v330 = vld [vmem:[%s1 + $0x30] sm:$0xf]
  %v331 = vld [vmem:[%s1 + $0x34] sm:$0xf]
  %v332 = vld [vmem:[%s1 + $0x38] sm:$0xf]
  %v333 = vld [vmem:[%s1 + $0x3c] sm:$0xf]
  %v334 = vld [vmem:[%s1 + $0x40] sm:$0xf]
  %v335 = vld [vmem:[%s1 + $0x44] sm:$0xf]
  %v336 = vld [vmem:[%s1 + $0x48] sm:$0xf]
  %v337 = vld [vmem:[%s1 + $0x4c] sm:$0xf]
  %v338 = vld [vmem:[%s1 + $0x50] sm:$0xf]
  %v339 = vld [vmem:[%s1 + $0x54] sm:$0xf]
  %v340 = vld [vmem:[%s1 + $0x58] sm:$0xf]
  %v341 = vld [vmem:[%s1 + $0x5c] sm:$0xf]
  %v342 = vld [vmem:[%s1 + $0x60] sm:$0xf]
  %v343 = vld [vmem:[%s1 + $0x64] sm:$0xf]
  %v344 = vld [vmem:[%s1 + $0x68] sm:$0xf]
  %v345 = vld [vmem:[%s1 + $0x6c] sm:$0xf]
  %v346 = vld [vmem:[%s1 + $0x70] sm:$0xf]
  %v347 = vld [vmem:[%s1 + $0x74] sm:$0xf]
  %v348 = vld [vmem:[%s1 + $0x78] sm:$0xf]
  %v349 = vld [vmem:[%s1 + $0x7c] sm:$0xf]
  %v350 = vld [vmem:[%s1 + $0x80] sm:$0xf]
  %v351 = vld [vmem:[%s1 + $0x84] sm:$0xf]
  %v352 = vld [vmem:[%s1 + $0x88] sm:$0xf]
  %v353 = vld [vmem:[%s1 + $0x8c] sm:$0xf]
  %v354 = vld [vmem:[%s1 + $0x90] sm:$0xf]
  %v355 = vld [vmem:[%s1 + $0x94] sm:$0xf]
  %v356 = vld [vmem:[%s1 + $0x98] sm:$0xf]
  %v357 = vld [vmem:[%s1 + $0x9c] sm:$0xf]
  %v358 = vld [vmem:[%s1 + $0xa0] sm:$0xf]
  %v359 = vld [vmem:[%s1 + $0xa4] sm:$0xf]
  %v360 = vld [vmem:[%s1 + $0xa8] sm:$0xf]
  %v361 = vld [vmem:[%s1 + $0xac] sm:$0xf]
  %v362 = vld [vmem:[%s1 + $0xb0] sm:$0xf]
  %v363 = vld [vmem:[%s1 + $0xb4] sm:$0xf]
  %v364 = vld [vmem:[%s1 + $0xb8] sm:$0xf]
  %v365 = vld [vmem:[%s1 + $0xbc] sm:$0xf]
  %v366 = vld [vmem:[%s1 + $0xc0] sm:$0xf]
  %v367 = vld [vmem:[%s1 + $0xc4] sm:$0xf]
  %v368 = vld [vmem:[%s1 + $0xc8] sm:$0xf]
  %v369 = vld [vmem:[%s1 + $0xcc] sm:$0xf]
  %v370 = vld [vmem:[%s1 + $0xd0] sm:$0xf]
  %v371 = vld [vmem:[%s1 + $0xd4] sm:$0xf]
  %v372 = vld [vmem:[%s1 + $0xd8] sm:$0xf]
  %v373 = vld [vmem:[%s1 + $0xdc] sm:$0xf]
  %v374 = vld [vmem:[%s1 + $0xe0] sm:$0xf]
  %v375 = vld [vmem:[%s1 + $0xe4] sm:$0xf]
  %v376 = vld [vmem:[%s1 + $0xe8] sm:$0xf]
  %v377 = vld [vmem:[%s1 + $0xec] sm:$0xf]
  %v378 = vld [vmem:[%s1 + $0xf0] sm:$0xf]
  %v379 = vld [vmem:[%s1 + $0xf4] sm:$0xf]
  %v380 = vld [vmem:[%s1 + $0xf8] sm:$0xf]
  %v381 = vld [vmem:[%s1 + $0xfc] sm:$0xf]
  %v382 = vld [vmem:[%s1 + $0x100] sm:$0xf]
  %v383 = vld [vmem:[%s1 + $0x104] sm:$0xf]
  %v384 = vld [vmem:[%s1 + $0x108] sm:$0xf]
  %v385 = vld [vmem:[%s1 + $0x10c] sm:$0xf]
  %v386 = vld [vmem:[%s1 + $0x110] sm:$0xf]
  %v387 = vld [vmem:[%s1 + $0x114] sm:$0xf]
  %v388 = vld [vmem:[%s1 + $0x118] sm:$0xf]
  %v389 = vld [vmem:[%s1 + $0x11c] sm:$0xf]
  %v390 = vld [vmem:[%s1 + $0x120] sm:$0xf]
  %v391 = vld [vmem:[%s1 + $0x124] sm:$0xf]
  %v392 = vld [vmem:[%s1 + $0x128] sm:$0xf]
  %v393 = vld [vmem:[%s1 + $0x12c] sm:$0xf]
  %v394 = vld [vmem:[%s1 + $0x130] sm:$0xf]
  %v395 = vld [vmem:[%s1 + $0x134] sm:$0xf]
  %v396 = vld [vmem:[%s1 + $0x138] sm:$0xf]
  %v397 = vld [vmem:[%s1 + $0x13c] sm:$0xf]
  %v398 = vld [vmem:[%s1 + $0x140] sm:$0xf]
  %v399 = vld [vmem:[%s1 + $0x144] sm:$0xf]
  %v400 = vld [vmem:[%s1 + $0x148] sm:$0xf]
  %v401 = vld [vmem:[%s1 + $0x14c] sm:$0xf]
  %v402 = vld [vmem:[%s1 + $0x150] sm:$0xf]
  %v403 = vld [vmem:[%s1 + $0x154] sm:$0xf]
  %v404 = vld [vmem:[%s1 + $0x158] sm:$0xf]
  %v405 = vld [vmem:[%s1 + $0x15c] sm:$0xf]
  %v406 = vld [vmem:[%s1 + $0x160] sm:$0xf]
  %v407 = vld [vmem:[%s1 + $0x164] sm:$0xf]
  %v408 = vld [vmem:[%s1 + $0x168] sm:$0xf]
  %v409 = vld [vmem:[%s1 + $0x16c] sm:$0xf]
  %v410 = vld [vmem:[%s1 + $0x170] sm:$0xf]
  %v411 = vld [vmem:[%s1 + $0x174] sm:$0xf]
  %v412 = vld [vmem:[%s1 + $0x178] sm:$0xf]
  %v413 = vld [vmem:[%s1 + $0x17c] sm:$0xf]
  %v414 = vld [vmem:[%s1 + $0x180] sm:$0xf]
  %v415 = vld [vmem:[%s1 + $0x184] sm:$0xf]
  %v416 = vld [vmem:[%s1 + $0x188] sm:$0xf]
  %v417 = vld [vmem:[%s1 + $0x18c] sm:$0xf]
  %v418 = vld [vmem:[%s1 + $0x190] sm:$0xf]
  %v419 = vld [vmem:[%s1 + $0x194] sm:$0xf]
  %v420 = vld [vmem:[%s1 + $0x198] sm:$0xf]
  %v421 = vld [vmem:[%s1 + $0x19c] sm:$0xf]
  %v422 = vld [vmem:[%s1 + $0x1a0] sm:$0xf]
  %v423 = vld [vmem:[%s1 + $0x1a4] sm:$0xf]
  %v424 = vld [vmem:[%s1 + $0x1a8] sm:$0xf]
  %v425 = vld [vmem:[%s1 + $0x1ac] sm:$0xf]
  %v426 = vld [vmem:[%s1 + $0x1b0] sm:$0xf]
  %v427 = vld [vmem:[%s1 + $0x1b4] sm:$0xf]
  %v428 = vld [vmem:[%s1 + $0x1b8] sm:$0xf]
  %v429 = vld [vmem:[%s1 + $0x1bc] sm:$0xf]
  %v430 = vld [vmem:[%s1 + $0x1c0] sm:$0xf]
  %v431 = vld [vmem:[%s1 + $0x1c4] sm:$0xf]
  %v432 = vld [vmem:[%s1 + $0x1c8] sm:$0xf]
  %v433 = vld [vmem:[%s1 + $0x1cc] sm:$0xf]
  %v434 = vld [vmem:[%s1 + $0x1d0] sm:$0xf]
  %v435 = vld [vmem:[%s1 + $0x1d4] sm:$0xf]
  %v436 = vld [vmem:[%s1 + $0x1d8] sm:$0xf]
  %v437 = vld [vmem:[%s1 + $0x1dc] sm:$0xf]
  %v438 = vld [vmem:[%s1 + $0x1e0] sm:$0xf]
  %v439 = vld [vmem:[%s1 + $0x1e4] sm:$0xf]
  %v440 = vld [vmem:[%s1 + $0x1e8] sm:$0xf]
  %v441 = vld [vmem:[%s1 + $0x1ec] sm:$0xf]
  %v442 = vld [vmem:[%s1 + $0x1f0] sm:$0xf]
  %v443 = vld [vmem:[%s1 + $0x1f4] sm:$0xf]
  %v444 = vld [vmem:[%s1 + $0x1f8] sm:$0xf]
  %v445 = vld [vmem:[%s1 + $0x1fc] sm:$0xf]
  %v446 = vld [vmem:[%s1 + $0x200] sm:$0xf]
  %v447 = vld [vmem:[%s1 + $0x204] sm:$0xf]
  %v448 = vld [vmem:[%s1 + $0x208] sm:$0xf]
  %v449 = vld [vmem:[%s1 + $0x20c] sm:$0xf]
  %v450 = vld [vmem:[%s1 + $0x210] sm:$0xf]
  %v451 = vld [vmem:[%s1 + $0x214] sm:$0xf]
  %v452 = vld [vmem:[%s1 + $0x218] sm:$0xf]
  %v453 = vld [vmem:[%s1 + $0x21c] sm:$0xf]
  %v454 = vld [vmem:[%s1 + $0x220] sm:$0xf]
  %v455 = vld [vmem:[%s1 + $0x224] sm:$0xf]
  %v456 = vld [vmem:[%s1 + $0x228] sm:$0xf]
  %v457 = vld [vmem:[%s1 + $0x22c] sm:$0xf]
  %v458 = vld [vmem:[%s1 + $0x230] sm:$0xf]
  %v459 = vld [vmem:[%s1 + $0x234] sm:$0xf]
  %v460 = vld [vmem:[%s1 + $0x238] sm:$0xf]
  %v461 = vld [vmem:[%s1 + $0x23c] sm:$0xf]
  %v462 = vld [vmem:[%s1 + $0x240] sm:$0xf]
  %v463 = vld [vmem:[%s1 + $0x244] sm:$0xf]
  %v464 = vld [vmem:[%s1 + $0x248] sm:$0xf]
  %v465 = vld [vmem:[%s1 + $0x24c] sm:$0xf]
  %v466 = vld [vmem:[%s1 + $0x250] sm:$0xf]
  %v467 = vld [vmem:[%s1 + $0x254] sm:$0xf]
  %v468 = vld [vmem:[%s1 + $0x258] sm:$0xf]
  %v469 = vld [vmem:[%s1 + $0x25c] sm:$0xf]
  %v470 = vld [vmem:[%s1 + $0x260] sm:$0xf]
  %v471 = vld [vmem:[%s1 + $0x264] sm:$0xf]
  %v472 = vld [vmem:[%s1 + $0x268] sm:$0xf]
  %v473 = vld [vmem:[%s1 + $0x26c] sm:$0xf]
  %v474 = vld [vmem:[%s1 + $0x270] sm:$0xf]
  %v475 = vld [vmem:[%s1 + $0x274] sm:$0xf]
  %v476 = vld [vmem:[%s1 + $0x278] sm:$0xf]
  %v477 = vld [vmem:[%s1 + $0x27c] sm:$0xf]
  %v478 = vld [vmem:[%s1 + $0x280] sm:$0xf]
  %v479 = vld [vmem:[%s1 + $0x284] sm:$0xf]
  %v480 = vld [vmem:[%s1 + $0x288] sm:$0xf]
  %v481 = vld [vmem:[%s1 + $0x28c] sm:$0xf]
  %v482 = vld [vmem:[%s1 + $0x290] sm:$0xf]
  %v483 = vld [vmem:[%s1 + $0x294] sm:$0xf]
  %v484 = vld [vmem:[%s1 + $0x298] sm:$0xf]
  %v485 = vld [vmem:[%s1 + $0x29c] sm:$0xf]
  %v486 = vld [vmem:[%s1 + $0x2a0] sm:$0xf]
  %v487 = vld [vmem:[%s1 + $0x2a4] sm:$0xf]
  %v488 = vld [vmem:[%s1 + $0x2a8] sm:$0xf]
  %v489 = vld [vmem:[%s1 + $0x2ac] sm:$0xf]
  %v490 = vld [vmem:[%s1 + $0x2b0] sm:$0xf]
  %v491 = vld [vmem:[%s1 + $0x2b4] sm:$0xf]
  %v492 = vld [vmem:[%s1 + $0x2b8] sm:$0xf]
  %v493 = vld [vmem:[%s1 + $0x2bc] sm:$0xf]
  %v494 = vld [vmem:[%s1 + $0x2c0] sm:$0xf]
  %v495 = vld [vmem:[%s1 + $0x2c4] sm:$0xf]
  %v496 = vld [vmem:[%s1 + $0x2c8] sm:$0xf]
  %v497 = vld [vmem:[%s1 + $0x2cc] sm:$0xf]
  %v498 = vld [vmem:[%s1 + $0x2d0] sm:$0xf]
  %v499 = vld [vmem:[%s1 + $0x2d4] sm:$0xf]
  %v500 = vld [vmem:[%s1 + $0x2d8] sm:$0xf]
  %v501 = vld [vmem:[%s1 + $0x2dc] sm:$0xf]
  %v502 = vld [vmem:[%s1 + $0x2e0] sm:$0xf]
  %v503 = vld [vmem:[%s1 + $0x2e4] sm:$0xf]
  %v504 = vld [vmem:[%s1 + $0x2e8] sm:$0xf]
  %v505 = vld [vmem:[%s1 + $0x2ec] sm:$0xf]
  %v506 = vld [vmem:[%s1 + $0x2f0] sm:$0xf]
  %v507 = vld [vmem:[%s1 + $0x2f4] sm:$0xf]
  %v508 = vld [vmem:[%s1 + $0x2f8] sm:$0xf]
  %v509 = vld [vmem:[%s1 + $0x2fc] sm:$0xf]
  %v510 = vld [vmem:[%s1 + $0x300] sm:$0xf]
  %v511 = vld [vmem:[%s1 + $0x304] sm:$0xf]
  %v512 = vld [vmem:[%s1 + $0x308] sm:$0xf]
  %v513 = vld [vmem:[%s1 + $0x30c] sm:$0xf]
  %v514 = vld [vmem:[%s1 + $0x310] sm:$0xf]
  %v515 = vld [vmem:[%s1 + $0x314] sm:$0xf]
  %v516 = vld [vmem:[%s1 + $0x318] sm:$0xf]
  %v517 = vld [vmem:[%s1 + $0x31c] sm:$0xf]
  %v518 = vld [vmem:[%s1 + $0x320] sm:$0xf]
  %v519 = vld [vmem:[%s1 + $0x324] sm:$0xf]
  %v520 = vld [vmem:[%s1 + $0x328] sm:$0xf]
  %v521 = vld [vmem:[%s1 + $0x32c] sm:$0xf]
  %v522 = vld [vmem:[%s1 + $0x330] sm:$0xf]
  %v523 = vld [vmem:[%s1 + $0x334] sm:$0xf]
  %v524 = vld [vmem:[%s1 + $0x338] sm:$0xf]
  %v525 = vld [vmem:[%s1 + $0x33c] sm:$0xf]
  %v526 = vld [vmem:[%s2] sm:$0x1]
  %v528 = vlaneseq
  %v529 = vshrl.u32 %v528, 7
  %v530 = vsub.s32 0, %v529
  %v531 = vrot.slane %v526, %v530
  %v834 = vunpack.c.l.b16 %v17
  %v835 = vunpack.c.h.b16 %v17
  %v836 = vunpack.c.l.b16 %v18
  %v837 = vunpack.c.h.b16 %v18
  %v838 = vunpack.c.l.b16 %v19
  %v839 = vunpack.c.h.b16 %v19
  %v840 = vunpack.c.l.b16 %v20
  %v841 = vunpack.c.h.b16 %v20
  %v842 = vunpack.c.l.b16 %v21
  %v843 = vunpack.c.h.b16 %v21
  %v844 = vunpack.c.l.b16 %v22
  %v845 = vunpack.c.h.b16 %v22
  %v846 = vunpack.c.l.b16 %v23
  %v847 = vunpack.c.l.b16 %v24
  %v848 = vunpack.c.h.b16 %v24
  %v849 = vunpack.c.l.b16 %v25
  %v850 = vunpack.c.h.b16 %v25
  %v851 = vunpack.c.l.b16 %v26
  %v852 = vunpack.c.h.b16 %v26
  %v853 = vunpack.c.l.b16 %v27
  %v854 = vunpack.c.h.b16 %v27
  %v855 = vunpack.c.l.b16 %v28
  %v856 = vunpack.c.h.b16 %v28
  %v857 = vunpack.c.l.b16 %v29
  %v858 = vunpack.c.h.b16 %v29
  %v859 = vunpack.c.l.b16 %v30
  %v860 = vunpack.c.l.b16 %v31
  %v861 = vunpack.c.h.b16 %v31
  %v862 = vunpack.c.l.b16 %v32
  %v863 = vunpack.c.h.b16 %v32
  %v864 = vunpack.c.l.b16 %v33
  %v865 = vunpack.c.h.b16 %v33
  %v866 = vunpack.c.l.b16 %v34
  %v867 = vunpack.c.h.b16 %v34
  %v868 = vunpack.c.l.b16 %v35
  %v869 = vunpack.c.h.b16 %v35
  %v870 = vunpack.c.l.b16 %v36
  %v871 = vunpack.c.h.b16 %v36
  %v872 = vunpack.c.l.b16 %v37
  %v873 = vunpack.c.l.b16 %v38
  %v874 = vunpack.c.h.b16 %v38
  %v875 = vunpack.c.l.b16 %v39
  %v876 = vunpack.c.h.b16 %v39
  %v877 = vunpack.c.l.b16 %v40
  %v878 = vunpack.c.h.b16 %v40
  %v879 = vunpack.c.l.b16 %v41
  %v880 = vunpack.c.h.b16 %v41
  %v881 = vunpack.c.l.b16 %v42
  %v882 = vunpack.c.h.b16 %v42
  %v883 = vunpack.c.l.b16 %v43
  %v884 = vunpack.c.h.b16 %v43
  %v885 = vunpack.c.l.b16 %v44
  %v886 = vunpack.c.l.b16 %v45
  %v887 = vunpack.c.h.b16 %v45
  %v888 = vunpack.c.l.b16 %v46
  %v889 = vunpack.c.h.b16 %v46
  %v890 = vunpack.c.l.b16 %v47
  %v891 = vunpack.c.h.b16 %v47
  %v892 = vunpack.c.l.b16 %v48
  %v893 = vunpack.c.h.b16 %v48
  %v894 = vunpack.c.l.b16 %v49
  %v895 = vunpack.c.h.b16 %v49
  %v896 = vunpack.c.l.b16 %v50
  %v897 = vunpack.c.h.b16 %v50
  %v898 = vunpack.c.l.b16 %v51
  %v899 = vunpack.c.l.b16 %v52
  %v900 = vunpack.c.h.b16 %v52
  %v901 = vunpack.c.l.b16 %v53
  %v902 = vunpack.c.h.b16 %v53
  %v903 = vunpack.c.l.b16 %v54
  %v904 = vunpack.c.h.b16 %v54
  %v905 = vunpack.c.l.b16 %v55
  %v906 = vunpack.c.h.b16 %v55
  %v907 = vunpack.c.l.b16 %v56
  %v908 = vunpack.c.h.b16 %v56
  %v909 = vunpack.c.l.b16 %v57
  %v910 = vunpack.c.h.b16 %v57
  %v911 = vunpack.c.l.b16 %v58
  %v912 = vunpack.c.l.b16 %v59
  %v913 = vunpack.c.h.b16 %v59
  %v914 = vunpack.c.l.b16 %v60
  %v915 = vunpack.c.h.b16 %v60
  %v916 = vunpack.c.l.b16 %v61
  %v917 = vunpack.c.h.b16 %v61
  %v918 = vunpack.c.l.b16 %v62
  %v919 = vunpack.c.h.b16 %v62
  %v920 = vunpack.c.l.b16 %v63
  %v921 = vunpack.c.h.b16 %v63
  %v922 = vunpack.c.l.b16 %v64
  %v923 = vunpack.c.h.b16 %v64
  %v924 = vunpack.c.l.b16 %v65
  %v925 = vunpack.c.l.b16 %v66
  %v926 = vunpack.c.h.b16 %v66
  %v927 = vunpack.c.l.b16 %v67
  %v928 = vunpack.c.h.b16 %v67
  %v929 = vunpack.c.l.b16 %v68
  %v930 = vunpack.c.h.b16 %v68
  %v931 = vunpack.c.l.b16 %v69
  %v932 = vunpack.c.h.b16 %v69
  %v933 = vunpack.c.l.b16 %v70
  %v934 = vunpack.c.h.b16 %v70
  %v935 = vunpack.c.l.b16 %v71
  %v936 = vunpack.c.h.b16 %v71
  %v937 = vunpack.c.l.b16 %v72
  %v938 = vunpack.c.l.b16 %v73
  %v939 = vunpack.c.h.b16 %v73
  %v940 = vunpack.c.l.b16 %v74
  %v941 = vunpack.c.h.b16 %v74
  %v942 = vunpack.c.l.b16 %v75
  %v943 = vunpack.c.h.b16 %v75
  %v944 = vunpack.c.l.b16 %v76
  %v945 = vunpack.c.h.b16 %v76
  %v946 = vunpack.c.l.b16 %v77
  %v947 = vunpack.c.h.b16 %v77
  %v948 = vunpack.c.l.b16 %v78
  %v949 = vunpack.c.h.b16 %v78
  %v950 = vunpack.c.l.b16 %v79
  %v951 = vunpack.c.l.b16 %v80
  %v952 = vunpack.c.h.b16 %v80
  %v953 = vunpack.c.l.b16 %v81
  %v954 = vunpack.c.h.b16 %v81
  %v955 = vunpack.c.l.b16 %v82
  %v956 = vunpack.c.h.b16 %v82
  %v957 = vunpack.c.l.b16 %v83
  %v958 = vunpack.c.h.b16 %v83
  %v959 = vunpack.c.l.b16 %v84
  %v960 = vunpack.c.h.b16 %v84
  %v961 = vunpack.c.l.b16 %v85
  %v962 = vunpack.c.h.b16 %v85
  %v963 = vunpack.c.l.b16 %v86
  %v964 = vunpack.c.l.b16 %v87
  %v965 = vunpack.c.h.b16 %v87
  %v966 = vunpack.c.l.b16 %v88
  %v967 = vunpack.c.h.b16 %v88
  %v968 = vunpack.c.l.b16 %v89
  %v969 = vunpack.c.h.b16 %v89
  %v970 = vunpack.c.l.b16 %v90
  %v971 = vunpack.c.h.b16 %v90
  %v972 = vunpack.c.l.b16 %v91
  %v973 = vunpack.c.h.b16 %v91
  %v974 = vunpack.c.l.b16 %v92
  %v975 = vunpack.c.h.b16 %v92
  %v976 = vunpack.c.l.b16 %v93
  %v977 = vunpack.c.l.b16 %v94
  %v978 = vunpack.c.h.b16 %v94
  %v979 = vunpack.c.l.b16 %v95
  %v980 = vunpack.c.h.b16 %v95
  %v981 = vunpack.c.l.b16 %v96
  %v982 = vunpack.c.h.b16 %v96
  %v983 = vunpack.c.l.b16 %v97
  %v984 = vunpack.c.h.b16 %v97
  %v985 = vunpack.c.l.b16 %v98
  %v986 = vunpack.c.h.b16 %v98
  %v987 = vunpack.c.l.b16 %v99
  %v988 = vunpack.c.h.b16 %v99
  %v989 = vunpack.c.l.b16 %v100
  %v990 = vunpack.c.l.b16 %v101
  %v991 = vunpack.c.h.b16 %v101
  %v992 = vunpack.c.l.b16 %v102
  %v993 = vunpack.c.h.b16 %v102
  %v994 = vunpack.c.l.b16 %v103
  %v995 = vunpack.c.h.b16 %v103
  %v996 = vunpack.c.l.b16 %v104
  %v997 = vunpack.c.h.b16 %v104
  %v998 = vunpack.c.l.b16 %v105
  %v999 = vunpack.c.h.b16 %v105
  %v1000 = vunpack.c.l.b16 %v106
  %v1001 = vunpack.c.h.b16 %v106
  %v1002 = vunpack.c.l.b16 %v107
  %v1003 = vunpack.c.l.b16 %v108
  %v1004 = vunpack.c.h.b16 %v108
  %v1005 = vunpack.c.l.b16 %v109
  %v1006 = vunpack.c.h.b16 %v109
  %v1007 = vunpack.c.l.b16 %v110
  %v1008 = vunpack.c.h.b16 %v110
  %v1009 = vunpack.c.l.b16 %v111
  %v1010 = vunpack.c.h.b16 %v111
  %v1011 = vunpack.c.l.b16 %v112
  %v1012 = vunpack.c.h.b16 %v112
  %v1013 = vunpack.c.l.b16 %v113
  %v1014 = vunpack.c.h.b16 %v113
  %v1015 = vunpack.c.l.b16 %v114
  %v1016 = vunpack.c.l.b16 %v115
  %v1017 = vunpack.c.h.b16 %v115
  %v1018 = vunpack.c.l.b16 %v116
  %v1019 = vunpack.c.h.b16 %v116
  %v1020 = vunpack.c.l.b16 %v117
  %v1021 = vunpack.c.h.b16 %v117
  %v1022 = vunpack.c.l.b16 %v118
  %v1023 = vunpack.c.h.b16 %v118
  %v1024 = vunpack.c.l.b16 %v119
  %v1025 = vunpack.c.h.b16 %v119
  %v1026 = vunpack.c.l.b16 %v120
  %v1027 = vunpack.c.h.b16 %v120
  %v1028 = vunpack.c.l.b16 %v121
  %v1029 = vunpack.c.l.b16 %v122
  %v1030 = vunpack.c.h.b16 %v122
  %v1031 = vunpack.c.l.b16 %v123
  %v1032 = vunpack.c.h.b16 %v123
  %v1033 = vunpack.c.l.b16 %v124
  %v1034 = vunpack.c.h.b16 %v124
  %v1035 = vunpack.c.l.b16 %v125
  %v1036 = vunpack.c.h.b16 %v125
  %v1037 = vunpack.c.l.b16 %v126
  %v1038 = vunpack.c.h.b16 %v126
  %v1039 = vunpack.c.l.b16 %v127
  %v1040 = vunpack.c.h.b16 %v127
  %v1041 = vunpack.c.l.b16 %v128
  %v1042 = vunpack.c.l.b16 %v129
  %v1043 = vunpack.c.h.b16 %v129
  %v1044 = vunpack.c.l.b16 %v130
  %v1045 = vunpack.c.h.b16 %v130
  %v1046 = vunpack.c.l.b16 %v131
  %v1047 = vunpack.c.h.b16 %v131
  %v1048 = vunpack.c.l.b16 %v132
  %v1049 = vunpack.c.h.b16 %v132
  %v1050 = vunpack.c.l.b16 %v133
  %v1051 = vunpack.c.h.b16 %v133
  %v1052 = vunpack.c.l.b16 %v134
  %v1053 = vunpack.c.h.b16 %v134
  %v1054 = vunpack.c.l.b16 %v135
  %v1055 = vunpack.c.l.b16 %v136
  %v1056 = vunpack.c.h.b16 %v136
  %v1057 = vunpack.c.l.b16 %v137
  %v1058 = vunpack.c.h.b16 %v137
  %v1059 = vunpack.c.l.b16 %v138
  %v1060 = vunpack.c.h.b16 %v138
  %v1061 = vunpack.c.l.b16 %v139
  %v1062 = vunpack.c.h.b16 %v139
  %v1063 = vunpack.c.l.b16 %v140
  %v1064 = vunpack.c.h.b16 %v140
  %v1065 = vunpack.c.l.b16 %v141
  %v1066 = vunpack.c.h.b16 %v141
  %v1067 = vunpack.c.l.b16 %v142
  %v1068 = vunpack.c.l.b16 %v143
  %v1069 = vunpack.c.h.b16 %v143
  %v1070 = vunpack.c.l.b16 %v144
  %v1071 = vunpack.c.h.b16 %v144
  %v1072 = vunpack.c.l.b16 %v145
  %v1073 = vunpack.c.h.b16 %v145
  %v1074 = vunpack.c.l.b16 %v146
  %v1075 = vunpack.c.h.b16 %v146
  %v1076 = vunpack.c.l.b16 %v147
  %v1077 = vunpack.c.h.b16 %v147
  %v1078 = vunpack.c.l.b16 %v148
  %v1079 = vunpack.c.h.b16 %v148
  %v1080 = vunpack.c.l.b16 %v149
  %v1081 = vunpack.c.l.b16 %v150
  %v1082 = vunpack.c.h.b16 %v150
  %v1083 = vunpack.c.l.b16 %v151
  %v1084 = vunpack.c.h.b16 %v151
  %v1085 = vunpack.c.l.b16 %v152
  %v1086 = vunpack.c.h.b16 %v152
  %v1087 = vunpack.c.l.b16 %v153
  %v1088 = vunpack.c.h.b16 %v153
  %v1089 = vunpack.c.l.b16 %v154
  %v1090 = vunpack.c.h.b16 %v154
  %v1091 = vunpack.c.l.b16 %v155
  %v1092 = vunpack.c.h.b16 %v155
  %v1093 = vunpack.c.l.b16 %v156
  %v1094 = vunpack.c.l.b16 %v157
  %v1095 = vunpack.c.h.b16 %v157
  %v1096 = vunpack.c.l.b16 %v158
  %v1097 = vunpack.c.h.b16 %v158
  %v1098 = vunpack.c.l.b16 %v159
  %v1099 = vunpack.c.h.b16 %v159
  %v1100 = vunpack.c.l.b16 %v160
  %v1101 = vunpack.c.h.b16 %v160
  %v1102 = vunpack.c.l.b16 %v161
  %v1103 = vunpack.c.h.b16 %v161
  %v1104 = vunpack.c.l.b16 %v162
  %v1105 = vunpack.c.h.b16 %v162
  %v1106 = vunpack.c.l.b16 %v163
  %v1107 = vunpack.c.l.b16 %v164
  %v1108 = vunpack.c.h.b16 %v164
  %v1109 = vunpack.c.l.b16 %v165
  %v1110 = vunpack.c.h.b16 %v165
  %v1111 = vunpack.c.l.b16 %v166
  %v1112 = vunpack.c.h.b16 %v166
  %v1113 = vunpack.c.l.b16 %v167
  %v1114 = vunpack.c.h.b16 %v167
  %v1115 = vunpack.c.l.b16 %v168
  %v1116 = vunpack.c.h.b16 %v168
  %v1117 = vunpack.c.l.b16 %v169
  %v1118 = vunpack.c.h.b16 %v169
  %v1119 = vunpack.c.l.b16 %v170
  %v1120 = vunpack.c.l.b16 %v171
  %v1121 = vunpack.c.h.b16 %v171
  %v1122 = vunpack.c.l.b16 %v172
  %v1123 = vunpack.c.h.b16 %v172
  %v1124 = vunpack.c.l.b16 %v173
  %v1125 = vunpack.c.h.b16 %v173
  %v1126 = vunpack.c.l.b16 %v174
  %v1127 = vunpack.c.h.b16 %v174
  %v1128 = vunpack.c.l.b16 %v175
  %v1129 = vunpack.c.h.b16 %v175
  %v1130 = vunpack.c.l.b16 %v176
  %v1131 = vunpack.c.h.b16 %v176
  %v1132 = vunpack.c.l.b16 %v177
  %v1133 = vunpack.c.l.b16 %v178
  %v1134 = vunpack.c.h.b16 %v178
  %v1135 = vunpack.c.l.b16 %v179
  %v1136 = vunpack.c.h.b16 %v179
  %v1137 = vunpack.c.l.b16 %v180
  %v1138 = vunpack.c.h.b16 %v180
  %v1139 = vunpack.c.l.b16 %v181
  %v1140 = vunpack.c.h.b16 %v181
  %v1141 = vunpack.c.l.b16 %v182
  %v1142 = vunpack.c.h.b16 %v182
  %v1143 = vunpack.c.l.b16 %v183
  %v1144 = vunpack.c.h.b16 %v183
  %v1145 = vunpack.c.l.b16 %v184
  %v1146 = vunpack.c.l.b16 %v185
  %v1147 = vunpack.c.h.b16 %v185
  %v1148 = vunpack.c.l.b16 %v186
  %v1149 = vunpack.c.h.b16 %v186
  %v1150 = vunpack.c.l.b16 %v187
  %v1151 = vunpack.c.h.b16 %v187
  %v1152 = vunpack.c.l.b16 %v188
  %v1153 = vunpack.c.h.b16 %v188
  %v1154 = vunpack.c.l.b16 %v189
  %v1155 = vunpack.c.h.b16 %v189
  %v1156 = vunpack.c.l.b16 %v190
  %v1157 = vunpack.c.h.b16 %v190
  %v1158 = vunpack.c.l.b16 %v191
  %v1159 = vunpack.c.l.b16 %v192
  %v1160 = vunpack.c.h.b16 %v192
  %v1161 = vunpack.c.l.b16 %v193
  %v1162 = vunpack.c.h.b16 %v193
  %v1163 = vunpack.c.l.b16 %v194
  %v1164 = vunpack.c.h.b16 %v194
  %v1165 = vunpack.c.l.b16 %v195
  %v1166 = vunpack.c.h.b16 %v195
  %v1167 = vunpack.c.l.b16 %v196
  %v1168 = vunpack.c.h.b16 %v196
  %v1169 = vunpack.c.l.b16 %v197
  %v1170 = vunpack.c.h.b16 %v197
  %v1171 = vunpack.c.l.b16 %v198
  %v1172 = vunpack.c.l.b16 %v199
  %v1173 = vunpack.c.h.b16 %v199
  %v1174 = vunpack.c.l.b16 %v200
  %v1175 = vunpack.c.h.b16 %v200
  %v1176 = vunpack.c.l.b16 %v201
  %v1177 = vunpack.c.h.b16 %v201
  %v1178 = vunpack.c.l.b16 %v202
  %v1179 = vunpack.c.h.b16 %v202
  %v1180 = vunpack.c.l.b16 %v203
  %v1181 = vunpack.c.h.b16 %v203
  %v1182 = vunpack.c.l.b16 %v204
  %v1183 = vunpack.c.h.b16 %v204
  %v1184 = vunpack.c.l.b16 %v205
  %v1185 = vunpack.c.l.b16 %v206
  %v1186 = vunpack.c.h.b16 %v206
  %v1187 = vunpack.c.l.b16 %v207
  %v1188 = vunpack.c.h.b16 %v207
  %v1189 = vunpack.c.l.b16 %v208
  %v1190 = vunpack.c.h.b16 %v208
  %v1191 = vunpack.c.l.b16 %v209
  %v1192 = vunpack.c.h.b16 %v209
  %v1193 = vunpack.c.l.b16 %v210
  %v1194 = vunpack.c.h.b16 %v210
  %v1195 = vunpack.c.l.b16 %v211
  %v1196 = vunpack.c.h.b16 %v211
  %v1197 = vunpack.c.l.b16 %v212
  %v1198 = vunpack.c.l.b16 %v213
  %v1199 = vunpack.c.h.b16 %v213
  %v1200 = vunpack.c.l.b16 %v214
  %v1201 = vunpack.c.h.b16 %v214
  %v1202 = vunpack.c.l.b16 %v215
  %v1203 = vunpack.c.h.b16 %v215
  %v1204 = vunpack.c.l.b16 %v216
  %v1205 = vunpack.c.h.b16 %v216
  %v1206 = vunpack.c.l.b16 %v217
  %v1207 = vunpack.c.h.b16 %v217
  %v1208 = vunpack.c.l.b16 %v218
  %v1209 = vunpack.c.h.b16 %v218
  %v1210 = vunpack.c.l.b16 %v219
  %v1211 = vunpack.c.l.b16 %v220
  %v1212 = vunpack.c.h.b16 %v220
  %v1213 = vunpack.c.l.b16 %v221
  %v1214 = vunpack.c.h.b16 %v221
  %v1215 = vunpack.c.l.b16 %v222
  %v1216 = vunpack.c.h.b16 %v222
  %v1217 = vunpack.c.l.b16 %v223
  %v1218 = vunpack.c.h.b16 %v223
  %v1219 = vunpack.c.l.b16 %v224
  %v1220 = vunpack.c.h.b16 %v224
  %v1221 = vunpack.c.l.b16 %v225
  %v1222 = vunpack.c.h.b16 %v225
  %v1223 = vunpack.c.l.b16 %v226
  %v1224 = vunpack.c.l.b16 %v227
  %v1225 = vunpack.c.h.b16 %v227
  %v1226 = vunpack.c.l.b16 %v228
  %v1227 = vunpack.c.h.b16 %v228
  %v1228 = vunpack.c.l.b16 %v229
  %v1229 = vunpack.c.h.b16 %v229
  %v1230 = vunpack.c.l.b16 %v230
  %v1231 = vunpack.c.h.b16 %v230
  %v1232 = vunpack.c.l.b16 %v231
  %v1233 = vunpack.c.h.b16 %v231
  %v1234 = vunpack.c.l.b16 %v232
  %v1235 = vunpack.c.h.b16 %v232
  %v1236 = vunpack.c.l.b16 %v233
  %v1237 = vunpack.c.l.b16 %v234
  %v1238 = vunpack.c.h.b16 %v234
  %v1239 = vunpack.c.l.b16 %v235
  %v1240 = vunpack.c.h.b16 %v235
  %v1241 = vunpack.c.l.b16 %v236
  %v1242 = vunpack.c.h.b16 %v236
  %v1243 = vunpack.c.l.b16 %v237
  %v1244 = vunpack.c.h.b16 %v237
  %v1245 = vunpack.c.l.b16 %v238
  %v1246 = vunpack.c.h.b16 %v238
  %v1247 = vunpack.c.l.b16 %v239
  %v1248 = vunpack.c.h.b16 %v239
  %v1249 = vunpack.c.l.b16 %v240
  %v1250 = vunpack.c.l.b16 %v241
  %v1251 = vunpack.c.h.b16 %v241
  %v1252 = vunpack.c.l.b16 %v242
  %v1253 = vunpack.c.h.b16 %v242
  %v1254 = vunpack.c.l.b16 %v243
  %v1255 = vunpack.c.h.b16 %v243
  %v1256 = vunpack.c.l.b16 %v244
  %v1257 = vunpack.c.h.b16 %v244
  %v1258 = vunpack.c.l.b16 %v245
  %v1259 = vunpack.c.h.b16 %v245
  %v1260 = vunpack.c.l.b16 %v246
  %v1261 = vunpack.c.h.b16 %v246
  %v1262 = vunpack.c.l.b16 %v247
  %v1263 = vunpack.c.l.b16 %v248
  %v1264 = vunpack.c.h.b16 %v248
  %v1265 = vunpack.c.l.b16 %v249
  %v1266 = vunpack.c.h.b16 %v249
  %v1267 = vunpack.c.l.b16 %v250
  %v1268 = vunpack.c.h.b16 %v250
  %v1269 = vunpack.c.l.b16 %v251
  %v1270 = vunpack.c.h.b16 %v251
  %v1271 = vunpack.c.l.b16 %v252
  %v1272 = vunpack.c.h.b16 %v252
  %v1273 = vunpack.c.l.b16 %v253
  %v1274 = vunpack.c.h.b16 %v253
  %v1275 = vunpack.c.l.b16 %v254
  %v1276 = vunpack.c.l.b16 %v255
  %v1277 = vunpack.c.h.b16 %v255
  %v1278 = vunpack.c.l.b16 %v256
  %v1279 = vunpack.c.h.b16 %v256
  %v1280 = vunpack.c.l.b16 %v257
  %v1281 = vunpack.c.h.b16 %v257
  %v1282 = vunpack.c.l.b16 %v258
  %v1283 = vunpack.c.h.b16 %v258
  %v1284 = vunpack.c.l.b16 %v259
  %v1285 = vunpack.c.h.b16 %v259
  %v1286 = vunpack.c.l.b16 %v260
  %v1287 = vunpack.c.h.b16 %v260
  %v1288 = vunpack.c.l.b16 %v261
  %v1289 = vunpack.c.l.b16 %v262
  %v1290 = vunpack.c.h.b16 %v262
  %v1291 = vunpack.c.l.b16 %v263
  %v1292 = vunpack.c.h.b16 %v263
  %v1293 = vunpack.c.l.b16 %v264
  %v1294 = vunpack.c.h.b16 %v264
  %v1295 = vunpack.c.l.b16 %v265
  %v1296 = vunpack.c.h.b16 %v265
  %v1297 = vunpack.c.l.b16 %v266
  %v1298 = vunpack.c.h.b16 %v266
  %v1299 = vunpack.c.l.b16 %v267
  %v1300 = vunpack.c.h.b16 %v267
  %v1301 = vunpack.c.l.b16 %v268
  %v1302 = vunpack.c.l.b16 %v269
  %v1303 = vunpack.c.h.b16 %v269
  %v1304 = vunpack.c.l.b16 %v270
  %v1305 = vunpack.c.h.b16 %v270
  %v1306 = vunpack.c.l.b16 %v271
  %v1307 = vunpack.c.h.b16 %v271
  %v1308 = vunpack.c.l.b16 %v272
  %v1309 = vunpack.c.h.b16 %v272
  %v1310 = vunpack.c.l.b16 %v273
  %v1311 = vunpack.c.h.b16 %v273
  %v1312 = vunpack.c.l.b16 %v274
  %v1313 = vunpack.c.h.b16 %v274
  %v1314 = vunpack.c.l.b16 %v275
  %v1315 = vunpack.c.l.b16 %v276
  %v1316 = vunpack.c.h.b16 %v276
  %v1317 = vunpack.c.l.b16 %v277
  %v1318 = vunpack.c.h.b16 %v277
  %v1319 = vunpack.c.l.b16 %v278
  %v1320 = vunpack.c.h.b16 %v278
  %v1321 = vunpack.c.l.b16 %v279
  %v1322 = vunpack.c.h.b16 %v279
  %v1323 = vunpack.c.l.b16 %v280
  %v1324 = vunpack.c.h.b16 %v280
  %v1325 = vunpack.c.l.b16 %v281
  %v1326 = vunpack.c.h.b16 %v281
  %v1327 = vunpack.c.l.b16 %v282
  %v1328 = vunpack.c.l.b16 %v283
  %v1329 = vunpack.c.h.b16 %v283
  %v1330 = vunpack.c.l.b16 %v284
  %v1331 = vunpack.c.h.b16 %v284
  %v1332 = vunpack.c.l.b16 %v285
  %v1333 = vunpack.c.h.b16 %v285
  %v1334 = vunpack.c.l.b16 %v286
  %v1335 = vunpack.c.h.b16 %v286
  %v1336 = vunpack.c.l.b16 %v287
  %v1337 = vunpack.c.h.b16 %v287
  %v1338 = vunpack.c.l.b16 %v288
  %v1339 = vunpack.c.h.b16 %v288
  %v1340 = vunpack.c.l.b16 %v289
  %v1341 = vunpack.c.l.b16 %v290
  %v1342 = vunpack.c.h.b16 %v290
  %v1343 = vunpack.c.l.b16 %v291
  %v1344 = vunpack.c.h.b16 %v291
  %v1345 = vunpack.c.l.b16 %v292
  %v1346 = vunpack.c.h.b16 %v292
  %v1347 = vunpack.c.l.b16 %v293
  %v1348 = vunpack.c.h.b16 %v293
  %v1349 = vunpack.c.l.b16 %v294
  %v1350 = vunpack.c.h.b16 %v294
  %v1351 = vunpack.c.l.b16 %v295
  %v1352 = vunpack.c.h.b16 %v295
  %v1353 = vunpack.c.l.b16 %v296
  %v1354 = vunpack.c.l.b16 %v297
  %v1355 = vunpack.c.h.b16 %v297
  %v1356 = vunpack.c.l.b16 %v298
  %v1357 = vunpack.c.h.b16 %v298
  %v1358 = vunpack.c.l.b16 %v299
  %v1359 = vunpack.c.h.b16 %v299
  %v1360 = vunpack.c.l.b16 %v300
  %v1361 = vunpack.c.h.b16 %v300
  %v1362 = vunpack.c.l.b16 %v301
  %v1363 = vunpack.c.h.b16 %v301
  %v1364 = vunpack.c.l.b16 %v302
  %v1365 = vunpack.c.h.b16 %v302
  %v1366 = vunpack.c.l.b16 %v303
  %v1367 = vunpack.c.l.b16 %v304
  %v1368 = vunpack.c.h.b16 %v304
  %v1369 = vunpack.c.l.b16 %v305
  %v1370 = vunpack.c.h.b16 %v305
  %v1371 = vunpack.c.l.b16 %v306
  %v1372 = vunpack.c.h.b16 %v306
  %v1373 = vunpack.c.l.b16 %v307
  %v1374 = vunpack.c.h.b16 %v307
  %v1375 = vunpack.c.l.b16 %v308
  %v1376 = vunpack.c.h.b16 %v308
  %v1377 = vunpack.c.l.b16 %v309
  %v1378 = vunpack.c.h.b16 %v309
  %v1379 = vunpack.c.l.b16 %v310
  %v1380 = vunpack.c.l.b16 %v311
  %v1381 = vunpack.c.h.b16 %v311
  %v1382 = vunpack.c.l.b16 %v312
  %v1383 = vunpack.c.h.b16 %v312
  %v1384 = vunpack.c.l.b16 %v313
  %v1385 = vunpack.c.h.b16 %v313
  %v1386 = vunpack.c.l.b16 %v314
  %v1387 = vunpack.c.h.b16 %v314
  %v1388 = vunpack.c.l.b16 %v315
  %v1389 = vunpack.c.h.b16 %v315
  %v1390 = vunpack.c.l.b16 %v316
  %v1391 = vunpack.c.h.b16 %v316
  %v1392 = vunpack.c.l.b16 %v317
  %v1393 = vpack.c.b16 %v847, %v834
  %v1394 = vpack.c.b16 %v848, %v835
  %v1395 = vpack.c.b16 %v849, %v836
  %v1396 = vpack.c.b16 %v850, %v837
  %v1397 = vpack.c.b16 %v851, %v838
  %v1398 = vpack.c.b16 %v852, %v839
  %v1399 = vpack.c.b16 %v853, %v840
  %v1400 = vpack.c.b16 %v854, %v841
  %v1401 = vpack.c.b16 %v855, %v842
  %v1402 = vpack.c.b16 %v856, %v843
  %v1403 = vpack.c.b16 %v857, %v844
  %v1404 = vpack.c.b16 %v858, %v845
  %v1405 = vpack.c.b16 %v859, %v846
  %v1406 = vpack.c.b16 %v873, %v860
  %v1407 = vpack.c.b16 %v874, %v861
  %v1408 = vpack.c.b16 %v875, %v862
  %v1409 = vpack.c.b16 %v876, %v863
  %v1410 = vpack.c.b16 %v877, %v864
  %v1411 = vpack.c.b16 %v878, %v865
  %v1412 = vpack.c.b16 %v879, %v866
  %v1413 = vpack.c.b16 %v880, %v867
  %v1414 = vpack.c.b16 %v881, %v868
  %v1415 = vpack.c.b16 %v882, %v869
  %v1416 = vpack.c.b16 %v883, %v870
  %v1417 = vpack.c.b16 %v884, %v871
  %v1418 = vpack.c.b16 %v885, %v872
  %v1419 = vpack.c.b16 %v899, %v886
  %v1420 = vpack.c.b16 %v900, %v887
  %v1421 = vpack.c.b16 %v901, %v888
  %v1422 = vpack.c.b16 %v902, %v889
  %v1423 = vpack.c.b16 %v903, %v890
  %v1424 = vpack.c.b16 %v904, %v891
  %v1425 = vpack.c.b16 %v905, %v892
  %v1426 = vpack.c.b16 %v906, %v893
  %v1427 = vpack.c.b16 %v907, %v894
  %v1428 = vpack.c.b16 %v908, %v895
  %v1429 = vpack.c.b16 %v909, %v896
  %v1430 = vpack.c.b16 %v910, %v897
  %v1431 = vpack.c.b16 %v911, %v898
  %v1432 = vpack.c.b16 %v925, %v912
  %v1433 = vpack.c.b16 %v926, %v913
  %v1434 = vpack.c.b16 %v927, %v914
  %v1435 = vpack.c.b16 %v928, %v915
  %v1436 = vpack.c.b16 %v929, %v916
  %v1437 = vpack.c.b16 %v930, %v917
  %v1438 = vpack.c.b16 %v931, %v918
  %v1439 = vpack.c.b16 %v932, %v919
  %v1440 = vpack.c.b16 %v933, %v920
  %v1441 = vpack.c.b16 %v934, %v921
  %v1442 = vpack.c.b16 %v935, %v922
  %v1443 = vpack.c.b16 %v936, %v923
  %v1444 = vpack.c.b16 %v937, %v924
  %v1445 = vpack.c.b16 %v951, %v938
  %v1446 = vpack.c.b16 %v952, %v939
  %v1447 = vpack.c.b16 %v953, %v940
  %v1448 = vpack.c.b16 %v954, %v941
  %v1449 = vpack.c.b16 %v955, %v942
  %v1450 = vpack.c.b16 %v956, %v943
  %v1451 = vpack.c.b16 %v957, %v944
  %v1452 = vpack.c.b16 %v958, %v945
  %v1453 = vpack.c.b16 %v959, %v946
  %v1454 = vpack.c.b16 %v960, %v947
  %v1455 = vpack.c.b16 %v961, %v948
  %v1456 = vpack.c.b16 %v962, %v949
  %v1457 = vpack.c.b16 %v963, %v950
  %v1458 = vpack.c.b16 %v977, %v964
  %v1459 = vpack.c.b16 %v978, %v965
  %v1460 = vpack.c.b16 %v979, %v966
  %v1461 = vpack.c.b16 %v980, %v967
  %v1462 = vpack.c.b16 %v981, %v968
  %v1463 = vpack.c.b16 %v982, %v969
  %v1464 = vpack.c.b16 %v983, %v970
  %v1465 = vpack.c.b16 %v984, %v971
  %v1466 = vpack.c.b16 %v985, %v972
  %v1467 = vpack.c.b16 %v986, %v973
  %v1468 = vpack.c.b16 %v987, %v974
  %v1469 = vpack.c.b16 %v988, %v975
  %v1470 = vpack.c.b16 %v989, %v976
  %v1471 = vpack.c.b16 %v1003, %v990
  %v1472 = vpack.c.b16 %v1004, %v991
  %v1473 = vpack.c.b16 %v1005, %v992
  %v1474 = vpack.c.b16 %v1006, %v993
  %v1475 = vpack.c.b16 %v1007, %v994
  %v1476 = vpack.c.b16 %v1008, %v995
  %v1477 = vpack.c.b16 %v1009, %v996
  %v1478 = vpack.c.b16 %v1010, %v997
  %v1479 = vpack.c.b16 %v1011, %v998
  %v1480 = vpack.c.b16 %v1012, %v999
  %v1481 = vpack.c.b16 %v1013, %v1000
  %v1482 = vpack.c.b16 %v1014, %v1001
  %v1483 = vpack.c.b16 %v1015, %v1002
  %v1484 = vpack.c.b16 %v1029, %v1016
  %v1485 = vpack.c.b16 %v1030, %v1017
  %v1486 = vpack.c.b16 %v1031, %v1018
  %v1487 = vpack.c.b16 %v1032, %v1019
  %v1488 = vpack.c.b16 %v1033, %v1020
  %v1489 = vpack.c.b16 %v1034, %v1021
  %v1490 = vpack.c.b16 %v1035, %v1022
  %v1491 = vpack.c.b16 %v1036, %v1023
  %v1492 = vpack.c.b16 %v1037, %v1024
  %v1493 = vpack.c.b16 %v1038, %v1025
  %v1494 = vpack.c.b16 %v1039, %v1026
  %v1495 = vpack.c.b16 %v1040, %v1027
  %v1496 = vpack.c.b16 %v1041, %v1028
  %v1497 = vpack.c.b16 %v1055, %v1042
  %v1498 = vpack.c.b16 %v1056, %v1043
  %v1499 = vpack.c.b16 %v1057, %v1044
  %v1500 = vpack.c.b16 %v1058, %v1045
  %v1501 = vpack.c.b16 %v1059, %v1046
  %v1502 = vpack.c.b16 %v1060, %v1047
  %v1503 = vpack.c.b16 %v1061, %v1048
  %v1504 = vpack.c.b16 %v1062, %v1049
  %v1505 = vpack.c.b16 %v1063, %v1050
  %v1506 = vpack.c.b16 %v1064, %v1051
  %v1507 = vpack.c.b16 %v1065, %v1052
  %v1508 = vpack.c.b16 %v1066, %v1053
  %v1509 = vpack.c.b16 %v1067, %v1054
  %v1510 = vpack.c.b16 %v1081, %v1068
  %v1511 = vpack.c.b16 %v1082, %v1069
  %v1512 = vpack.c.b16 %v1083, %v1070
  %v1513 = vpack.c.b16 %v1084, %v1071
  %v1514 = vpack.c.b16 %v1085, %v1072
  %v1515 = vpack.c.b16 %v1086, %v1073
  %v1516 = vpack.c.b16 %v1087, %v1074
  %v1517 = vpack.c.b16 %v1088, %v1075
  %v1518 = vpack.c.b16 %v1089, %v1076
  %v1519 = vpack.c.b16 %v1090, %v1077
  %v1520 = vpack.c.b16 %v1091, %v1078
  %v1521 = vpack.c.b16 %v1092, %v1079
  %v1522 = vpack.c.b16 %v1093, %v1080
  %v1523 = vpack.c.b16 %v1107, %v1094
  %v1524 = vpack.c.b16 %v1108, %v1095
  %v1525 = vpack.c.b16 %v1109, %v1096
  %v1526 = vpack.c.b16 %v1110, %v1097
  %v1527 = vpack.c.b16 %v1111, %v1098
  %v1528 = vpack.c.b16 %v1112, %v1099
  %v1529 = vpack.c.b16 %v1113, %v1100
  %v1530 = vpack.c.b16 %v1114, %v1101
  %v1531 = vpack.c.b16 %v1115, %v1102
  %v1532 = vpack.c.b16 %v1116, %v1103
  %v1533 = vpack.c.b16 %v1117, %v1104
  %v1534 = vpack.c.b16 %v1118, %v1105
  %v1535 = vpack.c.b16 %v1119, %v1106
  %v1536 = vpack.c.b16 %v1133, %v1120
  %v1537 = vpack.c.b16 %v1134, %v1121
  %v1538 = vpack.c.b16 %v1135, %v1122
  %v1539 = vpack.c.b16 %v1136, %v1123
  %v1540 = vpack.c.b16 %v1137, %v1124
  %v1541 = vpack.c.b16 %v1138, %v1125
  %v1542 = vpack.c.b16 %v1139, %v1126
  %v1543 = vpack.c.b16 %v1140, %v1127
  %v1544 = vpack.c.b16 %v1141, %v1128
  %v1545 = vpack.c.b16 %v1142, %v1129
  %v1546 = vpack.c.b16 %v1143, %v1130
  %v1547 = vpack.c.b16 %v1144, %v1131
  %v1548 = vpack.c.b16 %v1145, %v1132
  %v1549 = vpack.c.b16 %v1159, %v1146
  %v1550 = vpack.c.b16 %v1160, %v1147
  %v1551 = vpack.c.b16 %v1161, %v1148
  %v1552 = vpack.c.b16 %v1162, %v1149
  %v1553 = vpack.c.b16 %v1163, %v1150
  %v1554 = vpack.c.b16 %v1164, %v1151
  %v1555 = vpack.c.b16 %v1165, %v1152
  %v1556 = vpack.c.b16 %v1166, %v1153
  %v1557 = vpack.c.b16 %v1167, %v1154
  %v1558 = vpack.c.b16 %v1168, %v1155
  %v1559 = vpack.c.b16 %v1169, %v1156
  %v1560 = vpack.c.b16 %v1170, %v1157
  %v1561 = vpack.c.b16 %v1171, %v1158
  %v1562 = vpack.c.b16 %v1185, %v1172
  %v1563 = vpack.c.b16 %v1186, %v1173
  %v1564 = vpack.c.b16 %v1187, %v1174
  %v1565 = vpack.c.b16 %v1188, %v1175
  %v1566 = vpack.c.b16 %v1189, %v1176
  %v1567 = vpack.c.b16 %v1190, %v1177
  %v1568 = vpack.c.b16 %v1191, %v1178
  %v1569 = vpack.c.b16 %v1192, %v1179
  %v1570 = vpack.c.b16 %v1193, %v1180
  %v1571 = vpack.c.b16 %v1194, %v1181
  %v1572 = vpack.c.b16 %v1195, %v1182
  %v1573 = vpack.c.b16 %v1196, %v1183
  %v1574 = vpack.c.b16 %v1197, %v1184
  %v1575 = vpack.c.b16 %v1211, %v1198
  %v1576 = vpack.c.b16 %v1212, %v1199
  %v1577 = vpack.c.b16 %v1213, %v1200
  %v1578 = vpack.c.b16 %v1214, %v1201
  %v1579 = vpack.c.b16 %v1215, %v1202
  %v1580 = vpack.c.b16 %v1216, %v1203
  %v1581 = vpack.c.b16 %v1217, %v1204
  %v1582 = vpack.c.b16 %v1218, %v1205
  %v1583 = vpack.c.b16 %v1219, %v1206
  %v1584 = vpack.c.b16 %v1220, %v1207
  %v1585 = vpack.c.b16 %v1221, %v1208
  %v1586 = vpack.c.b16 %v1222, %v1209
  %v1587 = vpack.c.b16 %v1223, %v1210
  %v1588 = vpack.c.b16 %v1237, %v1224
  %v1589 = vpack.c.b16 %v1238, %v1225
  %v1590 = vpack.c.b16 %v1239, %v1226
  %v1591 = vpack.c.b16 %v1240, %v1227
  %v1592 = vpack.c.b16 %v1241, %v1228
  %v1593 = vpack.c.b16 %v1242, %v1229
  %v1594 = vpack.c.b16 %v1243, %v1230
  %v1595 = vpack.c.b16 %v1244, %v1231
  %v1596 = vpack.c.b16 %v1245, %v1232
  %v1597 = vpack.c.b16 %v1246, %v1233
  %v1598 = vpack.c.b16 %v1247, %v1234
  %v1599 = vpack.c.b16 %v1248, %v1235
  %v1600 = vpack.c.b16 %v1249, %v1236
  %v1601 = vpack.c.b16 %v1263, %v1250
  %v1602 = vpack.c.b16 %v1264, %v1251
  %v1603 = vpack.c.b16 %v1265, %v1252
  %v1604 = vpack.c.b16 %v1266, %v1253
  %v1605 = vpack.c.b16 %v1267, %v1254
  %v1606 = vpack.c.b16 %v1268, %v1255
  %v1607 = vpack.c.b16 %v1269, %v1256
  %v1608 = vpack.c.b16 %v1270, %v1257
  %v1609 = vpack.c.b16 %v1271, %v1258
  %v1610 = vpack.c.b16 %v1272, %v1259
  %v1611 = vpack.c.b16 %v1273, %v1260
  %v1612 = vpack.c.b16 %v1274, %v1261
  %v1613 = vpack.c.b16 %v1275, %v1262
  %v1614 = vpack.c.b16 %v1289, %v1276
  %v1615 = vpack.c.b16 %v1290, %v1277
  %v1616 = vpack.c.b16 %v1291, %v1278
  %v1617 = vpack.c.b16 %v1292, %v1279
  %v1618 = vpack.c.b16 %v1293, %v1280
  %v1619 = vpack.c.b16 %v1294, %v1281
  %v1620 = vpack.c.b16 %v1295, %v1282
  %v1621 = vpack.c.b16 %v1296, %v1283
  %v1622 = vpack.c.b16 %v1297, %v1284
  %v1623 = vpack.c.b16 %v1298, %v1285
  %v1624 = vpack.c.b16 %v1299, %v1286
  %v1625 = vpack.c.b16 %v1300, %v1287
  %v1626 = vpack.c.b16 %v1301, %v1288
  %v1627 = vpack.c.b16 %v1315, %v1302
  %v1628 = vpack.c.b16 %v1316, %v1303
  %v1629 = vpack.c.b16 %v1317, %v1304
  %v1630 = vpack.c.b16 %v1318, %v1305
  %v1631 = vpack.c.b16 %v1319, %v1306
  %v1632 = vpack.c.b16 %v1320, %v1307
  %v1633 = vpack.c.b16 %v1321, %v1308
  %v1634 = vpack.c.b16 %v1322, %v1309
  %v1635 = vpack.c.b16 %v1323, %v1310
  %v1636 = vpack.c.b16 %v1324, %v1311
  %v1637 = vpack.c.b16 %v1325, %v1312
  %v1638 = vpack.c.b16 %v1326, %v1313
  %v1639 = vpack.c.b16 %v1327, %v1314
  %v1640 = vpack.c.b16 %v1341, %v1328
  %v1641 = vpack.c.b16 %v1342, %v1329
  %v1642 = vpack.c.b16 %v1343, %v1330
  %v1643 = vpack.c.b16 %v1344, %v1331
  %v1644 = vpack.c.b16 %v1345, %v1332
  %v1645 = vpack.c.b16 %v1346, %v1333
  %v1646 = vpack.c.b16 %v1347, %v1334
  %v1647 = vpack.c.b16 %v1348, %v1335
  %v1648 = vpack.c.b16 %v1349, %v1336
  %v1649 = vpack.c.b16 %v1350, %v1337
  %v1650 = vpack.c.b16 %v1351, %v1338
  %v1651 = vpack.c.b16 %v1352, %v1339
  %v1652 = vpack.c.b16 %v1353, %v1340
  %v1653 = vpack.c.b16 %v1367, %v1354
  %v1654 = vpack.c.b16 %v1368, %v1355
  %v1655 = vpack.c.b16 %v1369, %v1356
  %v1656 = vpack.c.b16 %v1370, %v1357
  %v1657 = vpack.c.b16 %v1371, %v1358
  %v1658 = vpack.c.b16 %v1372, %v1359
  %v1659 = vpack.c.b16 %v1373, %v1360
  %v1660 = vpack.c.b16 %v1374, %v1361
  %v1661 = vpack.c.b16 %v1375, %v1362
  %v1662 = vpack.c.b16 %v1376, %v1363
  %v1663 = vpack.c.b16 %v1377, %v1364
  %v1664 = vpack.c.b16 %v1378, %v1365
  %v1665 = vpack.c.b16 %v1379, %v1366
  %v1666 = vpack.c.b16 %v1380, %v1380
  %v1667 = vpack.c.b16 %v1381, %v1381
  %v1668 = vpack.c.b16 %v1382, %v1382
  %v1669 = vpack.c.b16 %v1383, %v1383
  %v1670 = vpack.c.b16 %v1384, %v1384
  %v1671 = vpack.c.b16 %v1385, %v1385
  %v1672 = vpack.c.b16 %v1386, %v1386
  %v1673 = vpack.c.b16 %v1387, %v1387
  %v1674 = vpack.c.b16 %v1388, %v1388
  %v1675 = vpack.c.b16 %v1389, %v1389
  %v1676 = vpack.c.b16 %v1390, %v1390
  %v1677 = vpack.c.b16 %v1391, %v1391
  %v1678 = vpack.c.b16 %v1392, %v1392
  %v2173 = vunpack.c.l.b16 %v318
  %v2174 = vunpack.c.l.b16 %v319
  %v2175 = vunpack.c.l.b16 %v320
  %v2176 = vunpack.c.l.b16 %v321
  %v2177 = vunpack.c.l.b16 %v322
  %v2178 = vunpack.c.l.b16 %v323
  %v2179 = vunpack.c.l.b16 %v324
  %v2180 = vunpack.c.l.b16 %v325
  %v2181 = vunpack.c.l.b16 %v326
  %v2182 = vunpack.c.l.b16 %v327
  %v2183 = vunpack.c.l.b16 %v328
  %v2184 = vunpack.c.l.b16 %v329
  %v2185 = vunpack.c.l.b16 %v330
  %v2186 = vunpack.c.l.b16 %v331
  %v2187 = vunpack.c.l.b16 %v332
  %v2188 = vunpack.c.l.b16 %v333
  %v2189 = vunpack.c.l.b16 %v334
  %v2190 = vunpack.c.l.b16 %v335
  %v2191 = vunpack.c.l.b16 %v336
  %v2192 = vunpack.c.l.b16 %v337
  %v2193 = vunpack.c.l.b16 %v338
  %v2194 = vunpack.c.l.b16 %v339
  %v2195 = vunpack.c.l.b16 %v340
  %v2196 = vunpack.c.l.b16 %v341
  %v2197 = vunpack.c.l.b16 %v342
  %v2198 = vunpack.c.l.b16 %v343
  %v2199 = vunpack.c.l.b16 %v344
  %v2200 = vunpack.c.l.b16 %v345
  %v2201 = vunpack.c.l.b16 %v346
  %v2202 = vunpack.c.l.b16 %v347
  %v2203 = vunpack.c.l.b16 %v348
  %v2204 = vunpack.c.l.b16 %v349
  %v2205 = vunpack.c.l.b16 %v350
  %v2206 = vunpack.c.l.b16 %v351
  %v2207 = vunpack.c.l.b16 %v352
  %v2208 = vunpack.c.l.b16 %v353
  %v2209 = vunpack.c.l.b16 %v354
  %v2210 = vunpack.c.l.b16 %v355
  %v2211 = vunpack.c.l.b16 %v356
  %v2212 = vunpack.c.l.b16 %v357
  %v2213 = vunpack.c.l.b16 %v358
  %v2214 = vunpack.c.l.b16 %v359
  %v2215 = vunpack.c.l.b16 %v360
  %v2216 = vunpack.c.l.b16 %v361
  %v2217 = vunpack.c.l.b16 %v362
  %v2218 = vunpack.c.l.b16 %v363
  %v2219 = vunpack.c.l.b16 %v364
  %v2220 = vunpack.c.l.b16 %v365
  %v2221 = vunpack.c.l.b16 %v366
  %v2222 = vunpack.c.l.b16 %v367
  %v2223 = vunpack.c.l.b16 %v368
  %v2224 = vunpack.c.l.b16 %v369
  %v2225 = vunpack.c.l.b16 %v370
  %v2226 = vunpack.c.l.b16 %v371
  %v2227 = vunpack.c.l.b16 %v372
  %v2228 = vunpack.c.l.b16 %v373
  %v2229 = vunpack.c.l.b16 %v374
  %v2230 = vunpack.c.l.b16 %v375
  %v2231 = vunpack.c.l.b16 %v376
  %v2232 = vunpack.c.l.b16 %v377
  %v2233 = vunpack.c.l.b16 %v378
  %v2234 = vunpack.c.l.b16 %v379
  %v2235 = vunpack.c.l.b16 %v380
  %v2236 = vunpack.c.l.b16 %v381
  %v2237 = vunpack.c.l.b16 %v382
  %v2238 = vunpack.c.l.b16 %v383
  %v2239 = vunpack.c.l.b16 %v384
  %v2240 = vunpack.c.l.b16 %v385
  %v2241 = vunpack.c.l.b16 %v386
  %v2242 = vunpack.c.l.b16 %v387
  %v2243 = vunpack.c.l.b16 %v388
  %v2244 = vunpack.c.l.b16 %v389
  %v2245 = vunpack.c.l.b16 %v390
  %v2246 = vunpack.c.l.b16 %v391
  %v2247 = vunpack.c.l.b16 %v392
  %v2248 = vunpack.c.l.b16 %v393
  %v2249 = vunpack.c.l.b16 %v394
  %v2250 = vunpack.c.l.b16 %v395
  %v2251 = vunpack.c.l.b16 %v396
  %v2252 = vunpack.c.l.b16 %v397
  %v2253 = vunpack.c.l.b16 %v398
  %v2254 = vunpack.c.l.b16 %v399
  %v2255 = vunpack.c.l.b16 %v400
  %v2256 = vunpack.c.l.b16 %v401
  %v2257 = vunpack.c.l.b16 %v402
  %v2258 = vunpack.c.l.b16 %v403
  %v2259 = vunpack.c.l.b16 %v404
  %v2260 = vunpack.c.l.b16 %v405
  %v2261 = vunpack.c.l.b16 %v406
  %v2262 = vunpack.c.l.b16 %v407
  %v2263 = vunpack.c.l.b16 %v408
  %v2264 = vunpack.c.l.b16 %v409
  %v2265 = vunpack.c.l.b16 %v410
  %v2266 = vunpack.c.l.b16 %v411
  %v2267 = vunpack.c.l.b16 %v412
  %v2268 = vunpack.c.l.b16 %v413
  %v2269 = vunpack.c.l.b16 %v414
  %v2270 = vunpack.c.l.b16 %v415
  %v2271 = vunpack.c.l.b16 %v416
  %v2272 = vunpack.c.l.b16 %v417
  %v2273 = vunpack.c.l.b16 %v418
  %v2274 = vunpack.c.l.b16 %v419
  %v2275 = vunpack.c.l.b16 %v420
  %v2276 = vunpack.c.l.b16 %v421
  %v2277 = vunpack.c.l.b16 %v422
  %v2278 = vunpack.c.l.b16 %v423
  %v2279 = vunpack.c.l.b16 %v424
  %v2280 = vunpack.c.l.b16 %v425
  %v2281 = vunpack.c.l.b16 %v426
  %v2282 = vunpack.c.l.b16 %v427
  %v2283 = vunpack.c.l.b16 %v428
  %v2284 = vunpack.c.l.b16 %v429
  %v2285 = vunpack.c.l.b16 %v430
  %v2286 = vunpack.c.l.b16 %v431
  %v2287 = vunpack.c.l.b16 %v432
  %v2288 = vunpack.c.l.b16 %v433
  %v2289 = vunpack.c.l.b16 %v434
  %v2290 = vunpack.c.l.b16 %v435
  %v2291 = vunpack.c.l.b16 %v436
  %v2292 = vunpack.c.l.b16 %v437
  %v2293 = vunpack.c.l.b16 %v438
  %v2294 = vunpack.c.l.b16 %v439
  %v2295 = vunpack.c.l.b16 %v440
  %v2296 = vunpack.c.l.b16 %v441
  %v2297 = vunpack.c.l.b16 %v442
  %v2298 = vunpack.c.l.b16 %v443
  %v2299 = vunpack.c.l.b16 %v444
  %v2300 = vunpack.c.l.b16 %v445
  %v2301 = vunpack.c.l.b16 %v446
  %v2302 = vunpack.c.l.b16 %v447
  %v2303 = vunpack.c.l.b16 %v448
  %v2304 = vunpack.c.l.b16 %v449
  %v2305 = vunpack.c.l.b16 %v450
  %v2306 = vunpack.c.l.b16 %v451
  %v2307 = vunpack.c.l.b16 %v452
  %v2308 = vunpack.c.l.b16 %v453
  %v2309 = vunpack.c.l.b16 %v454
  %v2310 = vunpack.c.l.b16 %v455
  %v2311 = vunpack.c.l.b16 %v456
  %v2312 = vunpack.c.l.b16 %v457
  %v2313 = vunpack.c.l.b16 %v458
  %v2314 = vunpack.c.l.b16 %v459
  %v2315 = vunpack.c.l.b16 %v460
  %v2316 = vunpack.c.l.b16 %v461
  %v2317 = vunpack.c.l.b16 %v462
  %v2318 = vunpack.c.l.b16 %v463
  %v2319 = vunpack.c.l.b16 %v464
  %v2320 = vunpack.c.l.b16 %v465
  %v2321 = vunpack.c.l.b16 %v466
  %v2322 = vunpack.c.l.b16 %v467
  %v2323 = vunpack.c.l.b16 %v468
  %v2324 = vunpack.c.l.b16 %v469
  %v2325 = vunpack.c.l.b16 %v470
  %v2326 = vunpack.c.l.b16 %v471
  %v2327 = vunpack.c.l.b16 %v472
  %v2328 = vunpack.c.l.b16 %v473
  %v2329 = vunpack.c.l.b16 %v474
  %v2330 = vunpack.c.l.b16 %v475
  %v2331 = vunpack.c.l.b16 %v476
  %v2332 = vunpack.c.l.b16 %v477
  %v2333 = vunpack.c.l.b16 %v478
  %v2334 = vunpack.c.l.b16 %v479
  %v2335 = vunpack.c.l.b16 %v480
  %v2336 = vunpack.c.l.b16 %v481
  %v2337 = vunpack.c.l.b16 %v482
  %v2338 = vunpack.c.l.b16 %v483
  %v2339 = vunpack.c.l.b16 %v484
  %v2340 = vunpack.c.l.b16 %v485
  %v2341 = vunpack.c.l.b16 %v486
  %v2342 = vunpack.c.l.b16 %v487
  %v2343 = vunpack.c.l.b16 %v488
  %v2344 = vunpack.c.l.b16 %v489
  %v2345 = vunpack.c.l.b16 %v490
  %v2346 = vunpack.c.l.b16 %v491
  %v2347 = vunpack.c.l.b16 %v492
  %v2348 = vunpack.c.l.b16 %v493
  %v2349 = vunpack.c.l.b16 %v494
  %v2350 = vunpack.c.l.b16 %v495
  %v2351 = vunpack.c.l.b16 %v496
  %v2352 = vunpack.c.l.b16 %v497
  %v2353 = vunpack.c.l.b16 %v498
  %v2354 = vunpack.c.l.b16 %v499
  %v2355 = vunpack.c.l.b16 %v500
  %v2356 = vunpack.c.l.b16 %v501
  %v2357 = vunpack.c.l.b16 %v502
  %v2358 = vunpack.c.l.b16 %v503
  %v2359 = vunpack.c.l.b16 %v504
  %v2360 = vunpack.c.l.b16 %v505
  %v2361 = vunpack.c.l.b16 %v506
  %v2362 = vunpack.c.l.b16 %v507
  %v2363 = vunpack.c.l.b16 %v508
  %v2364 = vunpack.c.l.b16 %v509
  %v2365 = vunpack.c.l.b16 %v510
  %v2366 = vunpack.c.l.b16 %v511
  %v2367 = vunpack.c.l.b16 %v512
  %v2368 = vunpack.c.l.b16 %v513
  %v2369 = vunpack.c.l.b16 %v514
  %v2370 = vunpack.c.l.b16 %v515
  %v2371 = vunpack.c.l.b16 %v516
  %v2372 = vunpack.c.l.b16 %v517
  %v2373 = vunpack.c.l.b16 %v518
  %v2374 = vunpack.c.l.b16 %v519
  %v2375 = vunpack.c.l.b16 %v520
  %v2376 = vunpack.c.l.b16 %v521
  %v2377 = vunpack.c.l.b16 %v522
  %v2378 = vunpack.c.l.b16 %v523
  %v2379 = vunpack.c.l.b16 %v524
  %v2380 = vunpack.c.l.b16 %v525
  %v2381 = vpack.c.b16 %v2174, %v2173
  %v2382 = vpack.c.b16 %v2176, %v2175
  %v2383 = vpack.c.b16 %v2178, %v2177
  %v2384 = vpack.c.b16 %v2180, %v2179
  %v2385 = vpack.c.b16 %v2182, %v2181
  %v2386 = vpack.c.b16 %v2184, %v2183
  %v2387 = vpack.c.b16 %v2186, %v2185
  %v2388 = vpack.c.b16 %v2188, %v2187
  %v2389 = vpack.c.b16 %v2190, %v2189
  %v2390 = vpack.c.b16 %v2192, %v2191
  %v2391 = vpack.c.b16 %v2194, %v2193
  %v2392 = vpack.c.b16 %v2196, %v2195
  %v2393 = vpack.c.b16 %v2198, %v2197
  %v2394 = vpack.c.b16 %v2200, %v2199
  %v2395 = vpack.c.b16 %v2202, %v2201
  %v2396 = vpack.c.b16 %v2204, %v2203
  %v2397 = vpack.c.b16 %v2206, %v2205
  %v2398 = vpack.c.b16 %v2208, %v2207
  %v2399 = vpack.c.b16 %v2210, %v2209
  %v2400 = vpack.c.b16 %v2212, %v2211
  %v2401 = vpack.c.b16 %v2214, %v2213
  %v2402 = vpack.c.b16 %v2216, %v2215
  %v2403 = vpack.c.b16 %v2218, %v2217
  %v2404 = vpack.c.b16 %v2220, %v2219
  %v2405 = vpack.c.b16 %v2222, %v2221
  %v2406 = vpack.c.b16 %v2224, %v2223
  %v2407 = vpack.c.b16 %v2226, %v2225
  %v2408 = vpack.c.b16 %v2228, %v2227
  %v2409 = vpack.c.b16 %v2230, %v2229
  %v2410 = vpack.c.b16 %v2232, %v2231
  %v2411 = vpack.c.b16 %v2234, %v2233
  %v2412 = vpack.c.b16 %v2236, %v2235
  %v2413 = vpack.c.b16 %v2238, %v2237
  %v2414 = vpack.c.b16 %v2240, %v2239
  %v2415 = vpack.c.b16 %v2242, %v2241
  %v2416 = vpack.c.b16 %v2244, %v2243
  %v2417 = vpack.c.b16 %v2246, %v2245
  %v2418 = vpack.c.b16 %v2248, %v2247
  %v2419 = vpack.c.b16 %v2250, %v2249
  %v2420 = vpack.c.b16 %v2252, %v2251
  %v2421 = vpack.c.b16 %v2254, %v2253
  %v2422 = vpack.c.b16 %v2256, %v2255
  %v2423 = vpack.c.b16 %v2258, %v2257
  %v2424 = vpack.c.b16 %v2260, %v2259
  %v2425 = vpack.c.b16 %v2262, %v2261
  %v2426 = vpack.c.b16 %v2264, %v2263
  %v2427 = vpack.c.b16 %v2266, %v2265
  %v2428 = vpack.c.b16 %v2268, %v2267
  %v2429 = vpack.c.b16 %v2270, %v2269
  %v2430 = vpack.c.b16 %v2272, %v2271
  %v2431 = vpack.c.b16 %v2274, %v2273
  %v2432 = vpack.c.b16 %v2276, %v2275
  %v2433 = vpack.c.b16 %v2278, %v2277
  %v2434 = vpack.c.b16 %v2280, %v2279
  %v2435 = vpack.c.b16 %v2282, %v2281
  %v2436 = vpack.c.b16 %v2284, %v2283
  %v2437 = vpack.c.b16 %v2286, %v2285
  %v2438 = vpack.c.b16 %v2288, %v2287
  %v2439 = vpack.c.b16 %v2290, %v2289
  %v2440 = vpack.c.b16 %v2292, %v2291
  %v2441 = vpack.c.b16 %v2294, %v2293
  %v2442 = vpack.c.b16 %v2296, %v2295
  %v2443 = vpack.c.b16 %v2298, %v2297
  %v2444 = vpack.c.b16 %v2300, %v2299
  %v2445 = vpack.c.b16 %v2302, %v2301
  %v2446 = vpack.c.b16 %v2304, %v2303
  %v2447 = vpack.c.b16 %v2306, %v2305
  %v2448 = vpack.c.b16 %v2308, %v2307
  %v2449 = vpack.c.b16 %v2310, %v2309
  %v2450 = vpack.c.b16 %v2312, %v2311
  %v2451 = vpack.c.b16 %v2314, %v2313
  %v2452 = vpack.c.b16 %v2316, %v2315
  %v2453 = vpack.c.b16 %v2318, %v2317
  %v2454 = vpack.c.b16 %v2320, %v2319
  %v2455 = vpack.c.b16 %v2322, %v2321
  %v2456 = vpack.c.b16 %v2324, %v2323
  %v2457 = vpack.c.b16 %v2326, %v2325
  %v2458 = vpack.c.b16 %v2328, %v2327
  %v2459 = vpack.c.b16 %v2330, %v2329
  %v2460 = vpack.c.b16 %v2332, %v2331
  %v2461 = vpack.c.b16 %v2334, %v2333
  %v2462 = vpack.c.b16 %v2336, %v2335
  %v2463 = vpack.c.b16 %v2338, %v2337
  %v2464 = vpack.c.b16 %v2340, %v2339
  %v2465 = vpack.c.b16 %v2342, %v2341
  %v2466 = vpack.c.b16 %v2344, %v2343
  %v2467 = vpack.c.b16 %v2346, %v2345
  %v2468 = vpack.c.b16 %v2348, %v2347
  %v2469 = vpack.c.b16 %v2350, %v2349
  %v2470 = vpack.c.b16 %v2352, %v2351
  %v2471 = vpack.c.b16 %v2354, %v2353
  %v2472 = vpack.c.b16 %v2356, %v2355
  %v2473 = vpack.c.b16 %v2358, %v2357
  %v2474 = vpack.c.b16 %v2360, %v2359
  %v2475 = vpack.c.b16 %v2362, %v2361
  %v2476 = vpack.c.b16 %v2364, %v2363
  %v2477 = vpack.c.b16 %v2366, %v2365
  %v2478 = vpack.c.b16 %v2368, %v2367
  %v2479 = vpack.c.b16 %v2370, %v2369
  %v2480 = vpack.c.b16 %v2372, %v2371
  %v2481 = vpack.c.b16 %v2374, %v2373
  %v2482 = vpack.c.b16 %v2376, %v2375
  %v2483 = vpack.c.b16 %v2378, %v2377
  %v2484 = vpack.c.b16 %v2380, %v2379
  %2589 = vmatprep.subr.bf16.mxu0 0
  %2590 = vmatpush1.bf16.msra.mxu0 %v2381
  %2591 = vmatprep.subr.bf16.mxu0 0
  %2592 = vmatpush1.bf16.msra.mxu0 %v2382
  %2593 = vmatprep.subr.bf16.mxu0 0
  %2594 = vmatpush1.bf16.msra.mxu0 %v2383
  %2595 = vmatprep.subr.bf16.mxu0 0
  %2596 = vmatpush1.bf16.msra.mxu0 %v2384
  %2597 = vmatprep.subr.bf16.mxu0 0
  %2598 = vmatpush1.bf16.msra.mxu0 %v2385
  %2599 = vmatprep.subr.bf16.mxu0 0
  %2600 = vmatpush1.bf16.msra.mxu0 %v2386
  %2601 = vmatprep.subr.bf16.mxu0 0
  %2602 = vmatpush1.bf16.msra.mxu0 %v2387
  %2603 = vmatprep.subr.bf16.mxu0 0
  %2604 = vmatpush1.bf16.msra.mxu0 %v2388
  %2605 = vmatprep.subr.bf16.mxu0 0
  %2606 = vmatpush1.bf16.msra.mxu0 %v2389
  %2607 = vmatprep.subr.bf16.mxu0 0
  %2608 = vmatpush1.bf16.msra.mxu0 %v2390
  %2609 = vmatprep.subr.bf16.mxu0 0
  %2610 = vmatpush1.bf16.msra.mxu0 %v2391
  %2611 = vmatprep.subr.bf16.mxu0 0
  %2612 = vmatpush1.bf16.msra.mxu0 %v2392
  %2613 = vmatprep.subr.bf16.mxu0 0
  %2614 = vmatpush1.bf16.msra.mxu0 %v2393
  %2615 = vmatprep.subr.bf16.mxu0 0
  %2616 = vmatpush1.bf16.msra.mxu0 %v2394
  %2617 = vmatprep.subr.bf16.mxu0 0
  %2618 = vmatpush1.bf16.msra.mxu0 %v2395
  %2619 = vmatprep.subr.bf16.mxu0 0
  %2620 = vmatpush1.bf16.msra.mxu0 %v2396
  %2621 = vmatprep.mubr.bf16.mxu0 %v1394
  %2622 = vmatmul.mubr.bf16.gmra.mrb[0].mxu0 %v1393
  %v2623 = vpop.f32.mrb[0].mxu0
  %v2624 = vadd.f32 %v531, %v2623
  %v2625 = vpop.f32.mrb[0].mxu0
  %v2626 = vpop.f32.mrb[0].mxu0
  %v2627 = vadd.f32 %v531, %v2626
  %v2628 = vpop.f32.mrb[0].mxu0
  %2629 = vmatprep.mubr.bf16.mxu0 %v1407
  %2630 = vmatmul.mubr.bf16.gmra.mrb[0].mxu0 %v1406
  %v2631 = vpop.f32.mrb[0].mxu0
  %v2632 = vadd.f32 %v531, %v2631
  %v2633 = vpop.f32.mrb[0].mxu0
  %v2634 = vpop.f32.mrb[0].mxu0
  %v2635 = vadd.f32 %v531, %v2634
  %v2636 = vpop.f32.mrb[0].mxu0
  %2637 = vmatprep.mubr.bf16.mxu0 %v1420
  %2638 = vmatmul.mubr.bf16.gmra.mrb[0].mxu0 %v1419
  %v2639 = vpop.f32.mrb[0].mxu0
  %v2640 = vadd.f32 %v531, %v2639
  %v2641 = vpop.f32.mrb[0].mxu0
  %v2642 = vpop.f32.mrb[0].mxu0
  %v2643 = vadd.f32 %v531, %v2642
  %v2644 = vpop.f32.mrb[0].mxu0
  %2645 = vmatprep.mubr.bf16.mxu0 %v1433
  %2646 = vmatmul.mubr.bf16.gmra.mrb[0].mxu0 %v1432
  %v2647 = vpop.f32.mrb[0].mxu0
  %v2648 = vadd.f32 %v531, %v2647
  %v2649 = vpop.f32.mrb[0].mxu0
  %v2650 = vpop.f32.mrb[0].mxu0
  %v2651 = vadd.f32 %v531, %v2650
  %v2652 = vpop.f32.mrb[0].mxu0
  %2653 = vmatprep.mubr.bf16.mxu0 %v1446
  %2654 = vmatmul.mubr.bf16.gmra.mrb[0].mxu0 %v1445
  %v2655 = vpop.f32.mrb[0].mxu0
  %v2656 = vadd.f32 %v531, %v2655
  %v2657 = vpop.f32.mrb[0].mxu0
  %v2658 = vpop.f32.mrb[0].mxu0
  %v2659 = vadd.f32 %v531, %v2658
  %v2660 = vpop.f32.mrb[0].mxu0
  %2661 = vmatprep.mubr.bf16.mxu0 %v1459
  %2662 = vmatmul.mubr.bf16.gmra.mrb[0].mxu0 %v1458
  %v2663 = vpop.f32.mrb[0].mxu0
  %v2664 = vadd.f32 %v531, %v2663
  %v2665 = vpop.f32.mrb[0].mxu0
  %v2666 = vpop.f32.mrb[0].mxu0
  %v2667 = vadd.f32 %v531, %v2666
  %v2668 = vpop.f32.mrb[0].mxu0
  %2669 = vmatprep.mubr.bf16.mxu0 %v1472
  %2670 = vmatmul.mubr.bf16.gmra.mrb[0].mxu0 %v1471
  %v2671 = vpop.f32.mrb[0].mxu0
  %v2672 = vadd.f32 %v531, %v2671
  %v2673 = vpop.f32.mrb[0].mxu0
  %v2674 = vpop.f32.mrb[0].mxu0
  %v2675 = vadd.f32 %v531, %v2674
  %v2676 = vpop.f32.mrb[0].mxu0
  %2677 = vmatprep.mubr.bf16.mxu0 %v1485
  %2678 = vmatmul.mubr.bf16.gmra.mrb[0].mxu0 %v1484
  %v2679 = vpop.f32.mrb[0].mxu0
  %v2680 = vadd.f32 %v531, %v2679
  %v2681 = vpop.f32.mrb[0].mxu0
  %v2682 = vpop.f32.mrb[0].mxu0
  %v2683 = vadd.f32 %v531, %v2682
  %v2684 = vpop.f32.mrb[0].mxu0
  %2685 = vmatprep.mubr.bf16.mxu0 %v1498
  %2686 = vmatmul.mubr.bf16.gmra.mrb[0].mxu0 %v1497
  %v2687 = vpop.f32.mrb[0].mxu0
  %v2688 = vadd.f32 %v531, %v2687
  %v2689 = vpop.f32.mrb[0].mxu0
  %v2690 = vpop.f32.mrb[0].mxu0
  %v2691 = vadd.f32 %v531, %v2690
  %v2692 = vpop.f32.mrb[0].mxu0
  %2693 = vmatprep.mubr.bf16.mxu0 %v1511
  %2694 = vmatmul.mubr.bf16.gmra.mrb[0].mxu0 %v1510
  %v2695 = vpop.f32.mrb[0].mxu0
  %v2696 = vadd.f32 %v531, %v2695
  %v2697 = vpop.f32.mrb[0].mxu0
  %v2698 = vpop.f32.mrb[0].mxu0
  %v2699 = vadd.f32 %v531, %v2698
  %v2700 = vpop.f32.mrb[0].mxu0
  %2701 = vmatprep.mubr.bf16.mxu0 %v1524
  %2702 = vmatmul.mubr.bf16.gmra.mrb[0].mxu0 %v1523
  %v2703 = vpop.f32.mrb[0].mxu0
  %v2704 = vadd.f32 %v531, %v2703
  %v2705 = vpop.f32.mrb[0].mxu0
  %v2706 = vpop.f32.mrb[0].mxu0
  %v2707 = vadd.f32 %v531, %v2706
  %v2708 = vpop.f32.mrb[0].mxu0
  %2709 = vmatprep.mubr.bf16.mxu0 %v1537
  %2710 = vmatmul.mubr.bf16.gmra.mrb[0].mxu0 %v1536
  %v2711 = vpop.f32.mrb[0].mxu0
  %v2712 = vadd.f32 %v531, %v2711
  %v2713 = vpop.f32.mrb[0].mxu0
  %v2714 = vpop.f32.mrb[0].mxu0
  %v2715 = vadd.f32 %v531, %v2714
  %v2716 = vpop.f32.mrb[0].mxu0
  %2717 = vmatprep.mubr.bf16.mxu0 %v1550
  %2718 = vmatmul.mubr.bf16.gmra.mrb[0].mxu0 %v1549
  %v2719 = vpop.f32.mrb[0].mxu0
  %v2720 = vadd.f32 %v531, %v2719
  %v2721 = vpop.f32.mrb[0].mxu0
  %v2722 = vpop.f32.mrb[0].mxu0
  %v2723 = vadd.f32 %v531, %v2722
  %v2724 = vpop.f32.mrb[0].mxu0
  %2725 = vmatprep.mubr.bf16.mxu0 %v1563
  %2726 = vmatmul.mubr.bf16.gmra.mrb[0].mxu0 %v1562
  %v2727 = vpop.f32.mrb[0].mxu0
  %v2728 = vadd.f32 %v531, %v2727
  %v2729 = vpop.f32.mrb[0].mxu0
  %v2730 = vpop.f32.mrb[0].mxu0
  %v2731 = vadd.f32 %v531, %v2730
  %v2732 = vpop.f32.mrb[0].mxu0
  %2733 = vmatprep.mubr.bf16.mxu0 %v1576
  %2734 = vmatmul.mubr.bf16.gmra.mrb[0].mxu0 %v1575
  %v2735 = vpop.f32.mrb[0].mxu0
  %v2736 = vadd.f32 %v531, %v2735
  %v2737 = vpop.f32.mrb[0].mxu0
  %v2738 = vpop.f32.mrb[0].mxu0
  %v2739 = vadd.f32 %v531, %v2738
  %v2740 = vpop.f32.mrb[0].mxu0
  %2741 = vmatprep.mubr.bf16.mxu0 %v1589
  %2742 = vmatmul.mubr.bf16.gmra.mrb[0].mxu0 %v1588
  %v2743 = vpop.f32.mrb[0].mxu0
  %v2744 = vadd.f32 %v531, %v2743
  %v2745 = vpop.f32.mrb[0].mxu0
  %v2746 = vpop.f32.mrb[0].mxu0
  %v2747 = vadd.f32 %v531, %v2746
  %v2748 = vpop.f32.mrb[0].mxu0
  %2749 = vmatprep.mubr.bf16.mxu0 %v1602
  %2750 = vmatmul.mubr.bf16.gmra.mrb[0].mxu0 %v1601
  %v2751 = vpop.f32.mrb[0].mxu0
  %v2752 = vadd.f32 %v531, %v2751
  %v2753 = vpop.f32.mrb[0].mxu0
  %v2754 = vpop.f32.mrb[0].mxu0
  %v2755 = vadd.f32 %v531, %v2754
  %v2756 = vpop.f32.mrb[0].mxu0
  %2757 = vmatprep.mubr.bf16.mxu0 %v1615
  %2758 = vmatmul.mubr.bf16.gmra.mrb[0].mxu0 %v1614
  %v2759 = vpop.f32.mrb[0].mxu0
  %v2760 = vadd.f32 %v531, %v2759
  %v2761 = vpop.f32.mrb[0].mxu0
  %v2762 = vpop.f32.mrb[0].mxu0
  %v2763 = vadd.f32 %v531, %v2762
  %v2764 = vpop.f32.mrb[0].mxu0
  %2765 = vmatprep.mubr.bf16.mxu0 %v1628
  %2766 = vmatmul.mubr.bf16.gmra.mrb[0].mxu0 %v1627
  %v2767 = vpop.f32.mrb[0].mxu0
  %v2768 = vadd.f32 %v531, %v2767
  %v2769 = vpop.f32.mrb[0].mxu0
  %v2770 = vpop.f32.mrb[0].mxu0
  %v2771 = vadd.f32 %v531, %v2770
  %v2772 = vpop.f32.mrb[0].mxu0
  %2773 = vmatprep.mubr.bf16.mxu0 %v1641
  %2774 = vmatmul.mubr.bf16.gmra.mrb[0].mxu0 %v1640
  %v2775 = vpop.f32.mrb[0].mxu0
  %v2776 = vadd.f32 %v531, %v2775
  %v2777 = vpop.f32.mrb[0].mxu0
  %v2778 = vpop.f32.mrb[0].mxu0
  %v2779 = vadd.f32 %v531, %v2778
  %v2780 = vpop.f32.mrb[0].mxu0
  %2781 = vmatprep.mubr.bf16.mxu0 %v1654
  %2782 = vmatmul.mubr.bf16.gmra.mrb[0].mxu0 %v1653
  %v2783 = vpop.f32.mrb[0].mxu0
  %v2784 = vadd.f32 %v531, %v2783
  %v2785 = vpop.f32.mrb[0].mxu0
  %v2786 = vpop.f32.mrb[0].mxu0
  %v2787 = vadd.f32 %v531, %v2786
  %v2788 = vpop.f32.mrb[0].mxu0
  %2789 = vmatprep.mubr.bf16.mxu0 %v1667
  %2790 = vmatmul.mubr.bf16.gmra.mrb[0].mxu0 %v1666
  %v2791 = vpop.f32.mrb[0].mxu0
  %v2792 = vadd.f32 %v531, %v2791
  %v2793 = vpop.f32.mrb[0].mxu0
  %v2794 = vpop.f32.mrb[0].mxu0
  %v2795 = vpop.f32.mrb[0].mxu0
  %2796 = vdwg.mxu0
  %2797 = vmatprep.subr.bf16.mxu0 0
  %2798 = vmatpush1.bf16.msra.mxu0 %v2397
  %2799 = vmatprep.subr.bf16.mxu0 0
  %2800 = vmatpush1.bf16.msra.mxu0 %v2398
  %2801 = vmatprep.subr.bf16.mxu0 0
  %2802 = vmatpush1.bf16.msra.mxu0 %v2399
  %2803 = vmatprep.subr.bf16.mxu0 0
  %2804 = vmatpush1.bf16.msra.mxu0 %v2400
  %2805 = vmatprep.subr.bf16.mxu0 0
  %2806 = vmatpush1.bf16.msra.mxu0 %v2401
  %2807 = vmatprep.subr.bf16.mxu0 0
  %2808 = vmatpush1.bf16.msra.mxu0 %v2402
  %2809 = vmatprep.subr.bf16.mxu0 0
  %2810 = vmatpush1.bf16.msra.mxu0 %v2403
  %2811 = vmatprep.subr.bf16.mxu0 0
  %2812 = vmatpush1.bf16.msra.mxu0 %v2404
  %2813 = vmatprep.subr.bf16.mxu0 0
  %2814 = vmatpush1.bf16.msra.mxu0 %v2405
  %2815 = vmatprep.subr.bf16.mxu0 0
  %2816 = vmatpush1.bf16.msra.mxu0 %v2406
  %2817 = vmatprep.subr.bf16.mxu0 0
  %2818 = vmatpush1.bf16.msra.mxu0 %v2407
  %2819 = vmatprep.subr.bf16.mxu0 0
  %2820 = vmatpush1.bf16.msra.mxu0 %v2408
  %2821 = vmatprep.subr.bf16.mxu0 0
  %2822 = vmatpush1.bf16.msra.mxu0 %v2409
  %2823 = vmatprep.subr.bf16.mxu0 0
  %2824 = vmatpush1.bf16.msra.mxu0 %v2410
  %2825 = vmatprep.subr.bf16.mxu0 0
  %2826 = vmatpush1.bf16.msra.mxu0 %v2411
  %2827 = vmatprep.subr.bf16.mxu0 0
  %2828 = vmatpush1.bf16.msra.mxu0 %v2412
  %2829 = vmatprep.mubr.bf16.mxu0 %v1396
  %2830 = vmatmul.mubr.bf16.gmra.mrb[0].mxu0 %v1395
  %v2831 = vpop.f32.mrb[0].mxu0
  %v2832 = vadd.f32 %v2624, %v2831
  %v2833 = vpop.f32.mrb[0].mxu0
  %v2834 = vpop.f32.mrb[0].mxu0
  %v2835 = vadd.f32 %v2627, %v2834
  %v2836 = vpop.f32.mrb[0].mxu0
  %2837 = vmatprep.mubr.bf16.mxu0 %v1409
  %2838 = vmatmul.mubr.bf16.gmra.mrb[0].mxu0 %v1408
  %v2839 = vpop.f32.mrb[0].mxu0
  %v2840 = vadd.f32 %v2632, %v2839
  %v2841 = vpop.f32.mrb[0].mxu0
  %v2842 = vpop.f32.mrb[0].mxu0
  %v2843 = vadd.f32 %v2635, %v2842
  %v2844 = vpop.f32.mrb[0].mxu0
  %2845 = vmatprep.mubr.bf16.mxu0 %v1422
  %2846 = vmatmul.mubr.bf16.gmra.mrb[0].mxu0 %v1421
  %v2847 = vpop.f32.mrb[0].mxu0
  %v2848 = vadd.f32 %v2640, %v2847
  %v2849 = vpop.f32.mrb[0].mxu0
  %v2850 = vpop.f32.mrb[0].mxu0
  %v2851 = vadd.f32 %v2643, %v2850
  %v2852 = vpop.f32.mrb[0].mxu0
  %2853 = vmatprep.mubr.bf16.mxu0 %v1435
  %2854 = vmatmul.mubr.bf16.gmra.mrb[0].mxu0 %v1434
  %v2855 = vpop.f32.mrb[0].mxu0
  %v2856 = vadd.f32 %v2648, %v2855
  %v2857 = vpop.f32.mrb[0].mxu0
  %v2858 = vpop.f32.mrb[0].mxu0
  %v2859 = vadd.f32 %v2651, %v2858
  %v2860 = vpop.f32.mrb[0].mxu0
  %2861 = vmatprep.mubr.bf16.mxu0 %v1448
  %2862 = vmatmul.mubr.bf16.gmra.mrb[0].mxu0 %v1447
  %v2863 = vpop.f32.mrb[0].mxu0
  %v2864 = vadd.f32 %v2656, %v2863
  %v2865 = vpop.f32.mrb[0].mxu0
  %v2866 = vpop.f32.mrb[0].mxu0
  %v2867 = vadd.f32 %v2659, %v2866
  %v2868 = vpop.f32.mrb[0].mxu0
  %2869 = vmatprep.mubr.bf16.mxu0 %v1461
  %2870 = vmatmul.mubr.bf16.gmra.mrb[0].mxu0 %v1460
  %v2871 = vpop.f32.mrb[0].mxu0
  %v2872 = vadd.f32 %v2664, %v2871
  %v2873 = vpop.f32.mrb[0].mxu0
  %v2874 = vpop.f32.mrb[0].mxu0
  %v2875 = vadd.f32 %v2667, %v2874
  %v2876 = vpop.f32.mrb[0].mxu0
  %2877 = vmatprep.mubr.bf16.mxu0 %v1474
  %2878 = vmatmul.mubr.bf16.gmra.mrb[0].mxu0 %v1473
  %v2879 = vpop.f32.mrb[0].mxu0
  %v2880 = vadd.f32 %v2672, %v2879
  %v2881 = vpop.f32.mrb[0].mxu0
  %v2882 = vpop.f32.mrb[0].mxu0
  %v2883 = vadd.f32 %v2675, %v2882
  %v2884 = vpop.f32.mrb[0].mxu0
  %2885 = vmatprep.mubr.bf16.mxu0 %v1487
  %2886 = vmatmul.mubr.bf16.gmra.mrb[0].mxu0 %v1486
  %v2887 = vpop.f32.mrb[0].mxu0
  %v2888 = vadd.f32 %v2680, %v2887
  %v2889 = vpop.f32.mrb[0].mxu0
  %v2890 = vpop.f32.mrb[0].mxu0
  %v2891 = vadd.f32 %v2683, %v2890
  %v2892 = vpop.f32.mrb[0].mxu0
  %2893 = vmatprep.mubr.bf16.mxu0 %v1500
  %2894 = vmatmul.mubr.bf16.gmra.mrb[0].mxu0 %v1499
  %v2895 = vpop.f32.mrb[0].mxu0
  %v2896 = vadd.f32 %v2688, %v2895
  %v2897 = vpop.f32.mrb[0].mxu0
  %v2898 = vpop.f32.mrb[0].mxu0
  %v2899 = vadd.f32 %v2691, %v2898
  %v2900 = vpop.f32.mrb[0].mxu0
  %2901 = vmatprep.mubr.bf16.mxu0 %v1513
  %2902 = vmatmul.mubr.bf16.gmra.mrb[0].mxu0 %v1512
  %v2903 = vpop.f32.mrb[0].mxu0
  %v2904 = vadd.f32 %v2696, %v2903
  %v2905 = vpop.f32.mrb[0].mxu0
  %v2906 = vpop.f32.mrb[0].mxu0
  %v2907 = vadd.f32 %v2699, %v2906
  %v2908 = vpop.f32.mrb[0].mxu0
  %2909 = vmatprep.mubr.bf16.mxu0 %v1526
  %2910 = vmatmul.mubr.bf16.gmra.mrb[0].mxu0 %v1525
  %v2911 = vpop.f32.mrb[0].mxu0
  %v2912 = vadd.f32 %v2704, %v2911
  %v2913 = vpop.f32.mrb[0].mxu0
  %v2914 = vpop.f32.mrb[0].mxu0
  %v2915 = vadd.f32 %v2707, %v2914
  %v2916 = vpop.f32.mrb[0].mxu0
  %2917 = vmatprep.mubr.bf16.mxu0 %v1539
  %2918 = vmatmul.mubr.bf16.gmra.mrb[0].mxu0 %v1538
  %v2919 = vpop.f32.mrb[0].mxu0
  %v2920 = vadd.f32 %v2712, %v2919
  %v2921 = vpop.f32.mrb[0].mxu0
  %v2922 = vpop.f32.mrb[0].mxu0
  %v2923 = vadd.f32 %v2715, %v2922
  %v2924 = vpop.f32.mrb[0].mxu0
  %2925 = vmatprep.mubr.bf16.mxu0 %v1552
  %2926 = vmatmul.mubr.bf16.gmra.mrb[0].mxu0 %v1551
  %v2927 = vpop.f32.mrb[0].mxu0
  %v2928 = vadd.f32 %v2720, %v2927
  %v2929 = vpop.f32.mrb[0].mxu0
  %v2930 = vpop.f32.mrb[0].mxu0
  %v2931 = vadd.f32 %v2723, %v2930
  %v2932 = vpop.f32.mrb[0].mxu0
  %2933 = vmatprep.mubr.bf16.mxu0 %v1565
  %2934 = vmatmul.mubr.bf16.gmra.mrb[0].mxu0 %v1564
  %v2935 = vpop.f32.mrb[0].mxu0
  %v2936 = vadd.f32 %v2728, %v2935
  %v2937 = vpop.f32.mrb[0].mxu0
  %v2938 = vpop.f32.mrb[0].mxu0
  %v2939 = vadd.f32 %v2731, %v2938
  %v2940 = vpop.f32.mrb[0].mxu0
  %2941 = vmatprep.mubr.bf16.mxu0 %v1578
  %2942 = vmatmul.mubr.bf16.gmra.mrb[0].mxu0 %v1577
  %v2943 = vpop.f32.mrb[0].mxu0
  %v2944 = vadd.f32 %v2736, %v2943
  %v2945 = vpop.f32.mrb[0].mxu0
  %v2946 = vpop.f32.mrb[0].mxu0
  %v2947 = vadd.f32 %v2739, %v2946
  %v2948 = vpop.f32.mrb[0].mxu0
  %2949 = vmatprep.mubr.bf16.mxu0 %v1591
  %2950 = vmatmul.mubr.bf16.gmra.mrb[0].mxu0 %v1590
  %v2951 = vpop.f32.mrb[0].mxu0
  %v2952 = vadd.f32 %v2744, %v2951
  %v2953 = vpop.f32.mrb[0].mxu0
  %v2954 = vpop.f32.mrb[0].mxu0
  %v2955 = vadd.f32 %v2747, %v2954
  %v2956 = vpop.f32.mrb[0].mxu0
  %2957 = vmatprep.mubr.bf16.mxu0 %v1604
  %2958 = vmatmul.mubr.bf16.gmra.mrb[0].mxu0 %v1603
  %v2959 = vpop.f32.mrb[0].mxu0
  %v2960 = vadd.f32 %v2752, %v2959
  %v2961 = vpop.f32.mrb[0].mxu0
  %v2962 = vpop.f32.mrb[0].mxu0
  %v2963 = vadd.f32 %v2755, %v2962
  %v2964 = vpop.f32.mrb[0].mxu0
  %2965 = vmatprep.mubr.bf16.mxu0 %v1617
  %2966 = vmatmul.mubr.bf16.gmra.mrb[0].mxu0 %v1616
  %v2967 = vpop.f32.mrb[0].mxu0
  %v2968 = vadd.f32 %v2760, %v2967
  %v2969 = vpop.f32.mrb[0].mxu0
  %v2970 = vpop.f32.mrb[0].mxu0
  %v2971 = vadd.f32 %v2763, %v2970
  %v2972 = vpop.f32.mrb[0].mxu0
  %2973 = vmatprep.mubr.bf16.mxu0 %v1630
  %2974 = vmatmul.mubr.bf16.gmra.mrb[0].mxu0 %v1629
  %v2975 = vpop.f32.mrb[0].mxu0
  %v2976 = vadd.f32 %v2768, %v2975
  %v2977 = vpop.f32.mrb[0].mxu0
  %v2978 = vpop.f32.mrb[0].mxu0
  %v2979 = vadd.f32 %v2771, %v2978
  %v2980 = vpop.f32.mrb[0].mxu0
  %2981 = vmatprep.mubr.bf16.mxu0 %v1643
  %2982 = vmatmul.mubr.bf16.gmra.mrb[0].mxu0 %v1642
  %v2983 = vpop.f32.mrb[0].mxu0
  %v2984 = vadd.f32 %v2776, %v2983
  %v2985 = vpop.f32.mrb[0].mxu0
  %v2986 = vpop.f32.mrb[0].mxu0
  %v2987 = vadd.f32 %v2779, %v2986
  %v2988 = vpop.f32.mrb[0].mxu0
  %2989 = vmatprep.mubr.bf16.mxu0 %v1656
  %2990 = vmatmul.mubr.bf16.gmra.mrb[0].mxu0 %v1655
  %v2991 = vpop.f32.mrb[0].mxu0
  %v2992 = vadd.f32 %v2784, %v2991
  %v2993 = vpop.f32.mrb[0].mxu0
  %v2994 = vpop.f32.mrb[0].mxu0
  %v2995 = vadd.f32 %v2787, %v2994
  %v2996 = vpop.f32.mrb[0].mxu0
  %2997 = vmatprep.mubr.bf16.mxu0 %v1669
  %2998 = vmatmul.mubr.bf16.gmra.mrb[0].mxu0 %v1668
  %v2999 = vpop.f32.mrb[0].mxu0
  %v3000 = vadd.f32 %v2792, %v2999
  %v3001 = vpop.f32.mrb[0].mxu0
  %v3002 = vpop.f32.mrb[0].mxu0
  %v3003 = vpop.f32.mrb[0].mxu0
  %3004 = vdwg.mxu0
  %3005 = vmatprep.subr.bf16.mxu0 0
  %3006 = vmatpush1.bf16.msra.mxu0 %v2413
  %3007 = vmatprep.subr.bf16.mxu0 0
  %3008 = vmatpush1.bf16.msra.mxu0 %v2414
  %3009 = vmatprep.subr.bf16.mxu0 0
  %3010 = vmatpush1.bf16.msra.mxu0 %v2415
  %3011 = vmatprep.subr.bf16.mxu0 0
  %3012 = vmatpush1.bf16.msra.mxu0 %v2416
  %3013 = vmatprep.subr.bf16.mxu0 0
  %3014 = vmatpush1.bf16.msra.mxu0 %v2417
  %3015 = vmatprep.subr.bf16.mxu0 0
  %3016 = vmatpush1.bf16.msra.mxu0 %v2418
  %3017 = vmatprep.subr.bf16.mxu0 0
  %3018 = vmatpush1.bf16.msra.mxu0 %v2419
  %3019 = vmatprep.subr.bf16.mxu0 0
  %3020 = vmatpush1.bf16.msra.mxu0 %v2420
  %3021 = vmatprep.subr.bf16.mxu0 0
  %3022 = vmatpush1.bf16.msra.mxu0 %v2421
  %3023 = vmatprep.subr.bf16.mxu0 0
  %3024 = vmatpush1.bf16.msra.mxu0 %v2422
  %3025 = vmatprep.subr.bf16.mxu0 0
  %3026 = vmatpush1.bf16.msra.mxu0 %v2423
  %3027 = vmatprep.subr.bf16.mxu0 0
  %3028 = vmatpush1.bf16.msra.mxu0 %v2424
  %3029 = vmatprep.subr.bf16.mxu0 0
  %3030 = vmatpush1.bf16.msra.mxu0 %v2425
  %3031 = vmatprep.subr.bf16.mxu0 0
  %3032 = vmatpush1.bf16.msra.mxu0 %v2426
  %3033 = vmatprep.subr.bf16.mxu0 0
  %3034 = vmatpush1.bf16.msra.mxu0 %v2427
  %3035 = vmatprep.subr.bf16.mxu0 0
  %3036 = vmatpush1.bf16.msra.mxu0 %v2428
  %3037 = vmatprep.mubr.bf16.mxu0 %v1398
  %3038 = vmatmul.mubr.bf16.gmra.mrb[0].mxu0 %v1397
  %v3039 = vpop.f32.mrb[0].mxu0
  %v3040 = vadd.f32 %v2832, %v3039
  %v3041 = vpop.f32.mrb[0].mxu0
  %v3042 = vpop.f32.mrb[0].mxu0
  %v3043 = vadd.f32 %v2835, %v3042
  %v3044 = vpop.f32.mrb[0].mxu0
  %3045 = vmatprep.mubr.bf16.mxu0 %v1411
  %3046 = vmatmul.mubr.bf16.gmra.mrb[0].mxu0 %v1410
  %v3047 = vpop.f32.mrb[0].mxu0
  %v3048 = vadd.f32 %v2840, %v3047
  %v3049 = vpop.f32.mrb[0].mxu0
  %v3050 = vpop.f32.mrb[0].mxu0
  %v3051 = vadd.f32 %v2843, %v3050
  %v3052 = vpop.f32.mrb[0].mxu0
  %3053 = vmatprep.mubr.bf16.mxu0 %v1424
  %3054 = vmatmul.mubr.bf16.gmra.mrb[0].mxu0 %v1423
  %v3055 = vpop.f32.mrb[0].mxu0
  %v3056 = vadd.f32 %v2848, %v3055
  %v3057 = vpop.f32.mrb[0].mxu0
  %v3058 = vpop.f32.mrb[0].mxu0
  %v3059 = vadd.f32 %v2851, %v3058
  %v3060 = vpop.f32.mrb[0].mxu0
  %3061 = vmatprep.mubr.bf16.mxu0 %v1437
  %3062 = vmatmul.mubr.bf16.gmra.mrb[0].mxu0 %v1436
  %v3063 = vpop.f32.mrb[0].mxu0
  %v3064 = vadd.f32 %v2856, %v3063
  %v3065 = vpop.f32.mrb[0].mxu0
  %v3066 = vpop.f32.mrb[0].mxu0
  %v3067 = vadd.f32 %v2859, %v3066
  %v3068 = vpop.f32.mrb[0].mxu0
  %3069 = vmatprep.mubr.bf16.mxu0 %v1450
  %3070 = vmatmul.mubr.bf16.gmra.mrb[0].mxu0 %v1449
  %v3071 = vpop.f32.mrb[0].mxu0
  %v3072 = vadd.f32 %v2864, %v3071
  %v3073 = vpop.f32.mrb[0].mxu0
  %v3074 = vpop.f32.mrb[0].mxu0
  %v3075 = vadd.f32 %v2867, %v3074
  %v3076 = vpop.f32.mrb[0].mxu0
  %3077 = vmatprep.mubr.bf16.mxu0 %v1463
  %3078 = vmatmul.mubr.bf16.gmra.mrb[0].mxu0 %v1462
  %v3079 = vpop.f32.mrb[0].mxu0
  %v3080 = vadd.f32 %v2872, %v3079
  %v3081 = vpop.f32.mrb[0].mxu0
  %v3082 = vpop.f32.mrb[0].mxu0
  %v3083 = vadd.f32 %v2875, %v3082
  %v3084 = vpop.f32.mrb[0].mxu0
  %3085 = vmatprep.mubr.bf16.mxu0 %v1476
  %3086 = vmatmul.mubr.bf16.gmra.mrb[0].mxu0 %v1475
  %v3087 = vpop.f32.mrb[0].mxu0
  %v3088 = vadd.f32 %v2880, %v3087
  %v3089 = vpop.f32.mrb[0].mxu0
  %v3090 = vpop.f32.mrb[0].mxu0
  %v3091 = vadd.f32 %v2883, %v3090
  %v3092 = vpop.f32.mrb[0].mxu0
  %3093 = vmatprep.mubr.bf16.mxu0 %v1489
  %3094 = vmatmul.mubr.bf16.gmra.mrb[0].mxu0 %v1488
  %v3095 = vpop.f32.mrb[0].mxu0
  %v3096 = vadd.f32 %v2888, %v3095
  %v3097 = vpop.f32.mrb[0].mxu0
  %v3098 = vpop.f32.mrb[0].mxu0
  %v3099 = vadd.f32 %v2891, %v3098
  %v3100 = vpop.f32.mrb[0].mxu0
  %3101 = vmatprep.mubr.bf16.mxu0 %v1502
  %3102 = vmatmul.mubr.bf16.gmra.mrb[0].mxu0 %v1501
  %v3103 = vpop.f32.mrb[0].mxu0
  %v3104 = vadd.f32 %v2896, %v3103
  %v3105 = vpop.f32.mrb[0].mxu0
  %v3106 = vpop.f32.mrb[0].mxu0
  %v3107 = vadd.f32 %v2899, %v3106
  %v3108 = vpop.f32.mrb[0].mxu0
  %3109 = vmatprep.mubr.bf16.mxu0 %v1515
  %3110 = vmatmul.mubr.bf16.gmra.mrb[0].mxu0 %v1514
  %v3111 = vpop.f32.mrb[0].mxu0
  %v3112 = vadd.f32 %v2904, %v3111
  %v3113 = vpop.f32.mrb[0].mxu0
  %v3114 = vpop.f32.mrb[0].mxu0
  %v3115 = vadd.f32 %v2907, %v3114
  %v3116 = vpop.f32.mrb[0].mxu0
  %3117 = vmatprep.mubr.bf16.mxu0 %v1528
  %3118 = vmatmul.mubr.bf16.gmra.mrb[0].mxu0 %v1527
  %v3119 = vpop.f32.mrb[0].mxu0
  %v3120 = vadd.f32 %v2912, %v3119
  %v3121 = vpop.f32.mrb[0].mxu0
  %v3122 = vpop.f32.mrb[0].mxu0
  %v3123 = vadd.f32 %v2915, %v3122
  %v3124 = vpop.f32.mrb[0].mxu0
  %3125 = vmatprep.mubr.bf16.mxu0 %v1541
  %3126 = vmatmul.mubr.bf16.gmra.mrb[0].mxu0 %v1540
  %v3127 = vpop.f32.mrb[0].mxu0
  %v3128 = vadd.f32 %v2920, %v3127
  %v3129 = vpop.f32.mrb[0].mxu0
  %v3130 = vpop.f32.mrb[0].mxu0
  %v3131 = vadd.f32 %v2923, %v3130
  %v3132 = vpop.f32.mrb[0].mxu0
  %3133 = vmatprep.mubr.bf16.mxu0 %v1554
  %3134 = vmatmul.mubr.bf16.gmra.mrb[0].mxu0 %v1553
  %v3135 = vpop.f32.mrb[0].mxu0
  %v3136 = vadd.f32 %v2928, %v3135
  %v3137 = vpop.f32.mrb[0].mxu0
  %v3138 = vpop.f32.mrb[0].mxu0
  %v3139 = vadd.f32 %v2931, %v3138
  %v3140 = vpop.f32.mrb[0].mxu0
  %3141 = vmatprep.mubr.bf16.mxu0 %v1567
  %3142 = vmatmul.mubr.bf16.gmra.mrb[0].mxu0 %v1566
  %v3143 = vpop.f32.mrb[0].mxu0
  %v3144 = vadd.f32 %v2936, %v3143
  %v3145 = vpop.f32.mrb[0].mxu0
  %v3146 = vpop.f32.mrb[0].mxu0
  %v3147 = vadd.f32 %v2939, %v3146
  %v3148 = vpop.f32.mrb[0].mxu0
  %3149 = vmatprep.mubr.bf16.mxu0 %v1580
  %3150 = vmatmul.mubr.bf16.gmra.mrb[0].mxu0 %v1579
  %v3151 = vpop.f32.mrb[0].mxu0
  %v3152 = vadd.f32 %v2944, %v3151
  %v3153 = vpop.f32.mrb[0].mxu0
  %v3154 = vpop.f32.mrb[0].mxu0
  %v3155 = vadd.f32 %v2947, %v3154
  %v3156 = vpop.f32.mrb[0].mxu0
  %3157 = vmatprep.mubr.bf16.mxu0 %v1593
  %3158 = vmatmul.mubr.bf16.gmra.mrb[0].mxu0 %v1592
  %v3159 = vpop.f32.mrb[0].mxu0
  %v3160 = vadd.f32 %v2952, %v3159
  %v3161 = vpop.f32.mrb[0].mxu0
  %v3162 = vpop.f32.mrb[0].mxu0
  %v3163 = vadd.f32 %v2955, %v3162
  %v3164 = vpop.f32.mrb[0].mxu0
  %3165 = vmatprep.mubr.bf16.mxu0 %v1606
  %3166 = vmatmul.mubr.bf16.gmra.mrb[0].mxu0 %v1605
  %v3167 = vpop.f32.mrb[0].mxu0
  %v3168 = vadd.f32 %v2960, %v3167
  %v3169 = vpop.f32.mrb[0].mxu0
  %v3170 = vpop.f32.mrb[0].mxu0
  %v3171 = vadd.f32 %v2963, %v3170
  %v3172 = vpop.f32.mrb[0].mxu0
  %3173 = vmatprep.mubr.bf16.mxu0 %v1619
  %3174 = vmatmul.mubr.bf16.gmra.mrb[0].mxu0 %v1618
  %v3175 = vpop.f32.mrb[0].mxu0
  %v3176 = vadd.f32 %v2968, %v3175
  %v3177 = vpop.f32.mrb[0].mxu0
  %v3178 = vpop.f32.mrb[0].mxu0
  %v3179 = vadd.f32 %v2971, %v3178
  %v3180 = vpop.f32.mrb[0].mxu0
  %3181 = vmatprep.mubr.bf16.mxu0 %v1632
  %3182 = vmatmul.mubr.bf16.gmra.mrb[0].mxu0 %v1631
  %v3183 = vpop.f32.mrb[0].mxu0
  %v3184 = vadd.f32 %v2976, %v3183
  %v3185 = vpop.f32.mrb[0].mxu0
  %v3186 = vpop.f32.mrb[0].mxu0
  %v3187 = vadd.f32 %v2979, %v3186
  %v3188 = vpop.f32.mrb[0].mxu0
  %3189 = vmatprep.mubr.bf16.mxu0 %v1645
  %3190 = vmatmul.mubr.bf16.gmra.mrb[0].mxu0 %v1644
  %v3191 = vpop.f32.mrb[0].mxu0
  %v3192 = vadd.f32 %v2984, %v3191
  %v3193 = vpop.f32.mrb[0].mxu0
  %v3194 = vpop.f32.mrb[0].mxu0
  %v3195 = vadd.f32 %v2987, %v3194
  %v3196 = vpop.f32.mrb[0].mxu0
  %3197 = vmatprep.mubr.bf16.mxu0 %v1658
  %3198 = vmatmul.mubr.bf16.gmra.mrb[0].mxu0 %v1657
  %v3199 = vpop.f32.mrb[0].mxu0
  %v3200 = vadd.f32 %v2992, %v3199
  %v3201 = vpop.f32.mrb[0].mxu0
  %v3202 = vpop.f32.mrb[0].mxu0
  %v3203 = vadd.f32 %v2995, %v3202
  %v3204 = vpop.f32.mrb[0].mxu0
  %3205 = vmatprep.mubr.bf16.mxu0 %v1671
  %3206 = vmatmul.mubr.bf16.gmra.mrb[0].mxu0 %v1670
  %v3207 = vpop.f32.mrb[0].mxu0
  %v3208 = vadd.f32 %v3000, %v3207
  %v3209 = vpop.f32.mrb[0].mxu0
  %v3210 = vpop.f32.mrb[0].mxu0
  %v3211 = vpop.f32.mrb[0].mxu0
  %3212 = vdwg.mxu0
  %3213 = vmatprep.subr.bf16.mxu0 0
  %3214 = vmatpush1.bf16.msra.mxu0 %v2429
  %3215 = vmatprep.subr.bf16.mxu0 0
  %3216 = vmatpush1.bf16.msra.mxu0 %v2430
  %3217 = vmatprep.subr.bf16.mxu0 0
  %3218 = vmatpush1.bf16.msra.mxu0 %v2431
  %3219 = vmatprep.subr.bf16.mxu0 0
  %3220 = vmatpush1.bf16.msra.mxu0 %v2432
  %3221 = vmatprep.subr.bf16.mxu0 0
  %3222 = vmatpush1.bf16.msra.mxu0 %v2433
  %3223 = vmatprep.subr.bf16.mxu0 0
  %3224 = vmatpush1.bf16.msra.mxu0 %v2434
  %3225 = vmatprep.subr.bf16.mxu0 0
  %3226 = vmatpush1.bf16.msra.mxu0 %v2435
  %3227 = vmatprep.subr.bf16.mxu0 0
  %3228 = vmatpush1.bf16.msra.mxu0 %v2436
  %3229 = vmatprep.subr.bf16.mxu0 0
  %3230 = vmatpush1.bf16.msra.mxu0 %v2437
  %3231 = vmatprep.subr.bf16.mxu0 0
  %3232 = vmatpush1.bf16.msra.mxu0 %v2438
  %3233 = vmatprep.subr.bf16.mxu0 0
  %3234 = vmatpush1.bf16.msra.mxu0 %v2439
  %3235 = vmatprep.subr.bf16.mxu0 0
  %3236 = vmatpush1.bf16.msra.mxu0 %v2440
  %3237 = vmatprep.subr.bf16.mxu0 0
  %3238 = vmatpush1.bf16.msra.mxu0 %v2441
  %3239 = vmatprep.subr.bf16.mxu0 0
  %3240 = vmatpush1.bf16.msra.mxu0 %v2442
  %3241 = vmatprep.subr.bf16.mxu0 0
  %3242 = vmatpush1.bf16.msra.mxu0 %v2443
  %3243 = vmatprep.subr.bf16.mxu0 0
  %3244 = vmatpush1.bf16.msra.mxu0 %v2444
  %3245 = vmatprep.mubr.bf16.mxu0 %v1400
  %3246 = vmatmul.mubr.bf16.gmra.mrb[0].mxu0 %v1399
  %v3247 = vpop.f32.mrb[0].mxu0
  %v3248 = vadd.f32 %v3040, %v3247
  %v3249 = vpop.f32.mrb[0].mxu0
  %v3250 = vpop.f32.mrb[0].mxu0
  %v3251 = vadd.f32 %v3043, %v3250
  %v3252 = vpop.f32.mrb[0].mxu0
  %3253 = vmatprep.mubr.bf16.mxu0 %v1413
  %3254 = vmatmul.mubr.bf16.gmra.mrb[0].mxu0 %v1412
  %v3255 = vpop.f32.mrb[0].mxu0
  %v3256 = vadd.f32 %v3048, %v3255
  %v3257 = vpop.f32.mrb[0].mxu0
  %v3258 = vpop.f32.mrb[0].mxu0
  %v3259 = vadd.f32 %v3051, %v3258
  %v3260 = vpop.f32.mrb[0].mxu0
  %3261 = vmatprep.mubr.bf16.mxu0 %v1426
  %3262 = vmatmul.mubr.bf16.gmra.mrb[0].mxu0 %v1425
  %v3263 = vpop.f32.mrb[0].mxu0
  %v3264 = vadd.f32 %v3056, %v3263
  %v3265 = vpop.f32.mrb[0].mxu0
  %v3266 = vpop.f32.mrb[0].mxu0
  %v3267 = vadd.f32 %v3059, %v3266
  %v3268 = vpop.f32.mrb[0].mxu0
  %3269 = vmatprep.mubr.bf16.mxu0 %v1439
  %3270 = vmatmul.mubr.bf16.gmra.mrb[0].mxu0 %v1438
  %v3271 = vpop.f32.mrb[0].mxu0
  %v3272 = vadd.f32 %v3064, %v3271
  %v3273 = vpop.f32.mrb[0].mxu0
  %v3274 = vpop.f32.mrb[0].mxu0
  %v3275 = vadd.f32 %v3067, %v3274
  %v3276 = vpop.f32.mrb[0].mxu0
  %3277 = vmatprep.mubr.bf16.mxu0 %v1452
  %3278 = vmatmul.mubr.bf16.gmra.mrb[0].mxu0 %v1451
  %v3279 = vpop.f32.mrb[0].mxu0
  %v3280 = vadd.f32 %v3072, %v3279
  %v3281 = vpop.f32.mrb[0].mxu0
  %v3282 = vpop.f32.mrb[0].mxu0
  %v3283 = vadd.f32 %v3075, %v3282
  %v3284 = vpop.f32.mrb[0].mxu0
  %3285 = vmatprep.mubr.bf16.mxu0 %v1465
  %3286 = vmatmul.mubr.bf16.gmra.mrb[0].mxu0 %v1464
  %v3287 = vpop.f32.mrb[0].mxu0
  %v3288 = vadd.f32 %v3080, %v3287
  %v3289 = vpop.f32.mrb[0].mxu0
  %v3290 = vpop.f32.mrb[0].mxu0
  %v3291 = vadd.f32 %v3083, %v3290
  %v3292 = vpop.f32.mrb[0].mxu0
  %3293 = vmatprep.mubr.bf16.mxu0 %v1478
  %3294 = vmatmul.mubr.bf16.gmra.mrb[0].mxu0 %v1477
  %v3295 = vpop.f32.mrb[0].mxu0
  %v3296 = vadd.f32 %v3088, %v3295
  %v3297 = vpop.f32.mrb[0].mxu0
  %v3298 = vpop.f32.mrb[0].mxu0
  %v3299 = vadd.f32 %v3091, %v3298
  %v3300 = vpop.f32.mrb[0].mxu0
  %3301 = vmatprep.mubr.bf16.mxu0 %v1491
  %3302 = vmatmul.mubr.bf16.gmra.mrb[0].mxu0 %v1490
  %v3303 = vpop.f32.mrb[0].mxu0
  %v3304 = vadd.f32 %v3096, %v3303
  %v3305 = vpop.f32.mrb[0].mxu0
  %v3306 = vpop.f32.mrb[0].mxu0
  %v3307 = vadd.f32 %v3099, %v3306
  %v3308 = vpop.f32.mrb[0].mxu0
  %3309 = vmatprep.mubr.bf16.mxu0 %v1504
  %3310 = vmatmul.mubr.bf16.gmra.mrb[0].mxu0 %v1503
  %v3311 = vpop.f32.mrb[0].mxu0
  %v3312 = vadd.f32 %v3104, %v3311
  %v3313 = vpop.f32.mrb[0].mxu0
  %v3314 = vpop.f32.mrb[0].mxu0
  %v3315 = vadd.f32 %v3107, %v3314
  %v3316 = vpop.f32.mrb[0].mxu0
  %3317 = vmatprep.mubr.bf16.mxu0 %v1517
  %3318 = vmatmul.mubr.bf16.gmra.mrb[0].mxu0 %v1516
  %v3319 = vpop.f32.mrb[0].mxu0
  %v3320 = vadd.f32 %v3112, %v3319
  %v3321 = vpop.f32.mrb[0].mxu0
  %v3322 = vpop.f32.mrb[0].mxu0
  %v3323 = vadd.f32 %v3115, %v3322
  %v3324 = vpop.f32.mrb[0].mxu0
  %3325 = vmatprep.mubr.bf16.mxu0 %v1530
  %3326 = vmatmul.mubr.bf16.gmra.mrb[0].mxu0 %v1529
  %v3327 = vpop.f32.mrb[0].mxu0
  %v3328 = vadd.f32 %v3120, %v3327
  %v3329 = vpop.f32.mrb[0].mxu0
  %v3330 = vpop.f32.mrb[0].mxu0
  %v3331 = vadd.f32 %v3123, %v3330
  %v3332 = vpop.f32.mrb[0].mxu0
  %3333 = vmatprep.mubr.bf16.mxu0 %v1543
  %3334 = vmatmul.mubr.bf16.gmra.mrb[0].mxu0 %v1542
  %v3335 = vpop.f32.mrb[0].mxu0
  %v3336 = vadd.f32 %v3128, %v3335
  %v3337 = vpop.f32.mrb[0].mxu0
  %v3338 = vpop.f32.mrb[0].mxu0
  %v3339 = vadd.f32 %v3131, %v3338
  %v3340 = vpop.f32.mrb[0].mxu0
  %3341 = vmatprep.mubr.bf16.mxu0 %v1556
  %3342 = vmatmul.mubr.bf16.gmra.mrb[0].mxu0 %v1555
  %v3343 = vpop.f32.mrb[0].mxu0
  %v3344 = vadd.f32 %v3136, %v3343
  %v3345 = vpop.f32.mrb[0].mxu0
  %v3346 = vpop.f32.mrb[0].mxu0
  %v3347 = vadd.f32 %v3139, %v3346
  %v3348 = vpop.f32.mrb[0].mxu0
  %3349 = vmatprep.mubr.bf16.mxu0 %v1569
  %3350 = vmatmul.mubr.bf16.gmra.mrb[0].mxu0 %v1568
  %v3351 = vpop.f32.mrb[0].mxu0
  %v3352 = vadd.f32 %v3144, %v3351
  %v3353 = vpop.f32.mrb[0].mxu0
  %v3354 = vpop.f32.mrb[0].mxu0
  %v3355 = vadd.f32 %v3147, %v3354
  %v3356 = vpop.f32.mrb[0].mxu0
  %3357 = vmatprep.mubr.bf16.mxu0 %v1582
  %3358 = vmatmul.mubr.bf16.gmra.mrb[0].mxu0 %v1581
  %v3359 = vpop.f32.mrb[0].mxu0
  %v3360 = vadd.f32 %v3152, %v3359
  %v3361 = vpop.f32.mrb[0].mxu0
  %v3362 = vpop.f32.mrb[0].mxu0
  %v3363 = vadd.f32 %v3155, %v3362
  %v3364 = vpop.f32.mrb[0].mxu0
  %3365 = vmatprep.mubr.bf16.mxu0 %v1595
  %3366 = vmatmul.mubr.bf16.gmra.mrb[0].mxu0 %v1594
  %v3367 = vpop.f32.mrb[0].mxu0
  %v3368 = vadd.f32 %v3160, %v3367
  %v3369 = vpop.f32.mrb[0].mxu0
  %v3370 = vpop.f32.mrb[0].mxu0
  %v3371 = vadd.f32 %v3163, %v3370
  %v3372 = vpop.f32.mrb[0].mxu0
  %3373 = vmatprep.mubr.bf16.mxu0 %v1608
  %3374 = vmatmul.mubr.bf16.gmra.mrb[0].mxu0 %v1607
  %v3375 = vpop.f32.mrb[0].mxu0
  %v3376 = vadd.f32 %v3168, %v3375
  %v3377 = vpop.f32.mrb[0].mxu0
  %v3378 = vpop.f32.mrb[0].mxu0
  %v3379 = vadd.f32 %v3171, %v3378
  %v3380 = vpop.f32.mrb[0].mxu0
  %3381 = vmatprep.mubr.bf16.mxu0 %v1621
  %3382 = vmatmul.mubr.bf16.gmra.mrb[0].mxu0 %v1620
  %v3383 = vpop.f32.mrb[0].mxu0
  %v3384 = vadd.f32 %v3176, %v3383
  %v3385 = vpop.f32.mrb[0].mxu0
  %v3386 = vpop.f32.mrb[0].mxu0
  %v3387 = vadd.f32 %v3179, %v3386
  %v3388 = vpop.f32.mrb[0].mxu0
  %3389 = vmatprep.mubr.bf16.mxu0 %v1634
  %3390 = vmatmul.mubr.bf16.gmra.mrb[0].mxu0 %v1633
  %v3391 = vpop.f32.mrb[0].mxu0
  %v3392 = vadd.f32 %v3184, %v3391
  %v3393 = vpop.f32.mrb[0].mxu0
  %v3394 = vpop.f32.mrb[0].mxu0
  %v3395 = vadd.f32 %v3187, %v3394
  %v3396 = vpop.f32.mrb[0].mxu0
  %3397 = vmatprep.mubr.bf16.mxu0 %v1647
  %3398 = vmatmul.mubr.bf16.gmra.mrb[0].mxu0 %v1646
  %v3399 = vpop.f32.mrb[0].mxu0
  %v3400 = vadd.f32 %v3192, %v3399
  %v3401 = vpop.f32.mrb[0].mxu0
  %v3402 = vpop.f32.mrb[0].mxu0
  %v3403 = vadd.f32 %v3195, %v3402
  %v3404 = vpop.f32.mrb[0].mxu0
  %3405 = vmatprep.mubr.bf16.mxu0 %v1660
  %3406 = vmatmul.mubr.bf16.gmra.mrb[0].mxu0 %v1659
  %v3407 = vpop.f32.mrb[0].mxu0
  %v3408 = vadd.f32 %v3200, %v3407
  %v3409 = vpop.f32.mrb[0].mxu0
  %v3410 = vpop.f32.mrb[0].mxu0
  %v3411 = vadd.f32 %v3203, %v3410
  %v3412 = vpop.f32.mrb[0].mxu0
  %3413 = vmatprep.mubr.bf16.mxu0 %v1673
  %3414 = vmatmul.mubr.bf16.gmra.mrb[0].mxu0 %v1672
  %v3415 = vpop.f32.mrb[0].mxu0
  %v3416 = vadd.f32 %v3208, %v3415
  %v3417 = vpop.f32.mrb[0].mxu0
  %v3418 = vpop.f32.mrb[0].mxu0
  %v3419 = vpop.f32.mrb[0].mxu0
  %3420 = vdwg.mxu0
  %3421 = vmatprep.subr.bf16.mxu0 0
  %3422 = vmatpush1.bf16.msra.mxu0 %v2445
  %3423 = vmatprep.subr.bf16.mxu0 0
  %3424 = vmatpush1.bf16.msra.mxu0 %v2446
  %3425 = vmatprep.subr.bf16.mxu0 0
  %3426 = vmatpush1.bf16.msra.mxu0 %v2447
  %3427 = vmatprep.subr.bf16.mxu0 0
  %3428 = vmatpush1.bf16.msra.mxu0 %v2448
  %3429 = vmatprep.subr.bf16.mxu0 0
  %3430 = vmatpush1.bf16.msra.mxu0 %v2449
  %3431 = vmatprep.subr.bf16.mxu0 0
  %3432 = vmatpush1.bf16.msra.mxu0 %v2450
  %3433 = vmatprep.subr.bf16.mxu0 0
  %3434 = vmatpush1.bf16.msra.mxu0 %v2451
  %3435 = vmatprep.subr.bf16.mxu0 0
  %3436 = vmatpush1.bf16.msra.mxu0 %v2452
  %3437 = vmatprep.subr.bf16.mxu0 0
  %3438 = vmatpush1.bf16.msra.mxu0 %v2453
  %3439 = vmatprep.subr.bf16.mxu0 0
  %3440 = vmatpush1.bf16.msra.mxu0 %v2454
  %3441 = vmatprep.subr.bf16.mxu0 0
  %3442 = vmatpush1.bf16.msra.mxu0 %v2455
  %3443 = vmatprep.subr.bf16.mxu0 0
  %3444 = vmatpush1.bf16.msra.mxu0 %v2456
  %3445 = vmatprep.subr.bf16.mxu0 0
  %3446 = vmatpush1.bf16.msra.mxu0 %v2457
  %3447 = vmatprep.subr.bf16.mxu0 0
  %3448 = vmatpush1.bf16.msra.mxu0 %v2458
  %3449 = vmatprep.subr.bf16.mxu0 0
  %3450 = vmatpush1.bf16.msra.mxu0 %v2459
  %3451 = vmatprep.subr.bf16.mxu0 0
  %3452 = vmatpush1.bf16.msra.mxu0 %v2460
  %3453 = vmatprep.mubr.bf16.mxu0 %v1402
  %3454 = vmatmul.mubr.bf16.gmra.mrb[0].mxu0 %v1401
  %v3455 = vpop.f32.mrb[0].mxu0
  %v3456 = vadd.f32 %v3248, %v3455
  %v3457 = vpop.f32.mrb[0].mxu0
  %v3458 = vpop.f32.mrb[0].mxu0
  %v3459 = vadd.f32 %v3251, %v3458
  %v3460 = vpop.f32.mrb[0].mxu0
  %3461 = vmatprep.mubr.bf16.mxu0 %v1415
  %3462 = vmatmul.mubr.bf16.gmra.mrb[0].mxu0 %v1414
  %v3463 = vpop.f32.mrb[0].mxu0
  %v3464 = vadd.f32 %v3256, %v3463
  %v3465 = vpop.f32.mrb[0].mxu0
  %v3466 = vpop.f32.mrb[0].mxu0
  %v3467 = vadd.f32 %v3259, %v3466
  %v3468 = vpop.f32.mrb[0].mxu0
  %3469 = vmatprep.mubr.bf16.mxu0 %v1428
  %3470 = vmatmul.mubr.bf16.gmra.mrb[0].mxu0 %v1427
  %v3471 = vpop.f32.mrb[0].mxu0
  %v3472 = vadd.f32 %v3264, %v3471
  %v3473 = vpop.f32.mrb[0].mxu0
  %v3474 = vpop.f32.mrb[0].mxu0
  %v3475 = vadd.f32 %v3267, %v3474
  %v3476 = vpop.f32.mrb[0].mxu0
  %3477 = vmatprep.mubr.bf16.mxu0 %v1441
  %3478 = vmatmul.mubr.bf16.gmra.mrb[0].mxu0 %v1440
  %v3479 = vpop.f32.mrb[0].mxu0
  %v3480 = vadd.f32 %v3272, %v3479
  %v3481 = vpop.f32.mrb[0].mxu0
  %v3482 = vpop.f32.mrb[0].mxu0
  %v3483 = vadd.f32 %v3275, %v3482
  %v3484 = vpop.f32.mrb[0].mxu0
  %3485 = vmatprep.mubr.bf16.mxu0 %v1454
  %3486 = vmatmul.mubr.bf16.gmra.mrb[0].mxu0 %v1453
  %v3487 = vpop.f32.mrb[0].mxu0
  %v3488 = vadd.f32 %v3280, %v3487
  %v3489 = vpop.f32.mrb[0].mxu0
  %v3490 = vpop.f32.mrb[0].mxu0
  %v3491 = vadd.f32 %v3283, %v3490
  %v3492 = vpop.f32.mrb[0].mxu0
  %3493 = vmatprep.mubr.bf16.mxu0 %v1467
  %3494 = vmatmul.mubr.bf16.gmra.mrb[0].mxu0 %v1466
  %v3495 = vpop.f32.mrb[0].mxu0
  %v3496 = vadd.f32 %v3288, %v3495
  %v3497 = vpop.f32.mrb[0].mxu0
  %v3498 = vpop.f32.mrb[0].mxu0
  %v3499 = vadd.f32 %v3291, %v3498
  %v3500 = vpop.f32.mrb[0].mxu0
  %3501 = vmatprep.mubr.bf16.mxu0 %v1480
  %3502 = vmatmul.mubr.bf16.gmra.mrb[0].mxu0 %v1479
  %v3503 = vpop.f32.mrb[0].mxu0
  %v3504 = vadd.f32 %v3296, %v3503
  %v3505 = vpop.f32.mrb[0].mxu0
  %v3506 = vpop.f32.mrb[0].mxu0
  %v3507 = vadd.f32 %v3299, %v3506
  %v3508 = vpop.f32.mrb[0].mxu0
  %3509 = vmatprep.mubr.bf16.mxu0 %v1493
  %3510 = vmatmul.mubr.bf16.gmra.mrb[0].mxu0 %v1492
  %v3511 = vpop.f32.mrb[0].mxu0
  %v3512 = vadd.f32 %v3304, %v3511
  %v3513 = vpop.f32.mrb[0].mxu0
  %v3514 = vpop.f32.mrb[0].mxu0
  %v3515 = vadd.f32 %v3307, %v3514
  %v3516 = vpop.f32.mrb[0].mxu0
  %3517 = vmatprep.mubr.bf16.mxu0 %v1506
  %3518 = vmatmul.mubr.bf16.gmra.mrb[0].mxu0 %v1505
  %v3519 = vpop.f32.mrb[0].mxu0
  %v3520 = vadd.f32 %v3312, %v3519
  %v3521 = vpop.f32.mrb[0].mxu0
  %v3522 = vpop.f32.mrb[0].mxu0
  %v3523 = vadd.f32 %v3315, %v3522
  %v3524 = vpop.f32.mrb[0].mxu0
  %3525 = vmatprep.mubr.bf16.mxu0 %v1519
  %3526 = vmatmul.mubr.bf16.gmra.mrb[0].mxu0 %v1518
  %v3527 = vpop.f32.mrb[0].mxu0
  %v3528 = vadd.f32 %v3320, %v3527
  %v3529 = vpop.f32.mrb[0].mxu0
  %v3530 = vpop.f32.mrb[0].mxu0
  %v3531 = vadd.f32 %v3323, %v3530
  %v3532 = vpop.f32.mrb[0].mxu0
  %3533 = vmatprep.mubr.bf16.mxu0 %v1532
  %3534 = vmatmul.mubr.bf16.gmra.mrb[0].mxu0 %v1531
  %v3535 = vpop.f32.mrb[0].mxu0
  %v3536 = vadd.f32 %v3328, %v3535
  %v3537 = vpop.f32.mrb[0].mxu0
  %v3538 = vpop.f32.mrb[0].mxu0
  %v3539 = vadd.f32 %v3331, %v3538
  %v3540 = vpop.f32.mrb[0].mxu0
  %3541 = vmatprep.mubr.bf16.mxu0 %v1545
  %3542 = vmatmul.mubr.bf16.gmra.mrb[0].mxu0 %v1544
  %v3543 = vpop.f32.mrb[0].mxu0
  %v3544 = vadd.f32 %v3336, %v3543
  %v3545 = vpop.f32.mrb[0].mxu0
  %v3546 = vpop.f32.mrb[0].mxu0
  %v3547 = vadd.f32 %v3339, %v3546
  %v3548 = vpop.f32.mrb[0].mxu0
  %3549 = vmatprep.mubr.bf16.mxu0 %v1558
  %3550 = vmatmul.mubr.bf16.gmra.mrb[0].mxu0 %v1557
  %v3551 = vpop.f32.mrb[0].mxu0
  %v3552 = vadd.f32 %v3344, %v3551
  %v3553 = vpop.f32.mrb[0].mxu0
  %v3554 = vpop.f32.mrb[0].mxu0
  %v3555 = vadd.f32 %v3347, %v3554
  %v3556 = vpop.f32.mrb[0].mxu0
  %3557 = vmatprep.mubr.bf16.mxu0 %v1571
  %3558 = vmatmul.mubr.bf16.gmra.mrb[0].mxu0 %v1570
  %v3559 = vpop.f32.mrb[0].mxu0
  %v3560 = vadd.f32 %v3352, %v3559
  %v3561 = vpop.f32.mrb[0].mxu0
  %v3562 = vpop.f32.mrb[0].mxu0
  %v3563 = vadd.f32 %v3355, %v3562
  %v3564 = vpop.f32.mrb[0].mxu0
  %3565 = vmatprep.mubr.bf16.mxu0 %v1584
  %3566 = vmatmul.mubr.bf16.gmra.mrb[0].mxu0 %v1583
  %v3567 = vpop.f32.mrb[0].mxu0
  %v3568 = vadd.f32 %v3360, %v3567
  %v3569 = vpop.f32.mrb[0].mxu0
  %v3570 = vpop.f32.mrb[0].mxu0
  %v3571 = vadd.f32 %v3363, %v3570
  %v3572 = vpop.f32.mrb[0].mxu0
  %3573 = vmatprep.mubr.bf16.mxu0 %v1597
  %3574 = vmatmul.mubr.bf16.gmra.mrb[0].mxu0 %v1596
  %v3575 = vpop.f32.mrb[0].mxu0
  %v3576 = vadd.f32 %v3368, %v3575
  %v3577 = vpop.f32.mrb[0].mxu0
  %v3578 = vpop.f32.mrb[0].mxu0
  %v3579 = vadd.f32 %v3371, %v3578
  %v3580 = vpop.f32.mrb[0].mxu0
  %3581 = vmatprep.mubr.bf16.mxu0 %v1610
  %3582 = vmatmul.mubr.bf16.gmra.mrb[0].mxu0 %v1609
  %v3583 = vpop.f32.mrb[0].mxu0
  %v3584 = vadd.f32 %v3376, %v3583
  %v3585 = vpop.f32.mrb[0].mxu0
  %v3586 = vpop.f32.mrb[0].mxu0
  %v3587 = vadd.f32 %v3379, %v3586
  %v3588 = vpop.f32.mrb[0].mxu0
  %3589 = vmatprep.mubr.bf16.mxu0 %v1623
  %3590 = vmatmul.mubr.bf16.gmra.mrb[0].mxu0 %v1622
  %v3591 = vpop.f32.mrb[0].mxu0
  %v3592 = vadd.f32 %v3384, %v3591
  %v3593 = vpop.f32.mrb[0].mxu0
  %v3594 = vpop.f32.mrb[0].mxu0
  %v3595 = vadd.f32 %v3387, %v3594
  %v3596 = vpop.f32.mrb[0].mxu0
  %3597 = vmatprep.mubr.bf16.mxu0 %v1636
  %3598 = vmatmul.mubr.bf16.gmra.mrb[0].mxu0 %v1635
  %v3599 = vpop.f32.mrb[0].mxu0
  %v3600 = vadd.f32 %v3392, %v3599
  %v3601 = vpop.f32.mrb[0].mxu0
  %v3602 = vpop.f32.mrb[0].mxu0
  %v3603 = vadd.f32 %v3395, %v3602
  %v3604 = vpop.f32.mrb[0].mxu0
  %3605 = vmatprep.mubr.bf16.mxu0 %v1649
  %3606 = vmatmul.mubr.bf16.gmra.mrb[0].mxu0 %v1648
  %v3607 = vpop.f32.mrb[0].mxu0
  %v3608 = vadd.f32 %v3400, %v3607
  %v3609 = vpop.f32.mrb[0].mxu0
  %v3610 = vpop.f32.mrb[0].mxu0
  %v3611 = vadd.f32 %v3403, %v3610
  %v3612 = vpop.f32.mrb[0].mxu0
  %3613 = vmatprep.mubr.bf16.mxu0 %v1662
  %3614 = vmatmul.mubr.bf16.gmra.mrb[0].mxu0 %v1661
  %v3615 = vpop.f32.mrb[0].mxu0
  %v3616 = vadd.f32 %v3408, %v3615
  %v3617 = vpop.f32.mrb[0].mxu0
  %v3618 = vpop.f32.mrb[0].mxu0
  %v3619 = vadd.f32 %v3411, %v3618
  %v3620 = vpop.f32.mrb[0].mxu0
  %3621 = vmatprep.mubr.bf16.mxu0 %v1675
  %3622 = vmatmul.mubr.bf16.gmra.mrb[0].mxu0 %v1674
  %v3623 = vpop.f32.mrb[0].mxu0
  %v3624 = vadd.f32 %v3416, %v3623
  %v3625 = vpop.f32.mrb[0].mxu0
  %v3626 = vpop.f32.mrb[0].mxu0
  %v3627 = vpop.f32.mrb[0].mxu0
  %3628 = vdwg.mxu0
  %3629 = vmatprep.subr.bf16.mxu0 0
  %3630 = vmatpush1.bf16.msra.mxu0 %v2461
  %3631 = vmatprep.subr.bf16.mxu0 0
  %3632 = vmatpush1.bf16.msra.mxu0 %v2462
  %3633 = vmatprep.subr.bf16.mxu0 0
  %3634 = vmatpush1.bf16.msra.mxu0 %v2463
  %3635 = vmatprep.subr.bf16.mxu0 0
  %3636 = vmatpush1.bf16.msra.mxu0 %v2464
  %3637 = vmatprep.subr.bf16.mxu0 0
  %3638 = vmatpush1.bf16.msra.mxu0 %v2465
  %3639 = vmatprep.subr.bf16.mxu0 0
  %3640 = vmatpush1.bf16.msra.mxu0 %v2466
  %3641 = vmatprep.subr.bf16.mxu0 0
  %3642 = vmatpush1.bf16.msra.mxu0 %v2467
  %3643 = vmatprep.subr.bf16.mxu0 0
  %3644 = vmatpush1.bf16.msra.mxu0 %v2468
  %3645 = vmatprep.subr.bf16.mxu0 0
  %3646 = vmatpush1.bf16.msra.mxu0 %v2469
  %3647 = vmatprep.subr.bf16.mxu0 0
  %3648 = vmatpush1.bf16.msra.mxu0 %v2470
  %3649 = vmatprep.subr.bf16.mxu0 0
  %3650 = vmatpush1.bf16.msra.mxu0 %v2471
  %3651 = vmatprep.subr.bf16.mxu0 0
  %3652 = vmatpush1.bf16.msra.mxu0 %v2472
  %3653 = vmatprep.subr.bf16.mxu0 0
  %3654 = vmatpush1.bf16.msra.mxu0 %v2473
  %3655 = vmatprep.subr.bf16.mxu0 0
  %3656 = vmatpush1.bf16.msra.mxu0 %v2474
  %3657 = vmatprep.subr.bf16.mxu0 0
  %3658 = vmatpush1.bf16.msra.mxu0 %v2475
  %3659 = vmatprep.subr.bf16.mxu0 0
  %3660 = vmatpush1.bf16.msra.mxu0 %v2476
  %3661 = vmatprep.mubr.bf16.mxu0 %v1404
  %3662 = vmatmul.mubr.bf16.gmra.mrb[0].mxu0 %v1403
  %v3663 = vpop.f32.mrb[0].mxu0
  %v3664 = vadd.f32 %v3456, %v3663
  %v3665 = vpop.f32.mrb[0].mxu0
  %v3666 = vpop.f32.mrb[0].mxu0
  %v3667 = vadd.f32 %v3459, %v3666
  %v3668 = vpop.f32.mrb[0].mxu0
  %3669 = vmatprep.mubr.bf16.mxu0 %v1417
  %3670 = vmatmul.mubr.bf16.gmra.mrb[0].mxu0 %v1416
  %v3671 = vpop.f32.mrb[0].mxu0
  %v3672 = vadd.f32 %v3464, %v3671
  %v3673 = vpop.f32.mrb[0].mxu0
  %v3674 = vpop.f32.mrb[0].mxu0
  %v3675 = vadd.f32 %v3467, %v3674
  %v3676 = vpop.f32.mrb[0].mxu0
  %3677 = vmatprep.mubr.bf16.mxu0 %v1430
  %3678 = vmatmul.mubr.bf16.gmra.mrb[0].mxu0 %v1429
  %v3679 = vpop.f32.mrb[0].mxu0
  %v3680 = vadd.f32 %v3472, %v3679
  %v3681 = vpop.f32.mrb[0].mxu0
  %v3682 = vpop.f32.mrb[0].mxu0
  %v3683 = vadd.f32 %v3475, %v3682
  %v3684 = vpop.f32.mrb[0].mxu0
  %3685 = vmatprep.mubr.bf16.mxu0 %v1443
  %3686 = vmatmul.mubr.bf16.gmra.mrb[0].mxu0 %v1442
  %v3687 = vpop.f32.mrb[0].mxu0
  %v3688 = vadd.f32 %v3480, %v3687
  %v3689 = vpop.f32.mrb[0].mxu0
  %v3690 = vpop.f32.mrb[0].mxu0
  %v3691 = vadd.f32 %v3483, %v3690
  %v3692 = vpop.f32.mrb[0].mxu0
  %3693 = vmatprep.mubr.bf16.mxu0 %v1456
  %3694 = vmatmul.mubr.bf16.gmra.mrb[0].mxu0 %v1455
  %v3695 = vpop.f32.mrb[0].mxu0
  %v3696 = vadd.f32 %v3488, %v3695
  %v3697 = vpop.f32.mrb[0].mxu0
  %v3698 = vpop.f32.mrb[0].mxu0
  %v3699 = vadd.f32 %v3491, %v3698
  %v3700 = vpop.f32.mrb[0].mxu0
  %3701 = vmatprep.mubr.bf16.mxu0 %v1469
  %3702 = vmatmul.mubr.bf16.gmra.mrb[0].mxu0 %v1468
  %v3703 = vpop.f32.mrb[0].mxu0
  %v3704 = vadd.f32 %v3496, %v3703
  %v3705 = vpop.f32.mrb[0].mxu0
  %v3706 = vpop.f32.mrb[0].mxu0
  %v3707 = vadd.f32 %v3499, %v3706
  %v3708 = vpop.f32.mrb[0].mxu0
  %3709 = vmatprep.mubr.bf16.mxu0 %v1482
  %3710 = vmatmul.mubr.bf16.gmra.mrb[0].mxu0 %v1481
  %v3711 = vpop.f32.mrb[0].mxu0
  %v3712 = vadd.f32 %v3504, %v3711
  %v3713 = vpop.f32.mrb[0].mxu0
  %v3714 = vpop.f32.mrb[0].mxu0
  %v3715 = vadd.f32 %v3507, %v3714
  %v3716 = vpop.f32.mrb[0].mxu0
  %3717 = vmatprep.mubr.bf16.mxu0 %v1495
  %3718 = vmatmul.mubr.bf16.gmra.mrb[0].mxu0 %v1494
  %v3719 = vpop.f32.mrb[0].mxu0
  %v3720 = vadd.f32 %v3512, %v3719
  %v3721 = vpop.f32.mrb[0].mxu0
  %v3722 = vpop.f32.mrb[0].mxu0
  %v3723 = vadd.f32 %v3515, %v3722
  %v3724 = vpop.f32.mrb[0].mxu0
  %3725 = vmatprep.mubr.bf16.mxu0 %v1508
  %3726 = vmatmul.mubr.bf16.gmra.mrb[0].mxu0 %v1507
  %v3727 = vpop.f32.mrb[0].mxu0
  %v3728 = vadd.f32 %v3520, %v3727
  %v3729 = vpop.f32.mrb[0].mxu0
  %v3730 = vpop.f32.mrb[0].mxu0
  %v3731 = vadd.f32 %v3523, %v3730
  %v3732 = vpop.f32.mrb[0].mxu0
  %3733 = vmatprep.mubr.bf16.mxu0 %v1521
  %3734 = vmatmul.mubr.bf16.gmra.mrb[0].mxu0 %v1520
  %v3735 = vpop.f32.mrb[0].mxu0
  %v3736 = vadd.f32 %v3528, %v3735
  %v3737 = vpop.f32.mrb[0].mxu0
  %v3738 = vpop.f32.mrb[0].mxu0
  %v3739 = vadd.f32 %v3531, %v3738
  %v3740 = vpop.f32.mrb[0].mxu0
  %3741 = vmatprep.mubr.bf16.mxu0 %v1534
  %3742 = vmatmul.mubr.bf16.gmra.mrb[0].mxu0 %v1533
  %v3743 = vpop.f32.mrb[0].mxu0
  %v3744 = vadd.f32 %v3536, %v3743
  %v3745 = vpop.f32.mrb[0].mxu0
  %v3746 = vpop.f32.mrb[0].mxu0
  %v3747 = vadd.f32 %v3539, %v3746
  %v3748 = vpop.f32.mrb[0].mxu0
  %3749 = vmatprep.mubr.bf16.mxu0 %v1547
  %3750 = vmatmul.mubr.bf16.gmra.mrb[0].mxu0 %v1546
  %v3751 = vpop.f32.mrb[0].mxu0
  %v3752 = vadd.f32 %v3544, %v3751
  %v3753 = vpop.f32.mrb[0].mxu0
  %v3754 = vpop.f32.mrb[0].mxu0
  %v3755 = vadd.f32 %v3547, %v3754
  %v3756 = vpop.f32.mrb[0].mxu0
  %3757 = vmatprep.mubr.bf16.mxu0 %v1560
  %3758 = vmatmul.mubr.bf16.gmra.mrb[0].mxu0 %v1559
  %v3759 = vpop.f32.mrb[0].mxu0
  %v3760 = vadd.f32 %v3552, %v3759
  %v3761 = vpop.f32.mrb[0].mxu0
  %v3762 = vpop.f32.mrb[0].mxu0
  %v3763 = vadd.f32 %v3555, %v3762
  %v3764 = vpop.f32.mrb[0].mxu0
  %3765 = vmatprep.mubr.bf16.mxu0 %v1573
  %3766 = vmatmul.mubr.bf16.gmra.mrb[0].mxu0 %v1572
  %v3767 = vpop.f32.mrb[0].mxu0
  %v3768 = vadd.f32 %v3560, %v3767
  %v3769 = vpop.f32.mrb[0].mxu0
  %v3770 = vpop.f32.mrb[0].mxu0
  %v3771 = vadd.f32 %v3563, %v3770
  %v3772 = vpop.f32.mrb[0].mxu0
  %3773 = vmatprep.mubr.bf16.mxu0 %v1586
  %3774 = vmatmul.mubr.bf16.gmra.mrb[0].mxu0 %v1585
  %v3775 = vpop.f32.mrb[0].mxu0
  %v3776 = vadd.f32 %v3568, %v3775
  %v3777 = vpop.f32.mrb[0].mxu0
  %v3778 = vpop.f32.mrb[0].mxu0
  %v3779 = vadd.f32 %v3571, %v3778
  %v3780 = vpop.f32.mrb[0].mxu0
  %3781 = vmatprep.mubr.bf16.mxu0 %v1599
  %3782 = vmatmul.mubr.bf16.gmra.mrb[0].mxu0 %v1598
  %v3783 = vpop.f32.mrb[0].mxu0
  %v3784 = vadd.f32 %v3576, %v3783
  %v3785 = vpop.f32.mrb[0].mxu0
  %v3786 = vpop.f32.mrb[0].mxu0
  %v3787 = vadd.f32 %v3579, %v3786
  %v3788 = vpop.f32.mrb[0].mxu0
  %3789 = vmatprep.mubr.bf16.mxu0 %v1612
  %3790 = vmatmul.mubr.bf16.gmra.mrb[0].mxu0 %v1611
  %v3791 = vpop.f32.mrb[0].mxu0
  %v3792 = vadd.f32 %v3584, %v3791
  %v3793 = vpop.f32.mrb[0].mxu0
  %v3794 = vpop.f32.mrb[0].mxu0
  %v3795 = vadd.f32 %v3587, %v3794
  %v3796 = vpop.f32.mrb[0].mxu0
  %3797 = vmatprep.mubr.bf16.mxu0 %v1625
  %3798 = vmatmul.mubr.bf16.gmra.mrb[0].mxu0 %v1624
  %v3799 = vpop.f32.mrb[0].mxu0
  %v3800 = vadd.f32 %v3592, %v3799
  %v3801 = vpop.f32.mrb[0].mxu0
  %v3802 = vpop.f32.mrb[0].mxu0
  %v3803 = vadd.f32 %v3595, %v3802
  %v3804 = vpop.f32.mrb[0].mxu0
  %3805 = vmatprep.mubr.bf16.mxu0 %v1638
  %3806 = vmatmul.mubr.bf16.gmra.mrb[0].mxu0 %v1637
  %v3807 = vpop.f32.mrb[0].mxu0
  %v3808 = vadd.f32 %v3600, %v3807
  %v3809 = vpop.f32.mrb[0].mxu0
  %v3810 = vpop.f32.mrb[0].mxu0
  %v3811 = vadd.f32 %v3603, %v3810
  %v3812 = vpop.f32.mrb[0].mxu0
  %3813 = vmatprep.mubr.bf16.mxu0 %v1651
  %3814 = vmatmul.mubr.bf16.gmra.mrb[0].mxu0 %v1650
  %v3815 = vpop.f32.mrb[0].mxu0
  %v3816 = vadd.f32 %v3608, %v3815
  %v3817 = vpop.f32.mrb[0].mxu0
  %v3818 = vpop.f32.mrb[0].mxu0
  %v3819 = vadd.f32 %v3611, %v3818
  %v3820 = vpop.f32.mrb[0].mxu0
  %3821 = vmatprep.mubr.bf16.mxu0 %v1664
  %3822 = vmatmul.mubr.bf16.gmra.mrb[0].mxu0 %v1663
  %v3823 = vpop.f32.mrb[0].mxu0
  %v3824 = vadd.f32 %v3616, %v3823
  %v3825 = vpop.f32.mrb[0].mxu0
  %v3826 = vpop.f32.mrb[0].mxu0
  %v3827 = vadd.f32 %v3619, %v3826
  %v3828 = vpop.f32.mrb[0].mxu0
  %3829 = vmatprep.mubr.bf16.mxu0 %v1677
  %3830 = vmatmul.mubr.bf16.gmra.mrb[0].mxu0 %v1676
  %v3831 = vpop.f32.mrb[0].mxu0
  %v3832 = vadd.f32 %v3624, %v3831
  %v3833 = vpop.f32.mrb[0].mxu0
  %v3834 = vpop.f32.mrb[0].mxu0
  %v3835 = vpop.f32.mrb[0].mxu0
  %3836 = vdwg.mxu0
  %3837 = vmatprep.subr.bf16.mxu0 0
  %3838 = vmatpush1.bf16.msra.mxu0 %v2477
  %3839 = vmatprep.subr.bf16.mxu0 0
  %3840 = vmatpush1.bf16.msra.mxu0 %v2478
  %3841 = vmatprep.subr.bf16.mxu0 0
  %3842 = vmatpush1.bf16.msra.mxu0 %v2479
  %3843 = vmatprep.subr.bf16.mxu0 0
  %3844 = vmatpush1.bf16.msra.mxu0 %v2480
  %3845 = vmatprep.subr.bf16.mxu0 0
  %3846 = vmatpush1.bf16.msra.mxu0 %v2481
  %3847 = vmatprep.subr.bf16.mxu0 0
  %3848 = vmatpush1.bf16.msra.mxu0 %v2482
  %3849 = vmatprep.subr.bf16.mxu0 0
  %3850 = vmatpush1.bf16.msra.mxu0 %v2483
  %3851 = vmatprep.subr.bf16.mxu0 0
  %3852 = vmatpush1.bf16.msra.mxu0 %v2484
  %3853 = vmatprep.subr.bf16.mxu0 0
  %3854 = vmatpush1.bf16.msra.mxu0 0
  %3855 = vmatprep.subr.bf16.mxu0 0
  %3856 = vmatpush1.bf16.msra.mxu0 0
  %3857 = vmatprep.subr.bf16.mxu0 0
  %3858 = vmatpush1.bf16.msra.mxu0 0
  %3859 = vmatprep.subr.bf16.mxu0 0
  %3860 = vmatpush1.bf16.msra.mxu0 0
  %3861 = vmatprep.subr.bf16.mxu0 0
  %3862 = vmatpush1.bf16.msra.mxu0 0
  %3863 = vmatprep.subr.bf16.mxu0 0
  %3864 = vmatpush1.bf16.msra.mxu0 0
  %3865 = vmatprep.subr.bf16.mxu0 0
  %3866 = vmatpush1.bf16.msra.mxu0 0
  %3867 = vmatprep.subr.bf16.mxu0 0
  %3868 = vmatpush1.bf16.msra.mxu0 0
  %3869 = vmatprep.mubr.bf16.mxu0 0
  %3870 = vmatmul.mubr.bf16.gmra.mrb[0].mxu0 %v1405
  %v3871 = vpop.f32.mrb[0].mxu0
  %v3872 = vadd.f32 %v3664, %v3871
  %v3873 = vpop.f32.mrb[0].mxu0
  %v3874 = vpop.f32.mrb[0].mxu0
  %v3875 = vadd.f32 %v3667, %v3874
  %v3876 = vpop.f32.mrb[0].mxu0
  %3877 = vmatprep.mubr.bf16.mxu0 0
  %3878 = vmatmul.mubr.bf16.gmra.mrb[0].mxu0 %v1418
  %v3879 = vpop.f32.mrb[0].mxu0
  %v3880 = vadd.f32 %v3672, %v3879
  %v3881 = vpop.f32.mrb[0].mxu0
  %v3882 = vpop.f32.mrb[0].mxu0
  %v3883 = vadd.f32 %v3675, %v3882
  %v3884 = vpop.f32.mrb[0].mxu0
  %3885 = vmatprep.mubr.bf16.mxu0 0
  %3886 = vmatmul.mubr.bf16.gmra.mrb[0].mxu0 %v1431
  %v3887 = vpop.f32.mrb[0].mxu0
  %v3888 = vadd.f32 %v3680, %v3887
  %v3889 = vpop.f32.mrb[0].mxu0
  %v3890 = vpop.f32.mrb[0].mxu0
  %v3891 = vadd.f32 %v3683, %v3890
  %v3892 = vpop.f32.mrb[0].mxu0
  %3893 = vmatprep.mubr.bf16.mxu0 0
  %3894 = vmatmul.mubr.bf16.gmra.mrb[0].mxu0 %v1444
  %v3895 = vpop.f32.mrb[0].mxu0
  %v3896 = vadd.f32 %v3688, %v3895
  %v3897 = vpop.f32.mrb[0].mxu0
  %v3898 = vpop.f32.mrb[0].mxu0
  %v3899 = vadd.f32 %v3691, %v3898
  %v3900 = vpop.f32.mrb[0].mxu0
  %3901 = vmatprep.mubr.bf16.mxu0 0
  %3902 = vmatmul.mubr.bf16.gmra.mrb[0].mxu0 %v1457
  %v3903 = vpop.f32.mrb[0].mxu0
  %v3904 = vadd.f32 %v3696, %v3903
  %v3905 = vpop.f32.mrb[0].mxu0
  %v3906 = vpop.f32.mrb[0].mxu0
  %v3907 = vadd.f32 %v3699, %v3906
  %v3908 = vpop.f32.mrb[0].mxu0
  %3909 = vmatprep.mubr.bf16.mxu0 0
  %3910 = vmatmul.mubr.bf16.gmra.mrb[0].mxu0 %v1470
  %v3911 = vpop.f32.mrb[0].mxu0
  %v3912 = vadd.f32 %v3704, %v3911
  %v3913 = vpop.f32.mrb[0].mxu0
  %v3914 = vpop.f32.mrb[0].mxu0
  %v3915 = vadd.f32 %v3707, %v3914
  %v3916 = vpop.f32.mrb[0].mxu0
  %3917 = vmatprep.mubr.bf16.mxu0 0
  %3918 = vmatmul.mubr.bf16.gmra.mrb[0].mxu0 %v1483
  %v3919 = vpop.f32.mrb[0].mxu0
  %v3920 = vadd.f32 %v3712, %v3919
  %v3921 = vpop.f32.mrb[0].mxu0
  %v3922 = vpop.f32.mrb[0].mxu0
  %v3923 = vadd.f32 %v3715, %v3922
  %v3924 = vpop.f32.mrb[0].mxu0
  %3925 = vmatprep.mubr.bf16.mxu0 0
  %3926 = vmatmul.mubr.bf16.gmra.mrb[0].mxu0 %v1496
  %v3927 = vpop.f32.mrb[0].mxu0
  %v3928 = vadd.f32 %v3720, %v3927
  %v3929 = vpop.f32.mrb[0].mxu0
  %v3930 = vpop.f32.mrb[0].mxu0
  %v3931 = vadd.f32 %v3723, %v3930
  %v3932 = vpop.f32.mrb[0].mxu0
  %3933 = vmatprep.mubr.bf16.mxu0 0
  %3934 = vmatmul.mubr.bf16.gmra.mrb[0].mxu0 %v1509
  %v3935 = vpop.f32.mrb[0].mxu0
  %v3936 = vadd.f32 %v3728, %v3935
  %v3937 = vpop.f32.mrb[0].mxu0
  %v3938 = vpop.f32.mrb[0].mxu0
  %v3939 = vadd.f32 %v3731, %v3938
  %v3940 = vpop.f32.mrb[0].mxu0
  %3941 = vmatprep.mubr.bf16.mxu0 0
  %3942 = vmatmul.mubr.bf16.gmra.mrb[0].mxu0 %v1522
  %v3943 = vpop.f32.mrb[0].mxu0
  %v3944 = vadd.f32 %v3736, %v3943
  %v3945 = vpop.f32.mrb[0].mxu0
  %v3946 = vpop.f32.mrb[0].mxu0
  %v3947 = vadd.f32 %v3739, %v3946
  %v3948 = vpop.f32.mrb[0].mxu0
  %3949 = vmatprep.mubr.bf16.mxu0 0
  %3950 = vmatmul.mubr.bf16.gmra.mrb[0].mxu0 %v1535
  %v3951 = vpop.f32.mrb[0].mxu0
  %v3952 = vadd.f32 %v3744, %v3951
  %v3953 = vpop.f32.mrb[0].mxu0
  %v3954 = vpop.f32.mrb[0].mxu0
  %v3955 = vadd.f32 %v3747, %v3954
  %v3956 = vpop.f32.mrb[0].mxu0
  %3957 = vmatprep.mubr.bf16.mxu0 0
  %3958 = vmatmul.mubr.bf16.gmra.mrb[0].mxu0 %v1548
  %v3959 = vpop.f32.mrb[0].mxu0
  %v3960 = vadd.f32 %v3752, %v3959
  %v3961 = vpop.f32.mrb[0].mxu0
  %v3962 = vpop.f32.mrb[0].mxu0
  %v3963 = vadd.f32 %v3755, %v3962
  %v3964 = vpop.f32.mrb[0].mxu0
  %3965 = vmatprep.mubr.bf16.mxu0 0
  %3966 = vmatmul.mubr.bf16.gmra.mrb[0].mxu0 %v1561
  %v3967 = vpop.f32.mrb[0].mxu0
  %v3968 = vadd.f32 %v3760, %v3967
  %v3969 = vpop.f32.mrb[0].mxu0
  %v3970 = vpop.f32.mrb[0].mxu0
  %v3971 = vadd.f32 %v3763, %v3970
  %v3972 = vpop.f32.mrb[0].mxu0
  %3973 = vmatprep.mubr.bf16.mxu0 0
  %3974 = vmatmul.mubr.bf16.gmra.mrb[0].mxu0 %v1574
  %v3975 = vpop.f32.mrb[0].mxu0
  %v3976 = vadd.f32 %v3768, %v3975
  %v3977 = vpop.f32.mrb[0].mxu0
  %v3978 = vpop.f32.mrb[0].mxu0
  %v3979 = vadd.f32 %v3771, %v3978
  %v3980 = vpop.f32.mrb[0].mxu0
  %3981 = vmatprep.mubr.bf16.mxu0 0
  %3982 = vmatmul.mubr.bf16.gmra.mrb[0].mxu0 %v1587
  %v3983 = vpop.f32.mrb[0].mxu0
  %v3984 = vadd.f32 %v3776, %v3983
  %v3985 = vpop.f32.mrb[0].mxu0
  %v3986 = vpop.f32.mrb[0].mxu0
  %v3987 = vadd.f32 %v3779, %v3986
  %v3988 = vpop.f32.mrb[0].mxu0
  %3989 = vmatprep.mubr.bf16.mxu0 0
  %3990 = vmatmul.mubr.bf16.gmra.mrb[0].mxu0 %v1600
  %v3991 = vpop.f32.mrb[0].mxu0
  %v3992 = vadd.f32 %v3784, %v3991
  %v3993 = vpop.f32.mrb[0].mxu0
  %v3994 = vpop.f32.mrb[0].mxu0
  %v3995 = vadd.f32 %v3787, %v3994
  %v3996 = vpop.f32.mrb[0].mxu0
  %3997 = vmatprep.mubr.bf16.mxu0 0
  %3998 = vmatmul.mubr.bf16.gmra.mrb[0].mxu0 %v1613
  %v3999 = vpop.f32.mrb[0].mxu0
  %v4000 = vadd.f32 %v3792, %v3999
  %v4001 = vpop.f32.mrb[0].mxu0
  %v4002 = vpop.f32.mrb[0].mxu0
  %v4003 = vadd.f32 %v3795, %v4002
  %v4004 = vpop.f32.mrb[0].mxu0
  %4005 = vmatprep.mubr.bf16.mxu0 0
  %4006 = vmatmul.mubr.bf16.gmra.mrb[0].mxu0 %v1626
  %v4007 = vpop.f32.mrb[0].mxu0
  %v4008 = vadd.f32 %v3800, %v4007
  %v4009 = vpop.f32.mrb[0].mxu0
  %v4010 = vpop.f32.mrb[0].mxu0
  %v4011 = vadd.f32 %v3803, %v4010
  %v4012 = vpop.f32.mrb[0].mxu0
  %4013 = vmatprep.mubr.bf16.mxu0 0
  %4014 = vmatmul.mubr.bf16.gmra.mrb[0].mxu0 %v1639
  %v4015 = vpop.f32.mrb[0].mxu0
  %v4016 = vadd.f32 %v3808, %v4015
  %v4017 = vpop.f32.mrb[0].mxu0
  %v4018 = vpop.f32.mrb[0].mxu0
  %v4019 = vadd.f32 %v3811, %v4018
  %v4020 = vpop.f32.mrb[0].mxu0
  %4021 = vmatprep.mubr.bf16.mxu0 0
  %4022 = vmatmul.mubr.bf16.gmra.mrb[0].mxu0 %v1652
  %v4023 = vpop.f32.mrb[0].mxu0
  %v4024 = vadd.f32 %v3816, %v4023
  %v4025 = vpop.f32.mrb[0].mxu0
  %v4026 = vpop.f32.mrb[0].mxu0
  %v4027 = vadd.f32 %v3819, %v4026
  %v4028 = vpop.f32.mrb[0].mxu0
  %4029 = vmatprep.mubr.bf16.mxu0 0
  %4030 = vmatmul.mubr.bf16.gmra.mrb[0].mxu0 %v1665
  %v4031 = vpop.f32.mrb[0].mxu0
  %v4032 = vadd.f32 %v3824, %v4031
  %v4033 = vpop.f32.mrb[0].mxu0
  %v4034 = vpop.f32.mrb[0].mxu0
  %v4035 = vadd.f32 %v3827, %v4034
  %v4036 = vpop.f32.mrb[0].mxu0
  %4037 = vmatprep.mubr.bf16.mxu0 0
  %4038 = vmatmul.mubr.bf16.gmra.mrb[0].mxu0 %v1678
  %v4039 = vpop.f32.mrb[0].mxu0
  %v4040 = vadd.f32 %v3832, %v4039
  %v4041 = vpop.f32.mrb[0].mxu0
  %v4042 = vpop.f32.mrb[0].mxu0
  %v4043 = vpop.f32.mrb[0].mxu0
  %4044 = vdwg.mxu0
  %v4045 = vpack.c.bf16 %v3875, %v3872
  %v4046 = vpack.c.bf16 %v3883, %v3880
  %v4047 = vpack.c.bf16 %v3891, %v3888
  %v4048 = vpack.c.bf16 %v3899, %v3896
  %v4049 = vpack.c.bf16 %v3907, %v3904
  %v4050 = vpack.c.bf16 %v3915, %v3912
  %v4051 = vpack.c.bf16 %v3923, %v3920
  %v4052 = vpack.c.bf16 %v3931, %v3928
  %v4053 = vpack.c.bf16 %v3939, %v3936
  %v4054 = vpack.c.bf16 %v3947, %v3944
  %v4055 = vpack.c.bf16 %v3955, %v3952
  %v4056 = vpack.c.bf16 %v3963, %v3960
  %v4057 = vpack.c.bf16 %v3971, %v3968
  %v4058 = vpack.c.bf16 %v3979, %v3976
  %v4059 = vpack.c.bf16 %v3987, %v3984
  %v4060 = vpack.c.bf16 %v3995, %v3992
  %v4061 = vpack.c.bf16 %v4003, %v4000
  %v4062 = vpack.c.bf16 %v4011, %v4008
  %v4063 = vpack.c.bf16 %v4019, %v4016
  %v4064 = vpack.c.bf16 %v4027, %v4024
  %v4065 = vpack.c.bf16 %v4035, %v4032
  %v4066 = vpack.c.bf16 %v4040, %v4040
  %v4089 = vunpack.c.l.b16 %v4045
  %v4090 = vunpack.c.h.b16 %v4045
  %v4091 = vunpack.c.l.b16 %v4046
  %v4092 = vunpack.c.h.b16 %v4046
  %v4093 = vunpack.c.l.b16 %v4047
  %v4094 = vunpack.c.h.b16 %v4047
  %v4095 = vunpack.c.l.b16 %v4048
  %v4096 = vunpack.c.h.b16 %v4048
  %v4097 = vunpack.c.l.b16 %v4049
  %v4098 = vunpack.c.h.b16 %v4049
  %v4099 = vunpack.c.l.b16 %v4050
  %v4100 = vunpack.c.h.b16 %v4050
  %v4101 = vunpack.c.l.b16 %v4051
  %v4102 = vunpack.c.h.b16 %v4051
  %v4103 = vunpack.c.l.b16 %v4052
  %v4104 = vunpack.c.h.b16 %v4052
  %v4105 = vunpack.c.l.b16 %v4053
  %v4106 = vunpack.c.h.b16 %v4053
  %v4107 = vunpack.c.l.b16 %v4054
  %v4108 = vunpack.c.h.b16 %v4054
  %v4109 = vunpack.c.l.b16 %v4055
  %v4110 = vunpack.c.h.b16 %v4055
  %v4111 = vunpack.c.l.b16 %v4056
  %v4112 = vunpack.c.h.b16 %v4056
  %v4113 = vunpack.c.l.b16 %v4057
  %v4114 = vunpack.c.h.b16 %v4057
  %v4115 = vunpack.c.l.b16 %v4058
  %v4116 = vunpack.c.h.b16 %v4058
  %v4117 = vunpack.c.l.b16 %v4059
  %v4118 = vunpack.c.h.b16 %v4059
  %v4119 = vunpack.c.l.b16 %v4060
  %v4120 = vunpack.c.h.b16 %v4060
  %v4121 = vunpack.c.l.b16 %v4061
  %v4122 = vunpack.c.h.b16 %v4061
  %v4123 = vunpack.c.l.b16 %v4062
  %v4124 = vunpack.c.h.b16 %v4062
  %v4125 = vunpack.c.l.b16 %v4063
  %v4126 = vunpack.c.h.b16 %v4063
  %v4127 = vunpack.c.l.b16 %v4064
  %v4128 = vunpack.c.h.b16 %v4064
  %v4129 = vunpack.c.l.b16 %v4065
  %v4130 = vunpack.c.h.b16 %v4065
  %v4131 = vunpack.c.l.b16 %v4066
  %v4132 = vpack.c.b16 %v4089, %v4089
  %v4133 = vpack.c.b16 %v4090, %v4090
  %v4134 = vpack.c.b16 %v4091, %v4091
  %v4135 = vpack.c.b16 %v4092, %v4092
  %v4136 = vpack.c.b16 %v4093, %v4093
  %v4137 = vpack.c.b16 %v4094, %v4094
  %v4138 = vpack.c.b16 %v4095, %v4095
  %v4139 = vpack.c.b16 %v4096, %v4096
  %v4140 = vpack.c.b16 %v4097, %v4097
  %v4141 = vpack.c.b16 %v4098, %v4098
  %v4142 = vpack.c.b16 %v4099, %v4099
  %v4143 = vpack.c.b16 %v4100, %v4100
  %v4144 = vpack.c.b16 %v4101, %v4101
  %v4145 = vpack.c.b16 %v4102, %v4102
  %v4146 = vpack.c.b16 %v4103, %v4103
  %v4147 = vpack.c.b16 %v4104, %v4104
  %v4148 = vpack.c.b16 %v4105, %v4105
  %v4149 = vpack.c.b16 %v4106, %v4106
  %v4150 = vpack.c.b16 %v4107, %v4107
  %v4151 = vpack.c.b16 %v4108, %v4108
  %v4152 = vpack.c.b16 %v4109, %v4109
  %v4153 = vpack.c.b16 %v4110, %v4110
  %v4154 = vpack.c.b16 %v4111, %v4111
  %v4155 = vpack.c.b16 %v4112, %v4112
  %v4156 = vpack.c.b16 %v4113, %v4113
  %v4157 = vpack.c.b16 %v4114, %v4114
  %v4158 = vpack.c.b16 %v4115, %v4115
  %v4159 = vpack.c.b16 %v4116, %v4116
  %v4160 = vpack.c.b16 %v4117, %v4117
  %v4161 = vpack.c.b16 %v4118, %v4118
  %v4162 = vpack.c.b16 %v4119, %v4119
  %v4163 = vpack.c.b16 %v4120, %v4120
  %v4164 = vpack.c.b16 %v4121, %v4121
  %v4165 = vpack.c.b16 %v4122, %v4122
  %v4166 = vpack.c.b16 %v4123, %v4123
  %v4167 = vpack.c.b16 %v4124, %v4124
  %v4168 = vpack.c.b16 %v4125, %v4125
  %v4169 = vpack.c.b16 %v4126, %v4126
  %v4170 = vpack.c.b16 %v4127, %v4127
  %v4171 = vpack.c.b16 %v4128, %v4128
  %v4172 = vpack.c.b16 %v4129, %v4129
  %v4173 = vpack.c.b16 %v4130, %v4130
  %v4174 = vpack.c.b16 %v4131, %v4131
  %4218 = vst [vmem:[%s3] sm:$0xf] %v4132
  %4219 = vst [vmem:[%s3 + $0x4] sm:$0xf] %v4133
  %4220 = vst [vmem:[%s3 + $0x8] sm:$0xf] %v4134
  %4221 = vst [vmem:[%s3 + $0xc] sm:$0xf] %v4135
  %4222 = vst [vmem:[%s3 + $0x10] sm:$0xf] %v4136
  %4223 = vst [vmem:[%s3 + $0x14] sm:$0xf] %v4137
  %4224 = vst [vmem:[%s3 + $0x18] sm:$0xf] %v4138
  %4225 = vst [vmem:[%s3 + $0x1c] sm:$0xf] %v4139
  %4226 = vst [vmem:[%s3 + $0x20] sm:$0xf] %v4140
  %4227 = vst [vmem:[%s3 + $0x24] sm:$0xf] %v4141
  %4228 = vst [vmem:[%s3 + $0x28] sm:$0xf] %v4142
  %4229 = vst [vmem:[%s3 + $0x2c] sm:$0xf] %v4143
  %4230 = vst [vmem:[%s3 + $0x30] sm:$0xf] %v4144
  %4231 = vst [vmem:[%s3 + $0x34] sm:$0xf] %v4145
  %4232 = vst [vmem:[%s3 + $0x38] sm:$0xf] %v4146
  %4233 = vst [vmem:[%s3 + $0x3c] sm:$0xf] %v4147
  %4234 = vst [vmem:[%s3 + $0x40] sm:$0xf] %v4148
  %4235 = vst [vmem:[%s3 + $0x44] sm:$0xf] %v4149
  %4236 = vst [vmem:[%s3 + $0x48] sm:$0xf] %v4150
  %4237 = vst [vmem:[%s3 + $0x4c] sm:$0xf] %v4151
  %4238 = vst [vmem:[%s3 + $0x50] sm:$0xf] %v4152
  %4239 = vst [vmem:[%s3 + $0x54] sm:$0xf] %v4153
  %4240 = vst [vmem:[%s3 + $0x58] sm:$0xf] %v4154
  %4241 = vst [vmem:[%s3 + $0x5c] sm:$0xf] %v4155
  %4242 = vst [vmem:[%s3 + $0x60] sm:$0xf] %v4156
  %4243 = vst [vmem:[%s3 + $0x64] sm:$0xf] %v4157
  %4244 = vst [vmem:[%s3 + $0x68] sm:$0xf] %v4158
  %4245 = vst [vmem:[%s3 + $0x6c] sm:$0xf] %v4159
  %4246 = vst [vmem:[%s3 + $0x70] sm:$0xf] %v4160
  %4247 = vst [vmem:[%s3 + $0x74] sm:$0xf] %v4161
  %4248 = vst [vmem:[%s3 + $0x78] sm:$0xf] %v4162
  %4249 = vst [vmem:[%s3 + $0x7c] sm:$0xf] %v4163
  %4250 = vst [vmem:[%s3 + $0x80] sm:$0xf] %v4164
  %4251 = vst [vmem:[%s3 + $0x84] sm:$0xf] %v4165
  %4252 = vst [vmem:[%s3 + $0x88] sm:$0xf] %v4166
  %4253 = vst [vmem:[%s3 + $0x8c] sm:$0xf] %v4167
  %4254 = vst [vmem:[%s3 + $0x90] sm:$0xf] %v4168
  %4255 = vst [vmem:[%s3 + $0x94] sm:$0xf] %v4169
  %4256 = vst [vmem:[%s3 + $0x98] sm:$0xf] %v4170
  %4257 = vst [vmem:[%s3 + $0x9c] sm:$0xf] %v4171
  %4258 = vst [vmem:[%s3 + $0xa0] sm:$0xf] %v4172
  %4259 = vst [vmem:[%s3 + $0xa4] sm:$0xf] %v4173
  %4260 = vst [vmem:[%s3 + $0xa8] sm:$0x1] %v4174
  %v4261 = vadd.f32 %v3872, %v3875
  %v4262 = vadd.f32 %v4261, %v3880
  %v4263 = vadd.f32 %v4262, %v3883
  %v4264 = vadd.f32 %v4263, %v3888
  %v4265 = vadd.f32 %v4264, %v3891
  %v4266 = vadd.f32 %v4265, %v3896
  %v4267 = vadd.f32 %v4266, %v3899
  %v4268 = vadd.f32 %v4267, %v3904
  %v4269 = vadd.f32 %v4268, %v3907
  %v4270 = vadd.f32 %v4269, %v3912
  %v4271 = vadd.f32 %v4270, %v3915
  %v4272 = vadd.f32 %v4271, %v3920
  %v4273 = vadd.f32 %v4272, %v3923
  %v4274 = vadd.f32 %v4273, %v3928
  %v4275 = vadd.f32 %v4274, %v3931
  %v4276 = vadd.f32 %v4275, %v3936
  %v4277 = vadd.f32 %v4276, %v3939
  %v4278 = vadd.f32 %v4277, %v3944
  %v4279 = vadd.f32 %v4278, %v3947
  %v4280 = vadd.f32 %v4279, %v3952
  %v4281 = vadd.f32 %v4280, %v3955
  %v4282 = vadd.f32 %v4281, %v3960
  %v4283 = vadd.f32 %v4282, %v3963
  %v4284 = vadd.f32 %v4283, %v3968
  %v4285 = vadd.f32 %v4284, %v3971
  %v4286 = vadd.f32 %v4285, %v3976
  %v4287 = vadd.f32 %v4286, %v3979
  %v4288 = vadd.f32 %v4287, %v3984
  %v4289 = vadd.f32 %v4288, %v3987
  %v4290 = vadd.f32 %v4289, %v3992
  %v4291 = vadd.f32 %v4290, %v3995
  %v4292 = vadd.f32 %v4291, %v4000
  %v4293 = vadd.f32 %v4292, %v4003
  %v4294 = vadd.f32 %v4293, %v4008
  %v4295 = vadd.f32 %v4294, %v4011
  %v4296 = vadd.f32 %v4295, %v4016
  %v4297 = vadd.f32 %v4296, %v4019
  %v4298 = vadd.f32 %v4297, %v4024
  %v4299 = vadd.f32 %v4298, %v4027
  %v4300 = vadd.f32 %v4299, %v4032
  %v4301 = vadd.f32 %v4300, %v4035
  %vm4302 = vcmask 1041408
  %v4303 = vsel %vm4302, %v4040, 0.0
  %v4304 = vadd.f32 %v4301, %v4303
  %v4305 = vrot.slane %v4304, 4
  %v4306 = vadd.f32 %v4304, %v4305
  %v4307 = vrot.slane %v4306, 2
  %v4308 = vadd.f32 %v4306, %v4307
  %v4309 = vrot.slane %v4308, 1
  %v4310 = vadd.f32 %v4308, %v4309
  %v4311 = vmul.f32 %v3872, %v3872
  %v4312 = vmul.f32 %v3875, %v3875
  %v4313 = vmul.f32 %v3880, %v3880
  %v4314 = vmul.f32 %v3883, %v3883
  %v4315 = vmul.f32 %v3888, %v3888
  %v4316 = vmul.f32 %v3891, %v3891
  %v4317 = vmul.f32 %v3896, %v3896
  %v4318 = vmul.f32 %v3899, %v3899
  %v4319 = vmul.f32 %v3904, %v3904
  %v4320 = vmul.f32 %v3907, %v3907
  %v4321 = vmul.f32 %v3912, %v3912
  %v4322 = vmul.f32 %v3915, %v3915
  %v4323 = vmul.f32 %v3920, %v3920
  %v4324 = vmul.f32 %v3923, %v3923
  %v4325 = vmul.f32 %v3928, %v3928
  %v4326 = vmul.f32 %v3931, %v3931
  %v4327 = vmul.f32 %v3936, %v3936
  %v4328 = vmul.f32 %v3939, %v3939
  %v4329 = vmul.f32 %v3944, %v3944
  %v4330 = vmul.f32 %v3947, %v3947
  %v4331 = vmul.f32 %v3952, %v3952
  %v4332 = vmul.f32 %v3955, %v3955
  %v4333 = vmul.f32 %v3960, %v3960
  %v4334 = vmul.f32 %v3963, %v3963
  %v4335 = vmul.f32 %v3968, %v3968
  %v4336 = vmul.f32 %v3971, %v3971
  %v4337 = vmul.f32 %v3976, %v3976
  %v4338 = vmul.f32 %v3979, %v3979
  %v4339 = vmul.f32 %v3984, %v3984
  %v4340 = vmul.f32 %v3987, %v3987
  %v4341 = vmul.f32 %v3992, %v3992
  %v4342 = vmul.f32 %v3995, %v3995
  %v4343 = vmul.f32 %v4000, %v4000
  %v4344 = vmul.f32 %v4003, %v4003
  %v4345 = vmul.f32 %v4008, %v4008
  %v4346 = vmul.f32 %v4011, %v4011
  %v4347 = vmul.f32 %v4016, %v4016
  %v4348 = vmul.f32 %v4019, %v4019
  %v4349 = vmul.f32 %v4024, %v4024
  %v4350 = vmul.f32 %v4027, %v4027
  %v4351 = vmul.f32 %v4032, %v4032
  %v4352 = vmul.f32 %v4035, %v4035
  %v4353 = vmul.f32 %v4040, %v4040
  %v4354 = vadd.f32 %v4311, %v4312
  %v4355 = vadd.f32 %v4354, %v4313
  %v4356 = vadd.f32 %v4355, %v4314
  %v4357 = vadd.f32 %v4356, %v4315
  %v4358 = vadd.f32 %v4357, %v4316
  %v4359 = vadd.f32 %v4358, %v4317
  %v4360 = vadd.f32 %v4359, %v4318
  %v4361 = vadd.f32 %v4360, %v4319
  %v4362 = vadd.f32 %v4361, %v4320
  %v4363 = vadd.f32 %v4362, %v4321
  %v4364 = vadd.f32 %v4363, %v4322
  %v4365 = vadd.f32 %v4364, %v4323
  %v4366 = vadd.f32 %v4365, %v4324
  %v4367 = vadd.f32 %v4366, %v4325
  %v4368 = vadd.f32 %v4367, %v4326
  %v4369 = vadd.f32 %v4368, %v4327
  %v4370 = vadd.f32 %v4369, %v4328
  %v4371 = vadd.f32 %v4370, %v4329
  %v4372 = vadd.f32 %v4371, %v4330
  %v4373 = vadd.f32 %v4372, %v4331
  %v4374 = vadd.f32 %v4373, %v4332
  %v4375 = vadd.f32 %v4374, %v4333
  %v4376 = vadd.f32 %v4375, %v4334
  %v4377 = vadd.f32 %v4376, %v4335
  %v4378 = vadd.f32 %v4377, %v4336
  %v4379 = vadd.f32 %v4378, %v4337
  %v4380 = vadd.f32 %v4379, %v4338
  %v4381 = vadd.f32 %v4380, %v4339
  %v4382 = vadd.f32 %v4381, %v4340
  %v4383 = vadd.f32 %v4382, %v4341
  %v4384 = vadd.f32 %v4383, %v4342
  %v4385 = vadd.f32 %v4384, %v4343
  %v4386 = vadd.f32 %v4385, %v4344
  %v4387 = vadd.f32 %v4386, %v4345
  %v4388 = vadd.f32 %v4387, %v4346
  %v4389 = vadd.f32 %v4388, %v4347
  %v4390 = vadd.f32 %v4389, %v4348
  %v4391 = vadd.f32 %v4390, %v4349
  %v4392 = vadd.f32 %v4391, %v4350
  %v4393 = vadd.f32 %v4392, %v4351
  %v4394 = vadd.f32 %v4393, %v4352
  %v4395 = vsel %vm4302, %v4353, 0.0
  %v4396 = vadd.f32 %v4394, %v4395
  %v4397 = vrot.slane %v4396, 4
  %v4398 = vadd.f32 %v4396, %v4397
  %v4399 = vrot.slane %v4398, 2
  %v4400 = vadd.f32 %v4398, %v4399
  %v4401 = vrot.slane %v4400, 1
  %v4402 = vadd.f32 %v4400, %v4401
  %vm4403 = vcmask 1040384
  %v4404 = vsel %vm4403, %v4310, %v4402
  %4405 = vst [vmem:[%s4] sm:$0x3] %v4404
  // Predicated region
  $region14: #{image_model_forward.4} parent=0 // pred_check
    _
  $region15: #{image_model_forward.4} parent=0 // pred_check_branch
    %4407 = sbr.rel (0) target = $region17
  $region16: #{image_model_forward.4} parent=0 // pred_region
    _
  $region17: #{image_model_forward.4} parent=0 // pred_fallthru
    _
  // Predicated region
  $region18: #{image_model_forward.4} parent=0 // pred_check
    _
  $region19: #{image_model_forward.4} parent=0 // pred_check_branch
    %4409 = sbr.rel (0) target = $region21
  $region20: #{image_model_forward.4} parent=0 // pred_region
    _
  $region21: #{image_model_forward.4} parent=0 // pred_fallthru
    _
  // Predicated region
  $region22: #{image_model_forward.4} parent=0 // pred_check
    _
  $region23: #{image_model_forward.4} parent=0 // pred_check_branch
    %4411 = sbr.rel (0) target = $region25
  $region24: #{image_model_forward.4} parent=0 // pred_region
    _
  $region25: #{image_model_forward.4} parent=0 // pred_fallthru
    _
  // Predicated region
  $region26: #{image_model_forward.4} parent=0 // pred_check
    _
  $region27: #{image_model_forward.4} parent=0 // pred_check_branch
    %4413 = sbr.rel (0) target = $region29
  $region28: #{image_model_forward.4} parent=0 // pred_region
    _
  $region29: #{image_model_forward.4} parent=0 // pred_fallthru
    _

// kernel: mul.25
$region0: #{mul.25}
  #allocation0 [shape = 's32[1]{0}', space=sflag, size = 0x4, scoped, tag = 'scoped memory for mul.25']
  %s0 = inlined_call_operand.vmem [shape: f32[128], index: 0, kind: input, shape index: {}]
  %s1 = inlined_call_operand.vmem [shape: f32[128], index: 1, kind: input, shape index: {}]
  %s2 = inlined_call_operand.vmem [shape: f32[128], index: 2, kind: output, shape index: {}]
  %v3 = vld [vmem:[%s0] sm:$0x1]
  %v4 = vld [vmem:[%s1] sm:$0x1]
  %5 = xla_tuple %v3, %v4
  %6 = xla_tuple %5
  %v7 = vmul.f32 %v3, %v4
  %8 = xla_tuple %v7
  %9 = vst [vmem:[%s2] sm:$0x1] %v7

// kernel: image_model_forward.5
$region0: #{image_model_forward.5}
  #allocation0 [shape = 'u32[]', space=smem, size = 0x4, offset = 0x4, fixed_abs, tag = 'smem constant byte address 0x4 - core index']
  #allocation1 [shape = 'u32[144,128]{1,0:T(1,128)}', space=vmem, size = 0x12000, scoped, tag = 'internal scratch']
  %s0 = inlined_call_operand.vmem [shape: bf16[50,3200], index: 0, kind: input, shape index: {}]
  %s1 = inlined_call_operand.vmem [shape: bf16[3200,128], index: 1, kind: input, shape index: {}]
  %s2 = inlined_call_operand.vmem [shape: f32[1,128], index: 2, kind: input, shape index: {}]
  %s3 = inlined_call_operand.vmem [shape: bf16[50,128], index: 3, kind: output, shape index: {}]
  %s4 = sld [smem:[#allocation0]]
  $region22: #{image_model_forward.5} parent=0
    _
  %s6 = ssub.s32 1, %s4
  %s7 = scalar_select 0, %s6, %s4
  // Predicated region
  $region2: #{image_model_forward.5} parent=0 // pred_check
    _
  $region3: #{image_model_forward.5} parent=0 // pred_check_branch
    %9 = sbr.rel (0) target = $region5
  $region4: #{image_model_forward.5} parent=0 // pred_region
    _
  $region5: #{image_model_forward.5} parent=0 // pred_fallthru
    _
  // Predicated region
  $region6: #{image_model_forward.5} parent=0 // pred_check
    _
  $region7: #{image_model_forward.5} parent=0 // pred_check_branch
    %11 = sbr.rel (0) target = $region9
  $region8: #{image_model_forward.5} parent=0 // pred_region
    _
  $region9: #{image_model_forward.5} parent=0 // pred_fallthru
    _
  // Predicated region
  $region10: #{image_model_forward.5} parent=0 // pred_check
    _
  $region11: #{image_model_forward.5} parent=0 // pred_check_branch
    %13 = sbr.rel (0) target = $region13
  $region12: #{image_model_forward.5} parent=0 // pred_region
    _
  $region13: #{image_model_forward.5} parent=0 // pred_fallthru
    _
  %v15 = vld [vmem:[%s0] sm:$0xff]
  %v16 = vld [vmem:[%s0 + $0x8] sm:$0xff]
  %v17 = vld [vmem:[%s0 + $0x10] sm:$0xff]
  %v18 = vld [vmem:[%s0 + $0x18] sm:$0xff]
  %v19 = vld [vmem:[%s0 + $0x20] sm:$0xff]
  %v20 = vld [vmem:[%s0 + $0x28] sm:$0xff]
  %v21 = vld [vmem:[%s0 + $0x30] sm:$0xff]
  %v22 = vld [vmem:[%s0 + $0x38] sm:$0xff]
  %v23 = vld [vmem:[%s0 + $0x40] sm:$0xff]
  %v24 = vld [vmem:[%s0 + $0x48] sm:$0xff]
  %v25 = vld [vmem:[%s0 + $0x50] sm:$0xff]
  %v26 = vld [vmem:[%s0 + $0x58] sm:$0xff]
  %v27 = vld [vmem:[%s0 + $0x60] sm:$0xf]
  %v28 = vld [vmem:[%s0 + $0x64] sm:$0xff]
  %v29 = vld [vmem:[%s0 + $0x6c] sm:$0xff]
  %v30 = vld [vmem:[%s0 + $0x74] sm:$0xff]
  %v31 = vld [vmem:[%s0 + $0x7c] sm:$0xff]
  %v32 = vld [vmem:[%s0 + $0x84] sm:$0xff]
  %v33 = vld [vmem:[%s0 + $0x8c] sm:$0xff]
  %v34 = vld [vmem:[%s0 + $0x94] sm:$0xff]
  %v35 = vld [vmem:[%s0 + $0x9c] sm:$0xff]
  %v36 = vld [vmem:[%s0 + $0xa4] sm:$0xff]
  %v37 = vld [vmem:[%s0 + $0xac] sm:$0xff]
  %v38 = vld [vmem:[%s0 + $0xb4] sm:$0xff]
  %v39 = vld [vmem:[%s0 + $0xbc] sm:$0xff]
  %v40 = vld [vmem:[%s0 + $0xc4] sm:$0xf]
  %v41 = vld [vmem:[%s0 + $0xc8] sm:$0xff]
  %v42 = vld [vmem:[%s0 + $0xd0] sm:$0xff]
  %v43 = vld [vmem:[%s0 + $0xd8] sm:$0xff]
  %v44 = vld [vmem:[%s0 + $0xe0] sm:$0xff]
  %v45 = vld [vmem:[%s0 + $0xe8] sm:$0xff]
  %v46 = vld [vmem:[%s0 + $0xf0] sm:$0xff]
  %v47 = vld [vmem:[%s0 + $0xf8] sm:$0xff]
  %v48 = vld [vmem:[%s0 + $0x100] sm:$0xff]
  %v49 = vld [vmem:[%s0 + $0x108] sm:$0xff]
  %v50 = vld [vmem:[%s0 + $0x110] sm:$0xff]
  %v51 = vld [vmem:[%s0 + $0x118] sm:$0xff]
  %v52 = vld [vmem:[%s0 + $0x120] sm:$0xff]
  %v53 = vld [vmem:[%s0 + $0x128] sm:$0xf]
  %v54 = vld [vmem:[%s0 + $0x12c] sm:$0xff]
  %v55 = vld [vmem:[%s0 + $0x134] sm:$0xff]
  %v56 = vld [vmem:[%s0 + $0x13c] sm:$0xff]
  %v57 = vld [vmem:[%s0 + $0x144] sm:$0xff]
  %v58 = vld [vmem:[%s0 + $0x14c] sm:$0xff]
  %v59 = vld [vmem:[%s0 + $0x154] sm:$0xff]
  %v60 = vld [vmem:[%s0 + $0x15c] sm:$0xff]
  %v61 = vld [vmem:[%s0 + $0x164] sm:$0xff]
  %v62 = vld [vmem:[%s0 + $0x16c] sm:$0xff]
  %v63 = vld [vmem:[%s0 + $0x174] sm:$0xff]
  %v64 = vld [vmem:[%s0 + $0x17c] sm:$0xff]
  %v65 = vld [vmem:[%s0 + $0x184] sm:$0xff]
  %v66 = vld [vmem:[%s0 + $0x18c] sm:$0xf]
  %v67 = vld [vmem:[%s0 + $0x190] sm:$0xff]
  %v68 = vld [vmem:[%s0 + $0x198] sm:$0xff]
  %v69 = vld [vmem:[%s0 + $0x1a0] sm:$0xff]
  %v70 = vld [vmem:[%s0 + $0x1a8] sm:$0xff]
  %v71 = vld [vmem:[%s0 + $0x1b0] sm:$0xff]
  %v72 = vld [vmem:[%s0 + $0x1b8] sm:$0xff]
  %v73 = vld [vmem:[%s0 + $0x1c0] sm:$0xff]
  %v74 = vld [vmem:[%s0 + $0x1c8] sm:$0xff]
  %v75 = vld [vmem:[%s0 + $0x1d0] sm:$0xff]
  %v76 = vld [vmem:[%s0 + $0x1d8] sm:$0xff]
  %v77 = vld [vmem:[%s0 + $0x1e0] sm:$0xff]
  %v78 = vld [vmem:[%s0 + $0x1e8] sm:$0xff]
  %v79 = vld [vmem:[%s0 + $0x1f0] sm:$0xf]
  %v80 = vld [vmem:[%s0 + $0x1f4] sm:$0xff]
  %v81 = vld [vmem:[%s0 + $0x1fc] sm:$0xff]
  %v82 = vld [vmem:[%s0 + $0x204] sm:$0xff]
  %v83 = vld [vmem:[%s0 + $0x20c] sm:$0xff]
  %v84 = vld [vmem:[%s0 + $0x214] sm:$0xff]
  %v85 = vld [vmem:[%s0 + $0x21c] sm:$0xff]
  %v86 = vld [vmem:[%s0 + $0x224] sm:$0xff]
  %v87 = vld [vmem:[%s0 + $0x22c] sm:$0xff]
  %v88 = vld [vmem:[%s0 + $0x234] sm:$0xff]
  %v89 = vld [vmem:[%s0 + $0x23c] sm:$0xff]
  %v90 = vld [vmem:[%s0 + $0x244] sm:$0xff]
  %v91 = vld [vmem:[%s0 + $0x24c] sm:$0xff]
  %v92 = vld [vmem:[%s0 + $0x254] sm:$0xf]
  %v93 = vld [vmem:[%s0 + $0x258] sm:$0x11]
  %v94 = vld [vmem:[%s0 + $0x260] sm:$0x11]
  %v95 = vld [vmem:[%s0 + $0x268] sm:$0x11]
  %v96 = vld [vmem:[%s0 + $0x270] sm:$0x11]
  %v97 = vld [vmem:[%s0 + $0x278] sm:$0x11]
  %v98 = vld [vmem:[%s0 + $0x280] sm:$0x11]
  %v99 = vld [vmem:[%s0 + $0x288] sm:$0x11]
  %v100 = vld [vmem:[%s0 + $0x290] sm:$0x11]
  %v101 = vld [vmem:[%s0 + $0x298] sm:$0x11]
  %v102 = vld [vmem:[%s0 + $0x2a0] sm:$0x11]
  %v103 = vld [vmem:[%s0 + $0x2a8] sm:$0x11]
  %v104 = vld [vmem:[%s0 + $0x2b0] sm:$0x11]
  %v105 = vld [vmem:[%s0 + $0x2b8] sm:$0x1]
  %v106 = vld [vmem:[%s1] sm:$0xf]
  %v107 = vld [vmem:[%s1 + $0x4] sm:$0xf]
  %v108 = vld [vmem:[%s1 + $0x8] sm:$0xf]
  %v109 = vld [vmem:[%s1 + $0xc] sm:$0xf]
  %v110 = vld [vmem:[%s1 + $0x10] sm:$0xf]
  %v111 = vld [vmem:[%s1 + $0x14] sm:$0xf]
  %v112 = vld [vmem:[%s1 + $0x18] sm:$0xf]
  %v113 = vld [vmem:[%s1 + $0x1c] sm:$0xf]
  %v114 = vld [vmem:[%s1 + $0x20] sm:$0xf]
  %v115 = vld [vmem:[%s1 + $0x24] sm:$0xf]
  %v116 = vld [vmem:[%s1 + $0x28] sm:$0xf]
  %v117 = vld [vmem:[%s1 + $0x2c] sm:$0xf]
  %v118 = vld [vmem:[%s1 + $0x30] sm:$0xf]
  %v119 = vld [vmem:[%s1 + $0x34] sm:$0xf]
  %v120 = vld [vmem:[%s1 + $0x38] sm:$0xf]
  %v121 = vld [vmem:[%s1 + $0x3c] sm:$0xf]
  %v122 = vld [vmem:[%s1 + $0x40] sm:$0xf]
  %v123 = vld [vmem:[%s1 + $0x44] sm:$0xf]
  %v124 = vld [vmem:[%s1 + $0x48] sm:$0xf]
  %v125 = vld [vmem:[%s1 + $0x4c] sm:$0xf]
  %v126 = vld [vmem:[%s1 + $0x50] sm:$0xf]
  %v127 = vld [vmem:[%s1 + $0x54] sm:$0xf]
  %v128 = vld [vmem:[%s1 + $0x58] sm:$0xf]
  %v129 = vld [vmem:[%s1 + $0x5c] sm:$0xf]
  %v130 = vld [vmem:[%s1 + $0x60] sm:$0xf]
  %v131 = vld [vmem:[%s1 + $0x64] sm:$0xf]
  %v132 = vld [vmem:[%s1 + $0x68] sm:$0xf]
  %v133 = vld [vmem:[%s1 + $0x6c] sm:$0xf]
  %v134 = vld [vmem:[%s1 + $0x70] sm:$0xf]
  %v135 = vld [vmem:[%s1 + $0x74] sm:$0xf]
  %v136 = vld [vmem:[%s1 + $0x78] sm:$0xf]
  %v137 = vld [vmem:[%s1 + $0x7c] sm:$0xf]
  %v138 = vld [vmem:[%s1 + $0x80] sm:$0xf]
  %v139 = vld [vmem:[%s1 + $0x84] sm:$0xf]
  %v140 = vld [vmem:[%s1 + $0x88] sm:$0xf]
  %v141 = vld [vmem:[%s1 + $0x8c] sm:$0xf]
  %v142 = vld [vmem:[%s1 + $0x90] sm:$0xf]
  %v143 = vld [vmem:[%s1 + $0x94] sm:$0xf]
  %v144 = vld [vmem:[%s1 + $0x98] sm:$0xf]
  %v145 = vld [vmem:[%s1 + $0x9c] sm:$0xf]
  %v146 = vld [vmem:[%s1 + $0xa0] sm:$0xf]
  %v147 = vld [vmem:[%s1 + $0xa4] sm:$0xf]
  %v148 = vld [vmem:[%s1 + $0xa8] sm:$0xf]
  %v149 = vld [vmem:[%s1 + $0xac] sm:$0xf]
  %v150 = vld [vmem:[%s1 + $0xb0] sm:$0xf]
  %v151 = vld [vmem:[%s1 + $0xb4] sm:$0xf]
  %v152 = vld [vmem:[%s1 + $0xb8] sm:$0xf]
  %v153 = vld [vmem:[%s1 + $0xbc] sm:$0xf]
  %v154 = vld [vmem:[%s1 + $0xc0] sm:$0xf]
  %v155 = vld [vmem:[%s1 + $0xc4] sm:$0xf]
  %v156 = vld [vmem:[%s1 + $0xc8] sm:$0xf]
  %v157 = vld [vmem:[%s1 + $0xcc] sm:$0xf]
  %v158 = vld [vmem:[%s1 + $0xd0] sm:$0xf]
  %v159 = vld [vmem:[%s1 + $0xd4] sm:$0xf]
  %v160 = vld [vmem:[%s1 + $0xd8] sm:$0xf]
  %v161 = vld [vmem:[%s1 + $0xdc] sm:$0xf]
  %v162 = vld [vmem:[%s1 + $0xe0] sm:$0xf]
  %v163 = vld [vmem:[%s1 + $0xe4] sm:$0xf]
  %v164 = vld [vmem:[%s1 + $0xe8] sm:$0xf]
  %v165 = vld [vmem:[%s1 + $0xec] sm:$0xf]
  %v166 = vld [vmem:[%s1 + $0xf0] sm:$0xf]
  %v167 = vld [vmem:[%s1 + $0xf4] sm:$0xf]
  %v168 = vld [vmem:[%s1 + $0xf8] sm:$0xf]
  %v169 = vld [vmem:[%s1 + $0xfc] sm:$0xf]
  %v170 = vld [vmem:[%s1 + $0x100] sm:$0xf]
  %v171 = vld [vmem:[%s1 + $0x104] sm:$0xf]
  %v172 = vld [vmem:[%s1 + $0x108] sm:$0xf]
  %v173 = vld [vmem:[%s1 + $0x10c] sm:$0xf]
  %v174 = vld [vmem:[%s1 + $0x110] sm:$0xf]
  %v175 = vld [vmem:[%s1 + $0x114] sm:$0xf]
  %v176 = vld [vmem:[%s1 + $0x118] sm:$0xf]
  %v177 = vld [vmem:[%s1 + $0x11c] sm:$0xf]
  %v178 = vld [vmem:[%s1 + $0x120] sm:$0xf]
  %v179 = vld [vmem:[%s1 + $0x124] sm:$0xf]
  %v180 = vld [vmem:[%s1 + $0x128] sm:$0xf]
  %v181 = vld [vmem:[%s1 + $0x12c] sm:$0xf]
  %v182 = vld [vmem:[%s1 + $0x130] sm:$0xf]
  %v183 = vld [vmem:[%s1 + $0x134] sm:$0xf]
  %v184 = vld [vmem:[%s1 + $0x138] sm:$0xf]
  %v185 = vld [vmem:[%s1 + $0x13c] sm:$0xf]
  %v186 = vld [vmem:[%s1 + $0x140] sm:$0xf]
  %v187 = vld [vmem:[%s1 + $0x144] sm:$0xf]
  %v188 = vld [vmem:[%s1 + $0x148] sm:$0xf]
  %v189 = vld [vmem:[%s1 + $0x14c] sm:$0xf]
  %v190 = vld [vmem:[%s1 + $0x150] sm:$0xf]
  %v191 = vld [vmem:[%s1 + $0x154] sm:$0xf]
  %v192 = vld [vmem:[%s1 + $0x158] sm:$0xf]
  %v193 = vld [vmem:[%s1 + $0x15c] sm:$0xf]
  %v194 = vld [vmem:[%s1 + $0x160] sm:$0xf]
  %v195 = vld [vmem:[%s1 + $0x164] sm:$0xf]
  %v196 = vld [vmem:[%s1 + $0x168] sm:$0xf]
  %v197 = vld [vmem:[%s1 + $0x16c] sm:$0xf]
  %v198 = vld [vmem:[%s1 + $0x170] sm:$0xf]
  %v199 = vld [vmem:[%s1 + $0x174] sm:$0xf]
  %v200 = vld [vmem:[%s1 + $0x178] sm:$0xf]
  %v201 = vld [vmem:[%s1 + $0x17c] sm:$0xf]
  %v202 = vld [vmem:[%s1 + $0x180] sm:$0xf]
  %v203 = vld [vmem:[%s1 + $0x184] sm:$0xf]
  %v204 = vld [vmem:[%s1 + $0x188] sm:$0xf]
  %v205 = vld [vmem:[%s1 + $0x18c] sm:$0xf]
  %v206 = vld [vmem:[%s1 + $0x190] sm:$0xf]
  %v207 = vld [vmem:[%s1 + $0x194] sm:$0xf]
  %v208 = vld [vmem:[%s1 + $0x198] sm:$0xf]
  %v209 = vld [vmem:[%s1 + $0x19c] sm:$0xf]
  %v210 = vld [vmem:[%s1 + $0x1a0] sm:$0xf]
  %v211 = vld [vmem:[%s1 + $0x1a4] sm:$0xf]
  %v212 = vld [vmem:[%s1 + $0x1a8] sm:$0xf]
  %v213 = vld [vmem:[%s1 + $0x1ac] sm:$0xf]
  %v214 = vld [vmem:[%s1 + $0x1b0] sm:$0xf]
  %v215 = vld [vmem:[%s1 + $0x1b4] sm:$0xf]
  %v216 = vld [vmem:[%s1 + $0x1b8] sm:$0xf]
  %v217 = vld [vmem:[%s1 + $0x1bc] sm:$0xf]
  %v218 = vld [vmem:[%s1 + $0x1c0] sm:$0xf]
  %v219 = vld [vmem:[%s1 + $0x1c4] sm:$0xf]
  %v220 = vld [vmem:[%s1 + $0x1c8] sm:$0xf]
  %v221 = vld [vmem:[%s1 + $0x1cc] sm:$0xf]
  %v222 = vld [vmem:[%s1 + $0x1d0] sm:$0xf]
  %v223 = vld [vmem:[%s1 + $0x1d4] sm:$0xf]
  %v224 = vld [vmem:[%s1 + $0x1d8] sm:$0xf]
  %v225 = vld [vmem:[%s1 + $0x1dc] sm:$0xf]
  %v226 = vld [vmem:[%s1 + $0x1e0] sm:$0xf]
  %v227 = vld [vmem:[%s1 + $0x1e4] sm:$0xf]
  %v228 = vld [vmem:[%s1 + $0x1e8] sm:$0xf]
  %v229 = vld [vmem:[%s1 + $0x1ec] sm:$0xf]
  %v230 = vld [vmem:[%s1 + $0x1f0] sm:$0xf]
  %v231 = vld [vmem:[%s1 + $0x1f4] sm:$0xf]
  %v232 = vld [vmem:[%s1 + $0x1f8] sm:$0xf]
  %v233 = vld [vmem:[%s1 + $0x1fc] sm:$0xf]
  %v234 = vld [vmem:[%s1 + $0x200] sm:$0xf]
  %v235 = vld [vmem:[%s1 + $0x204] sm:$0xf]
  %v236 = vld [vmem:[%s1 + $0x208] sm:$0xf]
  %v237 = vld [vmem:[%s1 + $0x20c] sm:$0xf]
  %v238 = vld [vmem:[%s1 + $0x210] sm:$0xf]
  %v239 = vld [vmem:[%s1 + $0x214] sm:$0xf]
  %v240 = vld [vmem:[%s1 + $0x218] sm:$0xf]
  %v241 = vld [vmem:[%s1 + $0x21c] sm:$0xf]
  %v242 = vld [vmem:[%s1 + $0x220] sm:$0xf]
  %v243 = vld [vmem:[%s1 + $0x224] sm:$0xf]
  %v244 = vld [vmem:[%s1 + $0x228] sm:$0xf]
  %v245 = vld [vmem:[%s1 + $0x22c] sm:$0xf]
  %v246 = vld [vmem:[%s1 + $0x230] sm:$0xf]
  %v247 = vld [vmem:[%s1 + $0x234] sm:$0xf]
  %v248 = vld [vmem:[%s1 + $0x238] sm:$0xf]
  %v249 = vld [vmem:[%s1 + $0x23c] sm:$0xf]
  %v250 = vld [vmem:[%s1 + $0x240] sm:$0xf]
  %v251 = vld [vmem:[%s1 + $0x244] sm:$0xf]
  %v252 = vld [vmem:[%s1 + $0x248] sm:$0xf]
  %v253 = vld [vmem:[%s1 + $0x24c] sm:$0xf]
  %v254 = vld [vmem:[%s1 + $0x250] sm:$0xf]
  %v255 = vld [vmem:[%s1 + $0x254] sm:$0xf]
  %v256 = vld [vmem:[%s1 + $0x258] sm:$0xf]
  %v257 = vld [vmem:[%s1 + $0x25c] sm:$0xf]
  %v258 = vld [vmem:[%s1 + $0x260] sm:$0xf]
  %v259 = vld [vmem:[%s1 + $0x264] sm:$0xf]
  %v260 = vld [vmem:[%s1 + $0x268] sm:$0xf]
  %v261 = vld [vmem:[%s1 + $0x26c] sm:$0xf]
  %v262 = vld [vmem:[%s1 + $0x270] sm:$0xf]
  %v263 = vld [vmem:[%s1 + $0x274] sm:$0xf]
  %v264 = vld [vmem:[%s1 + $0x278] sm:$0xf]
  %v265 = vld [vmem:[%s1 + $0x27c] sm:$0xf]
  %v266 = vld [vmem:[%s1 + $0x280] sm:$0xf]
  %v267 = vld [vmem:[%s1 + $0x284] sm:$0xf]
  %v268 = vld [vmem:[%s1 + $0x288] sm:$0xf]
  %v269 = vld [vmem:[%s1 + $0x28c] sm:$0xf]
  %v270 = vld [vmem:[%s1 + $0x290] sm:$0xf]
  %v271 = vld [vmem:[%s1 + $0x294] sm:$0xf]
  %v272 = vld [vmem:[%s1 + $0x298] sm:$0xf]
  %v273 = vld [vmem:[%s1 + $0x29c] sm:$0xf]
  %v274 = vld [vmem:[%s1 + $0x2a0] sm:$0xf]
  %v275 = vld [vmem:[%s1 + $0x2a4] sm:$0xf]
  %v276 = vld [vmem:[%s1 + $0x2a8] sm:$0xf]
  %v277 = vld [vmem:[%s1 + $0x2ac] sm:$0xf]
  %v278 = vld [vmem:[%s1 + $0x2b0] sm:$0xf]
  %v279 = vld [vmem:[%s1 + $0x2b4] sm:$0xf]
  %v280 = vld [vmem:[%s1 + $0x2b8] sm:$0xf]
  %v281 = vld [vmem:[%s1 + $0x2bc] sm:$0xf]
  %v282 = vld [vmem:[%s1 + $0x2c0] sm:$0xf]
  %v283 = vld [vmem:[%s1 + $0x2c4] sm:$0xf]
  %v284 = vld [vmem:[%s1 + $0x2c8] sm:$0xf]
  %v285 = vld [vmem:[%s1 + $0x2cc] sm:$0xf]
  %v286 = vld [vmem:[%s1 + $0x2d0] sm:$0xf]
  %v287 = vld [vmem:[%s1 + $0x2d4] sm:$0xf]
  %v288 = vld [vmem:[%s1 + $0x2d8] sm:$0xf]
  %v289 = vld [vmem:[%s1 + $0x2dc] sm:$0xf]
  %v290 = vld [vmem:[%s1 + $0x2e0] sm:$0xf]
  %v291 = vld [vmem:[%s1 + $0x2e4] sm:$0xf]
  %v292 = vld [vmem:[%s1 + $0x2e8] sm:$0xf]
  %v293 = vld [vmem:[%s1 + $0x2ec] sm:$0xf]
  %v294 = vld [vmem:[%s1 + $0x2f0] sm:$0xf]
  %v295 = vld [vmem:[%s1 + $0x2f4] sm:$0xf]
  %v296 = vld [vmem:[%s1 + $0x2f8] sm:$0xf]
  %v297 = vld [vmem:[%s1 + $0x2fc] sm:$0xf]
  %v298 = vld [vmem:[%s1 + $0x300] sm:$0xf]
  %v299 = vld [vmem:[%s1 + $0x304] sm:$0xf]
  %v300 = vld [vmem:[%s1 + $0x308] sm:$0xf]
  %v301 = vld [vmem:[%s1 + $0x30c] sm:$0xf]
  %v302 = vld [vmem:[%s1 + $0x310] sm:$0xf]
  %v303 = vld [vmem:[%s1 + $0x314] sm:$0xf]
  %v304 = vld [vmem:[%s1 + $0x318] sm:$0xf]
  %v305 = vld [vmem:[%s1 + $0x31c] sm:$0xf]
  %v306 = vld [vmem:[%s1 + $0x320] sm:$0xf]
  %v307 = vld [vmem:[%s1 + $0x324] sm:$0xf]
  %v308 = vld [vmem:[%s1 + $0x328] sm:$0xf]
  %v309 = vld [vmem:[%s1 + $0x32c] sm:$0xf]
  %v310 = vld [vmem:[%s1 + $0x330] sm:$0xf]
  %v311 = vld [vmem:[%s1 + $0x334] sm:$0xf]
  %v312 = vld [vmem:[%s1 + $0x338] sm:$0xf]
  %v313 = vld [vmem:[%s1 + $0x33c] sm:$0xf]
  %v314 = vld [vmem:[%s1 + $0x340] sm:$0xf]
  %v315 = vld [vmem:[%s1 + $0x344] sm:$0xf]
  %v316 = vld [vmem:[%s1 + $0x348] sm:$0xf]
  %v317 = vld [vmem:[%s1 + $0x34c] sm:$0xf]
  %v318 = vld [vmem:[%s1 + $0x350] sm:$0xf]
  %v319 = vld [vmem:[%s1 + $0x354] sm:$0xf]
  %v320 = vld [vmem:[%s1 + $0x358] sm:$0xf]
  %v321 = vld [vmem:[%s1 + $0x35c] sm:$0xf]
  %v322 = vld [vmem:[%s1 + $0x360] sm:$0xf]
  %v323 = vld [vmem:[%s1 + $0x364] sm:$0xf]
  %v324 = vld [vmem:[%s1 + $0x368] sm:$0xf]
  %v325 = vld [vmem:[%s1 + $0x36c] sm:$0xf]
  %v326 = vld [vmem:[%s1 + $0x370] sm:$0xf]
  %v327 = vld [vmem:[%s1 + $0x374] sm:$0xf]
  %v328 = vld [vmem:[%s1 + $0x378] sm:$0xf]
  %v329 = vld [vmem:[%s1 + $0x37c] sm:$0xf]
  %v330 = vld [vmem:[%s1 + $0x380] sm:$0xf]
  %v331 = vld [vmem:[%s1 + $0x384] sm:$0xf]
  %v332 = vld [vmem:[%s1 + $0x388] sm:$0xf]
  %v333 = vld [vmem:[%s1 + $0x38c] sm:$0xf]
  %v334 = vld [vmem:[%s1 + $0x390] sm:$0xf]
  %v335 = vld [vmem:[%s1 + $0x394] sm:$0xf]
  %v336 = vld [vmem:[%s1 + $0x398] sm:$0xf]
  %v337 = vld [vmem:[%s1 + $0x39c] sm:$0xf]
  %v338 = vld [vmem:[%s1 + $0x3a0] sm:$0xf]
  %v339 = vld [vmem:[%s1 + $0x3a4] sm:$0xf]
  %v340 = vld [vmem:[%s1 + $0x3a8] sm:$0xf]
  %v341 = vld [vmem:[%s1 + $0x3ac] sm:$0xf]
  %v342 = vld [vmem:[%s1 + $0x3b0] sm:$0xf]
  %v343 = vld [vmem:[%s1 + $0x3b4] sm:$0xf]
  %v344 = vld [vmem:[%s1 + $0x3b8] sm:$0xf]
  %v345 = vld [vmem:[%s1 + $0x3bc] sm:$0xf]
  %v346 = vld [vmem:[%s1 + $0x3c0] sm:$0xf]
  %v347 = vld [vmem:[%s1 + $0x3c4] sm:$0xf]
  %v348 = vld [vmem:[%s1 + $0x3c8] sm:$0xf]
  %v349 = vld [vmem:[%s1 + $0x3cc] sm:$0xf]
  %v350 = vld [vmem:[%s1 + $0x3d0] sm:$0xf]
  %v351 = vld [vmem:[%s1 + $0x3d4] sm:$0xf]
  %v352 = vld [vmem:[%s1 + $0x3d8] sm:$0xf]
  %v353 = vld [vmem:[%s1 + $0x3dc] sm:$0xf]
  %v354 = vld [vmem:[%s1 + $0x3e0] sm:$0xf]
  %v355 = vld [vmem:[%s1 + $0x3e4] sm:$0xf]
  %v356 = vld [vmem:[%s1 + $0x3e8] sm:$0xf]
  %v357 = vld [vmem:[%s1 + $0x3ec] sm:$0xf]
  %v358 = vld [vmem:[%s1 + $0x3f0] sm:$0xf]
  %v359 = vld [vmem:[%s1 + $0x3f4] sm:$0xf]
  %v360 = vld [vmem:[%s1 + $0x3f8] sm:$0xf]
  %v361 = vld [vmem:[%s1 + $0x3fc] sm:$0xf]
  %v362 = vld [vmem:[%s1 + $0x400] sm:$0xf]
  %v363 = vld [vmem:[%s1 + $0x404] sm:$0xf]
  %v364 = vld [vmem:[%s1 + $0x408] sm:$0xf]
  %v365 = vld [vmem:[%s1 + $0x40c] sm:$0xf]
  %v366 = vld [vmem:[%s1 + $0x410] sm:$0xf]
  %v367 = vld [vmem:[%s1 + $0x414] sm:$0xf]
  %v368 = vld [vmem:[%s1 + $0x418] sm:$0xf]
  %v369 = vld [vmem:[%s1 + $0x41c] sm:$0xf]
  %v370 = vld [vmem:[%s1 + $0x420] sm:$0xf]
  %v371 = vld [vmem:[%s1 + $0x424] sm:$0xf]
  %v372 = vld [vmem:[%s1 + $0x428] sm:$0xf]
  %v373 = vld [vmem:[%s1 + $0x42c] sm:$0xf]
  %v374 = vld [vmem:[%s1 + $0x430] sm:$0xf]
  %v375 = vld [vmem:[%s1 + $0x434] sm:$0xf]
  %v376 = vld [vmem:[%s1 + $0x438] sm:$0xf]
  %v377 = vld [vmem:[%s1 + $0x43c] sm:$0xf]
  %v378 = vld [vmem:[%s1 + $0x440] sm:$0xf]
  %v379 = vld [vmem:[%s1 + $0x444] sm:$0xf]
  %v380 = vld [vmem:[%s1 + $0x448] sm:$0xf]
  %v381 = vld [vmem:[%s1 + $0x44c] sm:$0xf]
  %v382 = vld [vmem:[%s1 + $0x450] sm:$0xf]
  %v383 = vld [vmem:[%s1 + $0x454] sm:$0xf]
  %v384 = vld [vmem:[%s1 + $0x458] sm:$0xf]
  %v385 = vld [vmem:[%s1 + $0x45c] sm:$0xf]
  %v386 = vld [vmem:[%s1 + $0x460] sm:$0xf]
  %v387 = vld [vmem:[%s1 + $0x464] sm:$0xf]
  %v388 = vld [vmem:[%s1 + $0x468] sm:$0xf]
  %v389 = vld [vmem:[%s1 + $0x46c] sm:$0xf]
  %v390 = vld [vmem:[%s1 + $0x470] sm:$0xf]
  %v391 = vld [vmem:[%s1 + $0x474] sm:$0xf]
  %v392 = vld [vmem:[%s1 + $0x478] sm:$0xf]
  %v393 = vld [vmem:[%s1 + $0x47c] sm:$0xf]
  %v394 = vld [vmem:[%s1 + $0x480] sm:$0xf]
  %v395 = vld [vmem:[%s1 + $0x484] sm:$0xf]
  %v396 = vld [vmem:[%s1 + $0x488] sm:$0xf]
  %v397 = vld [vmem:[%s1 + $0x48c] sm:$0xf]
  %v398 = vld [vmem:[%s1 + $0x490] sm:$0xf]
  %v399 = vld [vmem:[%s1 + $0x494] sm:$0xf]
  %v400 = vld [vmem:[%s1 + $0x498] sm:$0xf]
  %v401 = vld [vmem:[%s1 + $0x49c] sm:$0xf]
  %v402 = vld [vmem:[%s1 + $0x4a0] sm:$0xf]
  %v403 = vld [vmem:[%s1 + $0x4a4] sm:$0xf]
  %v404 = vld [vmem:[%s1 + $0x4a8] sm:$0xf]
  %v405 = vld [vmem:[%s1 + $0x4ac] sm:$0xf]
  %v406 = vld [vmem:[%s1 + $0x4b0] sm:$0xf]
  %v407 = vld [vmem:[%s1 + $0x4b4] sm:$0xf]
  %v408 = vld [vmem:[%s1 + $0x4b8] sm:$0xf]
  %v409 = vld [vmem:[%s1 + $0x4bc] sm:$0xf]
  %v410 = vld [vmem:[%s1 + $0x4c0] sm:$0xf]
  %v411 = vld [vmem:[%s1 + $0x4c4] sm:$0xf]
  %v412 = vld [vmem:[%s1 + $0x4c8] sm:$0xf]
  %v413 = vld [vmem:[%s1 + $0x4cc] sm:$0xf]
  %v414 = vld [vmem:[%s1 + $0x4d0] sm:$0xf]
  %v415 = vld [vmem:[%s1 + $0x4d4] sm:$0xf]
  %v416 = vld [vmem:[%s1 + $0x4d8] sm:$0xf]
  %v417 = vld [vmem:[%s1 + $0x4dc] sm:$0xf]
  %v418 = vld [vmem:[%s1 + $0x4e0] sm:$0xf]
  %v419 = vld [vmem:[%s1 + $0x4e4] sm:$0xf]
  %v420 = vld [vmem:[%s1 + $0x4e8] sm:$0xf]
  %v421 = vld [vmem:[%s1 + $0x4ec] sm:$0xf]
  %v422 = vld [vmem:[%s1 + $0x4f0] sm:$0xf]
  %v423 = vld [vmem:[%s1 + $0x4f4] sm:$0xf]
  %v424 = vld [vmem:[%s1 + $0x4f8] sm:$0xf]
  %v425 = vld [vmem:[%s1 + $0x4fc] sm:$0xf]
  %v426 = vld [vmem:[%s1 + $0x500] sm:$0xf]
  %v427 = vld [vmem:[%s1 + $0x504] sm:$0xf]
  %v428 = vld [vmem:[%s1 + $0x508] sm:$0xf]
  %v429 = vld [vmem:[%s1 + $0x50c] sm:$0xf]
  %v430 = vld [vmem:[%s1 + $0x510] sm:$0xf]
  %v431 = vld [vmem:[%s1 + $0x514] sm:$0xf]
  %v432 = vld [vmem:[%s1 + $0x518] sm:$0xf]
  %v433 = vld [vmem:[%s1 + $0x51c] sm:$0xf]
  %v434 = vld [vmem:[%s1 + $0x520] sm:$0xf]
  %v435 = vld [vmem:[%s1 + $0x524] sm:$0xf]
  %v436 = vld [vmem:[%s1 + $0x528] sm:$0xf]
  %v437 = vld [vmem:[%s1 + $0x52c] sm:$0xf]
  %v438 = vld [vmem:[%s1 + $0x530] sm:$0xf]
  %v439 = vld [vmem:[%s1 + $0x534] sm:$0xf]
  %v440 = vld [vmem:[%s1 + $0x538] sm:$0xf]
  %v441 = vld [vmem:[%s1 + $0x53c] sm:$0xf]
  %v442 = vld [vmem:[%s1 + $0x540] sm:$0xf]
  %v443 = vld [vmem:[%s1 + $0x544] sm:$0xf]
  %v444 = vld [vmem:[%s1 + $0x548] sm:$0xf]
  %v445 = vld [vmem:[%s1 + $0x54c] sm:$0xf]
  %v446 = vld [vmem:[%s1 + $0x550] sm:$0xf]
  %v447 = vld [vmem:[%s1 + $0x554] sm:$0xf]
  %v448 = vld [vmem:[%s1 + $0x558] sm:$0xf]
  %v449 = vld [vmem:[%s1 + $0x55c] sm:$0xf]
  %v450 = vld [vmem:[%s1 + $0x560] sm:$0xf]
  %v451 = vld [vmem:[%s1 + $0x564] sm:$0xf]
  %v452 = vld [vmem:[%s1 + $0x568] sm:$0xf]
  %v453 = vld [vmem:[%s1 + $0x56c] sm:$0xf]
  %v454 = vld [vmem:[%s1 + $0x570] sm:$0xf]
  %v455 = vld [vmem:[%s1 + $0x574] sm:$0xf]
  %v456 = vld [vmem:[%s1 + $0x578] sm:$0xf]
  %v457 = vld [vmem:[%s1 + $0x57c] sm:$0xf]
  %v458 = vld [vmem:[%s1 + $0x580] sm:$0xf]
  %v459 = vld [vmem:[%s1 + $0x584] sm:$0xf]
  %v460 = vld [vmem:[%s1 + $0x588] sm:$0xf]
  %v461 = vld [vmem:[%s1 + $0x58c] sm:$0xf]
  %v462 = vld [vmem:[%s1 + $0x590] sm:$0xf]
  %v463 = vld [vmem:[%s1 + $0x594] sm:$0xf]
  %v464 = vld [vmem:[%s1 + $0x598] sm:$0xf]
  %v465 = vld [vmem:[%s1 + $0x59c] sm:$0xf]
  %v466 = vld [vmem:[%s1 + $0x5a0] sm:$0xf]
  %v467 = vld [vmem:[%s1 + $0x5a4] sm:$0xf]
  %v468 = vld [vmem:[%s1 + $0x5a8] sm:$0xf]
  %v469 = vld [vmem:[%s1 + $0x5ac] sm:$0xf]
  %v470 = vld [vmem:[%s1 + $0x5b0] sm:$0xf]
  %v471 = vld [vmem:[%s1 + $0x5b4] sm:$0xf]
  %v472 = vld [vmem:[%s1 + $0x5b8] sm:$0xf]
  %v473 = vld [vmem:[%s1 + $0x5bc] sm:$0xf]
  %v474 = vld [vmem:[%s1 + $0x5c0] sm:$0xf]
  %v475 = vld [vmem:[%s1 + $0x5c4] sm:$0xf]
  %v476 = vld [vmem:[%s1 + $0x5c8] sm:$0xf]
  %v477 = vld [vmem:[%s1 + $0x5cc] sm:$0xf]
  %v478 = vld [vmem:[%s1 + $0x5d0] sm:$0xf]
  %v479 = vld [vmem:[%s1 + $0x5d4] sm:$0xf]
  %v480 = vld [vmem:[%s1 + $0x5d8] sm:$0xf]
  %v481 = vld [vmem:[%s1 + $0x5dc] sm:$0xf]
  %v482 = vld [vmem:[%s1 + $0x5e0] sm:$0xf]
  %v483 = vld [vmem:[%s1 + $0x5e4] sm:$0xf]
  %v484 = vld [vmem:[%s1 + $0x5e8] sm:$0xf]
  %v485 = vld [vmem:[%s1 + $0x5ec] sm:$0xf]
  %v486 = vld [vmem:[%s1 + $0x5f0] sm:$0xf]
  %v487 = vld [vmem:[%s1 + $0x5f4] sm:$0xf]
  %v488 = vld [vmem:[%s1 + $0x5f8] sm:$0xf]
  %v489 = vld [vmem:[%s1 + $0x5fc] sm:$0xf]
  %v490 = vld [vmem:[%s1 + $0x600] sm:$0xf]
  %v491 = vld [vmem:[%s1 + $0x604] sm:$0xf]
  %v492 = vld [vmem:[%s1 + $0x608] sm:$0xf]
  %v493 = vld [vmem:[%s1 + $0x60c] sm:$0xf]
  %v494 = vld [vmem:[%s1 + $0x610] sm:$0xf]
  %v495 = vld [vmem:[%s1 + $0x614] sm:$0xf]
  %v496 = vld [vmem:[%s1 + $0x618] sm:$0xf]
  %v497 = vld [vmem:[%s1 + $0x61c] sm:$0xf]
  %v498 = vld [vmem:[%s1 + $0x620] sm:$0xf]
  %v499 = vld [vmem:[%s1 + $0x624] sm:$0xf]
  %v500 = vld [vmem:[%s1 + $0x628] sm:$0xf]
  %v501 = vld [vmem:[%s1 + $0x62c] sm:$0xf]
  %v502 = vld [vmem:[%s1 + $0x630] sm:$0xf]
  %v503 = vld [vmem:[%s1 + $0x634] sm:$0xf]
  %v504 = vld [vmem:[%s1 + $0x638] sm:$0xf]
  %v505 = vld [vmem:[%s1 + $0x63c] sm:$0xf]
  %v506 = vld [vmem:[%s2] sm:$0x1]
  %v508 = vlaneseq
  %v509 = vshrl.u32 %v508, 7
  %v510 = vsub.s32 0, %v509
  %v511 = vrot.slane %v506, %v510
  %v604 = vunpack.c.l.b16 %v15
  %v605 = vunpack.c.h.b16 %v15
  %v606 = vunpack.c.l.b16 %v16
  %v607 = vunpack.c.h.b16 %v16
  %v608 = vunpack.c.l.b16 %v17
  %v609 = vunpack.c.h.b16 %v17
  %v610 = vunpack.c.l.b16 %v18
  %v611 = vunpack.c.h.b16 %v18
  %v612 = vunpack.c.l.b16 %v19
  %v613 = vunpack.c.h.b16 %v19
  %v614 = vunpack.c.l.b16 %v20
  %v615 = vunpack.c.h.b16 %v20
  %v616 = vunpack.c.l.b16 %v21
  %v617 = vunpack.c.h.b16 %v21
  %v618 = vunpack.c.l.b16 %v22
  %v619 = vunpack.c.h.b16 %v22
  %v620 = vunpack.c.l.b16 %v23
  %v621 = vunpack.c.h.b16 %v23
  %v622 = vunpack.c.l.b16 %v24
  %v623 = vunpack.c.h.b16 %v24
  %v624 = vunpack.c.l.b16 %v25
  %v625 = vunpack.c.h.b16 %v25
  %v626 = vunpack.c.l.b16 %v26
  %v627 = vunpack.c.h.b16 %v26
  %v628 = vunpack.c.l.b16 %v27
  %v629 = vunpack.c.l.b16 %v28
  %v630 = vunpack.c.h.b16 %v28
  %v631 = vunpack.c.l.b16 %v29
  %v632 = vunpack.c.h.b16 %v29
  %v633 = vunpack.c.l.b16 %v30
  %v634 = vunpack.c.h.b16 %v30
  %v635 = vunpack.c.l.b16 %v31
  %v636 = vunpack.c.h.b16 %v31
  %v637 = vunpack.c.l.b16 %v32
  %v638 = vunpack.c.h.b16 %v32
  %v639 = vunpack.c.l.b16 %v33
  %v640 = vunpack.c.h.b16 %v33
  %v641 = vunpack.c.l.b16 %v34
  %v642 = vunpack.c.h.b16 %v34
  %v643 = vunpack.c.l.b16 %v35
  %v644 = vunpack.c.h.b16 %v35
  %v645 = vunpack.c.l.b16 %v36
  %v646 = vunpack.c.h.b16 %v36
  %v647 = vunpack.c.l.b16 %v37
  %v648 = vunpack.c.h.b16 %v37
  %v649 = vunpack.c.l.b16 %v38
  %v650 = vunpack.c.h.b16 %v38
  %v651 = vunpack.c.l.b16 %v39
  %v652 = vunpack.c.h.b16 %v39
  %v653 = vunpack.c.l.b16 %v40
  %v654 = vunpack.c.l.b16 %v41
  %v655 = vunpack.c.h.b16 %v41
  %v656 = vunpack.c.l.b16 %v42
  %v657 = vunpack.c.h.b16 %v42
  %v658 = vunpack.c.l.b16 %v43
  %v659 = vunpack.c.h.b16 %v43
  %v660 = vunpack.c.l.b16 %v44
  %v661 = vunpack.c.h.b16 %v44
  %v662 = vunpack.c.l.b16 %v45
  %v663 = vunpack.c.h.b16 %v45
  %v664 = vunpack.c.l.b16 %v46
  %v665 = vunpack.c.h.b16 %v46
  %v666 = vunpack.c.l.b16 %v47
  %v667 = vunpack.c.h.b16 %v47
  %v668 = vunpack.c.l.b16 %v48
  %v669 = vunpack.c.h.b16 %v48
  %v670 = vunpack.c.l.b16 %v49
  %v671 = vunpack.c.h.b16 %v49
  %v672 = vunpack.c.l.b16 %v50
  %v673 = vunpack.c.h.b16 %v50
  %v674 = vunpack.c.l.b16 %v51
  %v675 = vunpack.c.h.b16 %v51
  %v676 = vunpack.c.l.b16 %v52
  %v677 = vunpack.c.h.b16 %v52
  %v678 = vunpack.c.l.b16 %v53
  %v679 = vunpack.c.l.b16 %v54
  %v680 = vunpack.c.h.b16 %v54
  %v681 = vunpack.c.l.b16 %v55
  %v682 = vunpack.c.h.b16 %v55
  %v683 = vunpack.c.l.b16 %v56
  %v684 = vunpack.c.h.b16 %v56
  %v685 = vunpack.c.l.b16 %v57
  %v686 = vunpack.c.h.b16 %v57
  %v687 = vunpack.c.l.b16 %v58
  %v688 = vunpack.c.h.b16 %v58
  %v689 = vunpack.c.l.b16 %v59
  %v690 = vunpack.c.h.b16 %v59
  %v691 = vunpack.c.l.b16 %v60
  %v692 = vunpack.c.h.b16 %v60
  %v693 = vunpack.c.l.b16 %v61
  %v694 = vunpack.c.h.b16 %v61
  %v695 = vunpack.c.l.b16 %v62
  %v696 = vunpack.c.h.b16 %v62
  %v697 = vunpack.c.l.b16 %v63
  %v698 = vunpack.c.h.b16 %v63
  %v699 = vunpack.c.l.b16 %v64
  %v700 = vunpack.c.h.b16 %v64
  %v701 = vunpack.c.l.b16 %v65
  %v702 = vunpack.c.h.b16 %v65
  %v703 = vunpack.c.l.b16 %v66
  %v704 = vunpack.c.l.b16 %v67
  %v705 = vunpack.c.h.b16 %v67
  %v706 = vunpack.c.l.b16 %v68
  %v707 = vunpack.c.h.b16 %v68
  %v708 = vunpack.c.l.b16 %v69
  %v709 = vunpack.c.h.b16 %v69
  %v710 = vunpack.c.l.b16 %v70
  %v711 = vunpack.c.h.b16 %v70
  %v712 = vunpack.c.l.b16 %v71
  %v713 = vunpack.c.h.b16 %v71
  %v714 = vunpack.c.l.b16 %v72
  %v715 = vunpack.c.h.b16 %v72
  %v716 = vunpack.c.l.b16 %v73
  %v717 = vunpack.c.h.b16 %v73
  %v718 = vunpack.c.l.b16 %v74
  %v719 = vunpack.c.h.b16 %v74
  %v720 = vunpack.c.l.b16 %v75
  %v721 = vunpack.c.h.b16 %v75
  %v722 = vunpack.c.l.b16 %v76
  %v723 = vunpack.c.h.b16 %v76
  %v724 = vunpack.c.l.b16 %v77
  %v725 = vunpack.c.h.b16 %v77
  %v726 = vunpack.c.l.b16 %v78
  %v727 = vunpack.c.h.b16 %v78
  %v728 = vunpack.c.l.b16 %v79
  %v729 = vunpack.c.l.b16 %v80
  %v730 = vunpack.c.h.b16 %v80
  %v731 = vunpack.c.l.b16 %v81
  %v732 = vunpack.c.h.b16 %v81
  %v733 = vunpack.c.l.b16 %v82
  %v734 = vunpack.c.h.b16 %v82
  %v735 = vunpack.c.l.b16 %v83
  %v736 = vunpack.c.h.b16 %v83
  %v737 = vunpack.c.l.b16 %v84
  %v738 = vunpack.c.h.b16 %v84
  %v739 = vunpack.c.l.b16 %v85
  %v740 = vunpack.c.h.b16 %v85
  %v741 = vunpack.c.l.b16 %v86
  %v742 = vunpack.c.h.b16 %v86
  %v743 = vunpack.c.l.b16 %v87
  %v744 = vunpack.c.h.b16 %v87
  %v745 = vunpack.c.l.b16 %v88
  %v746 = vunpack.c.h.b16 %v88
  %v747 = vunpack.c.l.b16 %v89
  %v748 = vunpack.c.h.b16 %v89
  %v749 = vunpack.c.l.b16 %v90
  %v750 = vunpack.c.h.b16 %v90
  %v751 = vunpack.c.l.b16 %v91
  %v752 = vunpack.c.h.b16 %v91
  %v753 = vunpack.c.l.b16 %v92
  %v754 = vunpack.c.l.b16 %v93
  %v755 = vunpack.c.h.b16 %v93
  %v756 = vunpack.c.l.b16 %v94
  %v757 = vunpack.c.h.b16 %v94
  %v758 = vunpack.c.l.b16 %v95
  %v759 = vunpack.c.h.b16 %v95
  %v760 = vunpack.c.l.b16 %v96
  %v761 = vunpack.c.h.b16 %v96
  %v762 = vunpack.c.l.b16 %v97
  %v763 = vunpack.c.h.b16 %v97
  %v764 = vunpack.c.l.b16 %v98
  %v765 = vunpack.c.h.b16 %v98
  %v766 = vunpack.c.l.b16 %v99
  %v767 = vunpack.c.h.b16 %v99
  %v768 = vunpack.c.l.b16 %v100
  %v769 = vunpack.c.h.b16 %v100
  %v770 = vunpack.c.l.b16 %v101
  %v771 = vunpack.c.h.b16 %v101
  %v772 = vunpack.c.l.b16 %v102
  %v773 = vunpack.c.h.b16 %v102
  %v774 = vunpack.c.l.b16 %v103
  %v775 = vunpack.c.h.b16 %v103
  %v776 = vunpack.c.l.b16 %v104
  %v777 = vunpack.c.h.b16 %v104
  %v778 = vunpack.c.l.b16 %v105
  %v779 = vpack.c.b16 %v629, %v604
  %v780 = vpack.c.b16 %v630, %v605
  %v781 = vpack.c.b16 %v631, %v606
  %v782 = vpack.c.b16 %v632, %v607
  %v783 = vpack.c.b16 %v633, %v608
  %v784 = vpack.c.b16 %v634, %v609
  %v785 = vpack.c.b16 %v635, %v610
  %v786 = vpack.c.b16 %v636, %v611
  %v787 = vpack.c.b16 %v637, %v612
  %v788 = vpack.c.b16 %v638, %v613
  %v789 = vpack.c.b16 %v639, %v614
  %v790 = vpack.c.b16 %v640, %v615
  %v791 = vpack.c.b16 %v641, %v616
  %v792 = vpack.c.b16 %v642, %v617
  %v793 = vpack.c.b16 %v643, %v618
  %v794 = vpack.c.b16 %v644, %v619
  %v795 = vpack.c.b16 %v645, %v620
  %v796 = vpack.c.b16 %v646, %v621
  %v797 = vpack.c.b16 %v647, %v622
  %v798 = vpack.c.b16 %v648, %v623
  %v799 = vpack.c.b16 %v649, %v624
  %v800 = vpack.c.b16 %v650, %v625
  %v801 = vpack.c.b16 %v651, %v626
  %v802 = vpack.c.b16 %v652, %v627
  %v803 = vpack.c.b16 %v653, %v628
  %v804 = vpack.c.b16 %v679, %v654
  %v805 = vpack.c.b16 %v680, %v655
  %v806 = vpack.c.b16 %v681, %v656
  %v807 = vpack.c.b16 %v682, %v657
  %v808 = vpack.c.b16 %v683, %v658
  %v809 = vpack.c.b16 %v684, %v659
  %v810 = vpack.c.b16 %v685, %v660
  %v811 = vpack.c.b16 %v686, %v661
  %v812 = vpack.c.b16 %v687, %v662
  %v813 = vpack.c.b16 %v688, %v663
  %v814 = vpack.c.b16 %v689, %v664
  %v815 = vpack.c.b16 %v690, %v665
  %v816 = vpack.c.b16 %v691, %v666
  %v817 = vpack.c.b16 %v692, %v667
  %v818 = vpack.c.b16 %v693, %v668
  %v819 = vpack.c.b16 %v694, %v669
  %v820 = vpack.c.b16 %v695, %v670
  %v821 = vpack.c.b16 %v696, %v671
  %v822 = vpack.c.b16 %v697, %v672
  %v823 = vpack.c.b16 %v698, %v673
  %v824 = vpack.c.b16 %v699, %v674
  %v825 = vpack.c.b16 %v700, %v675
  %v826 = vpack.c.b16 %v701, %v676
  %v827 = vpack.c.b16 %v702, %v677
  %v828 = vpack.c.b16 %v703, %v678
  %v829 = vpack.c.b16 %v729, %v704
  %v830 = vpack.c.b16 %v730, %v705
  %v831 = vpack.c.b16 %v731, %v706
  %v832 = vpack.c.b16 %v732, %v707
  %v833 = vpack.c.b16 %v733, %v708
  %v834 = vpack.c.b16 %v734, %v709
  %v835 = vpack.c.b16 %v735, %v710
  %v836 = vpack.c.b16 %v736, %v711
  %v837 = vpack.c.b16 %v737, %v712
  %v838 = vpack.c.b16 %v738, %v713
  %v839 = vpack.c.b16 %v739, %v714
  %v840 = vpack.c.b16 %v740, %v715
  %v841 = vpack.c.b16 %v741, %v716
  %v842 = vpack.c.b16 %v742, %v717
  %v843 = vpack.c.b16 %v743, %v718
  %v844 = vpack.c.b16 %v744, %v719
  %v845 = vpack.c.b16 %v745, %v720
  %v846 = vpack.c.b16 %v746, %v721
  %v847 = vpack.c.b16 %v747, %v722
  %v848 = vpack.c.b16 %v748, %v723
  %v849 = vpack.c.b16 %v749, %v724
  %v850 = vpack.c.b16 %v750, %v725
  %v851 = vpack.c.b16 %v751, %v726
  %v852 = vpack.c.b16 %v752, %v727
  %v853 = vpack.c.b16 %v753, %v728
  %v854 = vpack.c.b16 %v754, %v754
  %v855 = vpack.c.b16 %v755, %v755
  %v856 = vpack.c.b16 %v756, %v756
  %v857 = vpack.c.b16 %v757, %v757
  %v858 = vpack.c.b16 %v758, %v758
  %v859 = vpack.c.b16 %v759, %v759
  %v860 = vpack.c.b16 %v760, %v760
  %v861 = vpack.c.b16 %v761, %v761
  %v862 = vpack.c.b16 %v762, %v762
  %v863 = vpack.c.b16 %v763, %v763
  %v864 = vpack.c.b16 %v764, %v764
  %v865 = vpack.c.b16 %v765, %v765
  %v866 = vpack.c.b16 %v766, %v766
  %v867 = vpack.c.b16 %v767, %v767
  %v868 = vpack.c.b16 %v768, %v768
  %v869 = vpack.c.b16 %v769, %v769
  %v870 = vpack.c.b16 %v770, %v770
  %v871 = vpack.c.b16 %v771, %v771
  %v872 = vpack.c.b16 %v772, %v772
  %v873 = vpack.c.b16 %v773, %v773
  %v874 = vpack.c.b16 %v774, %v774
  %v875 = vpack.c.b16 %v775, %v775
  %v876 = vpack.c.b16 %v776, %v776
  %v877 = vpack.c.b16 %v777, %v777
  %v878 = vpack.c.b16 %v778, %v778
  %v1379 = vunpack.c.l.b16 %v106
  %v1380 = vunpack.c.l.b16 %v107
  %v1381 = vunpack.c.l.b16 %v108
  %v1382 = vunpack.c.l.b16 %v109
  %v1383 = vunpack.c.l.b16 %v110
  %v1384 = vunpack.c.l.b16 %v111
  %v1385 = vunpack.c.l.b16 %v112
  %v1386 = vunpack.c.l.b16 %v113
  %v1387 = vunpack.c.l.b16 %v114
  %v1388 = vunpack.c.l.b16 %v115
  %v1389 = vunpack.c.l.b16 %v116
  %v1390 = vunpack.c.l.b16 %v117
  %v1391 = vunpack.c.l.b16 %v118
  %v1392 = vunpack.c.l.b16 %v119
  %v1393 = vunpack.c.l.b16 %v120
  %v1394 = vunpack.c.l.b16 %v121
  %v1395 = vunpack.c.l.b16 %v122
  %v1396 = vunpack.c.l.b16 %v123
  %v1397 = vunpack.c.l.b16 %v124
  %v1398 = vunpack.c.l.b16 %v125
  %v1399 = vunpack.c.l.b16 %v126
  %v1400 = vunpack.c.l.b16 %v127
  %v1401 = vunpack.c.l.b16 %v128
  %v1402 = vunpack.c.l.b16 %v129
  %v1403 = vunpack.c.l.b16 %v130
  %v1404 = vunpack.c.l.b16 %v131
  %v1405 = vunpack.c.l.b16 %v132
  %v1406 = vunpack.c.l.b16 %v133
  %v1407 = vunpack.c.l.b16 %v134
  %v1408 = vunpack.c.l.b16 %v135
  %v1409 = vunpack.c.l.b16 %v136
  %v1410 = vunpack.c.l.b16 %v137
  %v1411 = vunpack.c.l.b16 %v138
  %v1412 = vunpack.c.l.b16 %v139
  %v1413 = vunpack.c.l.b16 %v140
  %v1414 = vunpack.c.l.b16 %v141
  %v1415 = vunpack.c.l.b16 %v142
  %v1416 = vunpack.c.l.b16 %v143
  %v1417 = vunpack.c.l.b16 %v144
  %v1418 = vunpack.c.l.b16 %v145
  %v1419 = vunpack.c.l.b16 %v146
  %v1420 = vunpack.c.l.b16 %v147
  %v1421 = vunpack.c.l.b16 %v148
  %v1422 = vunpack.c.l.b16 %v149
  %v1423 = vunpack.c.l.b16 %v150
  %v1424 = vunpack.c.l.b16 %v151
  %v1425 = vunpack.c.l.b16 %v152
  %v1426 = vunpack.c.l.b16 %v153
  %v1427 = vunpack.c.l.b16 %v154
  %v1428 = vunpack.c.l.b16 %v155
  %v1429 = vunpack.c.l.b16 %v156
  %v1430 = vunpack.c.l.b16 %v157
  %v1431 = vunpack.c.l.b16 %v158
  %v1432 = vunpack.c.l.b16 %v159
  %v1433 = vunpack.c.l.b16 %v160
  %v1434 = vunpack.c.l.b16 %v161
  %v1435 = vunpack.c.l.b16 %v162
  %v1436 = vunpack.c.l.b16 %v163
  %v1437 = vunpack.c.l.b16 %v164
  %v1438 = vunpack.c.l.b16 %v165
  %v1439 = vunpack.c.l.b16 %v166
  %v1440 = vunpack.c.l.b16 %v167
  %v1441 = vunpack.c.l.b16 %v168
  %v1442 = vunpack.c.l.b16 %v169
  %v1443 = vunpack.c.l.b16 %v170
  %v1444 = vunpack.c.l.b16 %v171
  %v1445 = vunpack.c.l.b16 %v172
  %v1446 = vunpack.c.l.b16 %v173
  %v1447 = vunpack.c.l.b16 %v174
  %v1448 = vunpack.c.l.b16 %v175
  %v1449 = vunpack.c.l.b16 %v176
  %v1450 = vunpack.c.l.b16 %v177
  %v1451 = vunpack.c.l.b16 %v178
  %v1452 = vunpack.c.l.b16 %v179
  %v1453 = vunpack.c.l.b16 %v180
  %v1454 = vunpack.c.l.b16 %v181
  %v1455 = vunpack.c.l.b16 %v182
  %v1456 = vunpack.c.l.b16 %v183
  %v1457 = vunpack.c.l.b16 %v184
  %v1458 = vunpack.c.l.b16 %v185
  %v1459 = vunpack.c.l.b16 %v186
  %v1460 = vunpack.c.l.b16 %v187
  %v1461 = vunpack.c.l.b16 %v188
  %v1462 = vunpack.c.l.b16 %v189
  %v1463 = vunpack.c.l.b16 %v190
  %v1464 = vunpack.c.l.b16 %v191
  %v1465 = vunpack.c.l.b16 %v192
  %v1466 = vunpack.c.l.b16 %v193
  %v1467 = vunpack.c.l.b16 %v194
  %v1468 = vunpack.c.l.b16 %v195
  %v1469 = vunpack.c.l.b16 %v196
  %v1470 = vunpack.c.l.b16 %v197
  %v1471 = vunpack.c.l.b16 %v198
  %v1472 = vunpack.c.l.b16 %v199
  %v1473 = vunpack.c.l.b16 %v200
  %v1474 = vunpack.c.l.b16 %v201
  %v1475 = vunpack.c.l.b16 %v202
  %v1476 = vunpack.c.l.b16 %v203
  %v1477 = vunpack.c.l.b16 %v204
  %v1478 = vunpack.c.l.b16 %v205
  %v1479 = vunpack.c.l.b16 %v206
  %v1480 = vunpack.c.l.b16 %v207
  %v1481 = vunpack.c.l.b16 %v208
  %v1482 = vunpack.c.l.b16 %v209
  %v1483 = vunpack.c.l.b16 %v210
  %v1484 = vunpack.c.l.b16 %v211
  %v1485 = vunpack.c.l.b16 %v212
  %v1486 = vunpack.c.l.b16 %v213
  %v1487 = vunpack.c.l.b16 %v214
  %v1488 = vunpack.c.l.b16 %v215
  %v1489 = vunpack.c.l.b16 %v216
  %v1490 = vunpack.c.l.b16 %v217
  %v1491 = vunpack.c.l.b16 %v218
  %v1492 = vunpack.c.l.b16 %v219
  %v1493 = vunpack.c.l.b16 %v220
  %v1494 = vunpack.c.l.b16 %v221
  %v1495 = vunpack.c.l.b16 %v222
  %v1496 = vunpack.c.l.b16 %v223
  %v1497 = vunpack.c.l.b16 %v224
  %v1498 = vunpack.c.l.b16 %v225
  %v1499 = vunpack.c.l.b16 %v226
  %v1500 = vunpack.c.l.b16 %v227
  %v1501 = vunpack.c.l.b16 %v228
  %v1502 = vunpack.c.l.b16 %v229
  %v1503 = vunpack.c.l.b16 %v230
  %v1504 = vunpack.c.l.b16 %v231
  %v1505 = vunpack.c.l.b16 %v232
  %v1506 = vunpack.c.l.b16 %v233
  %v1507 = vunpack.c.l.b16 %v234
  %v1508 = vunpack.c.l.b16 %v235
  %v1509 = vunpack.c.l.b16 %v236
  %v1510 = vunpack.c.l.b16 %v237
  %v1511 = vunpack.c.l.b16 %v238
  %v1512 = vunpack.c.l.b16 %v239
  %v1513 = vunpack.c.l.b16 %v240
  %v1514 = vunpack.c.l.b16 %v241
  %v1515 = vunpack.c.l.b16 %v242
  %v1516 = vunpack.c.l.b16 %v243
  %v1517 = vunpack.c.l.b16 %v244
  %v1518 = vunpack.c.l.b16 %v245
  %v1519 = vunpack.c.l.b16 %v246
  %v1520 = vunpack.c.l.b16 %v247
  %v1521 = vunpack.c.l.b16 %v248
  %v1522 = vunpack.c.l.b16 %v249
  %v1523 = vunpack.c.l.b16 %v250
  %v1524 = vunpack.c.l.b16 %v251
  %v1525 = vunpack.c.l.b16 %v252
  %v1526 = vunpack.c.l.b16 %v253
  %v1527 = vunpack.c.l.b16 %v254
  %v1528 = vunpack.c.l.b16 %v255
  %v1529 = vunpack.c.l.b16 %v256
  %v1530 = vunpack.c.l.b16 %v257
  %v1531 = vunpack.c.l.b16 %v258
  %v1532 = vunpack.c.l.b16 %v259
  %v1533 = vunpack.c.l.b16 %v260
  %v1534 = vunpack.c.l.b16 %v261
  %v1535 = vunpack.c.l.b16 %v262
  %v1536 = vunpack.c.l.b16 %v263
  %v1537 = vunpack.c.l.b16 %v264
  %v1538 = vunpack.c.l.b16 %v265
  %v1539 = vunpack.c.l.b16 %v266
  %v1540 = vunpack.c.l.b16 %v267
  %v1541 = vunpack.c.l.b16 %v268
  %v1542 = vunpack.c.l.b16 %v269
  %v1543 = vunpack.c.l.b16 %v270
  %v1544 = vunpack.c.l.b16 %v271
  %v1545 = vunpack.c.l.b16 %v272
  %v1546 = vunpack.c.l.b16 %v273
  %v1547 = vunpack.c.l.b16 %v274
  %v1548 = vunpack.c.l.b16 %v275
  %v1549 = vunpack.c.l.b16 %v276
  %v1550 = vunpack.c.l.b16 %v277
  %v1551 = vunpack.c.l.b16 %v278
  %v1552 = vunpack.c.l.b16 %v279
  %v1553 = vunpack.c.l.b16 %v280
  %v1554 = vunpack.c.l.b16 %v281
  %v1555 = vunpack.c.l.b16 %v282
  %v1556 = vunpack.c.l.b16 %v283
  %v1557 = vunpack.c.l.b16 %v284
  %v1558 = vunpack.c.l.b16 %v285
  %v1559 = vunpack.c.l.b16 %v286
  %v1560 = vunpack.c.l.b16 %v287
  %v1561 = vunpack.c.l.b16 %v288
  %v1562 = vunpack.c.l.b16 %v289
  %v1563 = vunpack.c.l.b16 %v290
  %v1564 = vunpack.c.l.b16 %v291
  %v1565 = vunpack.c.l.b16 %v292
  %v1566 = vunpack.c.l.b16 %v293
  %v1567 = vunpack.c.l.b16 %v294
  %v1568 = vunpack.c.l.b16 %v295
  %v1569 = vunpack.c.l.b16 %v296
  %v1570 = vunpack.c.l.b16 %v297
  %v1571 = vunpack.c.l.b16 %v298
  %v1572 = vunpack.c.l.b16 %v299
  %v1573 = vunpack.c.l.b16 %v300
  %v1574 = vunpack.c.l.b16 %v301
  %v1575 = vunpack.c.l.b16 %v302
  %v1576 = vunpack.c.l.b16 %v303
  %v1577 = vunpack.c.l.b16 %v304
  %v1578 = vunpack.c.l.b16 %v305
  %v1579 = vunpack.c.l.b16 %v306
  %v1580 = vunpack.c.l.b16 %v307
  %v1581 = vunpack.c.l.b16 %v308
  %v1582 = vunpack.c.l.b16 %v309
  %v1583 = vunpack.c.l.b16 %v310
  %v1584 = vunpack.c.l.b16 %v311
  %v1585 = vunpack.c.l.b16 %v312
  %v1586 = vunpack.c.l.b16 %v313
  %v1587 = vunpack.c.l.b16 %v314
  %v1588 = vunpack.c.l.b16 %v315
  %v1589 = vunpack.c.l.b16 %v316
  %v1590 = vunpack.c.l.b16 %v317
  %v1591 = vunpack.c.l.b16 %v318
  %v1592 = vunpack.c.l.b16 %v319
  %v1593 = vunpack.c.l.b16 %v320
  %v1594 = vunpack.c.l.b16 %v321
  %v1595 = vunpack.c.l.b16 %v322
  %v1596 = vunpack.c.l.b16 %v323
  %v1597 = vunpack.c.l.b16 %v324
  %v1598 = vunpack.c.l.b16 %v325
  %v1599 = vunpack.c.l.b16 %v326
  %v1600 = vunpack.c.l.b16 %v327
  %v1601 = vunpack.c.l.b16 %v328
  %v1602 = vunpack.c.l.b16 %v329
  %v1603 = vunpack.c.l.b16 %v330
  %v1604 = vunpack.c.l.b16 %v331
  %v1605 = vunpack.c.l.b16 %v332
  %v1606 = vunpack.c.l.b16 %v333
  %v1607 = vunpack.c.l.b16 %v334
  %v1608 = vunpack.c.l.b16 %v335
  %v1609 = vunpack.c.l.b16 %v336
  %v1610 = vunpack.c.l.b16 %v337
  %v1611 = vunpack.c.l.b16 %v338
  %v1612 = vunpack.c.l.b16 %v339
  %v1613 = vunpack.c.l.b16 %v340
  %v1614 = vunpack.c.l.b16 %v341
  %v1615 = vunpack.c.l.b16 %v342
  %v1616 = vunpack.c.l.b16 %v343
  %v1617 = vunpack.c.l.b16 %v344
  %v1618 = vunpack.c.l.b16 %v345
  %v1619 = vunpack.c.l.b16 %v346
  %v1620 = vunpack.c.l.b16 %v347
  %v1621 = vunpack.c.l.b16 %v348
  %v1622 = vunpack.c.l.b16 %v349
  %v1623 = vunpack.c.l.b16 %v350
  %v1624 = vunpack.c.l.b16 %v351
  %v1625 = vunpack.c.l.b16 %v352
  %v1626 = vunpack.c.l.b16 %v353
  %v1627 = vunpack.c.l.b16 %v354
  %v1628 = vunpack.c.l.b16 %v355
  %v1629 = vunpack.c.l.b16 %v356
  %v1630 = vunpack.c.l.b16 %v357
  %v1631 = vunpack.c.l.b16 %v358
  %v1632 = vunpack.c.l.b16 %v359
  %v1633 = vunpack.c.l.b16 %v360
  %v1634 = vunpack.c.l.b16 %v361
  %v1635 = vunpack.c.l.b16 %v362
  %v1636 = vunpack.c.l.b16 %v363
  %v1637 = vunpack.c.l.b16 %v364
  %v1638 = vunpack.c.l.b16 %v365
  %v1639 = vunpack.c.l.b16 %v366
  %v1640 = vunpack.c.l.b16 %v367
  %v1641 = vunpack.c.l.b16 %v368
  %v1642 = vunpack.c.l.b16 %v369
  %v1643 = vunpack.c.l.b16 %v370
  %v1644 = vunpack.c.l.b16 %v371
  %v1645 = vunpack.c.l.b16 %v372
  %v1646 = vunpack.c.l.b16 %v373
  %v1647 = vunpack.c.l.b16 %v374
  %v1648 = vunpack.c.l.b16 %v375
  %v1649 = vunpack.c.l.b16 %v376
  %v1650 = vunpack.c.l.b16 %v377
  %v1651 = vunpack.c.l.b16 %v378
  %v1652 = vunpack.c.l.b16 %v379
  %v1653 = vunpack.c.l.b16 %v380
  %v1654 = vunpack.c.l.b16 %v381
  %v1655 = vunpack.c.l.b16 %v382
  %v1656 = vunpack.c.l.b16 %v383
  %v1657 = vunpack.c.l.b16 %v384
  %v1658 = vunpack.c.l.b16 %v385
  %v1659 = vunpack.c.l.b16 %v386
  %v1660 = vunpack.c.l.b16 %v387
  %v1661 = vunpack.c.l.b16 %v388
  %v1662 = vunpack.c.l.b16 %v389
  %v1663 = vunpack.c.l.b16 %v390
  %v1664 = vunpack.c.l.b16 %v391
  %v1665 = vunpack.c.l.b16 %v392
  %v1666 = vunpack.c.l.b16 %v393
  %v1667 = vunpack.c.l.b16 %v394
  %v1668 = vunpack.c.l.b16 %v395
  %v1669 = vunpack.c.l.b16 %v396
  %v1670 = vunpack.c.l.b16 %v397
  %v1671 = vunpack.c.l.b16 %v398
  %v1672 = vunpack.c.l.b16 %v399
  %v1673 = vunpack.c.l.b16 %v400
  %v1674 = vunpack.c.l.b16 %v401
  %v1675 = vunpack.c.l.b16 %v402
  %v1676 = vunpack.c.l.b16 %v403
  %v1677 = vunpack.c.l.b16 %v404
  %v1678 = vunpack.c.l.b16 %v405
  %v1679 = vunpack.c.l.b16 %v406
  %v1680 = vunpack.c.l.b16 %v407
  %v1681 = vunpack.c.l.b16 %v408
  %v1682 = vunpack.c.l.b16 %v409
  %v1683 = vunpack.c.l.b16 %v410
  %v1684 = vunpack.c.l.b16 %v411
  %v1685 = vunpack.c.l.b16 %v412
  %v1686 = vunpack.c.l.b16 %v413
  %v1687 = vunpack.c.l.b16 %v414
  %v1688 = vunpack.c.l.b16 %v415
  %v1689 = vunpack.c.l.b16 %v416
  %v1690 = vunpack.c.l.b16 %v417
  %v1691 = vunpack.c.l.b16 %v418
  %v1692 = vunpack.c.l.b16 %v419
  %v1693 = vunpack.c.l.b16 %v420
  %v1694 = vunpack.c.l.b16 %v421
  %v1695 = vunpack.c.l.b16 %v422
  %v1696 = vunpack.c.l.b16 %v423
  %v1697 = vunpack.c.l.b16 %v424
  %v1698 = vunpack.c.l.b16 %v425
  %v1699 = vunpack.c.l.b16 %v426
  %v1700 = vunpack.c.l.b16 %v427
  %v1701 = vunpack.c.l.b16 %v428
  %v1702 = vunpack.c.l.b16 %v429
  %v1703 = vunpack.c.l.b16 %v430
  %v1704 = vunpack.c.l.b16 %v431
  %v1705 = vunpack.c.l.b16 %v432
  %v1706 = vunpack.c.l.b16 %v433
  %v1707 = vunpack.c.l.b16 %v434
  %v1708 = vunpack.c.l.b16 %v435
  %v1709 = vunpack.c.l.b16 %v436
  %v1710 = vunpack.c.l.b16 %v437
  %v1711 = vunpack.c.l.b16 %v438
  %v1712 = vunpack.c.l.b16 %v439
  %v1713 = vunpack.c.l.b16 %v440
  %v1714 = vunpack.c.l.b16 %v441
  %v1715 = vunpack.c.l.b16 %v442
  %v1716 = vunpack.c.l.b16 %v443
  %v1717 = vunpack.c.l.b16 %v444
  %v1718 = vunpack.c.l.b16 %v445
  %v1719 = vunpack.c.l.b16 %v446
  %v1720 = vunpack.c.l.b16 %v447
  %v1721 = vunpack.c.l.b16 %v448
  %v1722 = vunpack.c.l.b16 %v449
  %v1723 = vunpack.c.l.b16 %v450
  %v1724 = vunpack.c.l.b16 %v451
  %v1725 = vunpack.c.l.b16 %v452
  %v1726 = vunpack.c.l.b16 %v453
  %v1727 = vunpack.c.l.b16 %v454
  %v1728 = vunpack.c.l.b16 %v455
  %v1729 = vunpack.c.l.b16 %v456
  %v1730 = vunpack.c.l.b16 %v457
  %v1731 = vunpack.c.l.b16 %v458
  %v1732 = vunpack.c.l.b16 %v459
  %v1733 = vunpack.c.l.b16 %v460
  %v1734 = vunpack.c.l.b16 %v461
  %v1735 = vunpack.c.l.b16 %v462
  %v1736 = vunpack.c.l.b16 %v463
  %v1737 = vunpack.c.l.b16 %v464
  %v1738 = vunpack.c.l.b16 %v465
  %v1739 = vunpack.c.l.b16 %v466
  %v1740 = vunpack.c.l.b16 %v467
  %v1741 = vunpack.c.l.b16 %v468
  %v1742 = vunpack.c.l.b16 %v469
  %v1743 = vunpack.c.l.b16 %v470
  %v1744 = vunpack.c.l.b16 %v471
  %v1745 = vunpack.c.l.b16 %v472
  %v1746 = vunpack.c.l.b16 %v473
  %v1747 = vunpack.c.l.b16 %v474
  %v1748 = vunpack.c.l.b16 %v475
  %v1749 = vunpack.c.l.b16 %v476
  %v1750 = vunpack.c.l.b16 %v477
  %v1751 = vunpack.c.l.b16 %v478
  %v1752 = vunpack.c.l.b16 %v479
  %v1753 = vunpack.c.l.b16 %v480
  %v1754 = vunpack.c.l.b16 %v481
  %v1755 = vunpack.c.l.b16 %v482
  %v1756 = vunpack.c.l.b16 %v483
  %v1757 = vunpack.c.l.b16 %v484
  %v1758 = vunpack.c.l.b16 %v485
  %v1759 = vunpack.c.l.b16 %v486
  %v1760 = vunpack.c.l.b16 %v487
  %v1761 = vunpack.c.l.b16 %v488
  %v1762 = vunpack.c.l.b16 %v489
  %v1763 = vunpack.c.l.b16 %v490
  %v1764 = vunpack.c.l.b16 %v491
  %v1765 = vunpack.c.l.b16 %v492
  %v1766 = vunpack.c.l.b16 %v493
  %v1767 = vunpack.c.l.b16 %v494
  %v1768 = vunpack.c.l.b16 %v495
  %v1769 = vunpack.c.l.b16 %v496
  %v1770 = vunpack.c.l.b16 %v497
  %v1771 = vunpack.c.l.b16 %v498
  %v1772 = vunpack.c.l.b16 %v499
  %v1773 = vunpack.c.l.b16 %v500
  %v1774 = vunpack.c.l.b16 %v501
  %v1775 = vunpack.c.l.b16 %v502
  %v1776 = vunpack.c.l.b16 %v503
  %v1777 = vunpack.c.l.b16 %v504
  %v1778 = vunpack.c.l.b16 %v505
  %v1779 = vpack.c.b16 %v1380, %v1379
  %v1780 = vpack.c.b16 %v1382, %v1381
  %v1781 = vpack.c.b16 %v1384, %v1383
  %v1782 = vpack.c.b16 %v1386, %v1385
  %v1783 = vpack.c.b16 %v1388, %v1387
  %v1784 = vpack.c.b16 %v1390, %v1389
  %v1785 = vpack.c.b16 %v1392, %v1391
  %v1786 = vpack.c.b16 %v1394, %v1393
  %v1787 = vpack.c.b16 %v1396, %v1395
  %v1788 = vpack.c.b16 %v1398, %v1397
  %v1789 = vpack.c.b16 %v1400, %v1399
  %v1790 = vpack.c.b16 %v1402, %v1401
  %v1791 = vpack.c.b16 %v1404, %v1403
  %v1792 = vpack.c.b16 %v1406, %v1405
  %v1793 = vpack.c.b16 %v1408, %v1407
  %v1794 = vpack.c.b16 %v1410, %v1409
  %v1795 = vpack.c.b16 %v1412, %v1411
  %v1796 = vpack.c.b16 %v1414, %v1413
  %v1797 = vpack.c.b16 %v1416, %v1415
  %v1798 = vpack.c.b16 %v1418, %v1417
  %v1799 = vpack.c.b16 %v1420, %v1419
  %v1800 = vpack.c.b16 %v1422, %v1421
  %v1801 = vpack.c.b16 %v1424, %v1423
  %v1802 = vpack.c.b16 %v1426, %v1425
  %v1803 = vpack.c.b16 %v1428, %v1427
  %v1804 = vpack.c.b16 %v1430, %v1429
  %v1805 = vpack.c.b16 %v1432, %v1431
  %v1806 = vpack.c.b16 %v1434, %v1433
  %v1807 = vpack.c.b16 %v1436, %v1435
  %v1808 = vpack.c.b16 %v1438, %v1437
  %v1809 = vpack.c.b16 %v1440, %v1439
  %v1810 = vpack.c.b16 %v1442, %v1441
  %v1811 = vpack.c.b16 %v1444, %v1443
  %v1812 = vpack.c.b16 %v1446, %v1445
  %v1813 = vpack.c.b16 %v1448, %v1447
  %v1814 = vpack.c.b16 %v1450, %v1449
  %v1815 = vpack.c.b16 %v1452, %v1451
  %v1816 = vpack.c.b16 %v1454, %v1453
  %v1817 = vpack.c.b16 %v1456, %v1455
  %v1818 = vpack.c.b16 %v1458, %v1457
  %v1819 = vpack.c.b16 %v1460, %v1459
  %v1820 = vpack.c.b16 %v1462, %v1461
  %v1821 = vpack.c.b16 %v1464, %v1463
  %v1822 = vpack.c.b16 %v1466, %v1465
  %v1823 = vpack.c.b16 %v1468, %v1467
  %v1824 = vpack.c.b16 %v1470, %v1469
  %v1825 = vpack.c.b16 %v1472, %v1471
  %v1826 = vpack.c.b16 %v1474, %v1473
  %v1827 = vpack.c.b16 %v1476, %v1475
  %v1828 = vpack.c.b16 %v1478, %v1477
  %v1829 = vpack.c.b16 %v1480, %v1479
  %v1830 = vpack.c.b16 %v1482, %v1481
  %v1831 = vpack.c.b16 %v1484, %v1483
  %v1832 = vpack.c.b16 %v1486, %v1485
  %v1833 = vpack.c.b16 %v1488, %v1487
  %v1834 = vpack.c.b16 %v1490, %v1489
  %v1835 = vpack.c.b16 %v1492, %v1491
  %v1836 = vpack.c.b16 %v1494, %v1493
  %v1837 = vpack.c.b16 %v1496, %v1495
  %v1838 = vpack.c.b16 %v1498, %v1497
  %v1839 = vpack.c.b16 %v1500, %v1499
  %v1840 = vpack.c.b16 %v1502, %v1501
  %v1841 = vpack.c.b16 %v1504, %v1503
  %v1842 = vpack.c.b16 %v1506, %v1505
  %v1843 = vpack.c.b16 %v1508, %v1507
  %v1844 = vpack.c.b16 %v1510, %v1509
  %v1845 = vpack.c.b16 %v1512, %v1511
  %v1846 = vpack.c.b16 %v1514, %v1513
  %v1847 = vpack.c.b16 %v1516, %v1515
  %v1848 = vpack.c.b16 %v1518, %v1517
  %v1849 = vpack.c.b16 %v1520, %v1519
  %v1850 = vpack.c.b16 %v1522, %v1521
  %v1851 = vpack.c.b16 %v1524, %v1523
  %v1852 = vpack.c.b16 %v1526, %v1525
  %v1853 = vpack.c.b16 %v1528, %v1527
  %v1854 = vpack.c.b16 %v1530, %v1529
  %v1855 = vpack.c.b16 %v1532, %v1531
  %v1856 = vpack.c.b16 %v1534, %v1533
  %v1857 = vpack.c.b16 %v1536, %v1535
  %v1858 = vpack.c.b16 %v1538, %v1537
  %v1859 = vpack.c.b16 %v1540, %v1539
  %v1860 = vpack.c.b16 %v1542, %v1541
  %v1861 = vpack.c.b16 %v1544, %v1543
  %v1862 = vpack.c.b16 %v1546, %v1545
  %v1863 = vpack.c.b16 %v1548, %v1547
  %v1864 = vpack.c.b16 %v1550, %v1549
  %v1865 = vpack.c.b16 %v1552, %v1551
  %v1866 = vpack.c.b16 %v1554, %v1553
  %v1867 = vpack.c.b16 %v1556, %v1555
  %v1868 = vpack.c.b16 %v1558, %v1557
  %v1869 = vpack.c.b16 %v1560, %v1559
  %v1870 = vpack.c.b16 %v1562, %v1561
  %v1871 = vpack.c.b16 %v1564, %v1563
  %v1872 = vpack.c.b16 %v1566, %v1565
  %v1873 = vpack.c.b16 %v1568, %v1567
  %v1874 = vpack.c.b16 %v1570, %v1569
  %v1875 = vpack.c.b16 %v1572, %v1571
  %v1876 = vpack.c.b16 %v1574, %v1573
  %v1877 = vpack.c.b16 %v1576, %v1575
  %v1878 = vpack.c.b16 %v1578, %v1577
  %v1879 = vpack.c.b16 %v1580, %v1579
  %v1880 = vpack.c.b16 %v1582, %v1581
  %v1881 = vpack.c.b16 %v1584, %v1583
  %v1882 = vpack.c.b16 %v1586, %v1585
  %v1883 = vpack.c.b16 %v1588, %v1587
  %v1884 = vpack.c.b16 %v1590, %v1589
  %v1885 = vpack.c.b16 %v1592, %v1591
  %v1886 = vpack.c.b16 %v1594, %v1593
  %v1887 = vpack.c.b16 %v1596, %v1595
  %v1888 = vpack.c.b16 %v1598, %v1597
  %v1889 = vpack.c.b16 %v1600, %v1599
  %v1890 = vpack.c.b16 %v1602, %v1601
  %v1891 = vpack.c.b16 %v1604, %v1603
  %v1892 = vpack.c.b16 %v1606, %v1605
  %v1893 = vpack.c.b16 %v1608, %v1607
  %v1894 = vpack.c.b16 %v1610, %v1609
  %v1895 = vpack.c.b16 %v1612, %v1611
  %v1896 = vpack.c.b16 %v1614, %v1613
  %v1897 = vpack.c.b16 %v1616, %v1615
  %v1898 = vpack.c.b16 %v1618, %v1617
  %v1899 = vpack.c.b16 %v1620, %v1619
  %v1900 = vpack.c.b16 %v1622, %v1621
  %v1901 = vpack.c.b16 %v1624, %v1623
  %v1902 = vpack.c.b16 %v1626, %v1625
  %v1903 = vpack.c.b16 %v1628, %v1627
  %v1904 = vpack.c.b16 %v1630, %v1629
  %v1905 = vpack.c.b16 %v1632, %v1631
  %v1906 = vpack.c.b16 %v1634, %v1633
  %v1907 = vpack.c.b16 %v1636, %v1635
  %v1908 = vpack.c.b16 %v1638, %v1637
  %v1909 = vpack.c.b16 %v1640, %v1639
  %v1910 = vpack.c.b16 %v1642, %v1641
  %v1911 = vpack.c.b16 %v1644, %v1643
  %v1912 = vpack.c.b16 %v1646, %v1645
  %v1913 = vpack.c.b16 %v1648, %v1647
  %v1914 = vpack.c.b16 %v1650, %v1649
  %v1915 = vpack.c.b16 %v1652, %v1651
  %v1916 = vpack.c.b16 %v1654, %v1653
  %v1917 = vpack.c.b16 %v1656, %v1655
  %v1918 = vpack.c.b16 %v1658, %v1657
  %v1919 = vpack.c.b16 %v1660, %v1659
  %v1920 = vpack.c.b16 %v1662, %v1661
  %v1921 = vpack.c.b16 %v1664, %v1663
  %v1922 = vpack.c.b16 %v1666, %v1665
  %v1923 = vpack.c.b16 %v1668, %v1667
  %v1924 = vpack.c.b16 %v1670, %v1669
  %v1925 = vpack.c.b16 %v1672, %v1671
  %v1926 = vpack.c.b16 %v1674, %v1673
  %v1927 = vpack.c.b16 %v1676, %v1675
  %v1928 = vpack.c.b16 %v1678, %v1677
  %v1929 = vpack.c.b16 %v1680, %v1679
  %v1930 = vpack.c.b16 %v1682, %v1681
  %v1931 = vpack.c.b16 %v1684, %v1683
  %v1932 = vpack.c.b16 %v1686, %v1685
  %v1933 = vpack.c.b16 %v1688, %v1687
  %v1934 = vpack.c.b16 %v1690, %v1689
  %v1935 = vpack.c.b16 %v1692, %v1691
  %v1936 = vpack.c.b16 %v1694, %v1693
  %v1937 = vpack.c.b16 %v1696, %v1695
  %v1938 = vpack.c.b16 %v1698, %v1697
  %v1939 = vpack.c.b16 %v1700, %v1699
  %v1940 = vpack.c.b16 %v1702, %v1701
  %v1941 = vpack.c.b16 %v1704, %v1703
  %v1942 = vpack.c.b16 %v1706, %v1705
  %v1943 = vpack.c.b16 %v1708, %v1707
  %v1944 = vpack.c.b16 %v1710, %v1709
  %v1945 = vpack.c.b16 %v1712, %v1711
  %v1946 = vpack.c.b16 %v1714, %v1713
  %v1947 = vpack.c.b16 %v1716, %v1715
  %v1948 = vpack.c.b16 %v1718, %v1717
  %v1949 = vpack.c.b16 %v1720, %v1719
  %v1950 = vpack.c.b16 %v1722, %v1721
  %v1951 = vpack.c.b16 %v1724, %v1723
  %v1952 = vpack.c.b16 %v1726, %v1725
  %v1953 = vpack.c.b16 %v1728, %v1727
  %v1954 = vpack.c.b16 %v1730, %v1729
  %v1955 = vpack.c.b16 %v1732, %v1731
  %v1956 = vpack.c.b16 %v1734, %v1733
  %v1957 = vpack.c.b16 %v1736, %v1735
  %v1958 = vpack.c.b16 %v1738, %v1737
  %v1959 = vpack.c.b16 %v1740, %v1739
  %v1960 = vpack.c.b16 %v1742, %v1741
  %v1961 = vpack.c.b16 %v1744, %v1743
  %v1962 = vpack.c.b16 %v1746, %v1745
  %v1963 = vpack.c.b16 %v1748, %v1747
  %v1964 = vpack.c.b16 %v1750, %v1749
  %v1965 = vpack.c.b16 %v1752, %v1751
  %v1966 = vpack.c.b16 %v1754, %v1753
  %v1967 = vpack.c.b16 %v1756, %v1755
  %v1968 = vpack.c.b16 %v1758, %v1757
  %v1969 = vpack.c.b16 %v1760, %v1759
  %v1970 = vpack.c.b16 %v1762, %v1761
  %v1971 = vpack.c.b16 %v1764, %v1763
  %v1972 = vpack.c.b16 %v1766, %v1765
  %v1973 = vpack.c.b16 %v1768, %v1767
  %v1974 = vpack.c.b16 %v1770, %v1769
  %v1975 = vpack.c.b16 %v1772, %v1771
  %v1976 = vpack.c.b16 %v1774, %v1773
  %v1977 = vpack.c.b16 %v1776, %v1775
  %v1978 = vpack.c.b16 %v1778, %v1777
  %2179 = vmatprep.subr.bf16.mxu0 0
  %2180 = vmatpush1.bf16.msra.mxu0 %v1779
  %2181 = vmatprep.subr.bf16.mxu0 0
  %2182 = vmatpush1.bf16.msra.mxu0 %v1780
  %2183 = vmatprep.subr.bf16.mxu0 0
  %2184 = vmatpush1.bf16.msra.mxu0 %v1781
  %2185 = vmatprep.subr.bf16.mxu0 0
  %2186 = vmatpush1.bf16.msra.mxu0 %v1782
  %2187 = vmatprep.subr.bf16.mxu0 0
  %2188 = vmatpush1.bf16.msra.mxu0 %v1783
  %2189 = vmatprep.subr.bf16.mxu0 0
  %2190 = vmatpush1.bf16.msra.mxu0 %v1784
  %2191 = vmatprep.subr.bf16.mxu0 0
  %2192 = vmatpush1.bf16.msra.mxu0 %v1785
  %2193 = vmatprep.subr.bf16.mxu0 0
  %2194 = vmatpush1.bf16.msra.mxu0 %v1786
  %2195 = vmatprep.subr.bf16.mxu0 0
  %2196 = vmatpush1.bf16.msra.mxu0 %v1787
  %2197 = vmatprep.subr.bf16.mxu0 0
  %2198 = vmatpush1.bf16.msra.mxu0 %v1788
  %2199 = vmatprep.subr.bf16.mxu0 0
  %2200 = vmatpush1.bf16.msra.mxu0 %v1789
  %2201 = vmatprep.subr.bf16.mxu0 0
  %2202 = vmatpush1.bf16.msra.mxu0 %v1790
  %2203 = vmatprep.subr.bf16.mxu0 0
  %2204 = vmatpush1.bf16.msra.mxu0 %v1791
  %2205 = vmatprep.subr.bf16.mxu0 0
  %2206 = vmatpush1.bf16.msra.mxu0 %v1792
  %2207 = vmatprep.subr.bf16.mxu0 0
  %2208 = vmatpush1.bf16.msra.mxu0 %v1793
  %2209 = vmatprep.subr.bf16.mxu0 0
  %2210 = vmatpush1.bf16.msra.mxu0 %v1794
  %2211 = vmatprep.mubr.bf16.mxu0 %v780
  %2212 = vmatmul.mubr.bf16.gmra.mrb[0].mxu0 %v779
  %v2213 = vpop.f32.mrb[0].mxu0
  %v2214 = vadd.f32 %v511, %v2213
  %v2215 = vpop.f32.mrb[0].mxu0
  %v2216 = vpop.f32.mrb[0].mxu0
  %v2217 = vadd.f32 %v511, %v2216
  %v2218 = vpop.f32.mrb[0].mxu0
  %2219 = vmatprep.mubr.bf16.mxu0 %v805
  %2220 = vmatmul.mubr.bf16.gmra.mrb[0].mxu0 %v804
  %v2221 = vpop.f32.mrb[0].mxu0
  %v2222 = vadd.f32 %v511, %v2221
  %v2223 = vpop.f32.mrb[0].mxu0
  %v2224 = vpop.f32.mrb[0].mxu0
  %v2225 = vadd.f32 %v511, %v2224
  %v2226 = vpop.f32.mrb[0].mxu0
  %2227 = vmatprep.mubr.bf16.mxu0 %v830
  %2228 = vmatmul.mubr.bf16.gmra.mrb[0].mxu0 %v829
  %v2229 = vpop.f32.mrb[0].mxu0
  %v2230 = vadd.f32 %v511, %v2229
  %v2231 = vpop.f32.mrb[0].mxu0
  %v2232 = vpop.f32.mrb[0].mxu0
  %v2233 = vadd.f32 %v511, %v2232
  %v2234 = vpop.f32.mrb[0].mxu0
  %2235 = vmatprep.mubr.bf16.mxu0 %v855
  %2236 = vmatmul.mubr.bf16.gmra.mrb[0].mxu0 %v854
  %v2237 = vpop.f32.mrb[0].mxu0
  %v2238 = vadd.f32 %v511, %v2237
  %v2239 = vpop.f32.mrb[0].mxu0
  %v2240 = vpop.f32.mrb[0].mxu0
  %v2241 = vpop.f32.mrb[0].mxu0
  %2242 = vdwg.mxu0
  %2243 = vmatprep.subr.bf16.mxu0 0
  %2244 = vmatpush1.bf16.msra.mxu0 %v1795
  %2245 = vmatprep.subr.bf16.mxu0 0
  %2246 = vmatpush1.bf16.msra.mxu0 %v1796
  %2247 = vmatprep.subr.bf16.mxu0 0
  %2248 = vmatpush1.bf16.msra.mxu0 %v1797
  %2249 = vmatprep.subr.bf16.mxu0 0
  %2250 = vmatpush1.bf16.msra.mxu0 %v1798
  %2251 = vmatprep.subr.bf16.mxu0 0
  %2252 = vmatpush1.bf16.msra.mxu0 %v1799
  %2253 = vmatprep.subr.bf16.mxu0 0
  %2254 = vmatpush1.bf16.msra.mxu0 %v1800
  %2255 = vmatprep.subr.bf16.mxu0 0
  %2256 = vmatpush1.bf16.msra.mxu0 %v1801
  %2257 = vmatprep.subr.bf16.mxu0 0
  %2258 = vmatpush1.bf16.msra.mxu0 %v1802
  %2259 = vmatprep.subr.bf16.mxu0 0
  %2260 = vmatpush1.bf16.msra.mxu0 %v1803
  %2261 = vmatprep.subr.bf16.mxu0 0
  %2262 = vmatpush1.bf16.msra.mxu0 %v1804
  %2263 = vmatprep.subr.bf16.mxu0 0
  %2264 = vmatpush1.bf16.msra.mxu0 %v1805
  %2265 = vmatprep.subr.bf16.mxu0 0
  %2266 = vmatpush1.bf16.msra.mxu0 %v1806
  %2267 = vmatprep.subr.bf16.mxu0 0
  %2268 = vmatpush1.bf16.msra.mxu0 %v1807
  %2269 = vmatprep.subr.bf16.mxu0 0
  %2270 = vmatpush1.bf16.msra.mxu0 %v1808
  %2271 = vmatprep.subr.bf16.mxu0 0
  %2272 = vmatpush1.bf16.msra.mxu0 %v1809
  %2273 = vmatprep.subr.bf16.mxu0 0
  %2274 = vmatpush1.bf16.msra.mxu0 %v1810
  %2275 = vmatprep.mubr.bf16.mxu0 %v782
  %2276 = vmatmul.mubr.bf16.gmra.mrb[0].mxu0 %v781
  %v2277 = vpop.f32.mrb[0].mxu0
  %v2278 = vadd.f32 %v2214, %v2277
  %v2279 = vpop.f32.mrb[0].mxu0
  %v2280 = vpop.f32.mrb[0].mxu0
  %v2281 = vadd.f32 %v2217, %v2280
  %v2282 = vpop.f32.mrb[0].mxu0
  %2283 = vmatprep.mubr.bf16.mxu0 %v807
  %2284 = vmatmul.mubr.bf16.gmra.mrb[0].mxu0 %v806
  %v2285 = vpop.f32.mrb[0].mxu0
  %v2286 = vadd.f32 %v2222, %v2285
  %v2287 = vpop.f32.mrb[0].mxu0
  %v2288 = vpop.f32.mrb[0].mxu0
  %v2289 = vadd.f32 %v2225, %v2288
  %v2290 = vpop.f32.mrb[0].mxu0
  %2291 = vmatprep.mubr.bf16.mxu0 %v832
  %2292 = vmatmul.mubr.bf16.gmra.mrb[0].mxu0 %v831
  %v2293 = vpop.f32.mrb[0].mxu0
  %v2294 = vadd.f32 %v2230, %v2293
  %v2295 = vpop.f32.mrb[0].mxu0
  %v2296 = vpop.f32.mrb[0].mxu0
  %v2297 = vadd.f32 %v2233, %v2296
  %v2298 = vpop.f32.mrb[0].mxu0
  %2299 = vmatprep.mubr.bf16.mxu0 %v857
  %2300 = vmatmul.mubr.bf16.gmra.mrb[0].mxu0 %v856
  %v2301 = vpop.f32.mrb[0].mxu0
  %v2302 = vadd.f32 %v2238, %v2301
  %v2303 = vpop.f32.mrb[0].mxu0
  %v2304 = vpop.f32.mrb[0].mxu0
  %v2305 = vpop.f32.mrb[0].mxu0
  %2306 = vdwg.mxu0
  %2307 = vmatprep.subr.bf16.mxu0 0
  %2308 = vmatpush1.bf16.msra.mxu0 %v1811
  %2309 = vmatprep.subr.bf16.mxu0 0
  %2310 = vmatpush1.bf16.msra.mxu0 %v1812
  %2311 = vmatprep.subr.bf16.mxu0 0
  %2312 = vmatpush1.bf16.msra.mxu0 %v1813
  %2313 = vmatprep.subr.bf16.mxu0 0
  %2314 = vmatpush1.bf16.msra.mxu0 %v1814
  %2315 = vmatprep.subr.bf16.mxu0 0
  %2316 = vmatpush1.bf16.msra.mxu0 %v1815
  %2317 = vmatprep.subr.bf16.mxu0 0
  %2318 = vmatpush1.bf16.msra.mxu0 %v1816
  %2319 = vmatprep.subr.bf16.mxu0 0
  %2320 = vmatpush1.bf16.msra.mxu0 %v1817
  %2321 = vmatprep.subr.bf16.mxu0 0
  %2322 = vmatpush1.bf16.msra.mxu0 %v1818
  %2323 = vmatprep.subr.bf16.mxu0 0
  %2324 = vmatpush1.bf16.msra.mxu0 %v1819
  %2325 = vmatprep.subr.bf16.mxu0 0
  %2326 = vmatpush1.bf16.msra.mxu0 %v1820
  %2327 = vmatprep.subr.bf16.mxu0 0
  %2328 = vmatpush1.bf16.msra.mxu0 %v1821
  %2329 = vmatprep.subr.bf16.mxu0 0
  %2330 = vmatpush1.bf16.msra.mxu0 %v1822
  %2331 = vmatprep.subr.bf16.mxu0 0
  %2332 = vmatpush1.bf16.msra.mxu0 %v1823
  %2333 = vmatprep.subr.bf16.mxu0 0
  %2334 = vmatpush1.bf16.msra.mxu0 %v1824
  %2335 = vmatprep.subr.bf16.mxu0 0
  %2336 = vmatpush1.bf16.msra.mxu0 %v1825
  %2337 = vmatprep.subr.bf16.mxu0 0
  %2338 = vmatpush1.bf16.msra.mxu0 %v1826
  %2339 = vmatprep.mubr.bf16.mxu0 %v784
  %2340 = vmatmul.mubr.bf16.gmra.mrb[0].mxu0 %v783
  %v2341 = vpop.f32.mrb[0].mxu0
  %v2342 = vadd.f32 %v2278, %v2341
  %v2343 = vpop.f32.mrb[0].mxu0
  %v2344 = vpop.f32.mrb[0].mxu0
  %v2345 = vadd.f32 %v2281, %v2344
  %v2346 = vpop.f32.mrb[0].mxu0
  %2347 = vmatprep.mubr.bf16.mxu0 %v809
  %2348 = vmatmul.mubr.bf16.gmra.mrb[0].mxu0 %v808
  %v2349 = vpop.f32.mrb[0].mxu0
  %v2350 = vadd.f32 %v2286, %v2349
  %v2351 = vpop.f32.mrb[0].mxu0
  %v2352 = vpop.f32.mrb[0].mxu0
  %v2353 = vadd.f32 %v2289, %v2352
  %v2354 = vpop.f32.mrb[0].mxu0
  %2355 = vmatprep.mubr.bf16.mxu0 %v834
  %2356 = vmatmul.mubr.bf16.gmra.mrb[0].mxu0 %v833
  %v2357 = vpop.f32.mrb[0].mxu0
  %v2358 = vadd.f32 %v2294, %v2357
  %v2359 = vpop.f32.mrb[0].mxu0
  %v2360 = vpop.f32.mrb[0].mxu0
  %v2361 = vadd.f32 %v2297, %v2360
  %v2362 = vpop.f32.mrb[0].mxu0
  %2363 = vmatprep.mubr.bf16.mxu0 %v859
  %2364 = vmatmul.mubr.bf16.gmra.mrb[0].mxu0 %v858
  %v2365 = vpop.f32.mrb[0].mxu0
  %v2366 = vadd.f32 %v2302, %v2365
  %v2367 = vpop.f32.mrb[0].mxu0
  %v2368 = vpop.f32.mrb[0].mxu0
  %v2369 = vpop.f32.mrb[0].mxu0
  %2370 = vdwg.mxu0
  %2371 = vmatprep.subr.bf16.mxu0 0
  %2372 = vmatpush1.bf16.msra.mxu0 %v1827
  %2373 = vmatprep.subr.bf16.mxu0 0
  %2374 = vmatpush1.bf16.msra.mxu0 %v1828
  %2375 = vmatprep.subr.bf16.mxu0 0
  %2376 = vmatpush1.bf16.msra.mxu0 %v1829
  %2377 = vmatprep.subr.bf16.mxu0 0
  %2378 = vmatpush1.bf16.msra.mxu0 %v1830
  %2379 = vmatprep.subr.bf16.mxu0 0
  %2380 = vmatpush1.bf16.msra.mxu0 %v1831
  %2381 = vmatprep.subr.bf16.mxu0 0
  %2382 = vmatpush1.bf16.msra.mxu0 %v1832
  %2383 = vmatprep.subr.bf16.mxu0 0
  %2384 = vmatpush1.bf16.msra.mxu0 %v1833
  %2385 = vmatprep.subr.bf16.mxu0 0
  %2386 = vmatpush1.bf16.msra.mxu0 %v1834
  %2387 = vmatprep.subr.bf16.mxu0 0
  %2388 = vmatpush1.bf16.msra.mxu0 %v1835
  %2389 = vmatprep.subr.bf16.mxu0 0
  %2390 = vmatpush1.bf16.msra.mxu0 %v1836
  %2391 = vmatprep.subr.bf16.mxu0 0
  %2392 = vmatpush1.bf16.msra.mxu0 %v1837
  %2393 = vmatprep.subr.bf16.mxu0 0
  %2394 = vmatpush1.bf16.msra.mxu0 %v1838
  %2395 = vmatprep.subr.bf16.mxu0 0
  %2396 = vmatpush1.bf16.msra.mxu0 %v1839
  %2397 = vmatprep.subr.bf16.mxu0 0
  %2398 = vmatpush1.bf16.msra.mxu0 %v1840
  %2399 = vmatprep.subr.bf16.mxu0 0
  %2400 = vmatpush1.bf16.msra.mxu0 %v1841
  %2401 = vmatprep.subr.bf16.mxu0 0
  %2402 = vmatpush1.bf16.msra.mxu0 %v1842
  %2403 = vmatprep.mubr.bf16.mxu0 %v786
  %2404 = vmatmul.mubr.bf16.gmra.mrb[0].mxu0 %v785
  %v2405 = vpop.f32.mrb[0].mxu0
  %v2406 = vadd.f32 %v2342, %v2405
  %v2407 = vpop.f32.mrb[0].mxu0
  %v2408 = vpop.f32.mrb[0].mxu0
  %v2409 = vadd.f32 %v2345, %v2408
  %v2410 = vpop.f32.mrb[0].mxu0
  %2411 = vmatprep.mubr.bf16.mxu0 %v811
  %2412 = vmatmul.mubr.bf16.gmra.mrb[0].mxu0 %v810
  %v2413 = vpop.f32.mrb[0].mxu0
  %v2414 = vadd.f32 %v2350, %v2413
  %v2415 = vpop.f32.mrb[0].mxu0
  %v2416 = vpop.f32.mrb[0].mxu0
  %v2417 = vadd.f32 %v2353, %v2416
  %v2418 = vpop.f32.mrb[0].mxu0
  %2419 = vmatprep.mubr.bf16.mxu0 %v836
  %2420 = vmatmul.mubr.bf16.gmra.mrb[0].mxu0 %v835
  %v2421 = vpop.f32.mrb[0].mxu0
  %v2422 = vadd.f32 %v2358, %v2421
  %v2423 = vpop.f32.mrb[0].mxu0
  %v2424 = vpop.f32.mrb[0].mxu0
  %v2425 = vadd.f32 %v2361, %v2424
  %v2426 = vpop.f32.mrb[0].mxu0
  %2427 = vmatprep.mubr.bf16.mxu0 %v861
  %2428 = vmatmul.mubr.bf16.gmra.mrb[0].mxu0 %v860
  %v2429 = vpop.f32.mrb[0].mxu0
  %v2430 = vadd.f32 %v2366, %v2429
  %v2431 = vpop.f32.mrb[0].mxu0
  %v2432 = vpop.f32.mrb[0].mxu0
  %v2433 = vpop.f32.mrb[0].mxu0
  %2434 = vdwg.mxu0
  %2435 = vmatprep.subr.bf16.mxu0 0
  %2436 = vmatpush1.bf16.msra.mxu0 %v1843
  %2437 = vmatprep.subr.bf16.mxu0 0
  %2438 = vmatpush1.bf16.msra.mxu0 %v1844
  %2439 = vmatprep.subr.bf16.mxu0 0
  %2440 = vmatpush1.bf16.msra.mxu0 %v1845
  %2441 = vmatprep.subr.bf16.mxu0 0
  %2442 = vmatpush1.bf16.msra.mxu0 %v1846
  %2443 = vmatprep.subr.bf16.mxu0 0
  %2444 = vmatpush1.bf16.msra.mxu0 %v1847
  %2445 = vmatprep.subr.bf16.mxu0 0
  %2446 = vmatpush1.bf16.msra.mxu0 %v1848
  %2447 = vmatprep.subr.bf16.mxu0 0
  %2448 = vmatpush1.bf16.msra.mxu0 %v1849
  %2449 = vmatprep.subr.bf16.mxu0 0
  %2450 = vmatpush1.bf16.msra.mxu0 %v1850
  %2451 = vmatprep.subr.bf16.mxu0 0
  %2452 = vmatpush1.bf16.msra.mxu0 %v1851
  %2453 = vmatprep.subr.bf16.mxu0 0
  %2454 = vmatpush1.bf16.msra.mxu0 %v1852
  %2455 = vmatprep.subr.bf16.mxu0 0
  %2456 = vmatpush1.bf16.msra.mxu0 %v1853
  %2457 = vmatprep.subr.bf16.mxu0 0
  %2458 = vmatpush1.bf16.msra.mxu0 %v1854
  %2459 = vmatprep.subr.bf16.mxu0 0
  %2460 = vmatpush1.bf16.msra.mxu0 %v1855
  %2461 = vmatprep.subr.bf16.mxu0 0
  %2462 = vmatpush1.bf16.msra.mxu0 %v1856
  %2463 = vmatprep.subr.bf16.mxu0 0
  %2464 = vmatpush1.bf16.msra.mxu0 %v1857
  %2465 = vmatprep.subr.bf16.mxu0 0
  %2466 = vmatpush1.bf16.msra.mxu0 %v1858
  %2467 = vmatprep.mubr.bf16.mxu0 %v788
  %2468 = vmatmul.mubr.bf16.gmra.mrb[0].mxu0 %v787
  %v2469 = vpop.f32.mrb[0].mxu0
  %v2470 = vadd.f32 %v2406, %v2469
  %v2471 = vpop.f32.mrb[0].mxu0
  %v2472 = vpop.f32.mrb[0].mxu0
  %v2473 = vadd.f32 %v2409, %v2472
  %v2474 = vpop.f32.mrb[0].mxu0
  %2475 = vmatprep.mubr.bf16.mxu0 %v813
  %2476 = vmatmul.mubr.bf16.gmra.mrb[0].mxu0 %v812
  %v2477 = vpop.f32.mrb[0].mxu0
  %v2478 = vadd.f32 %v2414, %v2477
  %v2479 = vpop.f32.mrb[0].mxu0
  %v2480 = vpop.f32.mrb[0].mxu0
  %v2481 = vadd.f32 %v2417, %v2480
  %v2482 = vpop.f32.mrb[0].mxu0
  %2483 = vmatprep.mubr.bf16.mxu0 %v838
  %2484 = vmatmul.mubr.bf16.gmra.mrb[0].mxu0 %v837
  %v2485 = vpop.f32.mrb[0].mxu0
  %v2486 = vadd.f32 %v2422, %v2485
  %v2487 = vpop.f32.mrb[0].mxu0
  %v2488 = vpop.f32.mrb[0].mxu0
  %v2489 = vadd.f32 %v2425, %v2488
  %v2490 = vpop.f32.mrb[0].mxu0
  %2491 = vmatprep.mubr.bf16.mxu0 %v863
  %2492 = vmatmul.mubr.bf16.gmra.mrb[0].mxu0 %v862
  %v2493 = vpop.f32.mrb[0].mxu0
  %v2494 = vadd.f32 %v2430, %v2493
  %v2495 = vpop.f32.mrb[0].mxu0
  %v2496 = vpop.f32.mrb[0].mxu0
  %v2497 = vpop.f32.mrb[0].mxu0
  %2498 = vdwg.mxu0
  %2499 = vmatprep.subr.bf16.mxu0 0
  %2500 = vmatpush1.bf16.msra.mxu0 %v1859
  %2501 = vmatprep.subr.bf16.mxu0 0
  %2502 = vmatpush1.bf16.msra.mxu0 %v1860
  %2503 = vmatprep.subr.bf16.mxu0 0
  %2504 = vmatpush1.bf16.msra.mxu0 %v1861
  %2505 = vmatprep.subr.bf16.mxu0 0
  %2506 = vmatpush1.bf16.msra.mxu0 %v1862
  %2507 = vmatprep.subr.bf16.mxu0 0
  %2508 = vmatpush1.bf16.msra.mxu0 %v1863
  %2509 = vmatprep.subr.bf16.mxu0 0
  %2510 = vmatpush1.bf16.msra.mxu0 %v1864
  %2511 = vmatprep.subr.bf16.mxu0 0
  %2512 = vmatpush1.bf16.msra.mxu0 %v1865
  %2513 = vmatprep.subr.bf16.mxu0 0
  %2514 = vmatpush1.bf16.msra.mxu0 %v1866
  %2515 = vmatprep.subr.bf16.mxu0 0
  %2516 = vmatpush1.bf16.msra.mxu0 %v1867
  %2517 = vmatprep.subr.bf16.mxu0 0
  %2518 = vmatpush1.bf16.msra.mxu0 %v1868
  %2519 = vmatprep.subr.bf16.mxu0 0
  %2520 = vmatpush1.bf16.msra.mxu0 %v1869
  %2521 = vmatprep.subr.bf16.mxu0 0
  %2522 = vmatpush1.bf16.msra.mxu0 %v1870
  %2523 = vmatprep.subr.bf16.mxu0 0
  %2524 = vmatpush1.bf16.msra.mxu0 %v1871
  %2525 = vmatprep.subr.bf16.mxu0 0
  %2526 = vmatpush1.bf16.msra.mxu0 %v1872
  %2527 = vmatprep.subr.bf16.mxu0 0
  %2528 = vmatpush1.bf16.msra.mxu0 %v1873
  %2529 = vmatprep.subr.bf16.mxu0 0
  %2530 = vmatpush1.bf16.msra.mxu0 %v1874
  %2531 = vmatprep.mubr.bf16.mxu0 %v790
  %2532 = vmatmul.mubr.bf16.gmra.mrb[0].mxu0 %v789
  %v2533 = vpop.f32.mrb[0].mxu0
  %v2534 = vadd.f32 %v2470, %v2533
  %v2535 = vpop.f32.mrb[0].mxu0
  %v2536 = vpop.f32.mrb[0].mxu0
  %v2537 = vadd.f32 %v2473, %v2536
  %v2538 = vpop.f32.mrb[0].mxu0
  %2539 = vmatprep.mubr.bf16.mxu0 %v815
  %2540 = vmatmul.mubr.bf16.gmra.mrb[0].mxu0 %v814
  %v2541 = vpop.f32.mrb[0].mxu0
  %v2542 = vadd.f32 %v2478, %v2541
  %v2543 = vpop.f32.mrb[0].mxu0
  %v2544 = vpop.f32.mrb[0].mxu0
  %v2545 = vadd.f32 %v2481, %v2544
  %v2546 = vpop.f32.mrb[0].mxu0
  %2547 = vmatprep.mubr.bf16.mxu0 %v840
  %2548 = vmatmul.mubr.bf16.gmra.mrb[0].mxu0 %v839
  %v2549 = vpop.f32.mrb[0].mxu0
  %v2550 = vadd.f32 %v2486, %v2549
  %v2551 = vpop.f32.mrb[0].mxu0
  %v2552 = vpop.f32.mrb[0].mxu0
  %v2553 = vadd.f32 %v2489, %v2552
  %v2554 = vpop.f32.mrb[0].mxu0
  %2555 = vmatprep.mubr.bf16.mxu0 %v865
  %2556 = vmatmul.mubr.bf16.gmra.mrb[0].mxu0 %v864
  %v2557 = vpop.f32.mrb[0].mxu0
  %v2558 = vadd.f32 %v2494, %v2557
  %v2559 = vpop.f32.mrb[0].mxu0
  %v2560 = vpop.f32.mrb[0].mxu0
  %v2561 = vpop.f32.mrb[0].mxu0
  %2562 = vdwg.mxu0
  %2563 = vmatprep.subr.bf16.mxu0 0
  %2564 = vmatpush1.bf16.msra.mxu0 %v1875
  %2565 = vmatprep.subr.bf16.mxu0 0
  %2566 = vmatpush1.bf16.msra.mxu0 %v1876
  %2567 = vmatprep.subr.bf16.mxu0 0
  %2568 = vmatpush1.bf16.msra.mxu0 %v1877
  %2569 = vmatprep.subr.bf16.mxu0 0
  %2570 = vmatpush1.bf16.msra.mxu0 %v1878
  %2571 = vmatprep.subr.bf16.mxu0 0
  %2572 = vmatpush1.bf16.msra.mxu0 %v1879
  %2573 = vmatprep.subr.bf16.mxu0 0
  %2574 = vmatpush1.bf16.msra.mxu0 %v1880
  %2575 = vmatprep.subr.bf16.mxu0 0
  %2576 = vmatpush1.bf16.msra.mxu0 %v1881
  %2577 = vmatprep.subr.bf16.mxu0 0
  %2578 = vmatpush1.bf16.msra.mxu0 %v1882
  %2579 = vmatprep.subr.bf16.mxu0 0
  %2580 = vmatpush1.bf16.msra.mxu0 %v1883
  %2581 = vmatprep.subr.bf16.mxu0 0
  %2582 = vmatpush1.bf16.msra.mxu0 %v1884
  %2583 = vmatprep.subr.bf16.mxu0 0
  %2584 = vmatpush1.bf16.msra.mxu0 %v1885
  %2585 = vmatprep.subr.bf16.mxu0 0
  %2586 = vmatpush1.bf16.msra.mxu0 %v1886
  %2587 = vmatprep.subr.bf16.mxu0 0
  %2588 = vmatpush1.bf16.msra.mxu0 %v1887
  %2589 = vmatprep.subr.bf16.mxu0 0
  %2590 = vmatpush1.bf16.msra.mxu0 %v1888
  %2591 = vmatprep.subr.bf16.mxu0 0
  %2592 = vmatpush1.bf16.msra.mxu0 %v1889
  %2593 = vmatprep.subr.bf16.mxu0 0
  %2594 = vmatpush1.bf16.msra.mxu0 %v1890
  %2595 = vmatprep.mubr.bf16.mxu0 %v792
  %2596 = vmatmul.mubr.bf16.gmra.mrb[0].mxu0 %v791
  %v2597 = vpop.f32.mrb[0].mxu0
  %v2598 = vadd.f32 %v2534, %v2597
  %v2599 = vpop.f32.mrb[0].mxu0
  %v2600 = vpop.f32.mrb[0].mxu0
  %v2601 = vadd.f32 %v2537, %v2600
  %v2602 = vpop.f32.mrb[0].mxu0
  %2603 = vmatprep.mubr.bf16.mxu0 %v817
  %2604 = vmatmul.mubr.bf16.gmra.mrb[0].mxu0 %v816
  %v2605 = vpop.f32.mrb[0].mxu0
  %v2606 = vadd.f32 %v2542, %v2605
  %v2607 = vpop.f32.mrb[0].mxu0
  %v2608 = vpop.f32.mrb[0].mxu0
  %v2609 = vadd.f32 %v2545, %v2608
  %v2610 = vpop.f32.mrb[0].mxu0
  %2611 = vmatprep.mubr.bf16.mxu0 %v842
  %2612 = vmatmul.mubr.bf16.gmra.mrb[0].mxu0 %v841
  %v2613 = vpop.f32.mrb[0].mxu0
  %v2614 = vadd.f32 %v2550, %v2613
  %v2615 = vpop.f32.mrb[0].mxu0
  %v2616 = vpop.f32.mrb[0].mxu0
  %v2617 = vadd.f32 %v2553, %v2616
  %v2618 = vpop.f32.mrb[0].mxu0
  %2619 = vmatprep.mubr.bf16.mxu0 %v867
  %2620 = vmatmul.mubr.bf16.gmra.mrb[0].mxu0 %v866
  %v2621 = vpop.f32.mrb[0].mxu0
  %v2622 = vadd.f32 %v2558, %v2621
  %v2623 = vpop.f32.mrb[0].mxu0
  %v2624 = vpop.f32.mrb[0].mxu0
  %v2625 = vpop.f32.mrb[0].mxu0
  %2626 = vdwg.mxu0
  %2627 = vmatprep.subr.bf16.mxu0 0
  %2628 = vmatpush1.bf16.msra.mxu0 %v1891
  %2629 = vmatprep.subr.bf16.mxu0 0
  %2630 = vmatpush1.bf16.msra.mxu0 %v1892
  %2631 = vmatprep.subr.bf16.mxu0 0
  %2632 = vmatpush1.bf16.msra.mxu0 %v1893
  %2633 = vmatprep.subr.bf16.mxu0 0
  %2634 = vmatpush1.bf16.msra.mxu0 %v1894
  %2635 = vmatprep.subr.bf16.mxu0 0
  %2636 = vmatpush1.bf16.msra.mxu0 %v1895
  %2637 = vmatprep.subr.bf16.mxu0 0
  %2638 = vmatpush1.bf16.msra.mxu0 %v1896
  %2639 = vmatprep.subr.bf16.mxu0 0
  %2640 = vmatpush1.bf16.msra.mxu0 %v1897
  %2641 = vmatprep.subr.bf16.mxu0 0
  %2642 = vmatpush1.bf16.msra.mxu0 %v1898
  %2643 = vmatprep.subr.bf16.mxu0 0
  %2644 = vmatpush1.bf16.msra.mxu0 %v1899
  %2645 = vmatprep.subr.bf16.mxu0 0
  %2646 = vmatpush1.bf16.msra.mxu0 %v1900
  %2647 = vmatprep.subr.bf16.mxu0 0
  %2648 = vmatpush1.bf16.msra.mxu0 %v1901
  %2649 = vmatprep.subr.bf16.mxu0 0
  %2650 = vmatpush1.bf16.msra.mxu0 %v1902
  %2651 = vmatprep.subr.bf16.mxu0 0
  %2652 = vmatpush1.bf16.msra.mxu0 %v1903
  %2653 = vmatprep.subr.bf16.mxu0 0
  %2654 = vmatpush1.bf16.msra.mxu0 %v1904
  %2655 = vmatprep.subr.bf16.mxu0 0
  %2656 = vmatpush1.bf16.msra.mxu0 %v1905
  %2657 = vmatprep.subr.bf16.mxu0 0
  %2658 = vmatpush1.bf16.msra.mxu0 %v1906
  %2659 = vmatprep.mubr.bf16.mxu0 %v794
  %2660 = vmatmul.mubr.bf16.gmra.mrb[0].mxu0 %v793
  %v2661 = vpop.f32.mrb[0].mxu0
  %v2662 = vadd.f32 %v2598, %v2661
  %v2663 = vpop.f32.mrb[0].mxu0
  %v2664 = vpop.f32.mrb[0].mxu0
  %v2665 = vadd.f32 %v2601, %v2664
  %v2666 = vpop.f32.mrb[0].mxu0
  %2667 = vmatprep.mubr.bf16.mxu0 %v819
  %2668 = vmatmul.mubr.bf16.gmra.mrb[0].mxu0 %v818
  %v2669 = vpop.f32.mrb[0].mxu0
  %v2670 = vadd.f32 %v2606, %v2669
  %v2671 = vpop.f32.mrb[0].mxu0
  %v2672 = vpop.f32.mrb[0].mxu0
  %v2673 = vadd.f32 %v2609, %v2672
  %v2674 = vpop.f32.mrb[0].mxu0
  %2675 = vmatprep.mubr.bf16.mxu0 %v844
  %2676 = vmatmul.mubr.bf16.gmra.mrb[0].mxu0 %v843
  %v2677 = vpop.f32.mrb[0].mxu0
  %v2678 = vadd.f32 %v2614, %v2677
  %v2679 = vpop.f32.mrb[0].mxu0
  %v2680 = vpop.f32.mrb[0].mxu0
  %v2681 = vadd.f32 %v2617, %v2680
  %v2682 = vpop.f32.mrb[0].mxu0
  %2683 = vmatprep.mubr.bf16.mxu0 %v869
  %2684 = vmatmul.mubr.bf16.gmra.mrb[0].mxu0 %v868
  %v2685 = vpop.f32.mrb[0].mxu0
  %v2686 = vadd.f32 %v2622, %v2685
  %v2687 = vpop.f32.mrb[0].mxu0
  %v2688 = vpop.f32.mrb[0].mxu0
  %v2689 = vpop.f32.mrb[0].mxu0
  %2690 = vdwg.mxu0
  %2691 = vmatprep.subr.bf16.mxu0 0
  %2692 = vmatpush1.bf16.msra.mxu0 %v1907
  %2693 = vmatprep.subr.bf16.mxu0 0
  %2694 = vmatpush1.bf16.msra.mxu0 %v1908
  %2695 = vmatprep.subr.bf16.mxu0 0
  %2696 = vmatpush1.bf16.msra.mxu0 %v1909
  %2697 = vmatprep.subr.bf16.mxu0 0
  %2698 = vmatpush1.bf16.msra.mxu0 %v1910
  %2699 = vmatprep.subr.bf16.mxu0 0
  %2700 = vmatpush1.bf16.msra.mxu0 %v1911
  %2701 = vmatprep.subr.bf16.mxu0 0
  %2702 = vmatpush1.bf16.msra.mxu0 %v1912
  %2703 = vmatprep.subr.bf16.mxu0 0
  %2704 = vmatpush1.bf16.msra.mxu0 %v1913
  %2705 = vmatprep.subr.bf16.mxu0 0
  %2706 = vmatpush1.bf16.msra.mxu0 %v1914
  %2707 = vmatprep.subr.bf16.mxu0 0
  %2708 = vmatpush1.bf16.msra.mxu0 %v1915
  %2709 = vmatprep.subr.bf16.mxu0 0
  %2710 = vmatpush1.bf16.msra.mxu0 %v1916
  %2711 = vmatprep.subr.bf16.mxu0 0
  %2712 = vmatpush1.bf16.msra.mxu0 %v1917
  %2713 = vmatprep.subr.bf16.mxu0 0
  %2714 = vmatpush1.bf16.msra.mxu0 %v1918
  %2715 = vmatprep.subr.bf16.mxu0 0
  %2716 = vmatpush1.bf16.msra.mxu0 %v1919
  %2717 = vmatprep.subr.bf16.mxu0 0
  %2718 = vmatpush1.bf16.msra.mxu0 %v1920
  %2719 = vmatprep.subr.bf16.mxu0 0
  %2720 = vmatpush1.bf16.msra.mxu0 %v1921
  %2721 = vmatprep.subr.bf16.mxu0 0
  %2722 = vmatpush1.bf16.msra.mxu0 %v1922
  %2723 = vmatprep.mubr.bf16.mxu0 %v796
  %2724 = vmatmul.mubr.bf16.gmra.mrb[0].mxu0 %v795
  %v2725 = vpop.f32.mrb[0].mxu0
  %v2726 = vadd.f32 %v2662, %v2725
  %v2727 = vpop.f32.mrb[0].mxu0
  %v2728 = vpop.f32.mrb[0].mxu0
  %v2729 = vadd.f32 %v2665, %v2728
  %v2730 = vpop.f32.mrb[0].mxu0
  %2731 = vmatprep.mubr.bf16.mxu0 %v821
  %2732 = vmatmul.mubr.bf16.gmra.mrb[0].mxu0 %v820
  %v2733 = vpop.f32.mrb[0].mxu0
  %v2734 = vadd.f32 %v2670, %v2733
  %v2735 = vpop.f32.mrb[0].mxu0
  %v2736 = vpop.f32.mrb[0].mxu0
  %v2737 = vadd.f32 %v2673, %v2736
  %v2738 = vpop.f32.mrb[0].mxu0
  %2739 = vmatprep.mubr.bf16.mxu0 %v846
  %2740 = vmatmul.mubr.bf16.gmra.mrb[0].mxu0 %v845
  %v2741 = vpop.f32.mrb[0].mxu0
  %v2742 = vadd.f32 %v2678, %v2741
  %v2743 = vpop.f32.mrb[0].mxu0
  %v2744 = vpop.f32.mrb[0].mxu0
  %v2745 = vadd.f32 %v2681, %v2744
  %v2746 = vpop.f32.mrb[0].mxu0
  %2747 = vmatprep.mubr.bf16.mxu0 %v871
  %2748 = vmatmul.mubr.bf16.gmra.mrb[0].mxu0 %v870
  %v2749 = vpop.f32.mrb[0].mxu0
  %v2750 = vadd.f32 %v2686, %v2749
  %v2751 = vpop.f32.mrb[0].mxu0
  %v2752 = vpop.f32.mrb[0].mxu0
  %v2753 = vpop.f32.mrb[0].mxu0
  %2754 = vdwg.mxu0
  %2755 = vmatprep.subr.bf16.mxu0 0
  %2756 = vmatpush1.bf16.msra.mxu0 %v1923
  %2757 = vmatprep.subr.bf16.mxu0 0
  %2758 = vmatpush1.bf16.msra.mxu0 %v1924
  %2759 = vmatprep.subr.bf16.mxu0 0
  %2760 = vmatpush1.bf16.msra.mxu0 %v1925
  %2761 = vmatprep.subr.bf16.mxu0 0
  %2762 = vmatpush1.bf16.msra.mxu0 %v1926
  %2763 = vmatprep.subr.bf16.mxu0 0
  %2764 = vmatpush1.bf16.msra.mxu0 %v1927
  %2765 = vmatprep.subr.bf16.mxu0 0
  %2766 = vmatpush1.bf16.msra.mxu0 %v1928
  %2767 = vmatprep.subr.bf16.mxu0 0
  %2768 = vmatpush1.bf16.msra.mxu0 %v1929
  %2769 = vmatprep.subr.bf16.mxu0 0
  %2770 = vmatpush1.bf16.msra.mxu0 %v1930
  %2771 = vmatprep.subr.bf16.mxu0 0
  %2772 = vmatpush1.bf16.msra.mxu0 %v1931
  %2773 = vmatprep.subr.bf16.mxu0 0
  %2774 = vmatpush1.bf16.msra.mxu0 %v1932
  %2775 = vmatprep.subr.bf16.mxu0 0
  %2776 = vmatpush1.bf16.msra.mxu0 %v1933
  %2777 = vmatprep.subr.bf16.mxu0 0
  %2778 = vmatpush1.bf16.msra.mxu0 %v1934
  %2779 = vmatprep.subr.bf16.mxu0 0
  %2780 = vmatpush1.bf16.msra.mxu0 %v1935
  %2781 = vmatprep.subr.bf16.mxu0 0
  %2782 = vmatpush1.bf16.msra.mxu0 %v1936
  %2783 = vmatprep.subr.bf16.mxu0 0
  %2784 = vmatpush1.bf16.msra.mxu0 %v1937
  %2785 = vmatprep.subr.bf16.mxu0 0
  %2786 = vmatpush1.bf16.msra.mxu0 %v1938
  %2787 = vmatprep.mubr.bf16.mxu0 %v798
  %2788 = vmatmul.mubr.bf16.gmra.mrb[0].mxu0 %v797
  %v2789 = vpop.f32.mrb[0].mxu0
  %v2790 = vadd.f32 %v2726, %v2789
  %v2791 = vpop.f32.mrb[0].mxu0
  %v2792 = vpop.f32.mrb[0].mxu0
  %v2793 = vadd.f32 %v2729, %v2792
  %v2794 = vpop.f32.mrb[0].mxu0
  %2795 = vmatprep.mubr.bf16.mxu0 %v823
  %2796 = vmatmul.mubr.bf16.gmra.mrb[0].mxu0 %v822
  %v2797 = vpop.f32.mrb[0].mxu0
  %v2798 = vadd.f32 %v2734, %v2797
  %v2799 = vpop.f32.mrb[0].mxu0
  %v2800 = vpop.f32.mrb[0].mxu0
  %v2801 = vadd.f32 %v2737, %v2800
  %v2802 = vpop.f32.mrb[0].mxu0
  %2803 = vmatprep.mubr.bf16.mxu0 %v848
  %2804 = vmatmul.mubr.bf16.gmra.mrb[0].mxu0 %v847
  %v2805 = vpop.f32.mrb[0].mxu0
  %v2806 = vadd.f32 %v2742, %v2805
  %v2807 = vpop.f32.mrb[0].mxu0
  %v2808 = vpop.f32.mrb[0].mxu0
  %v2809 = vadd.f32 %v2745, %v2808
  %v2810 = vpop.f32.mrb[0].mxu0
  %2811 = vmatprep.mubr.bf16.mxu0 %v873
  %2812 = vmatmul.mubr.bf16.gmra.mrb[0].mxu0 %v872
  %v2813 = vpop.f32.mrb[0].mxu0
  %v2814 = vadd.f32 %v2750, %v2813
  %v2815 = vpop.f32.mrb[0].mxu0
  %v2816 = vpop.f32.mrb[0].mxu0
  %v2817 = vpop.f32.mrb[0].mxu0
  %2818 = vdwg.mxu0
  %2819 = vmatprep.subr.bf16.mxu0 0
  %2820 = vmatpush1.bf16.msra.mxu0 %v1939
  %2821 = vmatprep.subr.bf16.mxu0 0
  %2822 = vmatpush1.bf16.msra.mxu0 %v1940
  %2823 = vmatprep.subr.bf16.mxu0 0
  %2824 = vmatpush1.bf16.msra.mxu0 %v1941
  %2825 = vmatprep.subr.bf16.mxu0 0
  %2826 = vmatpush1.bf16.msra.mxu0 %v1942
  %2827 = vmatprep.subr.bf16.mxu0 0
  %2828 = vmatpush1.bf16.msra.mxu0 %v1943
  %2829 = vmatprep.subr.bf16.mxu0 0
  %2830 = vmatpush1.bf16.msra.mxu0 %v1944
  %2831 = vmatprep.subr.bf16.mxu0 0
  %2832 = vmatpush1.bf16.msra.mxu0 %v1945
  %2833 = vmatprep.subr.bf16.mxu0 0
  %2834 = vmatpush1.bf16.msra.mxu0 %v1946
  %2835 = vmatprep.subr.bf16.mxu0 0
  %2836 = vmatpush1.bf16.msra.mxu0 %v1947
  %2837 = vmatprep.subr.bf16.mxu0 0
  %2838 = vmatpush1.bf16.msra.mxu0 %v1948
  %2839 = vmatprep.subr.bf16.mxu0 0
  %2840 = vmatpush1.bf16.msra.mxu0 %v1949
  %2841 = vmatprep.subr.bf16.mxu0 0
  %2842 = vmatpush1.bf16.msra.mxu0 %v1950
  %2843 = vmatprep.subr.bf16.mxu0 0
  %2844 = vmatpush1.bf16.msra.mxu0 %v1951
  %2845 = vmatprep.subr.bf16.mxu0 0
  %2846 = vmatpush1.bf16.msra.mxu0 %v1952
  %2847 = vmatprep.subr.bf16.mxu0 0
  %2848 = vmatpush1.bf16.msra.mxu0 %v1953
  %2849 = vmatprep.subr.bf16.mxu0 0
  %2850 = vmatpush1.bf16.msra.mxu0 %v1954
  %2851 = vmatprep.mubr.bf16.mxu0 %v800
  %2852 = vmatmul.mubr.bf16.gmra.mrb[0].mxu0 %v799
  %v2853 = vpop.f32.mrb[0].mxu0
  %v2854 = vadd.f32 %v2790, %v2853
  %v2855 = vpop.f32.mrb[0].mxu0
  %v2856 = vpop.f32.mrb[0].mxu0
  %v2857 = vadd.f32 %v2793, %v2856
  %v2858 = vpop.f32.mrb[0].mxu0
  %2859 = vmatprep.mubr.bf16.mxu0 %v825
  %2860 = vmatmul.mubr.bf16.gmra.mrb[0].mxu0 %v824
  %v2861 = vpop.f32.mrb[0].mxu0
  %v2862 = vadd.f32 %v2798, %v2861
  %v2863 = vpop.f32.mrb[0].mxu0
  %v2864 = vpop.f32.mrb[0].mxu0
  %v2865 = vadd.f32 %v2801, %v2864
  %v2866 = vpop.f32.mrb[0].mxu0
  %2867 = vmatprep.mubr.bf16.mxu0 %v850
  %2868 = vmatmul.mubr.bf16.gmra.mrb[0].mxu0 %v849
  %v2869 = vpop.f32.mrb[0].mxu0
  %v2870 = vadd.f32 %v2806, %v2869
  %v2871 = vpop.f32.mrb[0].mxu0
  %v2872 = vpop.f32.mrb[0].mxu0
  %v2873 = vadd.f32 %v2809, %v2872
  %v2874 = vpop.f32.mrb[0].mxu0
  %2875 = vmatprep.mubr.bf16.mxu0 %v875
  %2876 = vmatmul.mubr.bf16.gmra.mrb[0].mxu0 %v874
  %v2877 = vpop.f32.mrb[0].mxu0
  %v2878 = vadd.f32 %v2814, %v2877
  %v2879 = vpop.f32.mrb[0].mxu0
  %v2880 = vpop.f32.mrb[0].mxu0
  %v2881 = vpop.f32.mrb[0].mxu0
  %2882 = vdwg.mxu0
  %2883 = vmatprep.subr.bf16.mxu0 0
  %2884 = vmatpush1.bf16.msra.mxu0 %v1955
  %2885 = vmatprep.subr.bf16.mxu0 0
  %2886 = vmatpush1.bf16.msra.mxu0 %v1956
  %2887 = vmatprep.subr.bf16.mxu0 0
  %2888 = vmatpush1.bf16.msra.mxu0 %v1957
  %2889 = vmatprep.subr.bf16.mxu0 0
  %2890 = vmatpush1.bf16.msra.mxu0 %v1958
  %2891 = vmatprep.subr.bf16.mxu0 0
  %2892 = vmatpush1.bf16.msra.mxu0 %v1959
  %2893 = vmatprep.subr.bf16.mxu0 0
  %2894 = vmatpush1.bf16.msra.mxu0 %v1960
  %2895 = vmatprep.subr.bf16.mxu0 0
  %2896 = vmatpush1.bf16.msra.mxu0 %v1961
  %2897 = vmatprep.subr.bf16.mxu0 0
  %2898 = vmatpush1.bf16.msra.mxu0 %v1962
  %2899 = vmatprep.subr.bf16.mxu0 0
  %2900 = vmatpush1.bf16.msra.mxu0 %v1963
  %2901 = vmatprep.subr.bf16.mxu0 0
  %2902 = vmatpush1.bf16.msra.mxu0 %v1964
  %2903 = vmatprep.subr.bf16.mxu0 0
  %2904 = vmatpush1.bf16.msra.mxu0 %v1965
  %2905 = vmatprep.subr.bf16.mxu0 0
  %2906 = vmatpush1.bf16.msra.mxu0 %v1966
  %2907 = vmatprep.subr.bf16.mxu0 0
  %2908 = vmatpush1.bf16.msra.mxu0 %v1967
  %2909 = vmatprep.subr.bf16.mxu0 0
  %2910 = vmatpush1.bf16.msra.mxu0 %v1968
  %2911 = vmatprep.subr.bf16.mxu0 0
  %2912 = vmatpush1.bf16.msra.mxu0 %v1969
  %2913 = vmatprep.subr.bf16.mxu0 0
  %2914 = vmatpush1.bf16.msra.mxu0 %v1970
  %2915 = vmatprep.mubr.bf16.mxu0 %v802
  %2916 = vmatmul.mubr.bf16.gmra.mrb[0].mxu0 %v801
  %v2917 = vpop.f32.mrb[0].mxu0
  %v2918 = vadd.f32 %v2854, %v2917
  %v2919 = vpop.f32.mrb[0].mxu0
  %v2920 = vpop.f32.mrb[0].mxu0
  %v2921 = vadd.f32 %v2857, %v2920
  %v2922 = vpop.f32.mrb[0].mxu0
  %2923 = vmatprep.mubr.bf16.mxu0 %v827
  %2924 = vmatmul.mubr.bf16.gmra.mrb[0].mxu0 %v826
  %v2925 = vpop.f32.mrb[0].mxu0
  %v2926 = vadd.f32 %v2862, %v2925
  %v2927 = vpop.f32.mrb[0].mxu0
  %v2928 = vpop.f32.mrb[0].mxu0
  %v2929 = vadd.f32 %v2865, %v2928
  %v2930 = vpop.f32.mrb[0].mxu0
  %2931 = vmatprep.mubr.bf16.mxu0 %v852
  %2932 = vmatmul.mubr.bf16.gmra.mrb[0].mxu0 %v851
  %v2933 = vpop.f32.mrb[0].mxu0
  %v2934 = vadd.f32 %v2870, %v2933
  %v2935 = vpop.f32.mrb[0].mxu0
  %v2936 = vpop.f32.mrb[0].mxu0
  %v2937 = vadd.f32 %v2873, %v2936
  %v2938 = vpop.f32.mrb[0].mxu0
  %2939 = vmatprep.mubr.bf16.mxu0 %v877
  %2940 = vmatmul.mubr.bf16.gmra.mrb[0].mxu0 %v876
  %v2941 = vpop.f32.mrb[0].mxu0
  %v2942 = vadd.f32 %v2878, %v2941
  %v2943 = vpop.f32.mrb[0].mxu0
  %v2944 = vpop.f32.mrb[0].mxu0
  %v2945 = vpop.f32.mrb[0].mxu0
  %2946 = vdwg.mxu0
  %2947 = vmatprep.subr.bf16.mxu0 0
  %2948 = vmatpush1.bf16.msra.mxu0 %v1971
  %2949 = vmatprep.subr.bf16.mxu0 0
  %2950 = vmatpush1.bf16.msra.mxu0 %v1972
  %2951 = vmatprep.subr.bf16.mxu0 0
  %2952 = vmatpush1.bf16.msra.mxu0 %v1973
  %2953 = vmatprep.subr.bf16.mxu0 0
  %2954 = vmatpush1.bf16.msra.mxu0 %v1974
  %2955 = vmatprep.subr.bf16.mxu0 0
  %2956 = vmatpush1.bf16.msra.mxu0 %v1975
  %2957 = vmatprep.subr.bf16.mxu0 0
  %2958 = vmatpush1.bf16.msra.mxu0 %v1976
  %2959 = vmatprep.subr.bf16.mxu0 0
  %2960 = vmatpush1.bf16.msra.mxu0 %v1977
  %2961 = vmatprep.subr.bf16.mxu0 0
  %2962 = vmatpush1.bf16.msra.mxu0 %v1978
  %2963 = vmatprep.subr.bf16.mxu0 0
  %2964 = vmatpush1.bf16.msra.mxu0 0
  %2965 = vmatprep.subr.bf16.mxu0 0
  %2966 = vmatpush1.bf16.msra.mxu0 0
  %2967 = vmatprep.subr.bf16.mxu0 0
  %2968 = vmatpush1.bf16.msra.mxu0 0
  %2969 = vmatprep.subr.bf16.mxu0 0
  %2970 = vmatpush1.bf16.msra.mxu0 0
  %2971 = vmatprep.subr.bf16.mxu0 0
  %2972 = vmatpush1.bf16.msra.mxu0 0
  %2973 = vmatprep.subr.bf16.mxu0 0
  %2974 = vmatpush1.bf16.msra.mxu0 0
  %2975 = vmatprep.subr.bf16.mxu0 0
  %2976 = vmatpush1.bf16.msra.mxu0 0
  %2977 = vmatprep.subr.bf16.mxu0 0
  %2978 = vmatpush1.bf16.msra.mxu0 0
  %2979 = vmatprep.mubr.bf16.mxu0 0
  %2980 = vmatmul.mubr.bf16.gmra.mrb[0].mxu0 %v803
  %v2981 = vpop.f32.mrb[0].mxu0
  %v2982 = vadd.f32 %v2918, %v2981
  %v2983 = vpop.f32.mrb[0].mxu0
  %v2984 = vpop.f32.mrb[0].mxu0
  %v2985 = vadd.f32 %v2921, %v2984
  %v2986 = vpop.f32.mrb[0].mxu0
  %2987 = vmatprep.mubr.bf16.mxu0 0
  %2988 = vmatmul.mubr.bf16.gmra.mrb[0].mxu0 %v828
  %v2989 = vpop.f32.mrb[0].mxu0
  %v2990 = vadd.f32 %v2926, %v2989
  %v2991 = vpop.f32.mrb[0].mxu0
  %v2992 = vpop.f32.mrb[0].mxu0
  %v2993 = vadd.f32 %v2929, %v2992
  %v2994 = vpop.f32.mrb[0].mxu0
  %2995 = vmatprep.mubr.bf16.mxu0 0
  %2996 = vmatmul.mubr.bf16.gmra.mrb[0].mxu0 %v853
  %v2997 = vpop.f32.mrb[0].mxu0
  %v2998 = vadd.f32 %v2934, %v2997
  %v2999 = vpop.f32.mrb[0].mxu0
  %v3000 = vpop.f32.mrb[0].mxu0
  %v3001 = vadd.f32 %v2937, %v3000
  %v3002 = vpop.f32.mrb[0].mxu0
  %3003 = vmatprep.mubr.bf16.mxu0 0
  %3004 = vmatmul.mubr.bf16.gmra.mrb[0].mxu0 %v878
  %v3005 = vpop.f32.mrb[0].mxu0
  %v3006 = vadd.f32 %v2942, %v3005
  %v3007 = vpop.f32.mrb[0].mxu0
  %v3008 = vpop.f32.mrb[0].mxu0
  %v3009 = vpop.f32.mrb[0].mxu0
  %3010 = vdwg.mxu0
  %v3011 = vmax.f32 %v2982, 0.0
  %v3012 = vmax.f32 %v2985, 0.0
  %v3013 = vmax.f32 %v2990, 0.0
  %v3014 = vmax.f32 %v2993, 0.0
  %v3015 = vmax.f32 %v2998, 0.0
  %v3016 = vmax.f32 %v3001, 0.0
  %v3017 = vmax.f32 %v3006, 0.0
  %v3018 = vpack.c.bf16 %v3012, %v3011
  %v3019 = vpack.c.bf16 %v3014, %v3013
  %v3020 = vpack.c.bf16 %v3016, %v3015
  %v3021 = vpack.c.bf16 %v3017, %v3017
  %v3026 = vunpack.c.l.b16 %v3018
  %v3027 = vunpack.c.h.b16 %v3018
  %v3028 = vunpack.c.l.b16 %v3019
  %v3029 = vunpack.c.h.b16 %v3019
  %v3030 = vunpack.c.l.b16 %v3020
  %v3031 = vunpack.c.h.b16 %v3020
  %v3032 = vunpack.c.l.b16 %v3021
  %v3033 = vpack.c.b16 %v3026, %v3026
  %v3034 = vpack.c.b16 %v3027, %v3027
  %v3035 = vpack.c.b16 %v3028, %v3028
  %v3036 = vpack.c.b16 %v3029, %v3029
  %v3037 = vpack.c.b16 %v3030, %v3030
  %v3038 = vpack.c.b16 %v3031, %v3031
  %v3039 = vpack.c.b16 %v3032, %v3032
  %3047 = vst [vmem:[%s3] sm:$0xf] %v3033
  %3048 = vst [vmem:[%s3 + $0x4] sm:$0xf] %v3034
  %3049 = vst [vmem:[%s3 + $0x8] sm:$0xf] %v3035
  %3050 = vst [vmem:[%s3 + $0xc] sm:$0xf] %v3036
  %3051 = vst [vmem:[%s3 + $0x10] sm:$0xf] %v3037
  %3052 = vst [vmem:[%s3 + $0x14] sm:$0xf] %v3038
  %3053 = vst [vmem:[%s3 + $0x18] sm:$0x1] %v3039
  // Predicated region
  $region14: #{image_model_forward.5} parent=0 // pred_check
    _
  $region15: #{image_model_forward.5} parent=0 // pred_check_branch
    %3055 = sbr.rel (0) target = $region17
  $region16: #{image_model_forward.5} parent=0 // pred_region
    _
  $region17: #{image_model_forward.5} parent=0 // pred_fallthru
    _
  // Predicated region
  $region18: #{image_model_forward.5} parent=0 // pred_check
    _
  $region19: #{image_model_forward.5} parent=0 // pred_check_branch
    %3057 = sbr.rel (0) target = $region21
  $region20: #{image_model_forward.5} parent=0 // pred_region
    _
  $region21: #{image_model_forward.5} parent=0 // pred_fallthru
    _

</llo_original>
